<compile_context>
chip_gen: v7x
topology: tpu7x:2x2x1
jax: 0.10.0
libtpu: 0.0.40
codegen_flags: <defaults>
</compile_context>

<pallas_src>
import functools
import math

import jax
import jax.numpy as jnp
from jax import lax
from jax.experimental import pallas as pl
from jax.experimental.pallas import tpu as pltpu


def _round_up(x, m):
    return ((x + m - 1) // m) * m


def _pick_rows(ho, ws_p, cout):
    """Output rows per conv grid step: power of two dividing ho, chosen so the
    f32 accumulator stays <= ~192 KiB and M = r*ws_p lands around 256-640."""
    r = 1
    while (2 * r <= ho
           and (2 * r) * ws_p * cout * 4 <= 192 * 1024
           and r * ws_p < 512):
        r *= 2
    return r


# ----------------------------- Pallas kernels -----------------------------

def _conv_s2d_relu_kernel(s_ref, s_nxt_ref, w_ref, b_ref, o_ref, *, ws, wo):
    """R output rows of Conv2d(k=4, s=2, p=1) + bias + ReLU.

    s_ref:     (R*ws, 4*Cin) flattened s2d rows [j*R, j*R+R)           (bf16)
    s_nxt_ref: (R*ws, 4*Cin) next block (supplies s2d row j*R+R)        (bf16)
    w_ref:     (2, 2, 4*Cin, Cout) transformed tap weights (resident)   (bf16)
    b_ref:     (1, Cout) bias (resident)                                (f32)
    o_ref:     (R*ws, Cout) flattened output rows; cols >= wo zeroed    (bf16)
    """
    m = o_ref.shape[0]
    win = jnp.concatenate([s_ref[...], s_nxt_ref[...]], axis=0)
    need = m + ws + 1
    if win.shape[0] < need:                       # static guard (tiny inputs)
        pad = jnp.zeros((need - win.shape[0], win.shape[1]), win.dtype)
        win = jnp.concatenate([win, pad], axis=0)
    win1 = win[1:, :]                             # flat offset +1 (right taps)
    acc = jnp.dot(win[0:m], w_ref[0, 0], preferred_element_type=jnp.float32)
    acc = acc + jnp.dot(win1[0:m], w_ref[0, 1],
                        preferred_element_type=jnp.float32)
    acc = acc + jnp.dot(win[ws:ws + m], w_ref[1, 0],
                        preferred_element_type=jnp.float32)
    acc = acc + jnp.dot(win1[ws:ws + m], w_ref[1, 1],
                        preferred_element_type=jnp.float32)
    out = jnp.maximum(acc + b_ref[...], 0.0)
    q = lax.broadcasted_iota(jnp.int32, (m, 1), 0) % ws
    o_ref[...] = jnp.where(q < wo, out, 0.0).astype(o_ref.dtype)


def _vae_head_kernel(x_ref, wm_ref, wl_ref, bm_ref, bl_ref, rnd_ref, z_ref,
                     acc_mu, acc_lv):
    """Fused fc_mu / fc_logvar + reparameterization, K-tiled over the features.

    Matches the PyTorch reference: sigma = exp(fc_logvar(x)), z = mu + sigma*rnd.
    """
    k = pl.program_id(1)

    @pl.when(k == 0)
    def _():
        acc_mu[...] = jnp.zeros_like(acc_mu)
        acc_lv[...] = jnp.zeros_like(acc_lv)

    x = x_ref[...]
    acc_mu[...] += jnp.dot(x, wm_ref[...], preferred_element_type=jnp.float32)
    acc_lv[...] += jnp.dot(x, wl_ref[...], preferred_element_type=jnp.float32)

    @pl.when(k == pl.num_programs(1) - 1)
    def _():
        mu = acc_mu[...] + bm_ref[...]
        sigma = jnp.exp(acc_lv[...] + bl_ref[...])
        z_ref[...] = mu + sigma * rnd_ref[...]


# --------------------------- pallas_call wrappers ---------------------------

def conv_s2d_relu(s_flat, w2, b, *, ho, wo, ws_p, r):
    """s_flat: (N, (ho+1)*ws_p, 4*Cin) bf16;  w2: (2,2,4*Cin,Cout) bf16;
    b: (1,Cout) f32.  Returns (N, ho*ws_p, Cout) bf16 (cols >= wo are zero)."""
    n, rows, c4 = s_flat.shape
    cout = w2.shape[-1]
    br = r * ws_p
    nbi = pl.cdiv(rows, br)          # number of row-blocks of the s2d input
    kernel = functools.partial(_conv_s2d_relu_kernel, ws=ws_p, wo=wo)
    return pl.pallas_call(
        kernel,
        out_shape=jax.ShapeDtypeStruct((n, ho * ws_p, cout), jnp.bfloat16),
        grid=(n, ho // r),
        in_specs=[
            pl.BlockSpec((None, br, c4), lambda i, j: (i, j, 0)),
            # boundary view: the following block (holds s2d row j*R+R); clamped
            # so the block index is always valid (garbage only reaches masked
            # junk columns).
            pl.BlockSpec((None, br, c4),
                         lambda i, j: (i, jnp.minimum(j + 1, nbi - 1), 0)),
            pl.BlockSpec((2, 2, c4, cout), lambda i, j: (0, 0, 0, 0)),  # resident
            pl.BlockSpec((1, cout), lambda i, j: (0, 0)),               # resident
        ],
        out_specs=pl.BlockSpec((None, br, cout), lambda i, j: (i, j, 0)),
        compiler_params=pltpu.CompilerParams(
            dimension_semantics=("parallel", "parallel")),
    )(s_flat, s_flat, w2, b)


def vae_head(x, w_mu, w_lv, b_mu, b_lv, rnd):
    n, f = x.shape
    l = w_mu.shape[1]
    tm = n if n <= 128 else 128
    tk = f if f <= 4096 else 4096
    assert f % tk == 0, "feature dim must tile evenly along the reduction axis"
    return pl.pallas_call(
        _vae_head_kernel,
        out_shape=jax.ShapeDtypeStruct((n, l), jnp.float32),
        grid=(pl.cdiv(n, tm), f // tk),
        in_specs=[
            pl.BlockSpec((tm, tk), lambda i, k: (i, k)),
            pl.BlockSpec((tk, l), lambda i, k: (k, 0)),
            pl.BlockSpec((tk, l), lambda i, k: (k, 0)),
            pl.BlockSpec((1, l), lambda i, k: (0, 0)),
            pl.BlockSpec((1, l), lambda i, k: (0, 0)),
            pl.BlockSpec((tm, l), lambda i, k: (i, 0)),
        ],
        out_specs=pl.BlockSpec((tm, l), lambda i, k: (i, 0)),
        scratch_shapes=[pltpu.VMEM((tm, l), jnp.float32),
                        pltpu.VMEM((tm, l), jnp.float32)],
        compiler_params=pltpu.CompilerParams(
            dimension_semantics=("parallel", "arbitrary")),
    )(x, w_mu, w_lv, b_mu, b_lv, rnd)


# ------------------------------ JAX glue ------------------------------

def space_to_depth_pad(x, ws_p):
    """(N, H, W, C) -> (N, (H//2+1)*ws_p, 4*C): pad=1 each side, fold 2x2 blocks
    into channels (order: row_in_block, col_in_block, c), pad the folded width
    to ws_p (lane/sublane friendly), flatten the (row, col) grid."""
    n, h, w, c = x.shape
    xp = jnp.pad(x, ((0, 0), (1, 1), (1, 1), (0, 0)))
    hs, ws = (h + 2) // 2, (w + 2) // 2
    s = xp.reshape(n, hs, 2, ws, 2, c).transpose(0, 1, 3, 2, 4, 5)
    s = s.reshape(n, hs, ws, 4 * c)
    if ws_p > ws:
        s = jnp.pad(s, ((0, 0), (0, 0), (0, ws_p - ws), (0, 0)))
    return s.reshape(n, hs * ws_p, 4 * c)


def _conv_weight_s2d(w):
    """(4,4,Cin,Cout) HWIO conv weight -> (2, 2, 4*Cin, Cout) s2d tap weights."""
    _, _, cin, cout = w.shape
    w = w.reshape(2, 2, 2, 2, cin, cout)     # (a, r2, b, c2, ci, co); kh=2a+r2
    w = w.transpose(0, 2, 1, 3, 4, 5)        # (a, b, r2, c2, ci, co)
    return w.reshape(2, 2, 4 * cin, cout)


# --------------------------- parameters ---------------------------

def init_params(key, image_channels, latent_dim, flat_features):
    """PyTorch-style uniform(-1/sqrt(fan_in), 1/sqrt(fan_in)) init."""
    chans = [image_channels, 32, 64, 128, 256]
    params = {"conv": []}
    for i in range(4):
        key, kw, kb = jax.random.split(key, 3)
        cin, cout = chans[i], chans[i + 1]
        bound = 1.0 / math.sqrt(cin * 4 * 4)
        w = jax.random.uniform(kw, (4, 4, cin, cout), jnp.float32, -bound, bound)
        b = jax.random.uniform(kb, (cout,), jnp.float32, -bound, bound)
        params["conv"].append((w, b))
    key, k1, k2, k3, k4 = jax.random.split(key, 5)
    fb = 1.0 / math.sqrt(flat_features)
    params["fc_mu_w"] = jax.random.uniform(k1, (flat_features, latent_dim), jnp.float32, -fb, fb)
    params["fc_mu_b"] = jax.random.uniform(k2, (1, latent_dim), jnp.float32, -fb, fb)
    params["fc_lv_w"] = jax.random.uniform(k3, (flat_features, latent_dim), jnp.float32, -fb, fb)
    params["fc_lv_b"] = jax.random.uniform(k4, (1, latent_dim), jnp.float32, -fb, fb)
    return params


def prepare_params(params, image_channels, hf, wf):
    """One-time prep: s2d tap weights (bf16, real channel counts) and fc weights
    row-permuted from NCHW-flatten order to the NHWC order the kernels produce."""
    prepared = {"conv": []}
    for w, b in params["conv"]:
        cout = w.shape[3]
        w2 = _conv_weight_s2d(w).astype(jnp.bfloat16)
        prepared["conv"].append((w2, b.reshape(1, cout).astype(jnp.float32)))
    c_last = params["conv"][-1][0].shape[3]
    f, latent = params["fc_mu_w"].shape
    assert f == c_last * hf * wf

    def permute(w_fc):       # NCHW-flatten row order -> NHWC-flatten row order
        return (w_fc.reshape(c_last, hf, wf, latent)
                    .transpose(1, 2, 0, 3).reshape(f, latent))

    prepared["w_mu"] = permute(params["fc_mu_w"]).astype(jnp.bfloat16)
    prepared["w_lv"] = permute(params["fc_lv_w"]).astype(jnp.bfloat16)
    prepared["b_mu"] = params["fc_mu_b"].astype(jnp.float32)
    prepared["b_lv"] = params["fc_lv_b"].astype(jnp.float32)
    return prepared


# ------------------------------ forward pass ------------------------------

@jax.jit
def variational_encoder_forward(prepared, x_nchw, random_nums):
    # NCHW (PyTorch interface) -> NHWC, bf16 activations with f32 accumulation.
    x = jnp.transpose(x_nchw, (0, 2, 3, 1)).astype(jnp.bfloat16)
    for w2, b in prepared["conv"]:
        n, h, w, _ = x.shape
        ho, wo = h // 2, w // 2
        ws_p = _round_up(wo + 1, 16)
        cout = w2.shape[-1]
        r = _pick_rows(ho, ws_p, cout)
        s = space_to_depth_pad(x, ws_p)                       # fused XLA copy
        y = conv_s2d_relu(s, w2, b, ho=ho, wo=wo, ws_p=ws_p, r=r)
        x = y.reshape(n, ho, ws_p, cout)[:, :, :wo, :]        # drop junk columns
    n = x.shape[0]
    x_flat = x.reshape(n, -1)   # NHWC flatten; NCHW order baked into fc rows
    return vae_head(x_flat, prepared["w_mu"], prepared["w_lv"],
                    prepared["b_mu"], prepared["b_lv"],
                    random_nums.astype(jnp.float32))


# ------------------------------ pure-JAX reference ------------------------------

def reference_forward(params, x_nchw, random_nums):
    """f32 reference with the PyTorch module's semantics (correctness check)."""
    x = x_nchw.astype(jnp.float32)
    for w, b in params["conv"]:
        x = jax.lax.conv_general_dilated(
            x, w, window_strides=(2, 2), padding=((1, 1), (1, 1)),
            dimension_numbers=("NCHW", "HWIO", "NCHW"))
        x = jax.nn.relu(x + b.reshape(1, -1, 1, 1))
    xf = x.reshape(x.shape[0], -1)                     # torch.nn.Flatten on NCHW
    mu = xf @ params["fc_mu_w"] + params["fc_mu_b"]
    sigma = jnp.exp(xf @ params["fc_lv_w"] + params["fc_lv_b"])
    return mu + sigma * random_nums


# ---------------------------------- main ----------------------------------

if __name__ == "__main__":
    N = 2
    IMAGE_CHANNELS = 3
    H = W = 32               # scaled-down analogue of the 256x256 camera input
    LATENT_DIM = 16
    HF = WF = H // 16        # spatial size after four stride-2 convs
    FLAT = 256 * HF * WF     # fc in-features (256*16*16 at full resolution)

    key = jax.random.PRNGKey(0)
    key, kx, kr, kp = jax.random.split(key, 4)
    x = jax.random.normal(kx, (N, IMAGE_CHANNELS, H, W), jnp.float32)
    random_nums = jax.random.normal(kr, (N, LATENT_DIM), jnp.float32)

    params = init_params(kp, IMAGE_CHANNELS, LATENT_DIM, FLAT)
    prepared = prepare_params(params, IMAGE_CHANNELS, HF, WF)

    z = variational_encoder_forward(prepared, x, random_nums)
    z = jax.block_until_ready(z)

    assert z.shape == (N, LATENT_DIM) and z.dtype == jnp.float32
    assert bool(jnp.all(jnp.isfinite(z)))
    z_ref = reference_forward(params, x, random_nums)
    assert bool(jnp.allclose(z, z_ref, rtol=2e-2, atol=2e-2)), (
        float(jnp.max(jnp.abs(z - z_ref))))
    print("KERNEL_OK")
</pallas_src>

<mosaic_0001>
module attributes {stable_mosaic.version = 11 : i64} {
  func.func @_conv_s2d_relu_kernel(%arg0: i32, %arg1: i32, %arg2: memref<1x512x12xbf16, #tpu.memory_space<vmem>>, %arg3: memref<1x512x12xbf16, #tpu.memory_space<vmem>>, %arg4: memref<2x2x12x32xbf16, #tpu.memory_space<vmem>>, %arg5: memref<1x32xf32, #tpu.memory_space<vmem>>, %arg6: memref<1x512x32xbf16, #tpu.memory_space<vmem>>) attributes {dimension_semantics = [#tpu.dimension_semantics<parallel>, #tpu.dimension_semantics<parallel>], iteration_bounds = array<i64: 2, 1>, scalar_prefetch = 0 : i64, scratch_operands = 0 : i64, tpu.core_type = #tpu.core_type<tc>, window_params = [{transform_indices = @transform_0, window_bounds = array<i64: 1, 512, 12>}, {transform_indices = @transform_1, window_bounds = array<i64: 1, 512, 12>}, {pipeline_mode = #tpu.pipeline_mode<synchronous>, transform_indices = @transform_2, window_bounds = array<i64: 2, 2, 12, 32>}, {pipeline_mode = #tpu.pipeline_mode<synchronous>, transform_indices = @transform_3, window_bounds = array<i64: 1, 32>}, {transform_indices = @transform_4, window_bounds = array<i64: 1, 512, 32>}]} {
    %c0 = arith.constant 0 : index
    %c0_0 = arith.constant 0 : index
    %c0_1 = arith.constant 0 : index
    %0 = vector.load %arg2[%c0, %c0_0, %c0_1] : memref<1x512x12xbf16, #tpu.memory_space<vmem>>, vector<1x512x12xbf16>
    %1 = vector.shape_cast %0 : vector<1x512x12xbf16> to vector<512x12xbf16>
    %c0_2 = arith.constant 0 : index
    %c0_3 = arith.constant 0 : index
    %c0_4 = arith.constant 0 : index
    %2 = vector.load %arg3[%c0_2, %c0_3, %c0_4] : memref<1x512x12xbf16, #tpu.memory_space<vmem>>, vector<1x512x12xbf16>
    %3 = vector.shape_cast %2 : vector<1x512x12xbf16> to vector<512x12xbf16>
    %4 = tpu.concatenate %1, %3 in 0 : vector<512x12xbf16>, vector<512x12xbf16> -> vector<1024x12xbf16>
    %5 = vector.extract_strided_slice %4 {offsets = [1, 0], sizes = [1023, 12], strides = [1, 1]} : vector<1024x12xbf16> to vector<1023x12xbf16>
    %6 = vector.extract_strided_slice %4 {offsets = [0, 0], sizes = [512, 12], strides = [1, 1]} : vector<1024x12xbf16> to vector<512x12xbf16>
    %c0_5 = arith.constant 0 : index
    %c0_6 = arith.constant 0 : index
    %c0_7 = arith.constant 0 : index
    %c0_8 = arith.constant 0 : index
    %7 = vector.load %arg4[%c0_5, %c0_6, %c0_7, %c0_8] : memref<2x2x12x32xbf16, #tpu.memory_space<vmem>>, vector<1x1x12x32xbf16>
    %8 = vector.shape_cast %7 : vector<1x1x12x32xbf16> to vector<12x32xbf16>
    %cst = arith.constant dense<0.000000e+00> : vector<512x32xf32>
    %9 = tpu.matmul %6, %8, %cst {dimension_numbers = #tpu.dot_dimension_numbers<[1], [0], [0], [1], [0, 0, 1, 1], [], []>} : vector<512x12xbf16>, vector<12x32xbf16>, vector<512x32xf32> -> vector<512x32xf32>
    %10 = vector.extract_strided_slice %5 {offsets = [0, 0], sizes = [512, 12], strides = [1, 1]} : vector<1023x12xbf16> to vector<512x12xbf16>
    %c0_9 = arith.constant 0 : index
    %c1 = arith.constant 1 : index
    %c0_10 = arith.constant 0 : index
    %c0_11 = arith.constant 0 : index
    %11 = vector.load %arg4[%c0_9, %c1, %c0_10, %c0_11] : memref<2x2x12x32xbf16, #tpu.memory_space<vmem>>, vector<1x1x12x32xbf16>
    %12 = vector.shape_cast %11 : vector<1x1x12x32xbf16> to vector<12x32xbf16>
    %cst_12 = arith.constant dense<0.000000e+00> : vector<512x32xf32>
    %13 = tpu.matmul %10, %12, %cst_12 {dimension_numbers = #tpu.dot_dimension_numbers<[1], [0], [0], [1], [0, 0, 1, 1], [], []>} : vector<512x12xbf16>, vector<12x32xbf16>, vector<512x32xf32> -> vector<512x32xf32>
    %14 = arith.addf %9, %13 : vector<512x32xf32>
    %15 = vector.extract_strided_slice %4 {offsets = [32, 0], sizes = [512, 12], strides = [1, 1]} : vector<1024x12xbf16> to vector<512x12xbf16>
    %c1_13 = arith.constant 1 : index
    %c0_14 = arith.constant 0 : index
    %c0_15 = arith.constant 0 : index
    %c0_16 = arith.constant 0 : index
    %16 = vector.load %arg4[%c1_13, %c0_14, %c0_15, %c0_16] : memref<2x2x12x32xbf16, #tpu.memory_space<vmem>>, vector<1x1x12x32xbf16>
    %17 = vector.shape_cast %16 : vector<1x1x12x32xbf16> to vector<12x32xbf16>
    %cst_17 = arith.constant dense<0.000000e+00> : vector<512x32xf32>
    %18 = tpu.matmul %15, %17, %cst_17 {dimension_numbers = #tpu.dot_dimension_numbers<[1], [0], [0], [1], [0, 0, 1, 1], [], []>} : vector<512x12xbf16>, vector<12x32xbf16>, vector<512x32xf32> -> vector<512x32xf32>
    %19 = arith.addf %14, %18 : vector<512x32xf32>
    %20 = vector.extract_strided_slice %5 {offsets = [32, 0], sizes = [512, 12], strides = [1, 1]} : vector<1023x12xbf16> to vector<512x12xbf16>
    %c1_18 = arith.constant 1 : index
    %c1_19 = arith.constant 1 : index
    %c0_20 = arith.constant 0 : index
    %c0_21 = arith.constant 0 : index
    %21 = vector.load %arg4[%c1_18, %c1_19, %c0_20, %c0_21] : memref<2x2x12x32xbf16, #tpu.memory_space<vmem>>, vector<1x1x12x32xbf16>
    %22 = vector.shape_cast %21 : vector<1x1x12x32xbf16> to vector<12x32xbf16>
    %cst_22 = arith.constant dense<0.000000e+00> : vector<512x32xf32>
    %23 = tpu.matmul %20, %22, %cst_22 {dimension_numbers = #tpu.dot_dimension_numbers<[1], [0], [0], [1], [0, 0, 1, 1], [], []>} : vector<512x12xbf16>, vector<12x32xbf16>, vector<512x32xf32> -> vector<512x32xf32>
    %24 = arith.addf %19, %23 : vector<512x32xf32>
    %c0_23 = arith.constant 0 : index
    %c0_24 = arith.constant 0 : index
    %25 = vector.load %arg5[%c0_23, %c0_24] : memref<1x32xf32, #tpu.memory_space<vmem>>, vector<1x32xf32>
    %26 = vector.broadcast %25 : vector<1x32xf32> to vector<512x32xf32>
    %27 = arith.addf %24, %26 : vector<512x32xf32>
    %cst_25 = arith.constant 0.000000e+00 : f32
    %28 = vector.broadcast %cst_25 : f32 to vector<512x32xf32>
    %29 = arith.maximumf %27, %28 : vector<512x32xf32>
    %30 = tpu.iota {dimensions = array<i32: 0>} : vector<512x1xi32>
    %c32_i32 = arith.constant 32 : i32
    %c0_i32 = arith.constant 0 : i32
    %31 = arith.cmpi eq, %c32_i32, %c0_i32 : i32
    %c1_i32 = arith.constant 1 : i32
    %32 = arith.select %31, %c1_i32, %c32_i32 : i32
    %33 = vector.broadcast %32 : i32 to vector<512x1xi32>
    %34 = arith.remsi %30, %33 : vector<512x1xi32>
    %c0_i32_26 = arith.constant 0 : i32
    %35 = vector.broadcast %c0_i32_26 : i32 to vector<512x1xi32>
    %36 = arith.cmpi ne, %34, %35 : vector<512x1xi32>
    %c0_i32_27 = arith.constant 0 : i32
    %37 = vector.broadcast %c0_i32_27 : i32 to vector<512x1xi32>
    %38 = arith.cmpi slt, %34, %37 : vector<512x1xi32>
    %c0_i32_28 = arith.constant 0 : i32
    %39 = arith.cmpi slt, %32, %c0_i32_28 : i32
    %40 = vector.broadcast %39 : i1 to vector<512x1xi1>
    %41 = vector.broadcast %40 : vector<512x1xi1> to vector<512x1xi1>
    %42 = arith.xori %38, %41 : vector<512x1xi1>
    %43 = arith.andi %42, %36 : vector<512x1xi1>
    %44 = vector.broadcast %32 : i32 to vector<512x1xi32>
    %45 = arith.addi %34, %44 : vector<512x1xi32>
    %46 = arith.select %43, %45, %34 : vector<512x1xi1>, vector<512x1xi32>
    %c16_i32 = arith.constant 16 : i32
    %47 = vector.broadcast %c16_i32 : i32 to vector<512x1xi32>
    %48 = arith.cmpi slt, %46, %47 : vector<512x1xi32>
    %cst_29 = arith.constant 0.000000e+00 : f32
    %49 = vector.shape_cast %48 : vector<512x1xi1> to vector<512x1xi1>
    %50 = vector.broadcast %49 : vector<512x1xi1> to vector<512x32xi1>
    %51 = vector.broadcast %cst_29 : f32 to vector<512x32xf32>
    %52 = arith.select %50, %29, %51 : vector<512x32xi1>, vector<512x32xf32>
    %53 = arith.truncf %52 : vector<512x32xf32> to vector<512x32xbf16>
    %c0_30 = arith.constant 0 : index
    %c0_31 = arith.constant 0 : index
    %c0_32 = arith.constant 0 : index
    %54 = vector.load %arg6[%c0_30, %c0_31, %c0_32] : memref<1x512x32xbf16, #tpu.memory_space<vmem>>, vector<1x512x32xbf16>
    %55 = vector.shape_cast %54 : vector<1x512x32xbf16> to vector<512x32xbf16>
    %56 = vector.shape_cast %53 : vector<512x32xbf16> to vector<1x512x32xbf16>
    tpu.vector_store %arg6[%c0_30, %c0_31, %c0_32], %56 {strides = array<i32>} : memref<1x512x32xbf16, #tpu.memory_space<vmem>>, vector<1x512x32xbf16>,
    return
  }
  func.func @transform_0(%arg0: i32, %arg1: i32) -> (i32, i32, i32) {
    %c0_i32 = arith.constant 0 : i32
    %c0_i32_0 = arith.constant 0 : i32
    return %arg0, %arg1, %c0_i32 : i32, i32, i32
  }
  func.func @transform_1(%arg0: i32, %arg1: i32) -> (i32, i32, i32) {
    %c1_i32 = arith.constant 1 : i32
    %0 = arith.addi %arg1, %c1_i32 : i32
    %c1_i32_0 = arith.constant 1 : i32
    %1 = arith.minsi %0, %c1_i32_0 : i32
    %c0_i32 = arith.constant 0 : i32
    %c0_i32_1 = arith.constant 0 : i32
    return %arg0, %1, %c0_i32 : i32, i32, i32
  }
  func.func @transform_2(%arg0: i32, %arg1: i32) -> (i32, i32, i32, i32) {
    %c0_i32 = arith.constant 0 : i32
    %c0_i32_0 = arith.constant 0 : i32
    %c0_i32_1 = arith.constant 0 : i32
    %c0_i32_2 = arith.constant 0 : i32
    %c0_i32_3 = arith.constant 0 : i32
    return %c0_i32, %c0_i32_0, %c0_i32_1, %c0_i32_2 : i32, i32, i32, i32
  }
  func.func @transform_3(%arg0: i32, %arg1: i32) -> (i32, i32) {
    %c0_i32 = arith.constant 0 : i32
    %c0_i32_0 = arith.constant 0 : i32
    %c0_i32_1 = arith.constant 0 : i32
    return %c0_i32, %c0_i32_0 : i32, i32
  }
  func.func @transform_4(%arg0: i32, %arg1: i32) -> (i32, i32, i32) {
    %c0_i32 = arith.constant 0 : i32
    %c0_i32_0 = arith.constant 0 : i32
    return %arg0, %arg1, %c0_i32 : i32, i32, i32
  }
}

module attributes {stable_mosaic.version = 11 : i64} {
  func.func @_conv_s2d_relu_kernel(%arg0: i32, %arg1: i32, %arg2: memref<1x128x128xbf16, #tpu.memory_space<vmem>>, %arg3: memref<1x128x128xbf16, #tpu.memory_space<vmem>>, %arg4: memref<2x2x128x64xbf16, #tpu.memory_space<vmem>>, %arg5: memref<1x64xf32, #tpu.memory_space<vmem>>, %arg6: memref<1x128x64xbf16, #tpu.memory_space<vmem>>) attributes {dimension_semantics = [#tpu.dimension_semantics<parallel>, #tpu.dimension_semantics<parallel>], iteration_bounds = array<i64: 2, 1>, scalar_prefetch = 0 : i64, scratch_operands = 0 : i64, tpu.core_type = #tpu.core_type<tc>, window_params = [{transform_indices = @transform_0, window_bounds = array<i64: 1, 128, 128>}, {transform_indices = @transform_1, window_bounds = array<i64: 1, 128, 128>}, {pipeline_mode = #tpu.pipeline_mode<synchronous>, transform_indices = @transform_2, window_bounds = array<i64: 2, 2, 128, 64>}, {pipeline_mode = #tpu.pipeline_mode<synchronous>, transform_indices = @transform_3, window_bounds = array<i64: 1, 64>}, {transform_indices = @transform_4, window_bounds = array<i64: 1, 128, 64>}]} {
    %c0 = arith.constant 0 : index
    %c0_0 = arith.constant 0 : index
    %c0_1 = arith.constant 0 : index
    %0 = vector.load %arg2[%c0, %c0_0, %c0_1] : memref<1x128x128xbf16, #tpu.memory_space<vmem>>, vector<1x128x128xbf16>
    %1 = vector.shape_cast %0 : vector<1x128x128xbf16> to vector<128x128xbf16>
    %c0_2 = arith.constant 0 : index
    %c0_3 = arith.constant 0 : index
    %c0_4 = arith.constant 0 : index
    %2 = vector.load %arg3[%c0_2, %c0_3, %c0_4] : memref<1x128x128xbf16, #tpu.memory_space<vmem>>, vector<1x128x128xbf16>
    %3 = vector.shape_cast %2 : vector<1x128x128xbf16> to vector<128x128xbf16>
    %4 = tpu.concatenate %1, %3 in 0 : vector<128x128xbf16>, vector<128x128xbf16> -> vector<256x128xbf16>
    %5 = vector.extract_strided_slice %4 {offsets = [1, 0], sizes = [255, 128], strides = [1, 1]} : vector<256x128xbf16> to vector<255x128xbf16>
    %6 = vector.extract_strided_slice %4 {offsets = [0, 0], sizes = [128, 128], strides = [1, 1]} : vector<256x128xbf16> to vector<128x128xbf16>
    %c0_5 = arith.constant 0 : index
    %c0_6 = arith.constant 0 : index
    %c0_7 = arith.constant 0 : index
    %c0_8 = arith.constant 0 : index
    %7 = vector.load %arg4[%c0_5, %c0_6, %c0_7, %c0_8] : memref<2x2x128x64xbf16, #tpu.memory_space<vmem>>, vector<1x1x128x64xbf16>
    %8 = vector.shape_cast %7 : vector<1x1x128x64xbf16> to vector<128x64xbf16>
    %cst = arith.constant dense<0.000000e+00> : vector<128x64xf32>
    %9 = tpu.matmul %6, %8, %cst {dimension_numbers = #tpu.dot_dimension_numbers<[1], [0], [0], [1], [0, 0, 1, 1], [], []>} : vector<128x128xbf16>, vector<128x64xbf16>, vector<128x64xf32> -> vector<128x64xf32>
    %10 = vector.extract_strided_slice %5 {offsets = [0, 0], sizes = [128, 128], strides = [1, 1]} : vector<255x128xbf16> to vector<128x128xbf16>
    %c0_9 = arith.constant 0 : index
    %c1 = arith.constant 1 : index
    %c0_10 = arith.constant 0 : index
    %c0_11 = arith.constant 0 : index
    %11 = vector.load %arg4[%c0_9, %c1, %c0_10, %c0_11] : memref<2x2x128x64xbf16, #tpu.memory_space<vmem>>, vector<1x1x128x64xbf16>
    %12 = vector.shape_cast %11 : vector<1x1x128x64xbf16> to vector<128x64xbf16>
    %cst_12 = arith.constant dense<0.000000e+00> : vector<128x64xf32>
    %13 = tpu.matmul %10, %12, %cst_12 {dimension_numbers = #tpu.dot_dimension_numbers<[1], [0], [0], [1], [0, 0, 1, 1], [], []>} : vector<128x128xbf16>, vector<128x64xbf16>, vector<128x64xf32> -> vector<128x64xf32>
    %14 = arith.addf %9, %13 : vector<128x64xf32>
    %15 = vector.extract_strided_slice %4 {offsets = [16, 0], sizes = [128, 128], strides = [1, 1]} : vector<256x128xbf16> to vector<128x128xbf16>
    %c1_13 = arith.constant 1 : index
    %c0_14 = arith.constant 0 : index
    %c0_15 = arith.constant 0 : index
    %c0_16 = arith.constant 0 : index
    %16 = vector.load %arg4[%c1_13, %c0_14, %c0_15, %c0_16] : memref<2x2x128x64xbf16, #tpu.memory_space<vmem>>, vector<1x1x128x64xbf16>
    %17 = vector.shape_cast %16 : vector<1x1x128x64xbf16> to vector<128x64xbf16>
    %cst_17 = arith.constant dense<0.000000e+00> : vector<128x64xf32>
    %18 = tpu.matmul %15, %17, %cst_17 {dimension_numbers = #tpu.dot_dimension_numbers<[1], [0], [0], [1], [0, 0, 1, 1], [], []>} : vector<128x128xbf16>, vector<128x64xbf16>, vector<128x64xf32> -> vector<128x64xf32>
    %19 = arith.addf %14, %18 : vector<128x64xf32>
    %20 = vector.extract_strided_slice %5 {offsets = [16, 0], sizes = [128, 128], strides = [1, 1]} : vector<255x128xbf16> to vector<128x128xbf16>
    %c1_18 = arith.constant 1 : index
    %c1_19 = arith.constant 1 : index
    %c0_20 = arith.constant 0 : index
    %c0_21 = arith.constant 0 : index
    %21 = vector.load %arg4[%c1_18, %c1_19, %c0_20, %c0_21] : memref<2x2x128x64xbf16, #tpu.memory_space<vmem>>, vector<1x1x128x64xbf16>
    %22 = vector.shape_cast %21 : vector<1x1x128x64xbf16> to vector<128x64xbf16>
    %cst_22 = arith.constant dense<0.000000e+00> : vector<128x64xf32>
    %23 = tpu.matmul %20, %22, %cst_22 {dimension_numbers = #tpu.dot_dimension_numbers<[1], [0], [0], [1], [0, 0, 1, 1], [], []>} : vector<128x128xbf16>, vector<128x64xbf16>, vector<128x64xf32> -> vector<128x64xf32>
    %24 = arith.addf %19, %23 : vector<128x64xf32>
    %c0_23 = arith.constant 0 : index
    %c0_24 = arith.constant 0 : index
    %25 = vector.load %arg5[%c0_23, %c0_24] : memref<1x64xf32, #tpu.memory_space<vmem>>, vector<1x64xf32>
    %26 = vector.broadcast %25 : vector<1x64xf32> to vector<128x64xf32>
    %27 = arith.addf %24, %26 : vector<128x64xf32>
    %cst_25 = arith.constant 0.000000e+00 : f32
    %28 = vector.broadcast %cst_25 : f32 to vector<128x64xf32>
    %29 = arith.maximumf %27, %28 : vector<128x64xf32>
    %30 = tpu.iota {dimensions = array<i32: 0>} : vector<128x1xi32>
    %c16_i32 = arith.constant 16 : i32
    %c0_i32 = arith.constant 0 : i32
    %31 = arith.cmpi eq, %c16_i32, %c0_i32 : i32
    %c1_i32 = arith.constant 1 : i32
    %32 = arith.select %31, %c1_i32, %c16_i32 : i32
    %33 = vector.broadcast %32 : i32 to vector<128x1xi32>
    %34 = arith.remsi %30, %33 : vector<128x1xi32>
    %c0_i32_26 = arith.constant 0 : i32
    %35 = vector.broadcast %c0_i32_26 : i32 to vector<128x1xi32>
    %36 = arith.cmpi ne, %34, %35 : vector<128x1xi32>
    %c0_i32_27 = arith.constant 0 : i32
    %37 = vector.broadcast %c0_i32_27 : i32 to vector<128x1xi32>
    %38 = arith.cmpi slt, %34, %37 : vector<128x1xi32>
    %c0_i32_28 = arith.constant 0 : i32
    %39 = arith.cmpi slt, %32, %c0_i32_28 : i32
    %40 = vector.broadcast %39 : i1 to vector<128x1xi1>
    %41 = vector.broadcast %40 : vector<128x1xi1> to vector<128x1xi1>
    %42 = arith.xori %38, %41 : vector<128x1xi1>
    %43 = arith.andi %42, %36 : vector<128x1xi1>
    %44 = vector.broadcast %32 : i32 to vector<128x1xi32>
    %45 = arith.addi %34, %44 : vector<128x1xi32>
    %46 = arith.select %43, %45, %34 : vector<128x1xi1>, vector<128x1xi32>
    %c8_i32 = arith.constant 8 : i32
    %47 = vector.broadcast %c8_i32 : i32 to vector<128x1xi32>
    %48 = arith.cmpi slt, %46, %47 : vector<128x1xi32>
    %cst_29 = arith.constant 0.000000e+00 : f32
    %49 = vector.shape_cast %48 : vector<128x1xi1> to vector<128x1xi1>
    %50 = vector.broadcast %49 : vector<128x1xi1> to vector<128x64xi1>
    %51 = vector.broadcast %cst_29 : f32 to vector<128x64xf32>
    %52 = arith.select %50, %29, %51 : vector<128x64xi1>, vector<128x64xf32>
    %53 = arith.truncf %52 : vector<128x64xf32> to vector<128x64xbf16>
    %c0_30 = arith.constant 0 : index
    %c0_31 = arith.constant 0 : index
    %c0_32 = arith.constant 0 : index
    %54 = vector.load %arg6[%c0_30, %c0_31, %c0_32] : memref<1x128x64xbf16, #tpu.memory_space<vmem>>, vector<1x128x64xbf16>
    %55 = vector.shape_cast %54 : vector<1x128x64xbf16> to vector<128x64xbf16>
    %56 = vector.shape_cast %53 : vector<128x64xbf16> to vector<1x128x64xbf16>
    tpu.vector_store %arg6[%c0_30, %c0_31, %c0_32], %56 {strides = array<i32>} : memref<1x128x64xbf16, #tpu.memory_space<vmem>>, vector<1x128x64xbf16>,
    return
  }
  func.func @transform_0(%arg0: i32, %arg1: i32) -> (i32, i32, i32) {
    %c0_i32 = arith.constant 0 : i32
    %c0_i32_0 = arith.constant 0 : i32
    return %arg0, %arg1, %c0_i32 : i32, i32, i32
  }
  func.func @transform_1(%arg0: i32, %arg1: i32) -> (i32, i32, i32) {
    %c1_i32 = arith.constant 1 : i32
    %0 = arith.addi %arg1, %c1_i32 : i32
    %c1_i32_0 = arith.constant 1 : i32
    %1 = arith.minsi %0, %c1_i32_0 : i32
    %c0_i32 = arith.constant 0 : i32
    %c0_i32_1 = arith.constant 0 : i32
    return %arg0, %1, %c0_i32 : i32, i32, i32
  }
  func.func @transform_2(%arg0: i32, %arg1: i32) -> (i32, i32, i32, i32) {
    %c0_i32 = arith.constant 0 : i32
    %c0_i32_0 = arith.constant 0 : i32
    %c0_i32_1 = arith.constant 0 : i32
    %c0_i32_2 = arith.constant 0 : i32
    %c0_i32_3 = arith.constant 0 : i32
    return %c0_i32, %c0_i32_0, %c0_i32_1, %c0_i32_2 : i32, i32, i32, i32
  }
  func.func @transform_3(%arg0: i32, %arg1: i32) -> (i32, i32) {
    %c0_i32 = arith.constant 0 : i32
    %c0_i32_0 = arith.constant 0 : i32
    %c0_i32_1 = arith.constant 0 : i32
    return %c0_i32, %c0_i32_0 : i32, i32
  }
  func.func @transform_4(%arg0: i32, %arg1: i32) -> (i32, i32, i32) {
    %c0_i32 = arith.constant 0 : i32
    %c0_i32_0 = arith.constant 0 : i32
    return %arg0, %arg1, %c0_i32 : i32, i32, i32
  }
}

module attributes {stable_mosaic.version = 11 : i64} {
  func.func @_conv_s2d_relu_kernel(%arg0: i32, %arg1: i32, %arg2: memref<1x64x256xbf16, #tpu.memory_space<vmem>>, %arg3: memref<1x64x256xbf16, #tpu.memory_space<vmem>>, %arg4: memref<2x2x256x128xbf16, #tpu.memory_space<vmem>>, %arg5: memref<1x128xf32, #tpu.memory_space<vmem>>, %arg6: memref<1x64x128xbf16, #tpu.memory_space<vmem>>) attributes {dimension_semantics = [#tpu.dimension_semantics<parallel>, #tpu.dimension_semantics<parallel>], iteration_bounds = array<i64: 2, 1>, scalar_prefetch = 0 : i64, scratch_operands = 0 : i64, tpu.core_type = #tpu.core_type<tc>, window_params = [{transform_indices = @transform_0, window_bounds = array<i64: 1, 64, 256>}, {transform_indices = @transform_1, window_bounds = array<i64: 1, 64, 256>}, {pipeline_mode = #tpu.pipeline_mode<synchronous>, transform_indices = @transform_2, window_bounds = array<i64: 2, 2, 256, 128>}, {pipeline_mode = #tpu.pipeline_mode<synchronous>, transform_indices = @transform_3, window_bounds = array<i64: 1, 128>}, {transform_indices = @transform_4, window_bounds = array<i64: 1, 64, 128>}]} {
    %c0 = arith.constant 0 : index
    %c0_0 = arith.constant 0 : index
    %c0_1 = arith.constant 0 : index
    %0 = vector.load %arg2[%c0, %c0_0, %c0_1] : memref<1x64x256xbf16, #tpu.memory_space<vmem>>, vector<1x64x256xbf16>
    %1 = vector.shape_cast %0 : vector<1x64x256xbf16> to vector<64x256xbf16>
    %c0_2 = arith.constant 0 : index
    %c0_3 = arith.constant 0 : index
    %c0_4 = arith.constant 0 : index
    %2 = vector.load %arg3[%c0_2, %c0_3, %c0_4] : memref<1x64x256xbf16, #tpu.memory_space<vmem>>, vector<1x64x256xbf16>
    %3 = vector.shape_cast %2 : vector<1x64x256xbf16> to vector<64x256xbf16>
    %4 = tpu.concatenate %1, %3 in 0 : vector<64x256xbf16>, vector<64x256xbf16> -> vector<128x256xbf16>
    %5 = vector.extract_strided_slice %4 {offsets = [1, 0], sizes = [127, 256], strides = [1, 1]} : vector<128x256xbf16> to vector<127x256xbf16>
    %6 = vector.extract_strided_slice %4 {offsets = [0, 0], sizes = [64, 256], strides = [1, 1]} : vector<128x256xbf16> to vector<64x256xbf16>
    %c0_5 = arith.constant 0 : index
    %c0_6 = arith.constant 0 : index
    %c0_7 = arith.constant 0 : index
    %c0_8 = arith.constant 0 : index
    %7 = vector.load %arg4[%c0_5, %c0_6, %c0_7, %c0_8] : memref<2x2x256x128xbf16, #tpu.memory_space<vmem>>, vector<1x1x256x128xbf16>
    %8 = vector.shape_cast %7 : vector<1x1x256x128xbf16> to vector<256x128xbf16>
    %cst = arith.constant dense<0.000000e+00> : vector<64x128xf32>
    %9 = tpu.matmul %6, %8, %cst {dimension_numbers = #tpu.dot_dimension_numbers<[1], [0], [0], [1], [0, 0, 1, 1], [], []>} : vector<64x256xbf16>, vector<256x128xbf16>, vector<64x128xf32> -> vector<64x128xf32>
    %10 = vector.extract_strided_slice %5 {offsets = [0, 0], sizes = [64, 256], strides = [1, 1]} : vector<127x256xbf16> to vector<64x256xbf16>
    %c0_9 = arith.constant 0 : index
    %c1 = arith.constant 1 : index
    %c0_10 = arith.constant 0 : index
    %c0_11 = arith.constant 0 : index
    %11 = vector.load %arg4[%c0_9, %c1, %c0_10, %c0_11] : memref<2x2x256x128xbf16, #tpu.memory_space<vmem>>, vector<1x1x256x128xbf16>
    %12 = vector.shape_cast %11 : vector<1x1x256x128xbf16> to vector<256x128xbf16>
    %cst_12 = arith.constant dense<0.000000e+00> : vector<64x128xf32>
    %13 = tpu.matmul %10, %12, %cst_12 {dimension_numbers = #tpu.dot_dimension_numbers<[1], [0], [0], [1], [0, 0, 1, 1], [], []>} : vector<64x256xbf16>, vector<256x128xbf16>, vector<64x128xf32> -> vector<64x128xf32>
    %14 = arith.addf %9, %13 : vector<64x128xf32>
    %15 = vector.extract_strided_slice %4 {offsets = [16, 0], sizes = [64, 256], strides = [1, 1]} : vector<128x256xbf16> to vector<64x256xbf16>
    %c1_13 = arith.constant 1 : index
    %c0_14 = arith.constant 0 : index
    %c0_15 = arith.constant 0 : index
    %c0_16 = arith.constant 0 : index
    %16 = vector.load %arg4[%c1_13, %c0_14, %c0_15, %c0_16] : memref<2x2x256x128xbf16, #tpu.memory_space<vmem>>, vector<1x1x256x128xbf16>
    %17 = vector.shape_cast %16 : vector<1x1x256x128xbf16> to vector<256x128xbf16>
    %cst_17 = arith.constant dense<0.000000e+00> : vector<64x128xf32>
    %18 = tpu.matmul %15, %17, %cst_17 {dimension_numbers = #tpu.dot_dimension_numbers<[1], [0], [0], [1], [0, 0, 1, 1], [], []>} : vector<64x256xbf16>, vector<256x128xbf16>, vector<64x128xf32> -> vector<64x128xf32>
    %19 = arith.addf %14, %18 : vector<64x128xf32>
    %20 = vector.extract_strided_slice %5 {offsets = [16, 0], sizes = [64, 256], strides = [1, 1]} : vector<127x256xbf16> to vector<64x256xbf16>
    %c1_18 = arith.constant 1 : index
    %c1_19 = arith.constant 1 : index
    %c0_20 = arith.constant 0 : index
    %c0_21 = arith.constant 0 : index
    %21 = vector.load %arg4[%c1_18, %c1_19, %c0_20, %c0_21] : memref<2x2x256x128xbf16, #tpu.memory_space<vmem>>, vector<1x1x256x128xbf16>
    %22 = vector.shape_cast %21 : vector<1x1x256x128xbf16> to vector<256x128xbf16>
    %cst_22 = arith.constant dense<0.000000e+00> : vector<64x128xf32>
    %23 = tpu.matmul %20, %22, %cst_22 {dimension_numbers = #tpu.dot_dimension_numbers<[1], [0], [0], [1], [0, 0, 1, 1], [], []>} : vector<64x256xbf16>, vector<256x128xbf16>, vector<64x128xf32> -> vector<64x128xf32>
    %24 = arith.addf %19, %23 : vector<64x128xf32>
    %c0_23 = arith.constant 0 : index
    %c0_24 = arith.constant 0 : index
    %25 = vector.load %arg5[%c0_23, %c0_24] : memref<1x128xf32, #tpu.memory_space<vmem>>, vector<1x128xf32>
    %26 = vector.broadcast %25 : vector<1x128xf32> to vector<64x128xf32>
    %27 = arith.addf %24, %26 : vector<64x128xf32>
    %cst_25 = arith.constant 0.000000e+00 : f32
    %28 = vector.broadcast %cst_25 : f32 to vector<64x128xf32>
    %29 = arith.maximumf %27, %28 : vector<64x128xf32>
    %30 = tpu.iota {dimensions = array<i32: 0>} : vector<64x1xi32>
    %c16_i32 = arith.constant 16 : i32
    %c0_i32 = arith.constant 0 : i32
    %31 = arith.cmpi eq, %c16_i32, %c0_i32 : i32
    %c1_i32 = arith.constant 1 : i32
    %32 = arith.select %31, %c1_i32, %c16_i32 : i32
    %33 = vector.broadcast %32 : i32 to vector<64x1xi32>
    %34 = arith.remsi %30, %33 : vector<64x1xi32>
    %c0_i32_26 = arith.constant 0 : i32
    %35 = vector.broadcast %c0_i32_26 : i32 to vector<64x1xi32>
    %36 = arith.cmpi ne, %34, %35 : vector<64x1xi32>
    %c0_i32_27 = arith.constant 0 : i32
    %37 = vector.broadcast %c0_i32_27 : i32 to vector<64x1xi32>
    %38 = arith.cmpi slt, %34, %37 : vector<64x1xi32>
    %c0_i32_28 = arith.constant 0 : i32
    %39 = arith.cmpi slt, %32, %c0_i32_28 : i32
    %40 = vector.broadcast %39 : i1 to vector<64x1xi1>
    %41 = vector.broadcast %40 : vector<64x1xi1> to vector<64x1xi1>
    %42 = arith.xori %38, %41 : vector<64x1xi1>
    %43 = arith.andi %42, %36 : vector<64x1xi1>
    %44 = vector.broadcast %32 : i32 to vector<64x1xi32>
    %45 = arith.addi %34, %44 : vector<64x1xi32>
    %46 = arith.select %43, %45, %34 : vector<64x1xi1>, vector<64x1xi32>
    %c4_i32 = arith.constant 4 : i32
    %47 = vector.broadcast %c4_i32 : i32 to vector<64x1xi32>
    %48 = arith.cmpi slt, %46, %47 : vector<64x1xi32>
    %cst_29 = arith.constant 0.000000e+00 : f32
    %49 = vector.shape_cast %48 : vector<64x1xi1> to vector<64x1xi1>
    %50 = vector.broadcast %49 : vector<64x1xi1> to vector<64x128xi1>
    %51 = vector.broadcast %cst_29 : f32 to vector<64x128xf32>
    %52 = arith.select %50, %29, %51 : vector<64x128xi1>, vector<64x128xf32>
    %53 = arith.truncf %52 : vector<64x128xf32> to vector<64x128xbf16>
    %c0_30 = arith.constant 0 : index
    %c0_31 = arith.constant 0 : index
    %c0_32 = arith.constant 0 : index
    %54 = vector.load %arg6[%c0_30, %c0_31, %c0_32] : memref<1x64x128xbf16, #tpu.memory_space<vmem>>, vector<1x64x128xbf16>
    %55 = vector.shape_cast %54 : vector<1x64x128xbf16> to vector<64x128xbf16>
    %56 = vector.shape_cast %53 : vector<64x128xbf16> to vector<1x64x128xbf16>
    tpu.vector_store %arg6[%c0_30, %c0_31, %c0_32], %56 {strides = array<i32>} : memref<1x64x128xbf16, #tpu.memory_space<vmem>>, vector<1x64x128xbf16>,
    return
  }
  func.func @transform_0(%arg0: i32, %arg1: i32) -> (i32, i32, i32) {
    %c0_i32 = arith.constant 0 : i32
    %c0_i32_0 = arith.constant 0 : i32
    return %arg0, %arg1, %c0_i32 : i32, i32, i32
  }
  func.func @transform_1(%arg0: i32, %arg1: i32) -> (i32, i32, i32) {
    %c1_i32 = arith.constant 1 : i32
    %0 = arith.addi %arg1, %c1_i32 : i32
    %c1_i32_0 = arith.constant 1 : i32
    %1 = arith.minsi %0, %c1_i32_0 : i32
    %c0_i32 = arith.constant 0 : i32
    %c0_i32_1 = arith.constant 0 : i32
    return %arg0, %1, %c0_i32 : i32, i32, i32
  }
  func.func @transform_2(%arg0: i32, %arg1: i32) -> (i32, i32, i32, i32) {
    %c0_i32 = arith.constant 0 : i32
    %c0_i32_0 = arith.constant 0 : i32
    %c0_i32_1 = arith.constant 0 : i32
    %c0_i32_2 = arith.constant 0 : i32
    %c0_i32_3 = arith.constant 0 : i32
    return %c0_i32, %c0_i32_0, %c0_i32_1, %c0_i32_2 : i32, i32, i32, i32
  }
  func.func @transform_3(%arg0: i32, %arg1: i32) -> (i32, i32) {
    %c0_i32 = arith.constant 0 : i32
    %c0_i32_0 = arith.constant 0 : i32
    %c0_i32_1 = arith.constant 0 : i32
    return %c0_i32, %c0_i32_0 : i32, i32
  }
  func.func @transform_4(%arg0: i32, %arg1: i32) -> (i32, i32, i32) {
    %c0_i32 = arith.constant 0 : i32
    %c0_i32_0 = arith.constant 0 : i32
    return %arg0, %arg1, %c0_i32 : i32, i32, i32
  }
}

module attributes {stable_mosaic.version = 11 : i64} {
  func.func @_conv_s2d_relu_kernel(%arg0: i32, %arg1: i32, %arg2: memref<1x32x512xbf16, #tpu.memory_space<vmem>>, %arg3: memref<1x32x512xbf16, #tpu.memory_space<vmem>>, %arg4: memref<2x2x512x256xbf16, #tpu.memory_space<vmem>>, %arg5: memref<1x256xf32, #tpu.memory_space<vmem>>, %arg6: memref<1x32x256xbf16, #tpu.memory_space<vmem>>) attributes {dimension_semantics = [#tpu.dimension_semantics<parallel>, #tpu.dimension_semantics<parallel>], iteration_bounds = array<i64: 2, 1>, scalar_prefetch = 0 : i64, scratch_operands = 0 : i64, tpu.core_type = #tpu.core_type<tc>, window_params = [{transform_indices = @transform_0, window_bounds = array<i64: 1, 32, 512>}, {transform_indices = @transform_1, window_bounds = array<i64: 1, 32, 512>}, {pipeline_mode = #tpu.pipeline_mode<synchronous>, transform_indices = @transform_2, window_bounds = array<i64: 2, 2, 512, 256>}, {pipeline_mode = #tpu.pipeline_mode<synchronous>, transform_indices = @transform_3, window_bounds = array<i64: 1, 256>}, {transform_indices = @transform_4, window_bounds = array<i64: 1, 32, 256>}]} {
    %c0 = arith.constant 0 : index
    %c0_0 = arith.constant 0 : index
    %c0_1 = arith.constant 0 : index
    %0 = vector.load %arg2[%c0, %c0_0, %c0_1] : memref<1x32x512xbf16, #tpu.memory_space<vmem>>, vector<1x32x512xbf16>
    %1 = vector.shape_cast %0 : vector<1x32x512xbf16> to vector<32x512xbf16>
    %c0_2 = arith.constant 0 : index
    %c0_3 = arith.constant 0 : index
    %c0_4 = arith.constant 0 : index
    %2 = vector.load %arg3[%c0_2, %c0_3, %c0_4] : memref<1x32x512xbf16, #tpu.memory_space<vmem>>, vector<1x32x512xbf16>
    %3 = vector.shape_cast %2 : vector<1x32x512xbf16> to vector<32x512xbf16>
    %4 = tpu.concatenate %1, %3 in 0 : vector<32x512xbf16>, vector<32x512xbf16> -> vector<64x512xbf16>
    %5 = vector.extract_strided_slice %4 {offsets = [1, 0], sizes = [63, 512], strides = [1, 1]} : vector<64x512xbf16> to vector<63x512xbf16>
    %6 = vector.extract_strided_slice %4 {offsets = [0, 0], sizes = [32, 512], strides = [1, 1]} : vector<64x512xbf16> to vector<32x512xbf16>
    %c0_5 = arith.constant 0 : index
    %c0_6 = arith.constant 0 : index
    %c0_7 = arith.constant 0 : index
    %c0_8 = arith.constant 0 : index
    %7 = vector.load %arg4[%c0_5, %c0_6, %c0_7, %c0_8] : memref<2x2x512x256xbf16, #tpu.memory_space<vmem>>, vector<1x1x512x256xbf16>
    %8 = vector.shape_cast %7 : vector<1x1x512x256xbf16> to vector<512x256xbf16>
    %cst = arith.constant dense<0.000000e+00> : vector<32x256xf32>
    %9 = tpu.matmul %6, %8, %cst {dimension_numbers = #tpu.dot_dimension_numbers<[1], [0], [0], [1], [0, 0, 1, 1], [], []>} : vector<32x512xbf16>, vector<512x256xbf16>, vector<32x256xf32> -> vector<32x256xf32>
    %10 = vector.extract_strided_slice %5 {offsets = [0, 0], sizes = [32, 512], strides = [1, 1]} : vector<63x512xbf16> to vector<32x512xbf16>
    %c0_9 = arith.constant 0 : index
    %c1 = arith.constant 1 : index
    %c0_10 = arith.constant 0 : index
    %c0_11 = arith.constant 0 : index
    %11 = vector.load %arg4[%c0_9, %c1, %c0_10, %c0_11] : memref<2x2x512x256xbf16, #tpu.memory_space<vmem>>, vector<1x1x512x256xbf16>
    %12 = vector.shape_cast %11 : vector<1x1x512x256xbf16> to vector<512x256xbf16>
    %cst_12 = arith.constant dense<0.000000e+00> : vector<32x256xf32>
    %13 = tpu.matmul %10, %12, %cst_12 {dimension_numbers = #tpu.dot_dimension_numbers<[1], [0], [0], [1], [0, 0, 1, 1], [], []>} : vector<32x512xbf16>, vector<512x256xbf16>, vector<32x256xf32> -> vector<32x256xf32>
    %14 = arith.addf %9, %13 : vector<32x256xf32>
    %15 = vector.extract_strided_slice %4 {offsets = [16, 0], sizes = [32, 512], strides = [1, 1]} : vector<64x512xbf16> to vector<32x512xbf16>
    %c1_13 = arith.constant 1 : index
    %c0_14 = arith.constant 0 : index
    %c0_15 = arith.constant 0 : index
    %c0_16 = arith.constant 0 : index
    %16 = vector.load %arg4[%c1_13, %c0_14, %c0_15, %c0_16] : memref<2x2x512x256xbf16, #tpu.memory_space<vmem>>, vector<1x1x512x256xbf16>
    %17 = vector.shape_cast %16 : vector<1x1x512x256xbf16> to vector<512x256xbf16>
    %cst_17 = arith.constant dense<0.000000e+00> : vector<32x256xf32>
    %18 = tpu.matmul %15, %17, %cst_17 {dimension_numbers = #tpu.dot_dimension_numbers<[1], [0], [0], [1], [0, 0, 1, 1], [], []>} : vector<32x512xbf16>, vector<512x256xbf16>, vector<32x256xf32> -> vector<32x256xf32>
    %19 = arith.addf %14, %18 : vector<32x256xf32>
    %20 = vector.extract_strided_slice %5 {offsets = [16, 0], sizes = [32, 512], strides = [1, 1]} : vector<63x512xbf16> to vector<32x512xbf16>
    %c1_18 = arith.constant 1 : index
    %c1_19 = arith.constant 1 : index
    %c0_20 = arith.constant 0 : index
    %c0_21 = arith.constant 0 : index
    %21 = vector.load %arg4[%c1_18, %c1_19, %c0_20, %c0_21] : memref<2x2x512x256xbf16, #tpu.memory_space<vmem>>, vector<1x1x512x256xbf16>
    %22 = vector.shape_cast %21 : vector<1x1x512x256xbf16> to vector<512x256xbf16>
    %cst_22 = arith.constant dense<0.000000e+00> : vector<32x256xf32>
    %23 = tpu.matmul %20, %22, %cst_22 {dimension_numbers = #tpu.dot_dimension_numbers<[1], [0], [0], [1], [0, 0, 1, 1], [], []>} : vector<32x512xbf16>, vector<512x256xbf16>, vector<32x256xf32> -> vector<32x256xf32>
    %24 = arith.addf %19, %23 : vector<32x256xf32>
    %c0_23 = arith.constant 0 : index
    %c0_24 = arith.constant 0 : index
    %25 = vector.load %arg5[%c0_23, %c0_24] : memref<1x256xf32, #tpu.memory_space<vmem>>, vector<1x256xf32>
    %26 = vector.broadcast %25 : vector<1x256xf32> to vector<32x256xf32>
    %27 = arith.addf %24, %26 : vector<32x256xf32>
    %cst_25 = arith.constant 0.000000e+00 : f32
    %28 = vector.broadcast %cst_25 : f32 to vector<32x256xf32>
    %29 = arith.maximumf %27, %28 : vector<32x256xf32>
    %30 = tpu.iota {dimensions = array<i32: 0>} : vector<32x1xi32>
    %c16_i32 = arith.constant 16 : i32
    %c0_i32 = arith.constant 0 : i32
    %31 = arith.cmpi eq, %c16_i32, %c0_i32 : i32
    %c1_i32 = arith.constant 1 : i32
    %32 = arith.select %31, %c1_i32, %c16_i32 : i32
    %33 = vector.broadcast %32 : i32 to vector<32x1xi32>
    %34 = arith.remsi %30, %33 : vector<32x1xi32>
    %c0_i32_26 = arith.constant 0 : i32
    %35 = vector.broadcast %c0_i32_26 : i32 to vector<32x1xi32>
    %36 = arith.cmpi ne, %34, %35 : vector<32x1xi32>
    %c0_i32_27 = arith.constant 0 : i32
    %37 = vector.broadcast %c0_i32_27 : i32 to vector<32x1xi32>
    %38 = arith.cmpi slt, %34, %37 : vector<32x1xi32>
    %c0_i32_28 = arith.constant 0 : i32
    %39 = arith.cmpi slt, %32, %c0_i32_28 : i32
    %40 = vector.broadcast %39 : i1 to vector<32x1xi1>
    %41 = vector.broadcast %40 : vector<32x1xi1> to vector<32x1xi1>
    %42 = arith.xori %38, %41 : vector<32x1xi1>
    %43 = arith.andi %42, %36 : vector<32x1xi1>
    %44 = vector.broadcast %32 : i32 to vector<32x1xi32>
    %45 = arith.addi %34, %44 : vector<32x1xi32>
    %46 = arith.select %43, %45, %34 : vector<32x1xi1>, vector<32x1xi32>
    %c2_i32 = arith.constant 2 : i32
    %47 = vector.broadcast %c2_i32 : i32 to vector<32x1xi32>
    %48 = arith.cmpi slt, %46, %47 : vector<32x1xi32>
    %cst_29 = arith.constant 0.000000e+00 : f32
    %49 = vector.shape_cast %48 : vector<32x1xi1> to vector<32x1xi1>
    %50 = vector.broadcast %49 : vector<32x1xi1> to vector<32x256xi1>
    %51 = vector.broadcast %cst_29 : f32 to vector<32x256xf32>
    %52 = arith.select %50, %29, %51 : vector<32x256xi1>, vector<32x256xf32>
    %53 = arith.truncf %52 : vector<32x256xf32> to vector<32x256xbf16>
    %c0_30 = arith.constant 0 : index
    %c0_31 = arith.constant 0 : index
    %c0_32 = arith.constant 0 : index
    %54 = vector.load %arg6[%c0_30, %c0_31, %c0_32] : memref<1x32x256xbf16, #tpu.memory_space<vmem>>, vector<1x32x256xbf16>
    %55 = vector.shape_cast %54 : vector<1x32x256xbf16> to vector<32x256xbf16>
    %56 = vector.shape_cast %53 : vector<32x256xbf16> to vector<1x32x256xbf16>
    tpu.vector_store %arg6[%c0_30, %c0_31, %c0_32], %56 {strides = array<i32>} : memref<1x32x256xbf16, #tpu.memory_space<vmem>>, vector<1x32x256xbf16>,
    return
  }
  func.func @transform_0(%arg0: i32, %arg1: i32) -> (i32, i32, i32) {
    %c0_i32 = arith.constant 0 : i32
    %c0_i32_0 = arith.constant 0 : i32
    return %arg0, %arg1, %c0_i32 : i32, i32, i32
  }
  func.func @transform_1(%arg0: i32, %arg1: i32) -> (i32, i32, i32) {
    %c1_i32 = arith.constant 1 : i32
    %0 = arith.addi %arg1, %c1_i32 : i32
    %c1_i32_0 = arith.constant 1 : i32
    %1 = arith.minsi %0, %c1_i32_0 : i32
    %c0_i32 = arith.constant 0 : i32
    %c0_i32_1 = arith.constant 0 : i32
    return %arg0, %1, %c0_i32 : i32, i32, i32
  }
  func.func @transform_2(%arg0: i32, %arg1: i32) -> (i32, i32, i32, i32) {
    %c0_i32 = arith.constant 0 : i32
    %c0_i32_0 = arith.constant 0 : i32
    %c0_i32_1 = arith.constant 0 : i32
    %c0_i32_2 = arith.constant 0 : i32
    %c0_i32_3 = arith.constant 0 : i32
    return %c0_i32, %c0_i32_0, %c0_i32_1, %c0_i32_2 : i32, i32, i32, i32
  }
  func.func @transform_3(%arg0: i32, %arg1: i32) -> (i32, i32) {
    %c0_i32 = arith.constant 0 : i32
    %c0_i32_0 = arith.constant 0 : i32
    %c0_i32_1 = arith.constant 0 : i32
    return %c0_i32, %c0_i32_0 : i32, i32
  }
  func.func @transform_4(%arg0: i32, %arg1: i32) -> (i32, i32, i32) {
    %c0_i32 = arith.constant 0 : i32
    %c0_i32_0 = arith.constant 0 : i32
    return %arg0, %arg1, %c0_i32 : i32, i32, i32
  }
}

module attributes {stable_mosaic.version = 11 : i64} {
  func.func @_vae_head_kernel(%arg0: i32, %arg1: i32, %arg2: memref<2x1024xbf16, #tpu.memory_space<vmem>>, %arg3: memref<1024x16xbf16, #tpu.memory_space<vmem>>, %arg4: memref<1024x16xbf16, #tpu.memory_space<vmem>>, %arg5: memref<1x16xf32, #tpu.memory_space<vmem>>, %arg6: memref<1x16xf32, #tpu.memory_space<vmem>>, %arg7: memref<2x16xf32, #tpu.memory_space<vmem>>, %arg8: memref<2x16xf32, #tpu.memory_space<vmem>>, %arg9: memref<2x16xf32, #tpu.memory_space<vmem>>, %arg10: memref<2x16xf32, #tpu.memory_space<vmem>>) attributes {dimension_semantics = [#tpu.dimension_semantics<parallel>, #tpu.dimension_semantics<arbitrary>], iteration_bounds = array<i64: 1, 1>, scalar_prefetch = 0 : i64, scratch_operands = 2 : i64, tpu.core_type = #tpu.core_type<tc>, window_params = [{transform_indices = @transform_0, window_bounds = array<i64: 2, 1024>}, {transform_indices = @transform_1, window_bounds = array<i64: 1024, 16>}, {transform_indices = @transform_2, window_bounds = array<i64: 1024, 16>}, {pipeline_mode = #tpu.pipeline_mode<synchronous>, transform_indices = @transform_3, window_bounds = array<i64: 1, 16>}, {pipeline_mode = #tpu.pipeline_mode<synchronous>, transform_indices = @transform_4, window_bounds = array<i64: 1, 16>}, {transform_indices = @transform_5, window_bounds = array<i64: 2, 16>}, {transform_indices = @transform_6, window_bounds = array<i64: 2, 16>}]} {
    %c0_i32 = arith.constant 0 : i32
    %0 = arith.cmpi eq, %arg1, %c0_i32 : i32
    %1 = arith.extui %0 : i1 to i32
    %c0_i32_0 = arith.constant 0 : i32
    %2 = arith.cmpi ne, %1, %c0_i32_0 : i32
    scf.if %2 {
      %cst_17 = arith.constant 0.000000e+00 : f32
      %17 = vector.broadcast %cst_17 : f32 to vector<2x16xf32>
      %c0_18 = arith.constant 0 : index
      %c0_19 = arith.constant 0 : index
      %18 = vector.load %arg9[%c0_18, %c0_19] : memref<2x16xf32, #tpu.memory_space<vmem>>, vector<2x16xf32>
      tpu.vector_store %arg9[%c0_18, %c0_19], %17 {strides = array<i32>} : memref<2x16xf32, #tpu.memory_space<vmem>>, vector<2x16xf32>,
      %cst_20 = arith.constant 0.000000e+00 : f32
      %19 = vector.broadcast %cst_20 : f32 to vector<2x16xf32>
      %c0_21 = arith.constant 0 : index
      %c0_22 = arith.constant 0 : index
      %20 = vector.load %arg10[%c0_21, %c0_22] : memref<2x16xf32, #tpu.memory_space<vmem>>, vector<2x16xf32>
      tpu.vector_store %arg10[%c0_21, %c0_22], %19 {strides = array<i32>} : memref<2x16xf32, #tpu.memory_space<vmem>>, vector<2x16xf32>,
    } else {
    }
    %c0 = arith.constant 0 : index
    %c0_1 = arith.constant 0 : index
    %3 = vector.load %arg2[%c0, %c0_1] : memref<2x1024xbf16, #tpu.memory_space<vmem>>, vector<2x1024xbf16>
    %c0_2 = arith.constant 0 : index
    %c0_3 = arith.constant 0 : index
    %4 = vector.load %arg9[%c0_2, %c0_3] : memref<2x16xf32, #tpu.memory_space<vmem>>, vector<2x16xf32>
    %c0_4 = arith.constant 0 : index
    %c0_5 = arith.constant 0 : index
    %5 = vector.load %arg3[%c0_4, %c0_5] : memref<1024x16xbf16, #tpu.memory_space<vmem>>, vector<1024x16xbf16>
    %cst = arith.constant dense<0.000000e+00> : vector<2x16xf32>
    %6 = tpu.matmul %3, %5, %cst {dimension_numbers = #tpu.dot_dimension_numbers<[1], [0], [0], [1], [0, 0, 1, 1], [], []>} : vector<2x1024xbf16>, vector<1024x16xbf16>, vector<2x16xf32> -> vector<2x16xf32>
    %7 = arith.addf %4, %6 : vector<2x16xf32>
    %c0_6 = arith.constant 0 : index
    %c0_7 = arith.constant 0 : index
    %8 = vector.load %arg9[%c0_6, %c0_7] : memref<2x16xf32, #tpu.memory_space<vmem>>, vector<2x16xf32>
    tpu.vector_store %arg9[%c0_6, %c0_7], %7 {strides = array<i32>} : memref<2x16xf32, #tpu.memory_space<vmem>>, vector<2x16xf32>,
    %c0_8 = arith.constant 0 : index
    %c0_9 = arith.constant 0 : index
    %9 = vector.load %arg10[%c0_8, %c0_9] : memref<2x16xf32, #tpu.memory_space<vmem>>, vector<2x16xf32>
    %c0_10 = arith.constant 0 : index
    %c0_11 = arith.constant 0 : index
    %10 = vector.load %arg4[%c0_10, %c0_11] : memref<1024x16xbf16, #tpu.memory_space<vmem>>, vector<1024x16xbf16>
    %cst_12 = arith.constant dense<0.000000e+00> : vector<2x16xf32>
    %11 = tpu.matmul %3, %10, %cst_12 {dimension_numbers = #tpu.dot_dimension_numbers<[1], [0], [0], [1], [0, 0, 1, 1], [], []>} : vector<2x1024xbf16>, vector<1024x16xbf16>, vector<2x16xf32> -> vector<2x16xf32>
    %12 = arith.addf %9, %11 : vector<2x16xf32>
    %c0_13 = arith.constant 0 : index
    %c0_14 = arith.constant 0 : index
    %13 = vector.load %arg10[%c0_13, %c0_14] : memref<2x16xf32, #tpu.memory_space<vmem>>, vector<2x16xf32>
    tpu.vector_store %arg10[%c0_13, %c0_14], %12 {strides = array<i32>} : memref<2x16xf32, #tpu.memory_space<vmem>>, vector<2x16xf32>,
    %c0_i32_15 = arith.constant 0 : i32
    %14 = arith.cmpi eq, %arg1, %c0_i32_15 : i32
    %15 = arith.extui %14 : i1 to i32
    %c0_i32_16 = arith.constant 0 : i32
    %16 = arith.cmpi ne, %15, %c0_i32_16 : i32
    scf.if %16 {
      %c0_17 = arith.constant 0 : index
      %c0_18 = arith.constant 0 : index
      %17 = vector.load %arg9[%c0_17, %c0_18] : memref<2x16xf32, #tpu.memory_space<vmem>>, vector<2x16xf32>
      %c0_19 = arith.constant 0 : index
      %c0_20 = arith.constant 0 : index
      %18 = vector.load %arg5[%c0_19, %c0_20] : memref<1x16xf32, #tpu.memory_space<vmem>>, vector<1x16xf32>
      %19 = vector.broadcast %18 : vector<1x16xf32> to vector<2x16xf32>
      %20 = arith.addf %17, %19 : vector<2x16xf32>
      %c0_21 = arith.constant 0 : index
      %c0_22 = arith.constant 0 : index
      %21 = vector.load %arg10[%c0_21, %c0_22] : memref<2x16xf32, #tpu.memory_space<vmem>>, vector<2x16xf32>
      %c0_23 = arith.constant 0 : index
      %c0_24 = arith.constant 0 : index
      %22 = vector.load %arg6[%c0_23, %c0_24] : memref<1x16xf32, #tpu.memory_space<vmem>>, vector<1x16xf32>
      %23 = vector.broadcast %22 : vector<1x16xf32> to vector<2x16xf32>
      %24 = arith.addf %21, %23 : vector<2x16xf32>
      %25 = math.exp %24 : vector<2x16xf32>
      %c0_25 = arith.constant 0 : index
      %c0_26 = arith.constant 0 : index
      %26 = vector.load %arg7[%c0_25, %c0_26] : memref<2x16xf32, #tpu.memory_space<vmem>>, vector<2x16xf32>
      %27 = arith.mulf %25, %26 : vector<2x16xf32>
      %28 = arith.addf %20, %27 : vector<2x16xf32>
      %c0_27 = arith.constant 0 : index
      %c0_28 = arith.constant 0 : index
      %29 = vector.load %arg8[%c0_27, %c0_28] : memref<2x16xf32, #tpu.memory_space<vmem>>, vector<2x16xf32>
      tpu.vector_store %arg8[%c0_27, %c0_28], %28 {strides = array<i32>} : memref<2x16xf32, #tpu.memory_space<vmem>>, vector<2x16xf32>,
    } else {
    }
    return
  }
  func.func @transform_0(%arg0: i32, %arg1: i32) -> (i32, i32) {
    %c0_i32 = arith.constant 0 : i32
    return %arg0, %arg1 : i32, i32
  }
  func.func @transform_1(%arg0: i32, %arg1: i32) -> (i32, i32) {
    %c0_i32 = arith.constant 0 : i32
    %c0_i32_0 = arith.constant 0 : i32
    return %arg1, %c0_i32 : i32, i32
  }
  func.func @transform_2(%arg0: i32, %arg1: i32) -> (i32, i32) {
    %c0_i32 = arith.constant 0 : i32
    %c0_i32_0 = arith.constant 0 : i32
    return %arg1, %c0_i32 : i32, i32
  }
  func.func @transform_3(%arg0: i32, %arg1: i32) -> (i32, i32) {
    %c0_i32 = arith.constant 0 : i32
    %c0_i32_0 = arith.constant 0 : i32
    %c0_i32_1 = arith.constant 0 : i32
    return %c0_i32, %c0_i32_0 : i32, i32
  }
  func.func @transform_4(%arg0: i32, %arg1: i32) -> (i32, i32) {
    %c0_i32 = arith.constant 0 : i32
    %c0_i32_0 = arith.constant 0 : i32
    %c0_i32_1 = arith.constant 0 : i32
    return %c0_i32, %c0_i32_0 : i32, i32
  }
  func.func @transform_5(%arg0: i32, %arg1: i32) -> (i32, i32) {
    %c0_i32 = arith.constant 0 : i32
    %c0_i32_0 = arith.constant 0 : i32
    return %arg0, %c0_i32 : i32, i32
  }
  func.func @transform_6(%arg0: i32, %arg1: i32) -> (i32, i32) {
    %c0_i32 = arith.constant 0 : i32
    %c0_i32_0 = arith.constant 0 : i32
    return %arg0, %c0_i32 : i32, i32
  }
}

</mosaic_0001>

<llo_original>
// kernel: variational_encoder_forward.5
$region0: #{variational_encoder_forward.5}
  #allocation0 [shape = 'u32[]', space=smem, size = 0x4, offset = 0x4, fixed_abs, tag = 'smem constant byte address 0x4 - core index']
  #allocation1 [shape = 'u32[144,128]{1,0:T(1,128)}', space=vmem, size = 0x12000, scoped, tag = 'internal scratch']
  %s0 = inlined_call_operand.vmem [shape: bf16[2,544,12], index: 0, kind: input, shape index: {}, may-alias: {0,1}]
  %s1 = inlined_call_operand.vmem [shape: bf16[2,544,12], index: 1, kind: input, shape index: {}, may-alias: {0,1}]
  %s2 = inlined_call_operand.vmem [shape: bf16[2,2,12,32], index: 2, kind: input, shape index: {}]
  %s3 = inlined_call_operand.vmem [shape: f32[1,32], index: 3, kind: input, shape index: {}]
  %s4 = inlined_call_operand.vmem [shape: bf16[2,512,32], index: 4, kind: output, shape index: {}]
  %s5 = sld [smem:[#allocation0]]
  $region49: #{variational_encoder_forward.5} parent=0
    _
  %s7 = ssub.s32 1, %s5
  %s8 = scalar_select 0, %s7, %s5
  loop: start=0, step=1, limit=4
  $region2: #{variational_encoder_forward.5} parent=0 // loop_pre_header
    _
  $region3: #{variational_encoder_forward.5} parent=0 // loop_header
    %s10 = sphi 0, %s14
    %p11 = scmp.ge.s32.totalorder %s10, 4
    %s17 = sphi 0, %s29
    %s18 = sphi 0, %s25
    %s19 = sphi 0, %s17
    %s20 = sphi 0, %s18
    %s21 = sphi 0, %s19
    %s22 = sphi 0, %s20
    %s34 = sphi 0, %s36
    %s37 = sphi 0, %s34
    %s38 = sphi 0, %s37
    %s54 = sphi 0, %s38
    %s68 = sphi 0, %s70
    %s71 = sphi 0, %s68
    %s72 = sphi 0, %s71
    %s88 = sphi 0, %s72
    %s92 = sphi 0, %s92
    %s94 = sphi 0, %s92
    %s95 = sphi 0, %s94
    %s109 = sphi 0, %s95
    %s113 = sphi 0, %s113
    %s115 = sphi 0, %s113
    %s116 = sphi 0, %s115
    %s130 = sphi 0, %s116
    %s138 = sphi 0, %s140
    %s141 = sphi 0, %s138
    %s142 = sphi 0, %s141
    %s158 = sphi 0, %s142
  $region4: #{variational_encoder_forward.5} parent=0 // loop_header_branch
    %13 = sbr.rel (%p11) target = $region8
  $region5: #{variational_encoder_forward.5} parent=0 // loop_body
    %s15 = ssub.s32 %s10, 1
    %s16 = ssub.s32 %s10, 2
    %s23 = sadd.s32 1, %s18
    %p24 = scmp.ge.s32.totalorder %s23, 1
    %s25 = scalar_select %p24, 0, %s23
    %s26 = sadd.s32 1, %s17
    %s27 = scalar_select %p24, %s26, %s17
    %p28 = scmp.ge.s32.totalorder %s27, 2
    %s29 = scalar_select %p28, 0, %s27
    %s30 = ssub.s32 %s17, %s29
    %s31 = ssub.s32 %s18, %s25
    %s32 = sor.u32 %s30, %s31
    %p33 = scmp.eq.s32.totalorder %s32, 0
    %s35 = sadd.s32 %s34, 1
    %s36 = scalar_select %p33, %s34, %s35
    %p39 = pneg %p33
    %p40 = scmp.eq.s32.totalorder %s10, 1
    %p41 = por %p39, %p40
    %p42 = scmp.ne.s32.totalorder %s34, %s37
    %p43 = scmp.eq.s32.totalorder %s10, 0
    %p44 = por %p42, %p43
    %p45 = scmp.ne.s32.totalorder %s34, %s37
    %p46 = scmp.eq.s32.totalorder %s15, 1
    %p47 = por %p45, %p46
    %p48 = scmp.ne.s32.totalorder %s37, %s38
    %p49 = scmp.eq.s32.totalorder %s15, 0
    %p50 = por %p48, %p49
    %p51 = scmp.ne.s32.totalorder %s37, %s38
    %p52 = scmp.eq.s32.totalorder %s16, 1
    %p53 = por %p51, %p52
    %p55 = scmp.ne.s32.totalorder %s38, %s54
    %p56 = scmp.eq.s32.totalorder %s16, 0
    %p57 = por %p55, %p56
    %s58 = sadd.s32 %s18, 1
    %p59 = scmp.lt.s32.totalorder %s58, 1
    %s60 = scalar_select %p59, %s58, 1
    %s61 = sadd.s32 %s25, 1
    %p62 = scmp.lt.s32.totalorder %s61, 1
    %s63 = scalar_select %p62, %s61, 1
    %s64 = ssub.s32 %s17, %s29
    %s65 = ssub.s32 %s60, %s63
    %s66 = sor.u32 %s64, %s65
    %p67 = scmp.eq.s32.totalorder %s66, 0
    %s69 = sadd.s32 %s68, 1
    %s70 = scalar_select %p67, %s68, %s69
    %p73 = pneg %p67
    %p74 = scmp.eq.s32.totalorder %s10, 1
    %p75 = por %p73, %p74
    %p76 = scmp.ne.s32.totalorder %s68, %s71
    %p77 = scmp.eq.s32.totalorder %s10, 0
    %p78 = por %p76, %p77
    %p79 = scmp.ne.s32.totalorder %s68, %s71
    %p80 = scmp.eq.s32.totalorder %s15, 1
    %p81 = por %p79, %p80
    %p82 = scmp.ne.s32.totalorder %s71, %s72
    %p83 = scmp.eq.s32.totalorder %s15, 0
    %p84 = por %p82, %p83
    %p85 = scmp.ne.s32.totalorder %s71, %s72
    %p86 = scmp.eq.s32.totalorder %s16, 1
    %p87 = por %p85, %p86
    %p89 = scmp.ne.s32.totalorder %s72, %s88
    %p90 = scmp.eq.s32.totalorder %s16, 0
    %p91 = por %p89, %p90
    %s93 = sadd.s32 %s92, 1
    %p96 = scmp.eq.s32.totalorder %s10, 1
    %p97 = scmp.ne.s32.totalorder %s92, %s94
    %p98 = scmp.eq.s32.totalorder %s10, 0
    %p99 = por %p97, %p98
    %p100 = scmp.ne.s32.totalorder %s92, %s94
    %p101 = scmp.eq.s32.totalorder %s15, 1
    %p102 = por %p100, %p101
    %p103 = scmp.ne.s32.totalorder %s94, %s95
    %p104 = scmp.eq.s32.totalorder %s15, 0
    %p105 = por %p103, %p104
    %p106 = scmp.ne.s32.totalorder %s94, %s95
    %p107 = scmp.eq.s32.totalorder %s16, 1
    %p108 = por %p106, %p107
    %p110 = scmp.ne.s32.totalorder %s95, %s109
    %p111 = scmp.eq.s32.totalorder %s16, 0
    %p112 = por %p110, %p111
    %s114 = sadd.s32 %s113, 1
    %p117 = scmp.eq.s32.totalorder %s10, 1
    %p118 = scmp.ne.s32.totalorder %s113, %s115
    %p119 = scmp.eq.s32.totalorder %s10, 0
    %p120 = por %p118, %p119
    %p121 = scmp.ne.s32.totalorder %s113, %s115
    %p122 = scmp.eq.s32.totalorder %s15, 1
    %p123 = por %p121, %p122
    %p124 = scmp.ne.s32.totalorder %s115, %s116
    %p125 = scmp.eq.s32.totalorder %s15, 0
    %p126 = por %p124, %p125
    %p127 = scmp.ne.s32.totalorder %s115, %s116
    %p128 = scmp.eq.s32.totalorder %s16, 1
    %p129 = por %p127, %p128
    %p131 = scmp.ne.s32.totalorder %s116, %s130
    %p132 = scmp.eq.s32.totalorder %s16, 0
    %p133 = por %p131, %p132
    %s134 = ssub.s32 %s17, %s29
    %s135 = ssub.s32 %s18, %s25
    %s136 = sor.u32 %s134, %s135
    %p137 = scmp.eq.s32.totalorder %s136, 0
    %s139 = sadd.s32 %s138, 1
    %s140 = scalar_select %p137, %s138, %s139
    %p143 = pneg %p137
    %p144 = scmp.eq.s32.totalorder %s10, 1
    %p145 = por %p143, %p144
    %p146 = scmp.ne.s32.totalorder %s138, %s141
    %p147 = scmp.eq.s32.totalorder %s10, 0
    %p148 = por %p146, %p147
    %p149 = scmp.ne.s32.totalorder %s138, %s141
    %p150 = scmp.eq.s32.totalorder %s15, 1
    %p151 = por %p149, %p150
    %p152 = scmp.ne.s32.totalorder %s141, %s142
    %p153 = scmp.eq.s32.totalorder %s15, 0
    %p154 = por %p152, %p153
    %p155 = scmp.ne.s32.totalorder %s141, %s142
    %p156 = scmp.eq.s32.totalorder %s16, 1
    %p157 = por %p155, %p156
    %p159 = scmp.ne.s32.totalorder %s142, %s158
    %p160 = scmp.eq.s32.totalorder %s16, 0
    %p161 = por %p159, %p160
    %p162 = scmp.le.s32.totalorder 1, %s10
    %p163 = scmp.lt.s32.totalorder %s10, 3
    %p164 = pnand %p162, %p163
    %p165 = pneg %p164
    // Predicated region
    $region9: #{variational_encoder_forward.5} parent=5 // pred_check
      _
    $region10: #{variational_encoder_forward.5} parent=5 // pred_check_branch
      %167 = sbr.rel (%p164) target = $region12
    $region11: #{variational_encoder_forward.5} parent=5 // pred_region
      %s168 = ssub.s32 %s10, 1
      // Predicated region
      $region13: #{variational_encoder_forward.5} parent=11 // pred_check
        %p169 = pneg %p105
      $region14: #{variational_encoder_forward.5} parent=11 // pred_check_branch
        %171 = sbr.rel (%p169) target = $region16
      $region15: #{variational_encoder_forward.5} parent=11 // pred_region
        _
      $region16: #{variational_encoder_forward.5} parent=11 // pred_fallthru
        _
      // Predicated region
      $region17: #{variational_encoder_forward.5} parent=11 // pred_check
        %p172 = pneg %p126
      $region18: #{variational_encoder_forward.5} parent=11 // pred_check_branch
        %174 = sbr.rel (%p172) target = $region20
      $region19: #{variational_encoder_forward.5} parent=11 // pred_region
        _
      $region20: #{variational_encoder_forward.5} parent=11 // pred_fallthru
        _
    $region12: #{variational_encoder_forward.5} parent=5 // pred_fallthru
      _
    %p175 = scmp.lt.s32.totalorder %s10, 2
    // Predicated region
    $region21: #{variational_encoder_forward.5} parent=5 // pred_check
      %p176 = pneg %p175
    $region22: #{variational_encoder_forward.5} parent=5 // pred_check_branch
      %178 = sbr.rel (%p176) target = $region24
    $region23: #{variational_encoder_forward.5} parent=5 // pred_region
      // Predicated region
      $region25: #{variational_encoder_forward.5} parent=23 // pred_check
        %p179 = pneg %p44
      $region26: #{variational_encoder_forward.5} parent=23 // pred_check_branch
        %181 = sbr.rel (%p179) target = $region28
      $region27: #{variational_encoder_forward.5} parent=23 // pred_region
        %s182 = smul.u32 64, %s18
        %s183 = ssub.s32 68, %s182
        %p184 = scmp.lt.s32.totalorder %s183, 64
        %s185 = scalar_select %p184, %s183, 64
        %s186 = smul.u32 64, %s185
        %p187 = scmp.lt.s32.totalorder %s17, 1
        %s188 = scalar_select %p187, %s17, 1
        %p189 = scmp.lt.s32.totalorder %s182, 67
        %s190 = scalar_select %p189, %s182, 67
        %s191 = smul.addr %s188, 68
        %s192 = sadd.s32 %s190, %s191
        %s193 = smul.addr %s192, 4
        %s194 = scalar_lea.vmem %s0, %s193
        %s195 = smul.u32 64, %s18
        %s196 = ssub.s32 68, %s195
        %p197 = scmp.lt.s32.totalorder %s196, 64
        %s198 = scalar_select %p197, %s196, 64
        %s199 = smul.u32 64, %s198
      $region28: #{variational_encoder_forward.5} parent=23 // pred_fallthru
        _
      // Predicated region
      $region29: #{variational_encoder_forward.5} parent=23 // pred_check
        %p200 = pneg %p78
      $region30: #{variational_encoder_forward.5} parent=23 // pred_check_branch
        %202 = sbr.rel (%p200) target = $region32
      $region31: #{variational_encoder_forward.5} parent=23 // pred_region
        %s203 = sadd.s32 %s18, 1
        %p204 = scmp.lt.s32.totalorder %s203, 1
        %s205 = scalar_select %p204, %s203, 1
        %s206 = smul.u32 64, %s205
        %s207 = ssub.s32 68, %s206
        %p208 = scmp.lt.s32.totalorder %s207, 64
        %s209 = scalar_select %p208, %s207, 64
        %s210 = smul.u32 64, %s209
        %p211 = scmp.lt.s32.totalorder %s17, 1
        %s212 = scalar_select %p211, %s17, 1
        %p213 = scmp.lt.s32.totalorder %s206, 67
        %s214 = scalar_select %p213, %s206, 67
        %s215 = smul.addr %s212, 68
        %s216 = sadd.s32 %s214, %s215
        %s217 = smul.addr %s216, 4
        %s218 = scalar_lea.vmem %s1, %s217
        %s219 = sadd.s32 %s18, 1
        %p220 = scmp.lt.s32.totalorder %s219, 1
        %s221 = scalar_select %p220, %s219, 1
        %s222 = smul.u32 64, %s221
        %s223 = ssub.s32 68, %s222
        %p224 = scmp.lt.s32.totalorder %s223, 64
        %s225 = scalar_select %p224, %s223, 64
        %s226 = smul.u32 64, %s225
      $region32: #{variational_encoder_forward.5} parent=23 // pred_fallthru
        _
    $region24: #{variational_encoder_forward.5} parent=5 // pred_fallthru
      _
    %p227 = scmp.le.s32.totalorder 1, %s10
    %p228 = scmp.lt.s32.totalorder %s10, 3
    %p229 = pnand %p227, %p228
    %p230 = pneg %p229
    // Predicated region
    $region33: #{variational_encoder_forward.5} parent=5 // pred_check
      _
    $region34: #{variational_encoder_forward.5} parent=5 // pred_check_branch
      %232 = sbr.rel (%p229) target = $region36
    $region35: #{variational_encoder_forward.5} parent=5 // pred_region
      %s233 = ssub.s32 %s10, 1
      %s234 = smul.u32 64, %s20
      %s235 = ssub.s32 68, %s234
      %p236 = scmp.lt.s32.totalorder %s235, 64
      %s237 = scalar_select %p236, %s235, 64
      %s238 = smul.u32 64, %s237
      %p239 = scmp.lt.s32.totalorder %s19, 1
      %s240 = scalar_select %p239, %s19, 1
      %p241 = scmp.lt.s32.totalorder %s234, 67
      %s242 = scalar_select %p241, %s234, 67
      %s243 = smul.addr %s240, 68
      %s244 = sadd.s32 %s242, %s243
      %s245 = smul.addr %s244, 4
      %s246 = scalar_lea.vmem %s0, %s245
      %p247 = pneg %p50
      %p248 = pneg %p47
      %s249 = sadd.s32 %s20, 1
      %p250 = scmp.lt.s32.totalorder %s249, 1
      %s251 = scalar_select %p250, %s249, 1
      %s252 = smul.u32 64, %s251
      %s253 = ssub.s32 68, %s252
      %p254 = scmp.lt.s32.totalorder %s253, 64
      %s255 = scalar_select %p254, %s253, 64
      %s256 = smul.u32 64, %s255
      %p257 = scmp.lt.s32.totalorder %s19, 1
      %s258 = scalar_select %p257, %s19, 1
      %p259 = scmp.lt.s32.totalorder %s252, 67
      %s260 = scalar_select %p259, %s252, 67
      %s261 = smul.addr %s258, 68
      %s262 = sadd.s32 %s260, %s261
      %s263 = smul.addr %s262, 4
      %s264 = scalar_lea.vmem %s1, %s263
      %p265 = pneg %p84
      %p266 = pneg %p81
      %p267 = pneg %p105
      %p268 = pneg %p102
      %p269 = pneg %p126
      %p270 = pneg %p123
      %p271 = pneg %p154
      %p272 = pneg %p151
      %s273 = smul.u32 64, %s20
      %p274 = scmp.lt.s32.totalorder %s19, 1
      %s275 = scalar_select %p274, %s19, 1
      %p276 = scmp.lt.s32.totalorder %s273, 63
      %s277 = scalar_select %p276, %s273, 63
      %s278 = smul.addr %s275, 64
      %s279 = sadd.s32 %s277, %s278
      %s280 = smul.addr %s279, 4
      %s281 = scalar_lea.vmem %s4, %s280
      %s282 = smul.u32 64, %s20
      %s283 = ssub.s32 68, %s282
      %p284 = scmp.lt.s32.totalorder %s283, 64
      %s285 = scalar_select %p284, %s283, 64
      %s286 = smul.u32 64, %s285
      %p287 = scmp.lt.s32.totalorder %s19, 1
      %s288 = scalar_select %p287, %s19, 1
      %p289 = scmp.lt.s32.totalorder %s282, 67
      %s290 = scalar_select %p289, %s282, 67
      %s291 = smul.addr %s288, 68
      %s292 = sadd.s32 %s290, %s291
      %s293 = smul.addr %s292, 4
      %s294 = scalar_lea.vmem %s0, %s293
      %s295 = smul.u32 64, %s20
      %s296 = ssub.s32 68, %s295
      %p297 = scmp.lt.s32.totalorder %s296, 64
      %s298 = scalar_select %p297, %s296, 64
      %s299 = smul.u32 64, %s298
      %s300 = sadd.s32 %s20, 1
      %p301 = scmp.lt.s32.totalorder %s300, 1
      %s302 = scalar_select %p301, %s300, 1
      %s303 = smul.u32 64, %s302
      %s304 = ssub.s32 68, %s303
      %p305 = scmp.lt.s32.totalorder %s304, 64
      %s306 = scalar_select %p305, %s304, 64
      %s307 = smul.u32 64, %s306
      %p308 = scmp.lt.s32.totalorder %s19, 1
      %s309 = scalar_select %p308, %s19, 1
      %p310 = scmp.lt.s32.totalorder %s303, 67
      %s311 = scalar_select %p310, %s303, 67
      %s312 = smul.addr %s309, 68
      %s313 = sadd.s32 %s311, %s312
      %s314 = smul.addr %s313, 4
      %s315 = scalar_lea.vmem %s1, %s314
      %s316 = sadd.s32 %s20, 1
      %p317 = scmp.lt.s32.totalorder %s316, 1
      %s318 = scalar_select %p317, %s316, 1
      %s319 = smul.u32 64, %s318
      %s320 = ssub.s32 68, %s319
      %p321 = scmp.lt.s32.totalorder %s320, 64
      %s322 = scalar_select %p321, %s320, 64
      %s323 = smul.u32 64, %s322
      %s324 = smul.u32 64, %s20
      %p325 = scmp.lt.s32.totalorder %s19, 1
      %s326 = scalar_select %p325, %s19, 1
      %p327 = scmp.lt.s32.totalorder %s324, 63
      %s328 = scalar_select %p327, %s324, 63
      %s329 = smul.addr %s326, 64
      %s330 = sadd.s32 %s328, %s329
      %s331 = smul.addr %s330, 4
      %s332 = scalar_lea.vmem %s4, %s331
      %s333 = smul.u32 64, %s20
      %v335 = vld [vmem:[%s294] sm:$0xf]
      %v336 = vld [vmem:[%s294 + $0x4] sm:$0xf]
      %v337 = vld [vmem:[%s294 + $0x8] sm:$0xf]
      %v338 = vld [vmem:[%s294 + $0xc] sm:$0xf]
      %v339 = vld [vmem:[%s294 + $0x10] sm:$0xf]
      %v340 = vld [vmem:[%s294 + $0x14] sm:$0xf]
      %v341 = vld [vmem:[%s294 + $0x18] sm:$0xf]
      %v342 = vld [vmem:[%s294 + $0x1c] sm:$0xf]
      %v343 = vld [vmem:[%s294 + $0x20] sm:$0xf]
      %v344 = vld [vmem:[%s294 + $0x24] sm:$0xf]
      %v345 = vld [vmem:[%s294 + $0x28] sm:$0xf]
      %v346 = vld [vmem:[%s294 + $0x2c] sm:$0xf]
      %v347 = vld [vmem:[%s294 + $0x30] sm:$0xf]
      %v348 = vld [vmem:[%s294 + $0x34] sm:$0xf]
      %v349 = vld [vmem:[%s294 + $0x38] sm:$0xf]
      %v350 = vld [vmem:[%s294 + $0x3c] sm:$0xf]
      %v351 = vld [vmem:[%s294 + $0x40] sm:$0xf]
      %v352 = vld [vmem:[%s294 + $0x44] sm:$0xf]
      %v353 = vld [vmem:[%s294 + $0x48] sm:$0xf]
      %v354 = vld [vmem:[%s294 + $0x4c] sm:$0xf]
      %v355 = vld [vmem:[%s294 + $0x50] sm:$0xf]
      %v356 = vld [vmem:[%s294 + $0x54] sm:$0xf]
      %v357 = vld [vmem:[%s294 + $0x58] sm:$0xf]
      %v358 = vld [vmem:[%s294 + $0x5c] sm:$0xf]
      %v359 = vld [vmem:[%s294 + $0x60] sm:$0xf]
      %v360 = vld [vmem:[%s294 + $0x64] sm:$0xf]
      %v361 = vld [vmem:[%s294 + $0x68] sm:$0xf]
      %v362 = vld [vmem:[%s294 + $0x6c] sm:$0xf]
      %v363 = vld [vmem:[%s294 + $0x70] sm:$0xf]
      %v364 = vld [vmem:[%s294 + $0x74] sm:$0xf]
      %v365 = vld [vmem:[%s294 + $0x78] sm:$0xf]
      %v366 = vld [vmem:[%s294 + $0x7c] sm:$0xf]
      %v367 = vld [vmem:[%s294 + $0x80] sm:$0xf]
      %v368 = vld [vmem:[%s294 + $0x84] sm:$0xf]
      %v369 = vld [vmem:[%s294 + $0x88] sm:$0xf]
      %v370 = vld [vmem:[%s294 + $0x8c] sm:$0xf]
      %v371 = vld [vmem:[%s294 + $0x90] sm:$0xf]
      %v372 = vld [vmem:[%s294 + $0x94] sm:$0xf]
      %v373 = vld [vmem:[%s294 + $0x98] sm:$0xf]
      %v374 = vld [vmem:[%s294 + $0x9c] sm:$0xf]
      %v375 = vld [vmem:[%s294 + $0xa0] sm:$0xf]
      %v376 = vld [vmem:[%s294 + $0xa4] sm:$0xf]
      %v377 = vld [vmem:[%s294 + $0xa8] sm:$0xf]
      %v378 = vld [vmem:[%s294 + $0xac] sm:$0xf]
      %v379 = vld [vmem:[%s294 + $0xb0] sm:$0xf]
      %v380 = vld [vmem:[%s294 + $0xb4] sm:$0xf]
      %v381 = vld [vmem:[%s294 + $0xb8] sm:$0xf]
      %v382 = vld [vmem:[%s294 + $0xbc] sm:$0xf]
      %v383 = vld [vmem:[%s294 + $0xc0] sm:$0xf]
      %v384 = vld [vmem:[%s294 + $0xc4] sm:$0xf]
      %v385 = vld [vmem:[%s294 + $0xc8] sm:$0xf]
      %v386 = vld [vmem:[%s294 + $0xcc] sm:$0xf]
      %v387 = vld [vmem:[%s294 + $0xd0] sm:$0xf]
      %v388 = vld [vmem:[%s294 + $0xd4] sm:$0xf]
      %v389 = vld [vmem:[%s294 + $0xd8] sm:$0xf]
      %v390 = vld [vmem:[%s294 + $0xdc] sm:$0xf]
      %v391 = vld [vmem:[%s294 + $0xe0] sm:$0xf]
      %v392 = vld [vmem:[%s294 + $0xe4] sm:$0xf]
      %v393 = vld [vmem:[%s294 + $0xe8] sm:$0xf]
      %v394 = vld [vmem:[%s294 + $0xec] sm:$0xf]
      %v395 = vld [vmem:[%s294 + $0xf0] sm:$0xf]
      %v396 = vld [vmem:[%s294 + $0xf4] sm:$0xf]
      %v397 = vld [vmem:[%s294 + $0xf8] sm:$0xf]
      %v398 = vld [vmem:[%s294 + $0xfc] sm:$0xf]
      %v399 = vld [vmem:[%s315] sm:$0xf]
      %v400 = vld [vmem:[%s315 + $0x4] sm:$0xf]
      %v401 = vld [vmem:[%s315 + $0x8] sm:$0xf]
      %v402 = vld [vmem:[%s315 + $0xc] sm:$0xf]
      %v403 = vld [vmem:[%s315 + $0x10] sm:$0xf]
      %v404 = vld [vmem:[%s315 + $0x14] sm:$0xf]
      %v469 = vunpack.c.l.b16 %v335
      %v470 = vunpack.c.l.b16 %v336
      %v471 = vunpack.c.l.b16 %v337
      %v472 = vunpack.c.l.b16 %v338
      %v473 = vunpack.c.l.b16 %v339
      %v474 = vunpack.c.l.b16 %v340
      %v475 = vunpack.c.l.b16 %v341
      %v476 = vunpack.c.l.b16 %v342
      %v477 = vunpack.c.l.b16 %v343
      %v478 = vunpack.c.l.b16 %v344
      %v479 = vunpack.c.l.b16 %v345
      %v480 = vunpack.c.l.b16 %v346
      %v481 = vunpack.c.l.b16 %v347
      %v482 = vunpack.c.l.b16 %v348
      %v483 = vunpack.c.l.b16 %v349
      %v484 = vunpack.c.l.b16 %v350
      %v485 = vunpack.c.l.b16 %v351
      %v486 = vunpack.c.l.b16 %v352
      %v487 = vunpack.c.l.b16 %v353
      %v488 = vunpack.c.l.b16 %v354
      %v489 = vunpack.c.l.b16 %v355
      %v490 = vunpack.c.l.b16 %v356
      %v491 = vunpack.c.l.b16 %v357
      %v492 = vunpack.c.l.b16 %v358
      %v493 = vunpack.c.l.b16 %v359
      %v494 = vunpack.c.l.b16 %v360
      %v495 = vunpack.c.l.b16 %v361
      %v496 = vunpack.c.l.b16 %v362
      %v497 = vunpack.c.l.b16 %v363
      %v498 = vunpack.c.l.b16 %v364
      %v499 = vunpack.c.l.b16 %v365
      %v500 = vunpack.c.l.b16 %v366
      %v501 = vunpack.c.l.b16 %v367
      %v502 = vunpack.c.l.b16 %v368
      %v503 = vunpack.c.l.b16 %v369
      %v504 = vunpack.c.l.b16 %v370
      %v505 = vunpack.c.l.b16 %v371
      %v506 = vunpack.c.l.b16 %v372
      %v507 = vunpack.c.l.b16 %v373
      %v508 = vunpack.c.l.b16 %v374
      %v509 = vunpack.c.l.b16 %v375
      %v510 = vunpack.c.l.b16 %v376
      %v511 = vunpack.c.l.b16 %v377
      %v512 = vunpack.c.l.b16 %v378
      %v513 = vunpack.c.l.b16 %v379
      %v514 = vunpack.c.l.b16 %v380
      %v515 = vunpack.c.l.b16 %v381
      %v516 = vunpack.c.l.b16 %v382
      %v517 = vunpack.c.l.b16 %v383
      %v518 = vunpack.c.l.b16 %v384
      %v519 = vunpack.c.l.b16 %v385
      %v520 = vunpack.c.l.b16 %v386
      %v521 = vunpack.c.l.b16 %v387
      %v522 = vunpack.c.l.b16 %v388
      %v523 = vunpack.c.l.b16 %v389
      %v524 = vunpack.c.l.b16 %v390
      %v525 = vunpack.c.l.b16 %v391
      %v526 = vunpack.c.l.b16 %v392
      %v527 = vunpack.c.l.b16 %v393
      %v528 = vunpack.c.l.b16 %v394
      %v529 = vunpack.c.l.b16 %v395
      %v530 = vunpack.c.l.b16 %v396
      %v531 = vunpack.c.l.b16 %v397
      %v532 = vunpack.c.l.b16 %v398
      %v533 = vpack.c.b16 %v470, %v469
      %v534 = vpack.c.b16 %v472, %v471
      %v535 = vpack.c.b16 %v474, %v473
      %v536 = vpack.c.b16 %v476, %v475
      %v537 = vpack.c.b16 %v478, %v477
      %v538 = vpack.c.b16 %v480, %v479
      %v539 = vpack.c.b16 %v482, %v481
      %v540 = vpack.c.b16 %v484, %v483
      %v541 = vpack.c.b16 %v486, %v485
      %v542 = vpack.c.b16 %v488, %v487
      %v543 = vpack.c.b16 %v490, %v489
      %v544 = vpack.c.b16 %v492, %v491
      %v545 = vpack.c.b16 %v494, %v493
      %v546 = vpack.c.b16 %v496, %v495
      %v547 = vpack.c.b16 %v498, %v497
      %v548 = vpack.c.b16 %v500, %v499
      %v549 = vpack.c.b16 %v502, %v501
      %v550 = vpack.c.b16 %v504, %v503
      %v551 = vpack.c.b16 %v506, %v505
      %v552 = vpack.c.b16 %v508, %v507
      %v553 = vpack.c.b16 %v510, %v509
      %v554 = vpack.c.b16 %v512, %v511
      %v555 = vpack.c.b16 %v514, %v513
      %v556 = vpack.c.b16 %v516, %v515
      %v557 = vpack.c.b16 %v518, %v517
      %v558 = vpack.c.b16 %v520, %v519
      %v559 = vpack.c.b16 %v522, %v521
      %v560 = vpack.c.b16 %v524, %v523
      %v561 = vpack.c.b16 %v526, %v525
      %v562 = vpack.c.b16 %v528, %v527
      %v563 = vpack.c.b16 %v530, %v529
      %v564 = vpack.c.b16 %v532, %v531
      %v571 = vunpack.c.l.b16 %v399
      %v572 = vunpack.c.l.b16 %v400
      %v573 = vunpack.c.l.b16 %v401
      %v574 = vunpack.c.l.b16 %v402
      %v575 = vunpack.c.l.b16 %v403
      %v576 = vunpack.c.l.b16 %v404
      %v577 = vpack.c.b16 %v572, %v571
      %v578 = vpack.c.b16 %v574, %v573
      %v579 = vpack.c.b16 %v576, %v575
      %v580 = vld [vmem:[%s2] sm:$0xf]
      %v581 = vld [vmem:[%s2 + $0x4] sm:$0x3]
      %s582 = scalar_lea.vmem %s2, 8
      %v583 = vld [vmem:[%s582] sm:$0xf]
      %v584 = vld [vmem:[%s582 + $0x4] sm:$0x3]
      %vm585 = vsmask.f32 7424
      %v587 = vshrl.u32 %v533, 16
      %v589 = vshll.u32 %v533, 16
      %v591 = vrot.slane %v589, 1
      %v592 = vor.u32 %v587, %v591
      %v594 = vshll.u32 %v534, 16
      %v596 = vrot.slane %v594, 1
      %v597 = vsel %vm585, %v592, %v596
      %v598 = vshrl.u32 %v534, 16
      %v600 = vor.u32 %v598, %v596
      %v602 = vshll.u32 %v535, 16
      %v604 = vrot.slane %v602, 1
      %v605 = vsel %vm585, %v600, %v604
      %v606 = vshrl.u32 %v535, 16
      %v608 = vor.u32 %v606, %v604
      %v610 = vshll.u32 %v536, 16
      %v612 = vrot.slane %v610, 1
      %v613 = vsel %vm585, %v608, %v612
      %v614 = vshrl.u32 %v536, 16
      %v616 = vor.u32 %v614, %v612
      %v618 = vshll.u32 %v537, 16
      %v620 = vrot.slane %v618, 1
      %v621 = vsel %vm585, %v616, %v620
      %v622 = vshrl.u32 %v537, 16
      %v624 = vor.u32 %v622, %v620
      %v626 = vshll.u32 %v538, 16
      %v628 = vrot.slane %v626, 1
      %v629 = vsel %vm585, %v624, %v628
      %v630 = vshrl.u32 %v538, 16
      %v632 = vor.u32 %v630, %v628
      %v634 = vshll.u32 %v539, 16
      %v636 = vrot.slane %v634, 1
      %v637 = vsel %vm585, %v632, %v636
      %v638 = vshrl.u32 %v539, 16
      %v640 = vor.u32 %v638, %v636
      %v642 = vshll.u32 %v540, 16
      %v644 = vrot.slane %v642, 1
      %v645 = vsel %vm585, %v640, %v644
      %v646 = vshrl.u32 %v540, 16
      %v648 = vor.u32 %v646, %v644
      %v650 = vshll.u32 %v541, 16
      %v652 = vrot.slane %v650, 1
      %v653 = vsel %vm585, %v648, %v652
      %v654 = vshrl.u32 %v541, 16
      %v656 = vor.u32 %v654, %v652
      %v658 = vshll.u32 %v542, 16
      %v660 = vrot.slane %v658, 1
      %v661 = vsel %vm585, %v656, %v660
      %v662 = vshrl.u32 %v542, 16
      %v664 = vor.u32 %v662, %v660
      %v666 = vshll.u32 %v543, 16
      %v668 = vrot.slane %v666, 1
      %v669 = vsel %vm585, %v664, %v668
      %v670 = vshrl.u32 %v543, 16
      %v672 = vor.u32 %v670, %v668
      %v674 = vshll.u32 %v544, 16
      %v676 = vrot.slane %v674, 1
      %v677 = vsel %vm585, %v672, %v676
      %v678 = vshrl.u32 %v544, 16
      %v680 = vor.u32 %v678, %v676
      %v682 = vshll.u32 %v545, 16
      %v684 = vrot.slane %v682, 1
      %v685 = vsel %vm585, %v680, %v684
      %v686 = vshrl.u32 %v545, 16
      %v688 = vor.u32 %v686, %v684
      %v690 = vshll.u32 %v546, 16
      %v692 = vrot.slane %v690, 1
      %v693 = vsel %vm585, %v688, %v692
      %v694 = vshrl.u32 %v546, 16
      %v696 = vor.u32 %v694, %v692
      %v698 = vshll.u32 %v547, 16
      %v700 = vrot.slane %v698, 1
      %v701 = vsel %vm585, %v696, %v700
      %v702 = vshrl.u32 %v547, 16
      %v704 = vor.u32 %v702, %v700
      %v706 = vshll.u32 %v548, 16
      %v708 = vrot.slane %v706, 1
      %v709 = vsel %vm585, %v704, %v708
      %v710 = vshrl.u32 %v548, 16
      %v712 = vor.u32 %v710, %v708
      %v714 = vshll.u32 %v549, 16
      %v716 = vrot.slane %v714, 1
      %v717 = vsel %vm585, %v712, %v716
      %v718 = vshrl.u32 %v549, 16
      %v720 = vor.u32 %v718, %v716
      %v722 = vshll.u32 %v550, 16
      %v724 = vrot.slane %v722, 1
      %v725 = vsel %vm585, %v720, %v724
      %v726 = vshrl.u32 %v550, 16
      %v728 = vor.u32 %v726, %v724
      %v730 = vshll.u32 %v551, 16
      %v732 = vrot.slane %v730, 1
      %v733 = vsel %vm585, %v728, %v732
      %v734 = vshrl.u32 %v551, 16
      %v736 = vor.u32 %v734, %v732
      %v738 = vshll.u32 %v552, 16
      %v740 = vrot.slane %v738, 1
      %v741 = vsel %vm585, %v736, %v740
      %v742 = vshrl.u32 %v552, 16
      %v744 = vor.u32 %v742, %v740
      %v746 = vshll.u32 %v553, 16
      %v748 = vrot.slane %v746, 1
      %v749 = vsel %vm585, %v744, %v748
      %v750 = vshrl.u32 %v553, 16
      %v752 = vor.u32 %v750, %v748
      %v754 = vshll.u32 %v554, 16
      %v756 = vrot.slane %v754, 1
      %v757 = vsel %vm585, %v752, %v756
      %v758 = vshrl.u32 %v554, 16
      %v760 = vor.u32 %v758, %v756
      %v762 = vshll.u32 %v555, 16
      %v764 = vrot.slane %v762, 1
      %v765 = vsel %vm585, %v760, %v764
      %v766 = vshrl.u32 %v555, 16
      %v768 = vor.u32 %v766, %v764
      %v770 = vshll.u32 %v556, 16
      %v772 = vrot.slane %v770, 1
      %v773 = vsel %vm585, %v768, %v772
      %v774 = vshrl.u32 %v556, 16
      %v776 = vor.u32 %v774, %v772
      %v778 = vshll.u32 %v557, 16
      %v780 = vrot.slane %v778, 1
      %v781 = vsel %vm585, %v776, %v780
      %v782 = vshrl.u32 %v557, 16
      %v784 = vor.u32 %v782, %v780
      %v786 = vshll.u32 %v558, 16
      %v788 = vrot.slane %v786, 1
      %v789 = vsel %vm585, %v784, %v788
      %v790 = vshrl.u32 %v558, 16
      %v792 = vor.u32 %v790, %v788
      %v794 = vshll.u32 %v559, 16
      %v796 = vrot.slane %v794, 1
      %v797 = vsel %vm585, %v792, %v796
      %v798 = vshrl.u32 %v559, 16
      %v800 = vor.u32 %v798, %v796
      %v802 = vshll.u32 %v560, 16
      %v804 = vrot.slane %v802, 1
      %v805 = vsel %vm585, %v800, %v804
      %v806 = vshrl.u32 %v560, 16
      %v808 = vor.u32 %v806, %v804
      %v810 = vshll.u32 %v561, 16
      %v812 = vrot.slane %v810, 1
      %v813 = vsel %vm585, %v808, %v812
      %v814 = vshrl.u32 %v561, 16
      %v816 = vor.u32 %v814, %v812
      %v818 = vshll.u32 %v562, 16
      %v820 = vrot.slane %v818, 1
      %v821 = vsel %vm585, %v816, %v820
      %v822 = vshrl.u32 %v562, 16
      %v824 = vor.u32 %v822, %v820
      %v826 = vshll.u32 %v563, 16
      %v828 = vrot.slane %v826, 1
      %v829 = vsel %vm585, %v824, %v828
      %v830 = vshrl.u32 %v563, 16
      %v832 = vor.u32 %v830, %v828
      %v834 = vshll.u32 %v564, 16
      %v836 = vrot.slane %v834, 1
      %v837 = vsel %vm585, %v832, %v836
      %v838 = vshrl.u32 %v564, 16
      %v840 = vor.u32 %v838, %v836
      %v842 = vshll.u32 %v577, 16
      %v844 = vrot.slane %v842, 1
      %v845 = vsel %vm585, %v840, %v844
      %v848 = vunpack.c.l.b16 %v583
      %v849 = vunpack.c.l.b16 %v584
      %v850 = vpack.c.b16 %v849, %v848
      %vm851 = vcmask 97280
      %v853 = vsel %vm851, %v597, 0
      %v856 = vsel %vm851, %v605, 0
      %v859 = vsel %vm851, %v613, 0
      %v862 = vsel %vm851, %v621, 0
      %v865 = vsel %vm851, %v629, 0
      %v868 = vsel %vm851, %v637, 0
      %v871 = vsel %vm851, %v645, 0
      %v874 = vsel %vm851, %v653, 0
      %v877 = vsel %vm851, %v661, 0
      %v880 = vsel %vm851, %v669, 0
      %v883 = vsel %vm851, %v677, 0
      %v886 = vsel %vm851, %v685, 0
      %v889 = vsel %vm851, %v693, 0
      %v892 = vsel %vm851, %v701, 0
      %v895 = vsel %vm851, %v709, 0
      %v898 = vsel %vm851, %v717, 0
      %v901 = vsel %vm851, %v725, 0
      %v904 = vsel %vm851, %v733, 0
      %v907 = vsel %vm851, %v741, 0
      %v910 = vsel %vm851, %v749, 0
      %v913 = vsel %vm851, %v757, 0
      %v916 = vsel %vm851, %v765, 0
      %v919 = vsel %vm851, %v773, 0
      %v922 = vsel %vm851, %v781, 0
      %v925 = vsel %vm851, %v789, 0
      %v928 = vsel %vm851, %v797, 0
      %v931 = vsel %vm851, %v805, 0
      %v934 = vsel %vm851, %v813, 0
      %v937 = vsel %vm851, %v821, 0
      %v940 = vsel %vm851, %v829, 0
      %v943 = vsel %vm851, %v837, 0
      %v946 = vsel %vm851, %v845, 0
      %vm948 = vcmask 1045504
      %v950 = vsel %vm948, %v850, 0
      %952 = vmatprep.subr.bf16.mxu0 0
      %953 = vmatpush1.bf16.msra.mxu0 %v950
      %954 = vmatprep.subr.bf16.mxu0 0
      %955 = vmatpush1.bf16.msra.mxu0 0
      %956 = vmatprep.subr.bf16.mxu0 0
      %957 = vmatpush1.bf16.msra.mxu0 0
      %958 = vmatprep.subr.bf16.mxu0 0
      %959 = vmatpush1.bf16.msra.mxu0 0
      %960 = vmatprep.subr.bf16.mxu0 0
      %961 = vmatpush1.bf16.msra.mxu0 0
      %962 = vmatprep.subr.bf16.mxu0 0
      %963 = vmatpush1.bf16.msra.mxu0 0
      %964 = vmatprep.subr.bf16.mxu0 0
      %965 = vmatpush1.bf16.msra.mxu0 0
      %966 = vmatprep.subr.bf16.mxu0 0
      %967 = vmatpush1.bf16.msra.mxu0 0
      %968 = vmatprep.subr.bf16.mxu0 0
      %969 = vmatpush1.bf16.msra.mxu0 0
      %970 = vmatprep.subr.bf16.mxu0 0
      %971 = vmatpush1.bf16.msra.mxu0 0
      %972 = vmatprep.subr.bf16.mxu0 0
      %973 = vmatpush1.bf16.msra.mxu0 0
      %974 = vmatprep.subr.bf16.mxu0 0
      %975 = vmatpush1.bf16.msra.mxu0 0
      %976 = vmatprep.subr.bf16.mxu0 0
      %977 = vmatpush1.bf16.msra.mxu0 0
      %978 = vmatprep.subr.bf16.mxu0 0
      %979 = vmatpush1.bf16.msra.mxu0 0
      %980 = vmatprep.subr.bf16.mxu0 0
      %981 = vmatpush1.bf16.msra.mxu0 0
      %982 = vmatprep.subr.bf16.mxu0 0
      %983 = vmatpush1.bf16.msra.mxu0 0
      %984 = vmatprep.mubr.bf16.mxu0 0
      %985 = vmatmul.mubr.bf16.gmra.mrb[0].mxu0 %v853
      %v986 = vpop.f32.mrb[0].mxu0
      %v987 = vadd.f32 0.0, %v986
      %v988 = vpop.f32.mrb[0].mxu0
      %v989 = vpop.f32.mrb[0].mxu0
      %v990 = vadd.f32 0.0, %v989
      %v991 = vpop.f32.mrb[0].mxu0
      %992 = vmatprep.mubr.bf16.mxu0 0
      %993 = vmatmul.mubr.bf16.gmra.mrb[0].mxu0 %v856
      %v994 = vpop.f32.mrb[0].mxu0
      %v995 = vadd.f32 0.0, %v994
      %v996 = vpop.f32.mrb[0].mxu0
      %v997 = vpop.f32.mrb[0].mxu0
      %v998 = vadd.f32 0.0, %v997
      %v999 = vpop.f32.mrb[0].mxu0
      %1000 = vmatprep.mubr.bf16.mxu0 0
      %1001 = vmatmul.mubr.bf16.gmra.mrb[0].mxu0 %v859
      %v1002 = vpop.f32.mrb[0].mxu0
      %v1003 = vadd.f32 0.0, %v1002
      %v1004 = vpop.f32.mrb[0].mxu0
      %v1005 = vpop.f32.mrb[0].mxu0
      %v1006 = vadd.f32 0.0, %v1005
      %v1007 = vpop.f32.mrb[0].mxu0
      %1008 = vmatprep.mubr.bf16.mxu0 0
      %1009 = vmatmul.mubr.bf16.gmra.mrb[0].mxu0 %v862
      %v1010 = vpop.f32.mrb[0].mxu0
      %v1011 = vadd.f32 0.0, %v1010
      %v1012 = vpop.f32.mrb[0].mxu0
      %v1013 = vpop.f32.mrb[0].mxu0
      %v1014 = vadd.f32 0.0, %v1013
      %v1015 = vpop.f32.mrb[0].mxu0
      %1016 = vmatprep.mubr.bf16.mxu0 0
      %1017 = vmatmul.mubr.bf16.gmra.mrb[0].mxu0 %v865
      %v1018 = vpop.f32.mrb[0].mxu0
      %v1019 = vadd.f32 0.0, %v1018
      %v1020 = vpop.f32.mrb[0].mxu0
      %v1021 = vpop.f32.mrb[0].mxu0
      %v1022 = vadd.f32 0.0, %v1021
      %v1023 = vpop.f32.mrb[0].mxu0
      %1024 = vmatprep.mubr.bf16.mxu0 0
      %1025 = vmatmul.mubr.bf16.gmra.mrb[0].mxu0 %v868
      %v1026 = vpop.f32.mrb[0].mxu0
      %v1027 = vadd.f32 0.0, %v1026
      %v1028 = vpop.f32.mrb[0].mxu0
      %v1029 = vpop.f32.mrb[0].mxu0
      %v1030 = vadd.f32 0.0, %v1029
      %v1031 = vpop.f32.mrb[0].mxu0
      %1032 = vmatprep.mubr.bf16.mxu0 0
      %1033 = vmatmul.mubr.bf16.gmra.mrb[0].mxu0 %v871
      %v1034 = vpop.f32.mrb[0].mxu0
      %v1035 = vadd.f32 0.0, %v1034
      %v1036 = vpop.f32.mrb[0].mxu0
      %v1037 = vpop.f32.mrb[0].mxu0
      %v1038 = vadd.f32 0.0, %v1037
      %v1039 = vpop.f32.mrb[0].mxu0
      %1040 = vmatprep.mubr.bf16.mxu0 0
      %1041 = vmatmul.mubr.bf16.gmra.mrb[0].mxu0 %v874
      %v1042 = vpop.f32.mrb[0].mxu0
      %v1043 = vadd.f32 0.0, %v1042
      %v1044 = vpop.f32.mrb[0].mxu0
      %v1045 = vpop.f32.mrb[0].mxu0
      %v1046 = vadd.f32 0.0, %v1045
      %v1047 = vpop.f32.mrb[0].mxu0
      %1048 = vmatprep.mubr.bf16.mxu0 0
      %1049 = vmatmul.mubr.bf16.gmra.mrb[0].mxu0 %v877
      %v1050 = vpop.f32.mrb[0].mxu0
      %v1051 = vadd.f32 0.0, %v1050
      %v1052 = vpop.f32.mrb[0].mxu0
      %v1053 = vpop.f32.mrb[0].mxu0
      %v1054 = vadd.f32 0.0, %v1053
      %v1055 = vpop.f32.mrb[0].mxu0
      %1056 = vmatprep.mubr.bf16.mxu0 0
      %1057 = vmatmul.mubr.bf16.gmra.mrb[0].mxu0 %v880
      %v1058 = vpop.f32.mrb[0].mxu0
      %v1059 = vadd.f32 0.0, %v1058
      %v1060 = vpop.f32.mrb[0].mxu0
      %v1061 = vpop.f32.mrb[0].mxu0
      %v1062 = vadd.f32 0.0, %v1061
      %v1063 = vpop.f32.mrb[0].mxu0
      %1064 = vmatprep.mubr.bf16.mxu0 0
      %1065 = vmatmul.mubr.bf16.gmra.mrb[0].mxu0 %v883
      %v1066 = vpop.f32.mrb[0].mxu0
      %v1067 = vadd.f32 0.0, %v1066
      %v1068 = vpop.f32.mrb[0].mxu0
      %v1069 = vpop.f32.mrb[0].mxu0
      %v1070 = vadd.f32 0.0, %v1069
      %v1071 = vpop.f32.mrb[0].mxu0
      %1072 = vmatprep.mubr.bf16.mxu0 0
      %1073 = vmatmul.mubr.bf16.gmra.mrb[0].mxu0 %v886
      %v1074 = vpop.f32.mrb[0].mxu0
      %v1075 = vadd.f32 0.0, %v1074
      %v1076 = vpop.f32.mrb[0].mxu0
      %v1077 = vpop.f32.mrb[0].mxu0
      %v1078 = vadd.f32 0.0, %v1077
      %v1079 = vpop.f32.mrb[0].mxu0
      %1080 = vmatprep.mubr.bf16.mxu0 0
      %1081 = vmatmul.mubr.bf16.gmra.mrb[0].mxu0 %v889
      %v1082 = vpop.f32.mrb[0].mxu0
      %v1083 = vadd.f32 0.0, %v1082
      %v1084 = vpop.f32.mrb[0].mxu0
      %v1085 = vpop.f32.mrb[0].mxu0
      %v1086 = vadd.f32 0.0, %v1085
      %v1087 = vpop.f32.mrb[0].mxu0
      %1088 = vmatprep.mubr.bf16.mxu0 0
      %1089 = vmatmul.mubr.bf16.gmra.mrb[0].mxu0 %v892
      %v1090 = vpop.f32.mrb[0].mxu0
      %v1091 = vadd.f32 0.0, %v1090
      %v1092 = vpop.f32.mrb[0].mxu0
      %v1093 = vpop.f32.mrb[0].mxu0
      %v1094 = vadd.f32 0.0, %v1093
      %v1095 = vpop.f32.mrb[0].mxu0
      %1096 = vmatprep.mubr.bf16.mxu0 0
      %1097 = vmatmul.mubr.bf16.gmra.mrb[0].mxu0 %v895
      %v1098 = vpop.f32.mrb[0].mxu0
      %v1099 = vadd.f32 0.0, %v1098
      %v1100 = vpop.f32.mrb[0].mxu0
      %v1101 = vpop.f32.mrb[0].mxu0
      %v1102 = vadd.f32 0.0, %v1101
      %v1103 = vpop.f32.mrb[0].mxu0
      %1104 = vmatprep.mubr.bf16.mxu0 0
      %1105 = vmatmul.mubr.bf16.gmra.mrb[0].mxu0 %v898
      %v1106 = vpop.f32.mrb[0].mxu0
      %v1107 = vadd.f32 0.0, %v1106
      %v1108 = vpop.f32.mrb[0].mxu0
      %v1109 = vpop.f32.mrb[0].mxu0
      %v1110 = vadd.f32 0.0, %v1109
      %v1111 = vpop.f32.mrb[0].mxu0
      %1112 = vmatprep.mubr.bf16.mxu0 0
      %1113 = vmatmul.mubr.bf16.gmra.mrb[0].mxu0 %v901
      %v1114 = vpop.f32.mrb[0].mxu0
      %v1115 = vadd.f32 0.0, %v1114
      %v1116 = vpop.f32.mrb[0].mxu0
      %v1117 = vpop.f32.mrb[0].mxu0
      %v1118 = vadd.f32 0.0, %v1117
      %v1119 = vpop.f32.mrb[0].mxu0
      %1120 = vmatprep.mubr.bf16.mxu0 0
      %1121 = vmatmul.mubr.bf16.gmra.mrb[0].mxu0 %v904
      %v1122 = vpop.f32.mrb[0].mxu0
      %v1123 = vadd.f32 0.0, %v1122
      %v1124 = vpop.f32.mrb[0].mxu0
      %v1125 = vpop.f32.mrb[0].mxu0
      %v1126 = vadd.f32 0.0, %v1125
      %v1127 = vpop.f32.mrb[0].mxu0
      %1128 = vmatprep.mubr.bf16.mxu0 0
      %1129 = vmatmul.mubr.bf16.gmra.mrb[0].mxu0 %v907
      %v1130 = vpop.f32.mrb[0].mxu0
      %v1131 = vadd.f32 0.0, %v1130
      %v1132 = vpop.f32.mrb[0].mxu0
      %v1133 = vpop.f32.mrb[0].mxu0
      %v1134 = vadd.f32 0.0, %v1133
      %v1135 = vpop.f32.mrb[0].mxu0
      %1136 = vmatprep.mubr.bf16.mxu0 0
      %1137 = vmatmul.mubr.bf16.gmra.mrb[0].mxu0 %v910
      %v1138 = vpop.f32.mrb[0].mxu0
      %v1139 = vadd.f32 0.0, %v1138
      %v1140 = vpop.f32.mrb[0].mxu0
      %v1141 = vpop.f32.mrb[0].mxu0
      %v1142 = vadd.f32 0.0, %v1141
      %v1143 = vpop.f32.mrb[0].mxu0
      %1144 = vmatprep.mubr.bf16.mxu0 0
      %1145 = vmatmul.mubr.bf16.gmra.mrb[0].mxu0 %v913
      %v1146 = vpop.f32.mrb[0].mxu0
      %v1147 = vadd.f32 0.0, %v1146
      %v1148 = vpop.f32.mrb[0].mxu0
      %v1149 = vpop.f32.mrb[0].mxu0
      %v1150 = vadd.f32 0.0, %v1149
      %v1151 = vpop.f32.mrb[0].mxu0
      %1152 = vmatprep.mubr.bf16.mxu0 0
      %1153 = vmatmul.mubr.bf16.gmra.mrb[0].mxu0 %v916
      %v1154 = vpop.f32.mrb[0].mxu0
      %v1155 = vadd.f32 0.0, %v1154
      %v1156 = vpop.f32.mrb[0].mxu0
      %v1157 = vpop.f32.mrb[0].mxu0
      %v1158 = vadd.f32 0.0, %v1157
      %v1159 = vpop.f32.mrb[0].mxu0
      %1160 = vmatprep.mubr.bf16.mxu0 0
      %1161 = vmatmul.mubr.bf16.gmra.mrb[0].mxu0 %v919
      %v1162 = vpop.f32.mrb[0].mxu0
      %v1163 = vadd.f32 0.0, %v1162
      %v1164 = vpop.f32.mrb[0].mxu0
      %v1165 = vpop.f32.mrb[0].mxu0
      %v1166 = vadd.f32 0.0, %v1165
      %v1167 = vpop.f32.mrb[0].mxu0
      %1168 = vmatprep.mubr.bf16.mxu0 0
      %1169 = vmatmul.mubr.bf16.gmra.mrb[0].mxu0 %v922
      %v1170 = vpop.f32.mrb[0].mxu0
      %v1171 = vadd.f32 0.0, %v1170
      %v1172 = vpop.f32.mrb[0].mxu0
      %v1173 = vpop.f32.mrb[0].mxu0
      %v1174 = vadd.f32 0.0, %v1173
      %v1175 = vpop.f32.mrb[0].mxu0
      %1176 = vmatprep.mubr.bf16.mxu0 0
      %1177 = vmatmul.mubr.bf16.gmra.mrb[0].mxu0 %v925
      %v1178 = vpop.f32.mrb[0].mxu0
      %v1179 = vadd.f32 0.0, %v1178
      %v1180 = vpop.f32.mrb[0].mxu0
      %v1181 = vpop.f32.mrb[0].mxu0
      %v1182 = vadd.f32 0.0, %v1181
      %v1183 = vpop.f32.mrb[0].mxu0
      %1184 = vmatprep.mubr.bf16.mxu0 0
      %1185 = vmatmul.mubr.bf16.gmra.mrb[0].mxu0 %v928
      %v1186 = vpop.f32.mrb[0].mxu0
      %v1187 = vadd.f32 0.0, %v1186
      %v1188 = vpop.f32.mrb[0].mxu0
      %v1189 = vpop.f32.mrb[0].mxu0
      %v1190 = vadd.f32 0.0, %v1189
      %v1191 = vpop.f32.mrb[0].mxu0
      %1192 = vmatprep.mubr.bf16.mxu0 0
      %1193 = vmatmul.mubr.bf16.gmra.mrb[0].mxu0 %v931
      %v1194 = vpop.f32.mrb[0].mxu0
      %v1195 = vadd.f32 0.0, %v1194
      %v1196 = vpop.f32.mrb[0].mxu0
      %v1197 = vpop.f32.mrb[0].mxu0
      %v1198 = vadd.f32 0.0, %v1197
      %v1199 = vpop.f32.mrb[0].mxu0
      %1200 = vmatprep.mubr.bf16.mxu0 0
      %1201 = vmatmul.mubr.bf16.gmra.mrb[0].mxu0 %v934
      %v1202 = vpop.f32.mrb[0].mxu0
      %v1203 = vadd.f32 0.0, %v1202
      %v1204 = vpop.f32.mrb[0].mxu0
      %v1205 = vpop.f32.mrb[0].mxu0
      %v1206 = vadd.f32 0.0, %v1205
      %v1207 = vpop.f32.mrb[0].mxu0
      %1208 = vmatprep.mubr.bf16.mxu0 0
      %1209 = vmatmul.mubr.bf16.gmra.mrb[0].mxu0 %v937
      %v1210 = vpop.f32.mrb[0].mxu0
      %v1211 = vadd.f32 0.0, %v1210
      %v1212 = vpop.f32.mrb[0].mxu0
      %v1213 = vpop.f32.mrb[0].mxu0
      %v1214 = vadd.f32 0.0, %v1213
      %v1215 = vpop.f32.mrb[0].mxu0
      %1216 = vmatprep.mubr.bf16.mxu0 0
      %1217 = vmatmul.mubr.bf16.gmra.mrb[0].mxu0 %v940
      %v1218 = vpop.f32.mrb[0].mxu0
      %v1219 = vadd.f32 0.0, %v1218
      %v1220 = vpop.f32.mrb[0].mxu0
      %v1221 = vpop.f32.mrb[0].mxu0
      %v1222 = vadd.f32 0.0, %v1221
      %v1223 = vpop.f32.mrb[0].mxu0
      %1224 = vmatprep.mubr.bf16.mxu0 0
      %1225 = vmatmul.mubr.bf16.gmra.mrb[0].mxu0 %v943
      %v1226 = vpop.f32.mrb[0].mxu0
      %v1227 = vadd.f32 0.0, %v1226
      %v1228 = vpop.f32.mrb[0].mxu0
      %v1229 = vpop.f32.mrb[0].mxu0
      %v1230 = vadd.f32 0.0, %v1229
      %v1231 = vpop.f32.mrb[0].mxu0
      %1232 = vmatprep.mubr.bf16.mxu0 0
      %1233 = vmatmul.mubr.bf16.gmra.mrb[0].mxu0 %v946
      %v1234 = vpop.f32.mrb[0].mxu0
      %v1235 = vadd.f32 0.0, %v1234
      %v1236 = vpop.f32.mrb[0].mxu0
      %v1237 = vpop.f32.mrb[0].mxu0
      %v1238 = vadd.f32 0.0, %v1237
      %v1239 = vpop.f32.mrb[0].mxu0
      %1240 = vdwg.mxu0
      %v1243 = vunpack.c.l.b16 %v580
      %v1244 = vunpack.c.l.b16 %v581
      %v1245 = vpack.c.b16 %v1244, %v1243
      %v1246 = vsel %vm851, %v533, 0
      %v1248 = vsel %vm851, %v534, 0
      %v1250 = vsel %vm851, %v535, 0
      %v1252 = vsel %vm851, %v536, 0
      %v1254 = vsel %vm851, %v537, 0
      %v1256 = vsel %vm851, %v538, 0
      %v1258 = vsel %vm851, %v539, 0
      %v1260 = vsel %vm851, %v540, 0
      %v1262 = vsel %vm851, %v541, 0
      %v1264 = vsel %vm851, %v542, 0
      %v1266 = vsel %vm851, %v543, 0
      %v1268 = vsel %vm851, %v544, 0
      %v1270 = vsel %vm851, %v545, 0
      %v1272 = vsel %vm851, %v546, 0
      %v1274 = vsel %vm851, %v547, 0
      %v1276 = vsel %vm851, %v548, 0
      %v1278 = vsel %vm851, %v549, 0
      %v1280 = vsel %vm851, %v550, 0
      %v1282 = vsel %vm851, %v551, 0
      %v1284 = vsel %vm851, %v552, 0
      %v1286 = vsel %vm851, %v553, 0
      %v1288 = vsel %vm851, %v554, 0
      %v1290 = vsel %vm851, %v555, 0
      %v1292 = vsel %vm851, %v556, 0
      %v1294 = vsel %vm851, %v557, 0
      %v1296 = vsel %vm851, %v558, 0
      %v1298 = vsel %vm851, %v559, 0
      %v1300 = vsel %vm851, %v560, 0
      %v1302 = vsel %vm851, %v561, 0
      %v1304 = vsel %vm851, %v562, 0
      %v1306 = vsel %vm851, %v563, 0
      %v1308 = vsel %vm851, %v564, 0
      %v1311 = vsel %vm948, %v1245, 0
      %1313 = vmatprep.subr.bf16.mxu0 0
      %1314 = vmatpush1.bf16.msra.mxu0 %v1311
      %1315 = vmatprep.subr.bf16.mxu0 0
      %1316 = vmatpush1.bf16.msra.mxu0 0
      %1317 = vmatprep.subr.bf16.mxu0 0
      %1318 = vmatpush1.bf16.msra.mxu0 0
      %1319 = vmatprep.subr.bf16.mxu0 0
      %1320 = vmatpush1.bf16.msra.mxu0 0
      %1321 = vmatprep.subr.bf16.mxu0 0
      %1322 = vmatpush1.bf16.msra.mxu0 0
      %1323 = vmatprep.subr.bf16.mxu0 0
      %1324 = vmatpush1.bf16.msra.mxu0 0
      %1325 = vmatprep.subr.bf16.mxu0 0
      %1326 = vmatpush1.bf16.msra.mxu0 0
      %1327 = vmatprep.subr.bf16.mxu0 0
      %1328 = vmatpush1.bf16.msra.mxu0 0
      %1329 = vmatprep.subr.bf16.mxu0 0
      %1330 = vmatpush1.bf16.msra.mxu0 0
      %1331 = vmatprep.subr.bf16.mxu0 0
      %1332 = vmatpush1.bf16.msra.mxu0 0
      %1333 = vmatprep.subr.bf16.mxu0 0
      %1334 = vmatpush1.bf16.msra.mxu0 0
      %1335 = vmatprep.subr.bf16.mxu0 0
      %1336 = vmatpush1.bf16.msra.mxu0 0
      %1337 = vmatprep.subr.bf16.mxu0 0
      %1338 = vmatpush1.bf16.msra.mxu0 0
      %1339 = vmatprep.subr.bf16.mxu0 0
      %1340 = vmatpush1.bf16.msra.mxu0 0
      %1341 = vmatprep.subr.bf16.mxu0 0
      %1342 = vmatpush1.bf16.msra.mxu0 0
      %1343 = vmatprep.subr.bf16.mxu0 0
      %1344 = vmatpush1.bf16.msra.mxu0 0
      %1345 = vmatprep.mubr.bf16.mxu0 0
      %1346 = vmatmul.mubr.bf16.gmra.mrb[0].mxu0 %v1246
      %v1347 = vpop.f32.mrb[0].mxu0
      %v1348 = vadd.f32 %v987, %v1347
      %v1349 = vpop.f32.mrb[0].mxu0
      %v1350 = vpop.f32.mrb[0].mxu0
      %v1351 = vadd.f32 %v990, %v1350
      %v1352 = vpop.f32.mrb[0].mxu0
      %1353 = vmatprep.mubr.bf16.mxu0 0
      %1354 = vmatmul.mubr.bf16.gmra.mrb[0].mxu0 %v1248
      %v1355 = vpop.f32.mrb[0].mxu0
      %v1356 = vadd.f32 %v995, %v1355
      %v1357 = vpop.f32.mrb[0].mxu0
      %v1358 = vpop.f32.mrb[0].mxu0
      %v1359 = vadd.f32 %v998, %v1358
      %v1360 = vpop.f32.mrb[0].mxu0
      %1361 = vmatprep.mubr.bf16.mxu0 0
      %1362 = vmatmul.mubr.bf16.gmra.mrb[0].mxu0 %v1250
      %v1363 = vpop.f32.mrb[0].mxu0
      %v1364 = vadd.f32 %v1003, %v1363
      %v1365 = vpop.f32.mrb[0].mxu0
      %v1366 = vpop.f32.mrb[0].mxu0
      %v1367 = vadd.f32 %v1006, %v1366
      %v1368 = vpop.f32.mrb[0].mxu0
      %1369 = vmatprep.mubr.bf16.mxu0 0
      %1370 = vmatmul.mubr.bf16.gmra.mrb[0].mxu0 %v1252
      %v1371 = vpop.f32.mrb[0].mxu0
      %v1372 = vadd.f32 %v1011, %v1371
      %v1373 = vpop.f32.mrb[0].mxu0
      %v1374 = vpop.f32.mrb[0].mxu0
      %v1375 = vadd.f32 %v1014, %v1374
      %v1376 = vpop.f32.mrb[0].mxu0
      %1377 = vmatprep.mubr.bf16.mxu0 0
      %1378 = vmatmul.mubr.bf16.gmra.mrb[0].mxu0 %v1254
      %v1379 = vpop.f32.mrb[0].mxu0
      %v1380 = vadd.f32 %v1019, %v1379
      %v1381 = vpop.f32.mrb[0].mxu0
      %v1382 = vpop.f32.mrb[0].mxu0
      %v1383 = vadd.f32 %v1022, %v1382
      %v1384 = vpop.f32.mrb[0].mxu0
      %1385 = vmatprep.mubr.bf16.mxu0 0
      %1386 = vmatmul.mubr.bf16.gmra.mrb[0].mxu0 %v1256
      %v1387 = vpop.f32.mrb[0].mxu0
      %v1388 = vadd.f32 %v1027, %v1387
      %v1389 = vpop.f32.mrb[0].mxu0
      %v1390 = vpop.f32.mrb[0].mxu0
      %v1391 = vadd.f32 %v1030, %v1390
      %v1392 = vpop.f32.mrb[0].mxu0
      %1393 = vmatprep.mubr.bf16.mxu0 0
      %1394 = vmatmul.mubr.bf16.gmra.mrb[0].mxu0 %v1258
      %v1395 = vpop.f32.mrb[0].mxu0
      %v1396 = vadd.f32 %v1035, %v1395
      %v1397 = vpop.f32.mrb[0].mxu0
      %v1398 = vpop.f32.mrb[0].mxu0
      %v1399 = vadd.f32 %v1038, %v1398
      %v1400 = vpop.f32.mrb[0].mxu0
      %1401 = vmatprep.mubr.bf16.mxu0 0
      %1402 = vmatmul.mubr.bf16.gmra.mrb[0].mxu0 %v1260
      %v1403 = vpop.f32.mrb[0].mxu0
      %v1404 = vadd.f32 %v1043, %v1403
      %v1405 = vpop.f32.mrb[0].mxu0
      %v1406 = vpop.f32.mrb[0].mxu0
      %v1407 = vadd.f32 %v1046, %v1406
      %v1408 = vpop.f32.mrb[0].mxu0
      %1409 = vmatprep.mubr.bf16.mxu0 0
      %1410 = vmatmul.mubr.bf16.gmra.mrb[0].mxu0 %v1262
      %v1411 = vpop.f32.mrb[0].mxu0
      %v1412 = vadd.f32 %v1051, %v1411
      %v1413 = vpop.f32.mrb[0].mxu0
      %v1414 = vpop.f32.mrb[0].mxu0
      %v1415 = vadd.f32 %v1054, %v1414
      %v1416 = vpop.f32.mrb[0].mxu0
      %1417 = vmatprep.mubr.bf16.mxu0 0
      %1418 = vmatmul.mubr.bf16.gmra.mrb[0].mxu0 %v1264
      %v1419 = vpop.f32.mrb[0].mxu0
      %v1420 = vadd.f32 %v1059, %v1419
      %v1421 = vpop.f32.mrb[0].mxu0
      %v1422 = vpop.f32.mrb[0].mxu0
      %v1423 = vadd.f32 %v1062, %v1422
      %v1424 = vpop.f32.mrb[0].mxu0
      %1425 = vmatprep.mubr.bf16.mxu0 0
      %1426 = vmatmul.mubr.bf16.gmra.mrb[0].mxu0 %v1266
      %v1427 = vpop.f32.mrb[0].mxu0
      %v1428 = vadd.f32 %v1067, %v1427
      %v1429 = vpop.f32.mrb[0].mxu0
      %v1430 = vpop.f32.mrb[0].mxu0
      %v1431 = vadd.f32 %v1070, %v1430
      %v1432 = vpop.f32.mrb[0].mxu0
      %1433 = vmatprep.mubr.bf16.mxu0 0
      %1434 = vmatmul.mubr.bf16.gmra.mrb[0].mxu0 %v1268
      %v1435 = vpop.f32.mrb[0].mxu0
      %v1436 = vadd.f32 %v1075, %v1435
      %v1437 = vpop.f32.mrb[0].mxu0
      %v1438 = vpop.f32.mrb[0].mxu0
      %v1439 = vadd.f32 %v1078, %v1438
      %v1440 = vpop.f32.mrb[0].mxu0
      %1441 = vmatprep.mubr.bf16.mxu0 0
      %1442 = vmatmul.mubr.bf16.gmra.mrb[0].mxu0 %v1270
      %v1443 = vpop.f32.mrb[0].mxu0
      %v1444 = vadd.f32 %v1083, %v1443
      %v1445 = vpop.f32.mrb[0].mxu0
      %v1446 = vpop.f32.mrb[0].mxu0
      %v1447 = vadd.f32 %v1086, %v1446
      %v1448 = vpop.f32.mrb[0].mxu0
      %1449 = vmatprep.mubr.bf16.mxu0 0
      %1450 = vmatmul.mubr.bf16.gmra.mrb[0].mxu0 %v1272
      %v1451 = vpop.f32.mrb[0].mxu0
      %v1452 = vadd.f32 %v1091, %v1451
      %v1453 = vpop.f32.mrb[0].mxu0
      %v1454 = vpop.f32.mrb[0].mxu0
      %v1455 = vadd.f32 %v1094, %v1454
      %v1456 = vpop.f32.mrb[0].mxu0
      %1457 = vmatprep.mubr.bf16.mxu0 0
      %1458 = vmatmul.mubr.bf16.gmra.mrb[0].mxu0 %v1274
      %v1459 = vpop.f32.mrb[0].mxu0
      %v1460 = vadd.f32 %v1099, %v1459
      %v1461 = vpop.f32.mrb[0].mxu0
      %v1462 = vpop.f32.mrb[0].mxu0
      %v1463 = vadd.f32 %v1102, %v1462
      %v1464 = vpop.f32.mrb[0].mxu0
      %1465 = vmatprep.mubr.bf16.mxu0 0
      %1466 = vmatmul.mubr.bf16.gmra.mrb[0].mxu0 %v1276
      %v1467 = vpop.f32.mrb[0].mxu0
      %v1468 = vadd.f32 %v1107, %v1467
      %v1469 = vpop.f32.mrb[0].mxu0
      %v1470 = vpop.f32.mrb[0].mxu0
      %v1471 = vadd.f32 %v1110, %v1470
      %v1472 = vpop.f32.mrb[0].mxu0
      %1473 = vmatprep.mubr.bf16.mxu0 0
      %1474 = vmatmul.mubr.bf16.gmra.mrb[0].mxu0 %v1278
      %v1475 = vpop.f32.mrb[0].mxu0
      %v1476 = vadd.f32 %v1115, %v1475
      %v1477 = vpop.f32.mrb[0].mxu0
      %v1478 = vpop.f32.mrb[0].mxu0
      %v1479 = vadd.f32 %v1118, %v1478
      %v1480 = vpop.f32.mrb[0].mxu0
      %1481 = vmatprep.mubr.bf16.mxu0 0
      %1482 = vmatmul.mubr.bf16.gmra.mrb[0].mxu0 %v1280
      %v1483 = vpop.f32.mrb[0].mxu0
      %v1484 = vadd.f32 %v1123, %v1483
      %v1485 = vpop.f32.mrb[0].mxu0
      %v1486 = vpop.f32.mrb[0].mxu0
      %v1487 = vadd.f32 %v1126, %v1486
      %v1488 = vpop.f32.mrb[0].mxu0
      %1489 = vmatprep.mubr.bf16.mxu0 0
      %1490 = vmatmul.mubr.bf16.gmra.mrb[0].mxu0 %v1282
      %v1491 = vpop.f32.mrb[0].mxu0
      %v1492 = vadd.f32 %v1131, %v1491
      %v1493 = vpop.f32.mrb[0].mxu0
      %v1494 = vpop.f32.mrb[0].mxu0
      %v1495 = vadd.f32 %v1134, %v1494
      %v1496 = vpop.f32.mrb[0].mxu0
      %1497 = vmatprep.mubr.bf16.mxu0 0
      %1498 = vmatmul.mubr.bf16.gmra.mrb[0].mxu0 %v1284
      %v1499 = vpop.f32.mrb[0].mxu0
      %v1500 = vadd.f32 %v1139, %v1499
      %v1501 = vpop.f32.mrb[0].mxu0
      %v1502 = vpop.f32.mrb[0].mxu0
      %v1503 = vadd.f32 %v1142, %v1502
      %v1504 = vpop.f32.mrb[0].mxu0
      %1505 = vmatprep.mubr.bf16.mxu0 0
      %1506 = vmatmul.mubr.bf16.gmra.mrb[0].mxu0 %v1286
      %v1507 = vpop.f32.mrb[0].mxu0
      %v1508 = vadd.f32 %v1147, %v1507
      %v1509 = vpop.f32.mrb[0].mxu0
      %v1510 = vpop.f32.mrb[0].mxu0
      %v1511 = vadd.f32 %v1150, %v1510
      %v1512 = vpop.f32.mrb[0].mxu0
      %1513 = vmatprep.mubr.bf16.mxu0 0
      %1514 = vmatmul.mubr.bf16.gmra.mrb[0].mxu0 %v1288
      %v1515 = vpop.f32.mrb[0].mxu0
      %v1516 = vadd.f32 %v1155, %v1515
      %v1517 = vpop.f32.mrb[0].mxu0
      %v1518 = vpop.f32.mrb[0].mxu0
      %v1519 = vadd.f32 %v1158, %v1518
      %v1520 = vpop.f32.mrb[0].mxu0
      %1521 = vmatprep.mubr.bf16.mxu0 0
      %1522 = vmatmul.mubr.bf16.gmra.mrb[0].mxu0 %v1290
      %v1523 = vpop.f32.mrb[0].mxu0
      %v1524 = vadd.f32 %v1163, %v1523
      %v1525 = vpop.f32.mrb[0].mxu0
      %v1526 = vpop.f32.mrb[0].mxu0
      %v1527 = vadd.f32 %v1166, %v1526
      %v1528 = vpop.f32.mrb[0].mxu0
      %1529 = vmatprep.mubr.bf16.mxu0 0
      %1530 = vmatmul.mubr.bf16.gmra.mrb[0].mxu0 %v1292
      %v1531 = vpop.f32.mrb[0].mxu0
      %v1532 = vadd.f32 %v1171, %v1531
      %v1533 = vpop.f32.mrb[0].mxu0
      %v1534 = vpop.f32.mrb[0].mxu0
      %v1535 = vadd.f32 %v1174, %v1534
      %v1536 = vpop.f32.mrb[0].mxu0
      %1537 = vmatprep.mubr.bf16.mxu0 0
      %1538 = vmatmul.mubr.bf16.gmra.mrb[0].mxu0 %v1294
      %v1539 = vpop.f32.mrb[0].mxu0
      %v1540 = vadd.f32 %v1179, %v1539
      %v1541 = vpop.f32.mrb[0].mxu0
      %v1542 = vpop.f32.mrb[0].mxu0
      %v1543 = vadd.f32 %v1182, %v1542
      %v1544 = vpop.f32.mrb[0].mxu0
      %1545 = vmatprep.mubr.bf16.mxu0 0
      %1546 = vmatmul.mubr.bf16.gmra.mrb[0].mxu0 %v1296
      %v1547 = vpop.f32.mrb[0].mxu0
      %v1548 = vadd.f32 %v1187, %v1547
      %v1549 = vpop.f32.mrb[0].mxu0
      %v1550 = vpop.f32.mrb[0].mxu0
      %v1551 = vadd.f32 %v1190, %v1550
      %v1552 = vpop.f32.mrb[0].mxu0
      %1553 = vmatprep.mubr.bf16.mxu0 0
      %1554 = vmatmul.mubr.bf16.gmra.mrb[0].mxu0 %v1298
      %v1555 = vpop.f32.mrb[0].mxu0
      %v1556 = vadd.f32 %v1195, %v1555
      %v1557 = vpop.f32.mrb[0].mxu0
      %v1558 = vpop.f32.mrb[0].mxu0
      %v1559 = vadd.f32 %v1198, %v1558
      %v1560 = vpop.f32.mrb[0].mxu0
      %1561 = vmatprep.mubr.bf16.mxu0 0
      %1562 = vmatmul.mubr.bf16.gmra.mrb[0].mxu0 %v1300
      %v1563 = vpop.f32.mrb[0].mxu0
      %v1564 = vadd.f32 %v1203, %v1563
      %v1565 = vpop.f32.mrb[0].mxu0
      %v1566 = vpop.f32.mrb[0].mxu0
      %v1567 = vadd.f32 %v1206, %v1566
      %v1568 = vpop.f32.mrb[0].mxu0
      %1569 = vmatprep.mubr.bf16.mxu0 0
      %1570 = vmatmul.mubr.bf16.gmra.mrb[0].mxu0 %v1302
      %v1571 = vpop.f32.mrb[0].mxu0
      %v1572 = vadd.f32 %v1211, %v1571
      %v1573 = vpop.f32.mrb[0].mxu0
      %v1574 = vpop.f32.mrb[0].mxu0
      %v1575 = vadd.f32 %v1214, %v1574
      %v1576 = vpop.f32.mrb[0].mxu0
      %1577 = vmatprep.mubr.bf16.mxu0 0
      %1578 = vmatmul.mubr.bf16.gmra.mrb[0].mxu0 %v1304
      %v1579 = vpop.f32.mrb[0].mxu0
      %v1580 = vadd.f32 %v1219, %v1579
      %v1581 = vpop.f32.mrb[0].mxu0
      %v1582 = vpop.f32.mrb[0].mxu0
      %v1583 = vadd.f32 %v1222, %v1582
      %v1584 = vpop.f32.mrb[0].mxu0
      %1585 = vmatprep.mubr.bf16.mxu0 0
      %1586 = vmatmul.mubr.bf16.gmra.mrb[0].mxu0 %v1306
      %v1587 = vpop.f32.mrb[0].mxu0
      %v1588 = vadd.f32 %v1227, %v1587
      %v1589 = vpop.f32.mrb[0].mxu0
      %v1590 = vpop.f32.mrb[0].mxu0
      %v1591 = vadd.f32 %v1230, %v1590
      %v1592 = vpop.f32.mrb[0].mxu0
      %1593 = vmatprep.mubr.bf16.mxu0 0
      %1594 = vmatmul.mubr.bf16.gmra.mrb[0].mxu0 %v1308
      %v1595 = vpop.f32.mrb[0].mxu0
      %v1596 = vadd.f32 %v1235, %v1595
      %v1597 = vpop.f32.mrb[0].mxu0
      %v1598 = vpop.f32.mrb[0].mxu0
      %v1599 = vadd.f32 %v1238, %v1598
      %v1600 = vpop.f32.mrb[0].mxu0
      %1601 = vdwg.mxu0
      %s1602 = scalar_lea.vmem %s2, 16
      %v1603 = vld [vmem:[%s1602] sm:$0xf]
      %v1604 = vld [vmem:[%s1602 + $0x4] sm:$0x3]
      %v1607 = vunpack.c.l.b16 %v1603
      %v1608 = vunpack.c.l.b16 %v1604
      %v1609 = vpack.c.b16 %v1608, %v1607
      %v1610 = vsel %vm851, %v577, 0
      %v1613 = vsel %vm851, %v578, 0
      %v1616 = vsel %vm948, %v1609, 0
      %1618 = vmatprep.subr.bf16.mxu0 0
      %1619 = vmatpush1.bf16.msra.mxu0 %v1616
      %1620 = vmatprep.subr.bf16.mxu0 0
      %1621 = vmatpush1.bf16.msra.mxu0 0
      %1622 = vmatprep.subr.bf16.mxu0 0
      %1623 = vmatpush1.bf16.msra.mxu0 0
      %1624 = vmatprep.subr.bf16.mxu0 0
      %1625 = vmatpush1.bf16.msra.mxu0 0
      %1626 = vmatprep.subr.bf16.mxu0 0
      %1627 = vmatpush1.bf16.msra.mxu0 0
      %1628 = vmatprep.subr.bf16.mxu0 0
      %1629 = vmatpush1.bf16.msra.mxu0 0
      %1630 = vmatprep.subr.bf16.mxu0 0
      %1631 = vmatpush1.bf16.msra.mxu0 0
      %1632 = vmatprep.subr.bf16.mxu0 0
      %1633 = vmatpush1.bf16.msra.mxu0 0
      %1634 = vmatprep.subr.bf16.mxu0 0
      %1635 = vmatpush1.bf16.msra.mxu0 0
      %1636 = vmatprep.subr.bf16.mxu0 0
      %1637 = vmatpush1.bf16.msra.mxu0 0
      %1638 = vmatprep.subr.bf16.mxu0 0
      %1639 = vmatpush1.bf16.msra.mxu0 0
      %1640 = vmatprep.subr.bf16.mxu0 0
      %1641 = vmatpush1.bf16.msra.mxu0 0
      %1642 = vmatprep.subr.bf16.mxu0 0
      %1643 = vmatpush1.bf16.msra.mxu0 0
      %1644 = vmatprep.subr.bf16.mxu0 0
      %1645 = vmatpush1.bf16.msra.mxu0 0
      %1646 = vmatprep.subr.bf16.mxu0 0
      %1647 = vmatpush1.bf16.msra.mxu0 0
      %1648 = vmatprep.subr.bf16.mxu0 0
      %1649 = vmatpush1.bf16.msra.mxu0 0
      %1650 = vmatprep.mubr.bf16.mxu0 0
      %1651 = vmatmul.mubr.bf16.gmra.mrb[0].mxu0 %v1250
      %v1652 = vpop.f32.mrb[0].mxu0
      %v1653 = vadd.f32 0.0, %v1652
      %v1654 = vpop.f32.mrb[0].mxu0
      %v1655 = vpop.f32.mrb[0].mxu0
      %v1656 = vadd.f32 0.0, %v1655
      %v1657 = vpop.f32.mrb[0].mxu0
      %1658 = vmatprep.mubr.bf16.mxu0 0
      %1659 = vmatmul.mubr.bf16.gmra.mrb[0].mxu0 %v1252
      %v1660 = vpop.f32.mrb[0].mxu0
      %v1661 = vadd.f32 0.0, %v1660
      %v1662 = vpop.f32.mrb[0].mxu0
      %v1663 = vpop.f32.mrb[0].mxu0
      %v1664 = vadd.f32 0.0, %v1663
      %v1665 = vpop.f32.mrb[0].mxu0
      %1666 = vmatprep.mubr.bf16.mxu0 0
      %1667 = vmatmul.mubr.bf16.gmra.mrb[0].mxu0 %v1254
      %v1668 = vpop.f32.mrb[0].mxu0
      %v1669 = vadd.f32 0.0, %v1668
      %v1670 = vpop.f32.mrb[0].mxu0
      %v1671 = vpop.f32.mrb[0].mxu0
      %v1672 = vadd.f32 0.0, %v1671
      %v1673 = vpop.f32.mrb[0].mxu0
      %1674 = vmatprep.mubr.bf16.mxu0 0
      %1675 = vmatmul.mubr.bf16.gmra.mrb[0].mxu0 %v1256
      %v1676 = vpop.f32.mrb[0].mxu0
      %v1677 = vadd.f32 0.0, %v1676
      %v1678 = vpop.f32.mrb[0].mxu0
      %v1679 = vpop.f32.mrb[0].mxu0
      %v1680 = vadd.f32 0.0, %v1679
      %v1681 = vpop.f32.mrb[0].mxu0
      %1682 = vmatprep.mubr.bf16.mxu0 0
      %1683 = vmatmul.mubr.bf16.gmra.mrb[0].mxu0 %v1258
      %v1684 = vpop.f32.mrb[0].mxu0
      %v1685 = vadd.f32 0.0, %v1684
      %v1686 = vpop.f32.mrb[0].mxu0
      %v1687 = vpop.f32.mrb[0].mxu0
      %v1688 = vadd.f32 0.0, %v1687
      %v1689 = vpop.f32.mrb[0].mxu0
      %1690 = vmatprep.mubr.bf16.mxu0 0
      %1691 = vmatmul.mubr.bf16.gmra.mrb[0].mxu0 %v1260
      %v1692 = vpop.f32.mrb[0].mxu0
      %v1693 = vadd.f32 0.0, %v1692
      %v1694 = vpop.f32.mrb[0].mxu0
      %v1695 = vpop.f32.mrb[0].mxu0
      %v1696 = vadd.f32 0.0, %v1695
      %v1697 = vpop.f32.mrb[0].mxu0
      %1698 = vmatprep.mubr.bf16.mxu0 0
      %1699 = vmatmul.mubr.bf16.gmra.mrb[0].mxu0 %v1262
      %v1700 = vpop.f32.mrb[0].mxu0
      %v1701 = vadd.f32 0.0, %v1700
      %v1702 = vpop.f32.mrb[0].mxu0
      %v1703 = vpop.f32.mrb[0].mxu0
      %v1704 = vadd.f32 0.0, %v1703
      %v1705 = vpop.f32.mrb[0].mxu0
      %1706 = vmatprep.mubr.bf16.mxu0 0
      %1707 = vmatmul.mubr.bf16.gmra.mrb[0].mxu0 %v1264
      %v1708 = vpop.f32.mrb[0].mxu0
      %v1709 = vadd.f32 0.0, %v1708
      %v1710 = vpop.f32.mrb[0].mxu0
      %v1711 = vpop.f32.mrb[0].mxu0
      %v1712 = vadd.f32 0.0, %v1711
      %v1713 = vpop.f32.mrb[0].mxu0
      %1714 = vmatprep.mubr.bf16.mxu0 0
      %1715 = vmatmul.mubr.bf16.gmra.mrb[0].mxu0 %v1266
      %v1716 = vpop.f32.mrb[0].mxu0
      %v1717 = vadd.f32 0.0, %v1716
      %v1718 = vpop.f32.mrb[0].mxu0
      %v1719 = vpop.f32.mrb[0].mxu0
      %v1720 = vadd.f32 0.0, %v1719
      %v1721 = vpop.f32.mrb[0].mxu0
      %1722 = vmatprep.mubr.bf16.mxu0 0
      %1723 = vmatmul.mubr.bf16.gmra.mrb[0].mxu0 %v1268
      %v1724 = vpop.f32.mrb[0].mxu0
      %v1725 = vadd.f32 0.0, %v1724
      %v1726 = vpop.f32.mrb[0].mxu0
      %v1727 = vpop.f32.mrb[0].mxu0
      %v1728 = vadd.f32 0.0, %v1727
      %v1729 = vpop.f32.mrb[0].mxu0
      %1730 = vmatprep.mubr.bf16.mxu0 0
      %1731 = vmatmul.mubr.bf16.gmra.mrb[0].mxu0 %v1270
      %v1732 = vpop.f32.mrb[0].mxu0
      %v1733 = vadd.f32 0.0, %v1732
      %v1734 = vpop.f32.mrb[0].mxu0
      %v1735 = vpop.f32.mrb[0].mxu0
      %v1736 = vadd.f32 0.0, %v1735
      %v1737 = vpop.f32.mrb[0].mxu0
      %1738 = vmatprep.mubr.bf16.mxu0 0
      %1739 = vmatmul.mubr.bf16.gmra.mrb[0].mxu0 %v1272
      %v1740 = vpop.f32.mrb[0].mxu0
      %v1741 = vadd.f32 0.0, %v1740
      %v1742 = vpop.f32.mrb[0].mxu0
      %v1743 = vpop.f32.mrb[0].mxu0
      %v1744 = vadd.f32 0.0, %v1743
      %v1745 = vpop.f32.mrb[0].mxu0
      %1746 = vmatprep.mubr.bf16.mxu0 0
      %1747 = vmatmul.mubr.bf16.gmra.mrb[0].mxu0 %v1274
      %v1748 = vpop.f32.mrb[0].mxu0
      %v1749 = vadd.f32 0.0, %v1748
      %v1750 = vpop.f32.mrb[0].mxu0
      %v1751 = vpop.f32.mrb[0].mxu0
      %v1752 = vadd.f32 0.0, %v1751
      %v1753 = vpop.f32.mrb[0].mxu0
      %1754 = vmatprep.mubr.bf16.mxu0 0
      %1755 = vmatmul.mubr.bf16.gmra.mrb[0].mxu0 %v1276
      %v1756 = vpop.f32.mrb[0].mxu0
      %v1757 = vadd.f32 0.0, %v1756
      %v1758 = vpop.f32.mrb[0].mxu0
      %v1759 = vpop.f32.mrb[0].mxu0
      %v1760 = vadd.f32 0.0, %v1759
      %v1761 = vpop.f32.mrb[0].mxu0
      %1762 = vmatprep.mubr.bf16.mxu0 0
      %1763 = vmatmul.mubr.bf16.gmra.mrb[0].mxu0 %v1278
      %v1764 = vpop.f32.mrb[0].mxu0
      %v1765 = vadd.f32 0.0, %v1764
      %v1766 = vpop.f32.mrb[0].mxu0
      %v1767 = vpop.f32.mrb[0].mxu0
      %v1768 = vadd.f32 0.0, %v1767
      %v1769 = vpop.f32.mrb[0].mxu0
      %1770 = vmatprep.mubr.bf16.mxu0 0
      %1771 = vmatmul.mubr.bf16.gmra.mrb[0].mxu0 %v1280
      %v1772 = vpop.f32.mrb[0].mxu0
      %v1773 = vadd.f32 0.0, %v1772
      %v1774 = vpop.f32.mrb[0].mxu0
      %v1775 = vpop.f32.mrb[0].mxu0
      %v1776 = vadd.f32 0.0, %v1775
      %v1777 = vpop.f32.mrb[0].mxu0
      %1778 = vmatprep.mubr.bf16.mxu0 0
      %1779 = vmatmul.mubr.bf16.gmra.mrb[0].mxu0 %v1282
      %v1780 = vpop.f32.mrb[0].mxu0
      %v1781 = vadd.f32 0.0, %v1780
      %v1782 = vpop.f32.mrb[0].mxu0
      %v1783 = vpop.f32.mrb[0].mxu0
      %v1784 = vadd.f32 0.0, %v1783
      %v1785 = vpop.f32.mrb[0].mxu0
      %1786 = vmatprep.mubr.bf16.mxu0 0
      %1787 = vmatmul.mubr.bf16.gmra.mrb[0].mxu0 %v1284
      %v1788 = vpop.f32.mrb[0].mxu0
      %v1789 = vadd.f32 0.0, %v1788
      %v1790 = vpop.f32.mrb[0].mxu0
      %v1791 = vpop.f32.mrb[0].mxu0
      %v1792 = vadd.f32 0.0, %v1791
      %v1793 = vpop.f32.mrb[0].mxu0
      %1794 = vmatprep.mubr.bf16.mxu0 0
      %1795 = vmatmul.mubr.bf16.gmra.mrb[0].mxu0 %v1286
      %v1796 = vpop.f32.mrb[0].mxu0
      %v1797 = vadd.f32 0.0, %v1796
      %v1798 = vpop.f32.mrb[0].mxu0
      %v1799 = vpop.f32.mrb[0].mxu0
      %v1800 = vadd.f32 0.0, %v1799
      %v1801 = vpop.f32.mrb[0].mxu0
      %1802 = vmatprep.mubr.bf16.mxu0 0
      %1803 = vmatmul.mubr.bf16.gmra.mrb[0].mxu0 %v1288
      %v1804 = vpop.f32.mrb[0].mxu0
      %v1805 = vadd.f32 0.0, %v1804
      %v1806 = vpop.f32.mrb[0].mxu0
      %v1807 = vpop.f32.mrb[0].mxu0
      %v1808 = vadd.f32 0.0, %v1807
      %v1809 = vpop.f32.mrb[0].mxu0
      %1810 = vmatprep.mubr.bf16.mxu0 0
      %1811 = vmatmul.mubr.bf16.gmra.mrb[0].mxu0 %v1290
      %v1812 = vpop.f32.mrb[0].mxu0
      %v1813 = vadd.f32 0.0, %v1812
      %v1814 = vpop.f32.mrb[0].mxu0
      %v1815 = vpop.f32.mrb[0].mxu0
      %v1816 = vadd.f32 0.0, %v1815
      %v1817 = vpop.f32.mrb[0].mxu0
      %1818 = vmatprep.mubr.bf16.mxu0 0
      %1819 = vmatmul.mubr.bf16.gmra.mrb[0].mxu0 %v1292
      %v1820 = vpop.f32.mrb[0].mxu0
      %v1821 = vadd.f32 0.0, %v1820
      %v1822 = vpop.f32.mrb[0].mxu0
      %v1823 = vpop.f32.mrb[0].mxu0
      %v1824 = vadd.f32 0.0, %v1823
      %v1825 = vpop.f32.mrb[0].mxu0
      %1826 = vmatprep.mubr.bf16.mxu0 0
      %1827 = vmatmul.mubr.bf16.gmra.mrb[0].mxu0 %v1294
      %v1828 = vpop.f32.mrb[0].mxu0
      %v1829 = vadd.f32 0.0, %v1828
      %v1830 = vpop.f32.mrb[0].mxu0
      %v1831 = vpop.f32.mrb[0].mxu0
      %v1832 = vadd.f32 0.0, %v1831
      %v1833 = vpop.f32.mrb[0].mxu0
      %1834 = vmatprep.mubr.bf16.mxu0 0
      %1835 = vmatmul.mubr.bf16.gmra.mrb[0].mxu0 %v1296
      %v1836 = vpop.f32.mrb[0].mxu0
      %v1837 = vadd.f32 0.0, %v1836
      %v1838 = vpop.f32.mrb[0].mxu0
      %v1839 = vpop.f32.mrb[0].mxu0
      %v1840 = vadd.f32 0.0, %v1839
      %v1841 = vpop.f32.mrb[0].mxu0
      %1842 = vmatprep.mubr.bf16.mxu0 0
      %1843 = vmatmul.mubr.bf16.gmra.mrb[0].mxu0 %v1298
      %v1844 = vpop.f32.mrb[0].mxu0
      %v1845 = vadd.f32 0.0, %v1844
      %v1846 = vpop.f32.mrb[0].mxu0
      %v1847 = vpop.f32.mrb[0].mxu0
      %v1848 = vadd.f32 0.0, %v1847
      %v1849 = vpop.f32.mrb[0].mxu0
      %1850 = vmatprep.mubr.bf16.mxu0 0
      %1851 = vmatmul.mubr.bf16.gmra.mrb[0].mxu0 %v1300
      %v1852 = vpop.f32.mrb[0].mxu0
      %v1853 = vadd.f32 0.0, %v1852
      %v1854 = vpop.f32.mrb[0].mxu0
      %v1855 = vpop.f32.mrb[0].mxu0
      %v1856 = vadd.f32 0.0, %v1855
      %v1857 = vpop.f32.mrb[0].mxu0
      %1858 = vmatprep.mubr.bf16.mxu0 0
      %1859 = vmatmul.mubr.bf16.gmra.mrb[0].mxu0 %v1302
      %v1860 = vpop.f32.mrb[0].mxu0
      %v1861 = vadd.f32 0.0, %v1860
      %v1862 = vpop.f32.mrb[0].mxu0
      %v1863 = vpop.f32.mrb[0].mxu0
      %v1864 = vadd.f32 0.0, %v1863
      %v1865 = vpop.f32.mrb[0].mxu0
      %1866 = vmatprep.mubr.bf16.mxu0 0
      %1867 = vmatmul.mubr.bf16.gmra.mrb[0].mxu0 %v1304
      %v1868 = vpop.f32.mrb[0].mxu0
      %v1869 = vadd.f32 0.0, %v1868
      %v1870 = vpop.f32.mrb[0].mxu0
      %v1871 = vpop.f32.mrb[0].mxu0
      %v1872 = vadd.f32 0.0, %v1871
      %v1873 = vpop.f32.mrb[0].mxu0
      %1874 = vmatprep.mubr.bf16.mxu0 0
      %1875 = vmatmul.mubr.bf16.gmra.mrb[0].mxu0 %v1306
      %v1876 = vpop.f32.mrb[0].mxu0
      %v1877 = vadd.f32 0.0, %v1876
      %v1878 = vpop.f32.mrb[0].mxu0
      %v1879 = vpop.f32.mrb[0].mxu0
      %v1880 = vadd.f32 0.0, %v1879
      %v1881 = vpop.f32.mrb[0].mxu0
      %1882 = vmatprep.mubr.bf16.mxu0 0
      %1883 = vmatmul.mubr.bf16.gmra.mrb[0].mxu0 %v1308
      %v1884 = vpop.f32.mrb[0].mxu0
      %v1885 = vadd.f32 0.0, %v1884
      %v1886 = vpop.f32.mrb[0].mxu0
      %v1887 = vpop.f32.mrb[0].mxu0
      %v1888 = vadd.f32 0.0, %v1887
      %v1889 = vpop.f32.mrb[0].mxu0
      %1890 = vmatprep.mubr.bf16.mxu0 0
      %1891 = vmatmul.mubr.bf16.gmra.mrb[0].mxu0 %v1610
      %v1892 = vpop.f32.mrb[0].mxu0
      %v1893 = vadd.f32 0.0, %v1892
      %v1894 = vpop.f32.mrb[0].mxu0
      %v1895 = vpop.f32.mrb[0].mxu0
      %v1896 = vadd.f32 0.0, %v1895
      %v1897 = vpop.f32.mrb[0].mxu0
      %1898 = vmatprep.mubr.bf16.mxu0 0
      %1899 = vmatmul.mubr.bf16.gmra.mrb[0].mxu0 %v1613
      %v1900 = vpop.f32.mrb[0].mxu0
      %v1901 = vadd.f32 0.0, %v1900
      %v1902 = vpop.f32.mrb[0].mxu0
      %v1903 = vpop.f32.mrb[0].mxu0
      %v1904 = vadd.f32 0.0, %v1903
      %v1905 = vpop.f32.mrb[0].mxu0
      %1906 = vdwg.mxu0
      %v1907 = vadd.f32 %v1348, %v1653
      %v1908 = vadd.f32 %v1351, %v1656
      %v1909 = vadd.f32 %v1356, %v1661
      %v1910 = vadd.f32 %v1359, %v1664
      %v1911 = vadd.f32 %v1364, %v1669
      %v1912 = vadd.f32 %v1367, %v1672
      %v1913 = vadd.f32 %v1372, %v1677
      %v1914 = vadd.f32 %v1375, %v1680
      %v1915 = vadd.f32 %v1380, %v1685
      %v1916 = vadd.f32 %v1383, %v1688
      %v1917 = vadd.f32 %v1388, %v1693
      %v1918 = vadd.f32 %v1391, %v1696
      %v1919 = vadd.f32 %v1396, %v1701
      %v1920 = vadd.f32 %v1399, %v1704
      %v1921 = vadd.f32 %v1404, %v1709
      %v1922 = vadd.f32 %v1407, %v1712
      %v1923 = vadd.f32 %v1412, %v1717
      %v1924 = vadd.f32 %v1415, %v1720
      %v1925 = vadd.f32 %v1420, %v1725
      %v1926 = vadd.f32 %v1423, %v1728
      %v1927 = vadd.f32 %v1428, %v1733
      %v1928 = vadd.f32 %v1431, %v1736
      %v1929 = vadd.f32 %v1436, %v1741
      %v1930 = vadd.f32 %v1439, %v1744
      %v1931 = vadd.f32 %v1444, %v1749
      %v1932 = vadd.f32 %v1447, %v1752
      %v1933 = vadd.f32 %v1452, %v1757
      %v1934 = vadd.f32 %v1455, %v1760
      %v1935 = vadd.f32 %v1460, %v1765
      %v1936 = vadd.f32 %v1463, %v1768
      %v1937 = vadd.f32 %v1468, %v1773
      %v1938 = vadd.f32 %v1471, %v1776
      %v1939 = vadd.f32 %v1476, %v1781
      %v1940 = vadd.f32 %v1479, %v1784
      %v1941 = vadd.f32 %v1484, %v1789
      %v1942 = vadd.f32 %v1487, %v1792
      %v1943 = vadd.f32 %v1492, %v1797
      %v1944 = vadd.f32 %v1495, %v1800
      %v1945 = vadd.f32 %v1500, %v1805
      %v1946 = vadd.f32 %v1503, %v1808
      %v1947 = vadd.f32 %v1508, %v1813
      %v1948 = vadd.f32 %v1511, %v1816
      %v1949 = vadd.f32 %v1516, %v1821
      %v1950 = vadd.f32 %v1519, %v1824
      %v1951 = vadd.f32 %v1524, %v1829
      %v1952 = vadd.f32 %v1527, %v1832
      %v1953 = vadd.f32 %v1532, %v1837
      %v1954 = vadd.f32 %v1535, %v1840
      %v1955 = vadd.f32 %v1540, %v1845
      %v1956 = vadd.f32 %v1543, %v1848
      %v1957 = vadd.f32 %v1548, %v1853
      %v1958 = vadd.f32 %v1551, %v1856
      %v1959 = vadd.f32 %v1556, %v1861
      %v1960 = vadd.f32 %v1559, %v1864
      %v1961 = vadd.f32 %v1564, %v1869
      %v1962 = vadd.f32 %v1567, %v1872
      %v1963 = vadd.f32 %v1572, %v1877
      %v1964 = vadd.f32 %v1575, %v1880
      %v1965 = vadd.f32 %v1580, %v1885
      %v1966 = vadd.f32 %v1583, %v1888
      %v1967 = vadd.f32 %v1588, %v1893
      %v1968 = vadd.f32 %v1591, %v1896
      %v1969 = vadd.f32 %v1596, %v1901
      %v1970 = vadd.f32 %v1599, %v1904
      %s1971 = scalar_lea.vmem %s2, 24
      %v1972 = vld [vmem:[%s1971] sm:$0xf]
      %v1973 = vld [vmem:[%s1971 + $0x4] sm:$0x3]
      %v1974 = vshrl.u32 %v577, 16
      %v1976 = vor.u32 %v1974, %v844
      %v1977 = vshll.u32 %v578, 16
      %v1979 = vrot.slane %v1977, 1
      %v1980 = vsel %vm585, %v1976, %v1979
      %v1981 = vshrl.u32 %v578, 16
      %v1983 = vor.u32 %v1981, %v1979
      %v1985 = vshll.u32 %v579, 16
      %v1987 = vrot.slane %v1985, 1
      %v1988 = vsel %vm585, %v1983, %v1987
      %v1991 = vunpack.c.l.b16 %v1972
      %v1992 = vunpack.c.l.b16 %v1973
      %v1993 = vpack.c.b16 %v1992, %v1991
      %v1995 = vsel %vm851, %v1980, 0
      %v1998 = vsel %vm851, %v1988, 0
      %v2001 = vsel %vm948, %v1993, 0
      %2003 = vmatprep.subr.bf16.mxu0 0
      %2004 = vmatpush1.bf16.msra.mxu0 %v2001
      %2005 = vmatprep.subr.bf16.mxu0 0
      %2006 = vmatpush1.bf16.msra.mxu0 0
      %2007 = vmatprep.subr.bf16.mxu0 0
      %2008 = vmatpush1.bf16.msra.mxu0 0
      %2009 = vmatprep.subr.bf16.mxu0 0
      %2010 = vmatpush1.bf16.msra.mxu0 0
      %2011 = vmatprep.subr.bf16.mxu0 0
      %2012 = vmatpush1.bf16.msra.mxu0 0
      %2013 = vmatprep.subr.bf16.mxu0 0
      %2014 = vmatpush1.bf16.msra.mxu0 0
      %2015 = vmatprep.subr.bf16.mxu0 0
      %2016 = vmatpush1.bf16.msra.mxu0 0
      %2017 = vmatprep.subr.bf16.mxu0 0
      %2018 = vmatpush1.bf16.msra.mxu0 0
      %2019 = vmatprep.subr.bf16.mxu0 0
      %2020 = vmatpush1.bf16.msra.mxu0 0
      %2021 = vmatprep.subr.bf16.mxu0 0
      %2022 = vmatpush1.bf16.msra.mxu0 0
      %2023 = vmatprep.subr.bf16.mxu0 0
      %2024 = vmatpush1.bf16.msra.mxu0 0
      %2025 = vmatprep.subr.bf16.mxu0 0
      %2026 = vmatpush1.bf16.msra.mxu0 0
      %2027 = vmatprep.subr.bf16.mxu0 0
      %2028 = vmatpush1.bf16.msra.mxu0 0
      %2029 = vmatprep.subr.bf16.mxu0 0
      %2030 = vmatpush1.bf16.msra.mxu0 0
      %2031 = vmatprep.subr.bf16.mxu0 0
      %2032 = vmatpush1.bf16.msra.mxu0 0
      %2033 = vmatprep.subr.bf16.mxu0 0
      %2034 = vmatpush1.bf16.msra.mxu0 0
      %2035 = vmatprep.mubr.bf16.mxu0 0
      %2036 = vmatmul.mubr.bf16.gmra.mrb[0].mxu0 %v859
      %v2037 = vpop.f32.mrb[0].mxu0
      %v2038 = vadd.f32 0.0, %v2037
      %v2039 = vpop.f32.mrb[0].mxu0
      %v2040 = vpop.f32.mrb[0].mxu0
      %v2041 = vadd.f32 0.0, %v2040
      %v2042 = vpop.f32.mrb[0].mxu0
      %2043 = vmatprep.mubr.bf16.mxu0 0
      %2044 = vmatmul.mubr.bf16.gmra.mrb[0].mxu0 %v862
      %v2045 = vpop.f32.mrb[0].mxu0
      %v2046 = vadd.f32 0.0, %v2045
      %v2047 = vpop.f32.mrb[0].mxu0
      %v2048 = vpop.f32.mrb[0].mxu0
      %v2049 = vadd.f32 0.0, %v2048
      %v2050 = vpop.f32.mrb[0].mxu0
      %2051 = vmatprep.mubr.bf16.mxu0 0
      %2052 = vmatmul.mubr.bf16.gmra.mrb[0].mxu0 %v865
      %v2053 = vpop.f32.mrb[0].mxu0
      %v2054 = vadd.f32 0.0, %v2053
      %v2055 = vpop.f32.mrb[0].mxu0
      %v2056 = vpop.f32.mrb[0].mxu0
      %v2057 = vadd.f32 0.0, %v2056
      %v2058 = vpop.f32.mrb[0].mxu0
      %2059 = vmatprep.mubr.bf16.mxu0 0
      %2060 = vmatmul.mubr.bf16.gmra.mrb[0].mxu0 %v868
      %v2061 = vpop.f32.mrb[0].mxu0
      %v2062 = vadd.f32 0.0, %v2061
      %v2063 = vpop.f32.mrb[0].mxu0
      %v2064 = vpop.f32.mrb[0].mxu0
      %v2065 = vadd.f32 0.0, %v2064
      %v2066 = vpop.f32.mrb[0].mxu0
      %2067 = vmatprep.mubr.bf16.mxu0 0
      %2068 = vmatmul.mubr.bf16.gmra.mrb[0].mxu0 %v871
      %v2069 = vpop.f32.mrb[0].mxu0
      %v2070 = vadd.f32 0.0, %v2069
      %v2071 = vpop.f32.mrb[0].mxu0
      %v2072 = vpop.f32.mrb[0].mxu0
      %v2073 = vadd.f32 0.0, %v2072
      %v2074 = vpop.f32.mrb[0].mxu0
      %2075 = vmatprep.mubr.bf16.mxu0 0
      %2076 = vmatmul.mubr.bf16.gmra.mrb[0].mxu0 %v874
      %v2077 = vpop.f32.mrb[0].mxu0
      %v2078 = vadd.f32 0.0, %v2077
      %v2079 = vpop.f32.mrb[0].mxu0
      %v2080 = vpop.f32.mrb[0].mxu0
      %v2081 = vadd.f32 0.0, %v2080
      %v2082 = vpop.f32.mrb[0].mxu0
      %2083 = vmatprep.mubr.bf16.mxu0 0
      %2084 = vmatmul.mubr.bf16.gmra.mrb[0].mxu0 %v877
      %v2085 = vpop.f32.mrb[0].mxu0
      %v2086 = vadd.f32 0.0, %v2085
      %v2087 = vpop.f32.mrb[0].mxu0
      %v2088 = vpop.f32.mrb[0].mxu0
      %v2089 = vadd.f32 0.0, %v2088
      %v2090 = vpop.f32.mrb[0].mxu0
      %2091 = vmatprep.mubr.bf16.mxu0 0
      %2092 = vmatmul.mubr.bf16.gmra.mrb[0].mxu0 %v880
      %v2093 = vpop.f32.mrb[0].mxu0
      %v2094 = vadd.f32 0.0, %v2093
      %v2095 = vpop.f32.mrb[0].mxu0
      %v2096 = vpop.f32.mrb[0].mxu0
      %v2097 = vadd.f32 0.0, %v2096
      %v2098 = vpop.f32.mrb[0].mxu0
      %2099 = vmatprep.mubr.bf16.mxu0 0
      %2100 = vmatmul.mubr.bf16.gmra.mrb[0].mxu0 %v883
      %v2101 = vpop.f32.mrb[0].mxu0
      %v2102 = vadd.f32 0.0, %v2101
      %v2103 = vpop.f32.mrb[0].mxu0
      %v2104 = vpop.f32.mrb[0].mxu0
      %v2105 = vadd.f32 0.0, %v2104
      %v2106 = vpop.f32.mrb[0].mxu0
      %2107 = vmatprep.mubr.bf16.mxu0 0
      %2108 = vmatmul.mubr.bf16.gmra.mrb[0].mxu0 %v886
      %v2109 = vpop.f32.mrb[0].mxu0
      %v2110 = vadd.f32 0.0, %v2109
      %v2111 = vpop.f32.mrb[0].mxu0
      %v2112 = vpop.f32.mrb[0].mxu0
      %v2113 = vadd.f32 0.0, %v2112
      %v2114 = vpop.f32.mrb[0].mxu0
      %2115 = vmatprep.mubr.bf16.mxu0 0
      %2116 = vmatmul.mubr.bf16.gmra.mrb[0].mxu0 %v889
      %v2117 = vpop.f32.mrb[0].mxu0
      %v2118 = vadd.f32 0.0, %v2117
      %v2119 = vpop.f32.mrb[0].mxu0
      %v2120 = vpop.f32.mrb[0].mxu0
      %v2121 = vadd.f32 0.0, %v2120
      %v2122 = vpop.f32.mrb[0].mxu0
      %2123 = vmatprep.mubr.bf16.mxu0 0
      %2124 = vmatmul.mubr.bf16.gmra.mrb[0].mxu0 %v892
      %v2125 = vpop.f32.mrb[0].mxu0
      %v2126 = vadd.f32 0.0, %v2125
      %v2127 = vpop.f32.mrb[0].mxu0
      %v2128 = vpop.f32.mrb[0].mxu0
      %v2129 = vadd.f32 0.0, %v2128
      %v2130 = vpop.f32.mrb[0].mxu0
      %2131 = vmatprep.mubr.bf16.mxu0 0
      %2132 = vmatmul.mubr.bf16.gmra.mrb[0].mxu0 %v895
      %v2133 = vpop.f32.mrb[0].mxu0
      %v2134 = vadd.f32 0.0, %v2133
      %v2135 = vpop.f32.mrb[0].mxu0
      %v2136 = vpop.f32.mrb[0].mxu0
      %v2137 = vadd.f32 0.0, %v2136
      %v2138 = vpop.f32.mrb[0].mxu0
      %2139 = vmatprep.mubr.bf16.mxu0 0
      %2140 = vmatmul.mubr.bf16.gmra.mrb[0].mxu0 %v898
      %v2141 = vpop.f32.mrb[0].mxu0
      %v2142 = vadd.f32 0.0, %v2141
      %v2143 = vpop.f32.mrb[0].mxu0
      %v2144 = vpop.f32.mrb[0].mxu0
      %v2145 = vadd.f32 0.0, %v2144
      %v2146 = vpop.f32.mrb[0].mxu0
      %2147 = vmatprep.mubr.bf16.mxu0 0
      %2148 = vmatmul.mubr.bf16.gmra.mrb[0].mxu0 %v901
      %v2149 = vpop.f32.mrb[0].mxu0
      %v2150 = vadd.f32 0.0, %v2149
      %v2151 = vpop.f32.mrb[0].mxu0
      %v2152 = vpop.f32.mrb[0].mxu0
      %v2153 = vadd.f32 0.0, %v2152
      %v2154 = vpop.f32.mrb[0].mxu0
      %2155 = vmatprep.mubr.bf16.mxu0 0
      %2156 = vmatmul.mubr.bf16.gmra.mrb[0].mxu0 %v904
      %v2157 = vpop.f32.mrb[0].mxu0
      %v2158 = vadd.f32 0.0, %v2157
      %v2159 = vpop.f32.mrb[0].mxu0
      %v2160 = vpop.f32.mrb[0].mxu0
      %v2161 = vadd.f32 0.0, %v2160
      %v2162 = vpop.f32.mrb[0].mxu0
      %2163 = vmatprep.mubr.bf16.mxu0 0
      %2164 = vmatmul.mubr.bf16.gmra.mrb[0].mxu0 %v907
      %v2165 = vpop.f32.mrb[0].mxu0
      %v2166 = vadd.f32 0.0, %v2165
      %v2167 = vpop.f32.mrb[0].mxu0
      %v2168 = vpop.f32.mrb[0].mxu0
      %v2169 = vadd.f32 0.0, %v2168
      %v2170 = vpop.f32.mrb[0].mxu0
      %2171 = vmatprep.mubr.bf16.mxu0 0
      %2172 = vmatmul.mubr.bf16.gmra.mrb[0].mxu0 %v910
      %v2173 = vpop.f32.mrb[0].mxu0
      %v2174 = vadd.f32 0.0, %v2173
      %v2175 = vpop.f32.mrb[0].mxu0
      %v2176 = vpop.f32.mrb[0].mxu0
      %v2177 = vadd.f32 0.0, %v2176
      %v2178 = vpop.f32.mrb[0].mxu0
      %2179 = vmatprep.mubr.bf16.mxu0 0
      %2180 = vmatmul.mubr.bf16.gmra.mrb[0].mxu0 %v913
      %v2181 = vpop.f32.mrb[0].mxu0
      %v2182 = vadd.f32 0.0, %v2181
      %v2183 = vpop.f32.mrb[0].mxu0
      %v2184 = vpop.f32.mrb[0].mxu0
      %v2185 = vadd.f32 0.0, %v2184
      %v2186 = vpop.f32.mrb[0].mxu0
      %2187 = vmatprep.mubr.bf16.mxu0 0
      %2188 = vmatmul.mubr.bf16.gmra.mrb[0].mxu0 %v916
      %v2189 = vpop.f32.mrb[0].mxu0
      %v2190 = vadd.f32 0.0, %v2189
      %v2191 = vpop.f32.mrb[0].mxu0
      %v2192 = vpop.f32.mrb[0].mxu0
      %v2193 = vadd.f32 0.0, %v2192
      %v2194 = vpop.f32.mrb[0].mxu0
      %2195 = vmatprep.mubr.bf16.mxu0 0
      %2196 = vmatmul.mubr.bf16.gmra.mrb[0].mxu0 %v919
      %v2197 = vpop.f32.mrb[0].mxu0
      %v2198 = vadd.f32 0.0, %v2197
      %v2199 = vpop.f32.mrb[0].mxu0
      %v2200 = vpop.f32.mrb[0].mxu0
      %v2201 = vadd.f32 0.0, %v2200
      %v2202 = vpop.f32.mrb[0].mxu0
      %2203 = vmatprep.mubr.bf16.mxu0 0
      %2204 = vmatmul.mubr.bf16.gmra.mrb[0].mxu0 %v922
      %v2205 = vpop.f32.mrb[0].mxu0
      %v2206 = vadd.f32 0.0, %v2205
      %v2207 = vpop.f32.mrb[0].mxu0
      %v2208 = vpop.f32.mrb[0].mxu0
      %v2209 = vadd.f32 0.0, %v2208
      %v2210 = vpop.f32.mrb[0].mxu0
      %2211 = vmatprep.mubr.bf16.mxu0 0
      %2212 = vmatmul.mubr.bf16.gmra.mrb[0].mxu0 %v925
      %v2213 = vpop.f32.mrb[0].mxu0
      %v2214 = vadd.f32 0.0, %v2213
      %v2215 = vpop.f32.mrb[0].mxu0
      %v2216 = vpop.f32.mrb[0].mxu0
      %v2217 = vadd.f32 0.0, %v2216
      %v2218 = vpop.f32.mrb[0].mxu0
      %2219 = vmatprep.mubr.bf16.mxu0 0
      %2220 = vmatmul.mubr.bf16.gmra.mrb[0].mxu0 %v928
      %v2221 = vpop.f32.mrb[0].mxu0
      %v2222 = vadd.f32 0.0, %v2221
      %v2223 = vpop.f32.mrb[0].mxu0
      %v2224 = vpop.f32.mrb[0].mxu0
      %v2225 = vadd.f32 0.0, %v2224
      %v2226 = vpop.f32.mrb[0].mxu0
      %2227 = vmatprep.mubr.bf16.mxu0 0
      %2228 = vmatmul.mubr.bf16.gmra.mrb[0].mxu0 %v931
      %v2229 = vpop.f32.mrb[0].mxu0
      %v2230 = vadd.f32 0.0, %v2229
      %v2231 = vpop.f32.mrb[0].mxu0
      %v2232 = vpop.f32.mrb[0].mxu0
      %v2233 = vadd.f32 0.0, %v2232
      %v2234 = vpop.f32.mrb[0].mxu0
      %2235 = vmatprep.mubr.bf16.mxu0 0
      %2236 = vmatmul.mubr.bf16.gmra.mrb[0].mxu0 %v934
      %v2237 = vpop.f32.mrb[0].mxu0
      %v2238 = vadd.f32 0.0, %v2237
      %v2239 = vpop.f32.mrb[0].mxu0
      %v2240 = vpop.f32.mrb[0].mxu0
      %v2241 = vadd.f32 0.0, %v2240
      %v2242 = vpop.f32.mrb[0].mxu0
      %2243 = vmatprep.mubr.bf16.mxu0 0
      %2244 = vmatmul.mubr.bf16.gmra.mrb[0].mxu0 %v937
      %v2245 = vpop.f32.mrb[0].mxu0
      %v2246 = vadd.f32 0.0, %v2245
      %v2247 = vpop.f32.mrb[0].mxu0
      %v2248 = vpop.f32.mrb[0].mxu0
      %v2249 = vadd.f32 0.0, %v2248
      %v2250 = vpop.f32.mrb[0].mxu0
      %2251 = vmatprep.mubr.bf16.mxu0 0
      %2252 = vmatmul.mubr.bf16.gmra.mrb[0].mxu0 %v940
      %v2253 = vpop.f32.mrb[0].mxu0
      %v2254 = vadd.f32 0.0, %v2253
      %v2255 = vpop.f32.mrb[0].mxu0
      %v2256 = vpop.f32.mrb[0].mxu0
      %v2257 = vadd.f32 0.0, %v2256
      %v2258 = vpop.f32.mrb[0].mxu0
      %2259 = vmatprep.mubr.bf16.mxu0 0
      %2260 = vmatmul.mubr.bf16.gmra.mrb[0].mxu0 %v943
      %v2261 = vpop.f32.mrb[0].mxu0
      %v2262 = vadd.f32 0.0, %v2261
      %v2263 = vpop.f32.mrb[0].mxu0
      %v2264 = vpop.f32.mrb[0].mxu0
      %v2265 = vadd.f32 0.0, %v2264
      %v2266 = vpop.f32.mrb[0].mxu0
      %2267 = vmatprep.mubr.bf16.mxu0 0
      %2268 = vmatmul.mubr.bf16.gmra.mrb[0].mxu0 %v946
      %v2269 = vpop.f32.mrb[0].mxu0
      %v2270 = vadd.f32 0.0, %v2269
      %v2271 = vpop.f32.mrb[0].mxu0
      %v2272 = vpop.f32.mrb[0].mxu0
      %v2273 = vadd.f32 0.0, %v2272
      %v2274 = vpop.f32.mrb[0].mxu0
      %2275 = vmatprep.mubr.bf16.mxu0 0
      %2276 = vmatmul.mubr.bf16.gmra.mrb[0].mxu0 %v1995
      %v2277 = vpop.f32.mrb[0].mxu0
      %v2278 = vadd.f32 0.0, %v2277
      %v2279 = vpop.f32.mrb[0].mxu0
      %v2280 = vpop.f32.mrb[0].mxu0
      %v2281 = vadd.f32 0.0, %v2280
      %v2282 = vpop.f32.mrb[0].mxu0
      %2283 = vmatprep.mubr.bf16.mxu0 0
      %2284 = vmatmul.mubr.bf16.gmra.mrb[0].mxu0 %v1998
      %v2285 = vpop.f32.mrb[0].mxu0
      %v2286 = vadd.f32 0.0, %v2285
      %v2287 = vpop.f32.mrb[0].mxu0
      %v2288 = vpop.f32.mrb[0].mxu0
      %v2289 = vadd.f32 0.0, %v2288
      %v2290 = vpop.f32.mrb[0].mxu0
      %2291 = vdwg.mxu0
      %v2292 = vadd.f32 %v1907, %v2038
      %v2293 = vadd.f32 %v1908, %v2041
      %v2294 = vadd.f32 %v1909, %v2046
      %v2295 = vadd.f32 %v1910, %v2049
      %v2296 = vadd.f32 %v1911, %v2054
      %v2297 = vadd.f32 %v1912, %v2057
      %v2298 = vadd.f32 %v1913, %v2062
      %v2299 = vadd.f32 %v1914, %v2065
      %v2300 = vadd.f32 %v1915, %v2070
      %v2301 = vadd.f32 %v1916, %v2073
      %v2302 = vadd.f32 %v1917, %v2078
      %v2303 = vadd.f32 %v1918, %v2081
      %v2304 = vadd.f32 %v1919, %v2086
      %v2305 = vadd.f32 %v1920, %v2089
      %v2306 = vadd.f32 %v1921, %v2094
      %v2307 = vadd.f32 %v1922, %v2097
      %v2308 = vadd.f32 %v1923, %v2102
      %v2309 = vadd.f32 %v1924, %v2105
      %v2310 = vadd.f32 %v1925, %v2110
      %v2311 = vadd.f32 %v1926, %v2113
      %v2312 = vadd.f32 %v1927, %v2118
      %v2313 = vadd.f32 %v1928, %v2121
      %v2314 = vadd.f32 %v1929, %v2126
      %v2315 = vadd.f32 %v1930, %v2129
      %v2316 = vadd.f32 %v1931, %v2134
      %v2317 = vadd.f32 %v1932, %v2137
      %v2318 = vadd.f32 %v1933, %v2142
      %v2319 = vadd.f32 %v1934, %v2145
      %v2320 = vadd.f32 %v1935, %v2150
      %v2321 = vadd.f32 %v1936, %v2153
      %v2322 = vadd.f32 %v1937, %v2158
      %v2323 = vadd.f32 %v1938, %v2161
      %v2324 = vadd.f32 %v1939, %v2166
      %v2325 = vadd.f32 %v1940, %v2169
      %v2326 = vadd.f32 %v1941, %v2174
      %v2327 = vadd.f32 %v1942, %v2177
      %v2328 = vadd.f32 %v1943, %v2182
      %v2329 = vadd.f32 %v1944, %v2185
      %v2330 = vadd.f32 %v1945, %v2190
      %v2331 = vadd.f32 %v1946, %v2193
      %v2332 = vadd.f32 %v1947, %v2198
      %v2333 = vadd.f32 %v1948, %v2201
      %v2334 = vadd.f32 %v1949, %v2206
      %v2335 = vadd.f32 %v1950, %v2209
      %v2336 = vadd.f32 %v1951, %v2214
      %v2337 = vadd.f32 %v1952, %v2217
      %v2338 = vadd.f32 %v1953, %v2222
      %v2339 = vadd.f32 %v1954, %v2225
      %v2340 = vadd.f32 %v1955, %v2230
      %v2341 = vadd.f32 %v1956, %v2233
      %v2342 = vadd.f32 %v1957, %v2238
      %v2343 = vadd.f32 %v1958, %v2241
      %v2344 = vadd.f32 %v1959, %v2246
      %v2345 = vadd.f32 %v1960, %v2249
      %v2346 = vadd.f32 %v1961, %v2254
      %v2347 = vadd.f32 %v1962, %v2257
      %v2348 = vadd.f32 %v1963, %v2262
      %v2349 = vadd.f32 %v1964, %v2265
      %v2350 = vadd.f32 %v1965, %v2270
      %v2351 = vadd.f32 %v1966, %v2273
      %v2352 = vadd.f32 %v1967, %v2278
      %v2353 = vadd.f32 %v1968, %v2281
      %v2354 = vadd.f32 %v1969, %v2286
      %v2355 = vadd.f32 %v1970, %v2289
      %v2356 = vld [vmem:[%s3] sm:$0x1]
      %v2358 = vlaneseq
      %v2359 = vshrl.u32 %v2358, 7
      %v2360 = vsub.s32 0, %v2359
      %v2361 = vrot.slane %v2356, %v2360
      %v2363 = vadd.f32 %v2292, %v2361
      %v2364 = vadd.f32 %v2293, %v2361
      %v2365 = vadd.f32 %v2294, %v2361
      %v2366 = vadd.f32 %v2295, %v2361
      %v2367 = vadd.f32 %v2296, %v2361
      %v2368 = vadd.f32 %v2297, %v2361
      %v2369 = vadd.f32 %v2298, %v2361
      %v2370 = vadd.f32 %v2299, %v2361
      %v2371 = vadd.f32 %v2300, %v2361
      %v2372 = vadd.f32 %v2301, %v2361
      %v2373 = vadd.f32 %v2302, %v2361
      %v2374 = vadd.f32 %v2303, %v2361
      %v2375 = vadd.f32 %v2304, %v2361
      %v2376 = vadd.f32 %v2305, %v2361
      %v2377 = vadd.f32 %v2306, %v2361
      %v2378 = vadd.f32 %v2307, %v2361
      %v2379 = vadd.f32 %v2308, %v2361
      %v2380 = vadd.f32 %v2309, %v2361
      %v2381 = vadd.f32 %v2310, %v2361
      %v2382 = vadd.f32 %v2311, %v2361
      %v2383 = vadd.f32 %v2312, %v2361
      %v2384 = vadd.f32 %v2313, %v2361
      %v2385 = vadd.f32 %v2314, %v2361
      %v2386 = vadd.f32 %v2315, %v2361
      %v2387 = vadd.f32 %v2316, %v2361
      %v2388 = vadd.f32 %v2317, %v2361
      %v2389 = vadd.f32 %v2318, %v2361
      %v2390 = vadd.f32 %v2319, %v2361
      %v2391 = vadd.f32 %v2320, %v2361
      %v2392 = vadd.f32 %v2321, %v2361
      %v2393 = vadd.f32 %v2322, %v2361
      %v2394 = vadd.f32 %v2323, %v2361
      %v2395 = vadd.f32 %v2324, %v2361
      %v2396 = vadd.f32 %v2325, %v2361
      %v2397 = vadd.f32 %v2326, %v2361
      %v2398 = vadd.f32 %v2327, %v2361
      %v2399 = vadd.f32 %v2328, %v2361
      %v2400 = vadd.f32 %v2329, %v2361
      %v2401 = vadd.f32 %v2330, %v2361
      %v2402 = vadd.f32 %v2331, %v2361
      %v2403 = vadd.f32 %v2332, %v2361
      %v2404 = vadd.f32 %v2333, %v2361
      %v2405 = vadd.f32 %v2334, %v2361
      %v2406 = vadd.f32 %v2335, %v2361
      %v2407 = vadd.f32 %v2336, %v2361
      %v2408 = vadd.f32 %v2337, %v2361
      %v2409 = vadd.f32 %v2338, %v2361
      %v2410 = vadd.f32 %v2339, %v2361
      %v2411 = vadd.f32 %v2340, %v2361
      %v2412 = vadd.f32 %v2341, %v2361
      %v2413 = vadd.f32 %v2342, %v2361
      %v2414 = vadd.f32 %v2343, %v2361
      %v2415 = vadd.f32 %v2344, %v2361
      %v2416 = vadd.f32 %v2345, %v2361
      %v2417 = vadd.f32 %v2346, %v2361
      %v2418 = vadd.f32 %v2347, %v2361
      %v2419 = vadd.f32 %v2348, %v2361
      %v2420 = vadd.f32 %v2349, %v2361
      %v2421 = vadd.f32 %v2350, %v2361
      %v2422 = vadd.f32 %v2351, %v2361
      %v2423 = vadd.f32 %v2352, %v2361
      %v2424 = vadd.f32 %v2353, %v2361
      %v2425 = vadd.f32 %v2354, %v2361
      %v2426 = vadd.f32 %v2355, %v2361
      %v2427 = vmax.f32 %v2363, 0.0
      %v2428 = vmax.f32 %v2364, 0.0
      %v2429 = vmax.f32 %v2365, 0.0
      %v2430 = vmax.f32 %v2366, 0.0
      %v2431 = vmax.f32 %v2367, 0.0
      %v2432 = vmax.f32 %v2368, 0.0
      %v2433 = vmax.f32 %v2369, 0.0
      %v2434 = vmax.f32 %v2370, 0.0
      %v2435 = vmax.f32 %v2371, 0.0
      %v2436 = vmax.f32 %v2372, 0.0
      %v2437 = vmax.f32 %v2373, 0.0
      %v2438 = vmax.f32 %v2374, 0.0
      %v2439 = vmax.f32 %v2375, 0.0
      %v2440 = vmax.f32 %v2376, 0.0
      %v2441 = vmax.f32 %v2377, 0.0
      %v2442 = vmax.f32 %v2378, 0.0
      %v2443 = vmax.f32 %v2379, 0.0
      %v2444 = vmax.f32 %v2380, 0.0
      %v2445 = vmax.f32 %v2381, 0.0
      %v2446 = vmax.f32 %v2382, 0.0
      %v2447 = vmax.f32 %v2383, 0.0
      %v2448 = vmax.f32 %v2384, 0.0
      %v2449 = vmax.f32 %v2385, 0.0
      %v2450 = vmax.f32 %v2386, 0.0
      %v2451 = vmax.f32 %v2387, 0.0
      %v2452 = vmax.f32 %v2388, 0.0
      %v2453 = vmax.f32 %v2389, 0.0
      %v2454 = vmax.f32 %v2390, 0.0
      %v2455 = vmax.f32 %v2391, 0.0
      %v2456 = vmax.f32 %v2392, 0.0
      %v2457 = vmax.f32 %v2393, 0.0
      %v2458 = vmax.f32 %v2394, 0.0
      %v2459 = vmax.f32 %v2395, 0.0
      %v2460 = vmax.f32 %v2396, 0.0
      %v2461 = vmax.f32 %v2397, 0.0
      %v2462 = vmax.f32 %v2398, 0.0
      %v2463 = vmax.f32 %v2399, 0.0
      %v2464 = vmax.f32 %v2400, 0.0
      %v2465 = vmax.f32 %v2401, 0.0
      %v2466 = vmax.f32 %v2402, 0.0
      %v2467 = vmax.f32 %v2403, 0.0
      %v2468 = vmax.f32 %v2404, 0.0
      %v2469 = vmax.f32 %v2405, 0.0
      %v2470 = vmax.f32 %v2406, 0.0
      %v2471 = vmax.f32 %v2407, 0.0
      %v2472 = vmax.f32 %v2408, 0.0
      %v2473 = vmax.f32 %v2409, 0.0
      %v2474 = vmax.f32 %v2410, 0.0
      %v2475 = vmax.f32 %v2411, 0.0
      %v2476 = vmax.f32 %v2412, 0.0
      %v2477 = vmax.f32 %v2413, 0.0
      %v2478 = vmax.f32 %v2414, 0.0
      %v2479 = vmax.f32 %v2415, 0.0
      %v2480 = vmax.f32 %v2416, 0.0
      %v2481 = vmax.f32 %v2417, 0.0
      %v2482 = vmax.f32 %v2418, 0.0
      %v2483 = vmax.f32 %v2419, 0.0
      %v2484 = vmax.f32 %v2420, 0.0
      %v2485 = vmax.f32 %v2421, 0.0
      %v2486 = vmax.f32 %v2422, 0.0
      %v2487 = vmax.f32 %v2423, 0.0
      %v2488 = vmax.f32 %v2424, 0.0
      %v2489 = vmax.f32 %v2425, 0.0
      %v2490 = vmax.f32 %v2426, 0.0
      %v2491 = vlaneseq
      %v2492 = vshrl.u32 %v2491, 7
      %v2493 = vadd.s32 %v2492, 8
      %v2494 = vadd.s32 %v2492, 16
      %v2495 = vadd.s32 %v2492, 24
      %v2496 = vadd.s32 %v2492, 32
      %v2497 = vadd.s32 %v2492, 40
      %v2498 = vadd.s32 %v2492, 48
      %v2499 = vadd.s32 %v2492, 56
      %v2500 = vadd.s32 %v2492, 64
      %v2501 = vadd.s32 %v2492, 72
      %v2502 = vadd.s32 %v2492, 80
      %v2503 = vadd.s32 %v2492, 88
      %v2504 = vadd.s32 %v2492, 96
      %v2505 = vadd.s32 %v2492, 104
      %v2506 = vadd.s32 %v2492, 112
      %v2507 = vadd.s32 %v2492, 120
      %v2508 = vadd.s32 %v2492, 128
      %v2509 = vadd.s32 %v2492, 136
      %v2510 = vadd.s32 %v2492, 144
      %v2511 = vadd.s32 %v2492, 152
      %v2512 = vadd.s32 %v2492, 160
      %v2513 = vadd.s32 %v2492, 168
      %v2514 = vadd.s32 %v2492, 176
      %v2515 = vadd.s32 %v2492, 184
      %v2516 = vadd.s32 %v2492, 192
      %v2517 = vadd.s32 %v2492, 200
      %v2518 = vadd.s32 %v2492, 208
      %v2519 = vadd.s32 %v2492, 216
      %v2520 = vadd.s32 %v2492, 224
      %v2521 = vadd.s32 %v2492, 232
      %v2522 = vadd.s32 %v2492, 240
      %v2523 = vadd.s32 %v2492, 248
      %v2524 = vadd.s32 %v2492, 256
      %v2525 = vadd.s32 %v2492, 264
      %v2526 = vadd.s32 %v2492, 272
      %v2527 = vadd.s32 %v2492, 280
      %v2528 = vadd.s32 %v2492, 288
      %v2529 = vadd.s32 %v2492, 296
      %v2530 = vadd.s32 %v2492, 304
      %v2531 = vadd.s32 %v2492, 312
      %v2532 = vadd.s32 %v2492, 320
      %v2533 = vadd.s32 %v2492, 328
      %v2534 = vadd.s32 %v2492, 336
      %v2535 = vadd.s32 %v2492, 344
      %v2536 = vadd.s32 %v2492, 352
      %v2537 = vadd.s32 %v2492, 360
      %v2538 = vadd.s32 %v2492, 368
      %v2539 = vadd.s32 %v2492, 376
      %v2540 = vadd.s32 %v2492, 384
      %v2541 = vadd.s32 %v2492, 392
      %v2542 = vadd.s32 %v2492, 400
      %v2543 = vadd.s32 %v2492, 408
      %v2544 = vadd.s32 %v2492, 416
      %v2545 = vadd.s32 %v2492, 424
      %v2546 = vadd.s32 %v2492, 432
      %v2547 = vadd.s32 %v2492, 440
      %v2548 = vadd.s32 %v2492, 448
      %v2549 = vadd.s32 %v2492, 456
      %v2550 = vadd.s32 %v2492, 464
      %v2551 = vadd.s32 %v2492, 472
      %v2552 = vadd.s32 %v2492, 480
      %v2553 = vadd.s32 %v2492, 488
      %v2554 = vadd.s32 %v2492, 496
      %v2555 = vadd.s32 %v2492, 504
      %vm2556 = vcmp.lt.s32.totalorder %v2492, 0
      %v2557 = vsub.s32 0, %v2492
      %v2558 = vsel %vm2556, %v2557, %v2492
      %v2559 = vshrl.u32 %v2558, 5
      %v2560 = vand.u32 %v2558, 31
      %v2561 = vsub.s32 0, %v2560
      %v2562 = vsel %vm2556, %v2561, %v2560
      %vm2563 = vcmp.lt.s32.totalorder %v2493, 0
      %v2564 = vsub.s32 0, %v2493
      %v2565 = vsel %vm2563, %v2564, %v2493
      %v2566 = vshrl.u32 %v2565, 5
      %v2567 = vand.u32 %v2565, 31
      %v2568 = vsub.s32 0, %v2567
      %v2569 = vsel %vm2563, %v2568, %v2567
      %vm2570 = vcmp.lt.s32.totalorder %v2494, 0
      %v2571 = vsub.s32 0, %v2494
      %v2572 = vsel %vm2570, %v2571, %v2494
      %v2573 = vshrl.u32 %v2572, 5
      %v2574 = vand.u32 %v2572, 31
      %v2575 = vsub.s32 0, %v2574
      %v2576 = vsel %vm2570, %v2575, %v2574
      %vm2577 = vcmp.lt.s32.totalorder %v2495, 0
      %v2578 = vsub.s32 0, %v2495
      %v2579 = vsel %vm2577, %v2578, %v2495
      %v2580 = vshrl.u32 %v2579, 5
      %v2581 = vand.u32 %v2579, 31
      %v2582 = vsub.s32 0, %v2581
      %v2583 = vsel %vm2577, %v2582, %v2581
      %vm2584 = vcmp.lt.s32.totalorder %v2496, 0
      %v2585 = vsub.s32 0, %v2496
      %v2586 = vsel %vm2584, %v2585, %v2496
      %v2587 = vshrl.u32 %v2586, 5
      %v2588 = vand.u32 %v2586, 31
      %v2589 = vsub.s32 0, %v2588
      %v2590 = vsel %vm2584, %v2589, %v2588
      %vm2591 = vcmp.lt.s32.totalorder %v2497, 0
      %v2592 = vsub.s32 0, %v2497
      %v2593 = vsel %vm2591, %v2592, %v2497
      %v2594 = vshrl.u32 %v2593, 5
      %v2595 = vand.u32 %v2593, 31
      %v2596 = vsub.s32 0, %v2595
      %v2597 = vsel %vm2591, %v2596, %v2595
      %vm2598 = vcmp.lt.s32.totalorder %v2498, 0
      %v2599 = vsub.s32 0, %v2498
      %v2600 = vsel %vm2598, %v2599, %v2498
      %v2601 = vshrl.u32 %v2600, 5
      %v2602 = vand.u32 %v2600, 31
      %v2603 = vsub.s32 0, %v2602
      %v2604 = vsel %vm2598, %v2603, %v2602
      %vm2605 = vcmp.lt.s32.totalorder %v2499, 0
      %v2606 = vsub.s32 0, %v2499
      %v2607 = vsel %vm2605, %v2606, %v2499
      %v2608 = vshrl.u32 %v2607, 5
      %v2609 = vand.u32 %v2607, 31
      %v2610 = vsub.s32 0, %v2609
      %v2611 = vsel %vm2605, %v2610, %v2609
      %vm2612 = vcmp.lt.s32.totalorder %v2500, 0
      %v2613 = vsub.s32 0, %v2500
      %v2614 = vsel %vm2612, %v2613, %v2500
      %v2615 = vshrl.u32 %v2614, 5
      %v2616 = vand.u32 %v2614, 31
      %v2617 = vsub.s32 0, %v2616
      %v2618 = vsel %vm2612, %v2617, %v2616
      %vm2619 = vcmp.lt.s32.totalorder %v2501, 0
      %v2620 = vsub.s32 0, %v2501
      %v2621 = vsel %vm2619, %v2620, %v2501
      %v2622 = vshrl.u32 %v2621, 5
      %v2623 = vand.u32 %v2621, 31
      %v2624 = vsub.s32 0, %v2623
      %v2625 = vsel %vm2619, %v2624, %v2623
      %vm2626 = vcmp.lt.s32.totalorder %v2502, 0
      %v2627 = vsub.s32 0, %v2502
      %v2628 = vsel %vm2626, %v2627, %v2502
      %v2629 = vshrl.u32 %v2628, 5
      %v2630 = vand.u32 %v2628, 31
      %v2631 = vsub.s32 0, %v2630
      %v2632 = vsel %vm2626, %v2631, %v2630
      %vm2633 = vcmp.lt.s32.totalorder %v2503, 0
      %v2634 = vsub.s32 0, %v2503
      %v2635 = vsel %vm2633, %v2634, %v2503
      %v2636 = vshrl.u32 %v2635, 5
      %v2637 = vand.u32 %v2635, 31
      %v2638 = vsub.s32 0, %v2637
      %v2639 = vsel %vm2633, %v2638, %v2637
      %vm2640 = vcmp.lt.s32.totalorder %v2504, 0
      %v2641 = vsub.s32 0, %v2504
      %v2642 = vsel %vm2640, %v2641, %v2504
      %v2643 = vshrl.u32 %v2642, 5
      %v2644 = vand.u32 %v2642, 31
      %v2645 = vsub.s32 0, %v2644
      %v2646 = vsel %vm2640, %v2645, %v2644
      %vm2647 = vcmp.lt.s32.totalorder %v2505, 0
      %v2648 = vsub.s32 0, %v2505
      %v2649 = vsel %vm2647, %v2648, %v2505
      %v2650 = vshrl.u32 %v2649, 5
      %v2651 = vand.u32 %v2649, 31
      %v2652 = vsub.s32 0, %v2651
      %v2653 = vsel %vm2647, %v2652, %v2651
      %vm2654 = vcmp.lt.s32.totalorder %v2506, 0
      %v2655 = vsub.s32 0, %v2506
      %v2656 = vsel %vm2654, %v2655, %v2506
      %v2657 = vshrl.u32 %v2656, 5
      %v2658 = vand.u32 %v2656, 31
      %v2659 = vsub.s32 0, %v2658
      %v2660 = vsel %vm2654, %v2659, %v2658
      %vm2661 = vcmp.lt.s32.totalorder %v2507, 0
      %v2662 = vsub.s32 0, %v2507
      %v2663 = vsel %vm2661, %v2662, %v2507
      %v2664 = vshrl.u32 %v2663, 5
      %v2665 = vand.u32 %v2663, 31
      %v2666 = vsub.s32 0, %v2665
      %v2667 = vsel %vm2661, %v2666, %v2665
      %vm2668 = vcmp.lt.s32.totalorder %v2508, 0
      %v2669 = vsub.s32 0, %v2508
      %v2670 = vsel %vm2668, %v2669, %v2508
      %v2671 = vshrl.u32 %v2670, 5
      %v2672 = vand.u32 %v2670, 31
      %v2673 = vsub.s32 0, %v2672
      %v2674 = vsel %vm2668, %v2673, %v2672
      %vm2675 = vcmp.lt.s32.totalorder %v2509, 0
      %v2676 = vsub.s32 0, %v2509
      %v2677 = vsel %vm2675, %v2676, %v2509
      %v2678 = vshrl.u32 %v2677, 5
      %v2679 = vand.u32 %v2677, 31
      %v2680 = vsub.s32 0, %v2679
      %v2681 = vsel %vm2675, %v2680, %v2679
      %vm2682 = vcmp.lt.s32.totalorder %v2510, 0
      %v2683 = vsub.s32 0, %v2510
      %v2684 = vsel %vm2682, %v2683, %v2510
      %v2685 = vshrl.u32 %v2684, 5
      %v2686 = vand.u32 %v2684, 31
      %v2687 = vsub.s32 0, %v2686
      %v2688 = vsel %vm2682, %v2687, %v2686
      %vm2689 = vcmp.lt.s32.totalorder %v2511, 0
      %v2690 = vsub.s32 0, %v2511
      %v2691 = vsel %vm2689, %v2690, %v2511
      %v2692 = vshrl.u32 %v2691, 5
      %v2693 = vand.u32 %v2691, 31
      %v2694 = vsub.s32 0, %v2693
      %v2695 = vsel %vm2689, %v2694, %v2693
      %vm2696 = vcmp.lt.s32.totalorder %v2512, 0
      %v2697 = vsub.s32 0, %v2512
      %v2698 = vsel %vm2696, %v2697, %v2512
      %v2699 = vshrl.u32 %v2698, 5
      %v2700 = vand.u32 %v2698, 31
      %v2701 = vsub.s32 0, %v2700
      %v2702 = vsel %vm2696, %v2701, %v2700
      %vm2703 = vcmp.lt.s32.totalorder %v2513, 0
      %v2704 = vsub.s32 0, %v2513
      %v2705 = vsel %vm2703, %v2704, %v2513
      %v2706 = vshrl.u32 %v2705, 5
      %v2707 = vand.u32 %v2705, 31
      %v2708 = vsub.s32 0, %v2707
      %v2709 = vsel %vm2703, %v2708, %v2707
      %vm2710 = vcmp.lt.s32.totalorder %v2514, 0
      %v2711 = vsub.s32 0, %v2514
      %v2712 = vsel %vm2710, %v2711, %v2514
      %v2713 = vshrl.u32 %v2712, 5
      %v2714 = vand.u32 %v2712, 31
      %v2715 = vsub.s32 0, %v2714
      %v2716 = vsel %vm2710, %v2715, %v2714
      %vm2717 = vcmp.lt.s32.totalorder %v2515, 0
      %v2718 = vsub.s32 0, %v2515
      %v2719 = vsel %vm2717, %v2718, %v2515
      %v2720 = vshrl.u32 %v2719, 5
      %v2721 = vand.u32 %v2719, 31
      %v2722 = vsub.s32 0, %v2721
      %v2723 = vsel %vm2717, %v2722, %v2721
      %vm2724 = vcmp.lt.s32.totalorder %v2516, 0
      %v2725 = vsub.s32 0, %v2516
      %v2726 = vsel %vm2724, %v2725, %v2516
      %v2727 = vshrl.u32 %v2726, 5
      %v2728 = vand.u32 %v2726, 31
      %v2729 = vsub.s32 0, %v2728
      %v2730 = vsel %vm2724, %v2729, %v2728
      %vm2731 = vcmp.lt.s32.totalorder %v2517, 0
      %v2732 = vsub.s32 0, %v2517
      %v2733 = vsel %vm2731, %v2732, %v2517
      %v2734 = vshrl.u32 %v2733, 5
      %v2735 = vand.u32 %v2733, 31
      %v2736 = vsub.s32 0, %v2735
      %v2737 = vsel %vm2731, %v2736, %v2735
      %vm2738 = vcmp.lt.s32.totalorder %v2518, 0
      %v2739 = vsub.s32 0, %v2518
      %v2740 = vsel %vm2738, %v2739, %v2518
      %v2741 = vshrl.u32 %v2740, 5
      %v2742 = vand.u32 %v2740, 31
      %v2743 = vsub.s32 0, %v2742
      %v2744 = vsel %vm2738, %v2743, %v2742
      %vm2745 = vcmp.lt.s32.totalorder %v2519, 0
      %v2746 = vsub.s32 0, %v2519
      %v2747 = vsel %vm2745, %v2746, %v2519
      %v2748 = vshrl.u32 %v2747, 5
      %v2749 = vand.u32 %v2747, 31
      %v2750 = vsub.s32 0, %v2749
      %v2751 = vsel %vm2745, %v2750, %v2749
      %vm2752 = vcmp.lt.s32.totalorder %v2520, 0
      %v2753 = vsub.s32 0, %v2520
      %v2754 = vsel %vm2752, %v2753, %v2520
      %v2755 = vshrl.u32 %v2754, 5
      %v2756 = vand.u32 %v2754, 31
      %v2757 = vsub.s32 0, %v2756
      %v2758 = vsel %vm2752, %v2757, %v2756
      %vm2759 = vcmp.lt.s32.totalorder %v2521, 0
      %v2760 = vsub.s32 0, %v2521
      %v2761 = vsel %vm2759, %v2760, %v2521
      %v2762 = vshrl.u32 %v2761, 5
      %v2763 = vand.u32 %v2761, 31
      %v2764 = vsub.s32 0, %v2763
      %v2765 = vsel %vm2759, %v2764, %v2763
      %vm2766 = vcmp.lt.s32.totalorder %v2522, 0
      %v2767 = vsub.s32 0, %v2522
      %v2768 = vsel %vm2766, %v2767, %v2522
      %v2769 = vshrl.u32 %v2768, 5
      %v2770 = vand.u32 %v2768, 31
      %v2771 = vsub.s32 0, %v2770
      %v2772 = vsel %vm2766, %v2771, %v2770
      %vm2773 = vcmp.lt.s32.totalorder %v2523, 0
      %v2774 = vsub.s32 0, %v2523
      %v2775 = vsel %vm2773, %v2774, %v2523
      %v2776 = vshrl.u32 %v2775, 5
      %v2777 = vand.u32 %v2775, 31
      %v2778 = vsub.s32 0, %v2777
      %v2779 = vsel %vm2773, %v2778, %v2777
      %vm2780 = vcmp.lt.s32.totalorder %v2524, 0
      %v2781 = vsub.s32 0, %v2524
      %v2782 = vsel %vm2780, %v2781, %v2524
      %v2783 = vshrl.u32 %v2782, 5
      %v2784 = vand.u32 %v2782, 31
      %v2785 = vsub.s32 0, %v2784
      %v2786 = vsel %vm2780, %v2785, %v2784
      %vm2787 = vcmp.lt.s32.totalorder %v2525, 0
      %v2788 = vsub.s32 0, %v2525
      %v2789 = vsel %vm2787, %v2788, %v2525
      %v2790 = vshrl.u32 %v2789, 5
      %v2791 = vand.u32 %v2789, 31
      %v2792 = vsub.s32 0, %v2791
      %v2793 = vsel %vm2787, %v2792, %v2791
      %vm2794 = vcmp.lt.s32.totalorder %v2526, 0
      %v2795 = vsub.s32 0, %v2526
      %v2796 = vsel %vm2794, %v2795, %v2526
      %v2797 = vshrl.u32 %v2796, 5
      %v2798 = vand.u32 %v2796, 31
      %v2799 = vsub.s32 0, %v2798
      %v2800 = vsel %vm2794, %v2799, %v2798
      %vm2801 = vcmp.lt.s32.totalorder %v2527, 0
      %v2802 = vsub.s32 0, %v2527
      %v2803 = vsel %vm2801, %v2802, %v2527
      %v2804 = vshrl.u32 %v2803, 5
      %v2805 = vand.u32 %v2803, 31
      %v2806 = vsub.s32 0, %v2805
      %v2807 = vsel %vm2801, %v2806, %v2805
      %vm2808 = vcmp.lt.s32.totalorder %v2528, 0
      %v2809 = vsub.s32 0, %v2528
      %v2810 = vsel %vm2808, %v2809, %v2528
      %v2811 = vshrl.u32 %v2810, 5
      %v2812 = vand.u32 %v2810, 31
      %v2813 = vsub.s32 0, %v2812
      %v2814 = vsel %vm2808, %v2813, %v2812
      %vm2815 = vcmp.lt.s32.totalorder %v2529, 0
      %v2816 = vsub.s32 0, %v2529
      %v2817 = vsel %vm2815, %v2816, %v2529
      %v2818 = vshrl.u32 %v2817, 5
      %v2819 = vand.u32 %v2817, 31
      %v2820 = vsub.s32 0, %v2819
      %v2821 = vsel %vm2815, %v2820, %v2819
      %vm2822 = vcmp.lt.s32.totalorder %v2530, 0
      %v2823 = vsub.s32 0, %v2530
      %v2824 = vsel %vm2822, %v2823, %v2530
      %v2825 = vshrl.u32 %v2824, 5
      %v2826 = vand.u32 %v2824, 31
      %v2827 = vsub.s32 0, %v2826
      %v2828 = vsel %vm2822, %v2827, %v2826
      %vm2829 = vcmp.lt.s32.totalorder %v2531, 0
      %v2830 = vsub.s32 0, %v2531
      %v2831 = vsel %vm2829, %v2830, %v2531
      %v2832 = vshrl.u32 %v2831, 5
      %v2833 = vand.u32 %v2831, 31
      %v2834 = vsub.s32 0, %v2833
      %v2835 = vsel %vm2829, %v2834, %v2833
      %vm2836 = vcmp.lt.s32.totalorder %v2532, 0
      %v2837 = vsub.s32 0, %v2532
      %v2838 = vsel %vm2836, %v2837, %v2532
      %v2839 = vshrl.u32 %v2838, 5
      %v2840 = vand.u32 %v2838, 31
      %v2841 = vsub.s32 0, %v2840
      %v2842 = vsel %vm2836, %v2841, %v2840
      %vm2843 = vcmp.lt.s32.totalorder %v2533, 0
      %v2844 = vsub.s32 0, %v2533
      %v2845 = vsel %vm2843, %v2844, %v2533
      %v2846 = vshrl.u32 %v2845, 5
      %v2847 = vand.u32 %v2845, 31
      %v2848 = vsub.s32 0, %v2847
      %v2849 = vsel %vm2843, %v2848, %v2847
      %vm2850 = vcmp.lt.s32.totalorder %v2534, 0
      %v2851 = vsub.s32 0, %v2534
      %v2852 = vsel %vm2850, %v2851, %v2534
      %v2853 = vshrl.u32 %v2852, 5
      %v2854 = vand.u32 %v2852, 31
      %v2855 = vsub.s32 0, %v2854
      %v2856 = vsel %vm2850, %v2855, %v2854
      %vm2857 = vcmp.lt.s32.totalorder %v2535, 0
      %v2858 = vsub.s32 0, %v2535
      %v2859 = vsel %vm2857, %v2858, %v2535
      %v2860 = vshrl.u32 %v2859, 5
      %v2861 = vand.u32 %v2859, 31
      %v2862 = vsub.s32 0, %v2861
      %v2863 = vsel %vm2857, %v2862, %v2861
      %vm2864 = vcmp.lt.s32.totalorder %v2536, 0
      %v2865 = vsub.s32 0, %v2536
      %v2866 = vsel %vm2864, %v2865, %v2536
      %v2867 = vshrl.u32 %v2866, 5
      %v2868 = vand.u32 %v2866, 31
      %v2869 = vsub.s32 0, %v2868
      %v2870 = vsel %vm2864, %v2869, %v2868
      %vm2871 = vcmp.lt.s32.totalorder %v2537, 0
      %v2872 = vsub.s32 0, %v2537
      %v2873 = vsel %vm2871, %v2872, %v2537
      %v2874 = vshrl.u32 %v2873, 5
      %v2875 = vand.u32 %v2873, 31
      %v2876 = vsub.s32 0, %v2875
      %v2877 = vsel %vm2871, %v2876, %v2875
      %vm2878 = vcmp.lt.s32.totalorder %v2538, 0
      %v2879 = vsub.s32 0, %v2538
      %v2880 = vsel %vm2878, %v2879, %v2538
      %v2881 = vshrl.u32 %v2880, 5
      %v2882 = vand.u32 %v2880, 31
      %v2883 = vsub.s32 0, %v2882
      %v2884 = vsel %vm2878, %v2883, %v2882
      %vm2885 = vcmp.lt.s32.totalorder %v2539, 0
      %v2886 = vsub.s32 0, %v2539
      %v2887 = vsel %vm2885, %v2886, %v2539
      %v2888 = vshrl.u32 %v2887, 5
      %v2889 = vand.u32 %v2887, 31
      %v2890 = vsub.s32 0, %v2889
      %v2891 = vsel %vm2885, %v2890, %v2889
      %vm2892 = vcmp.lt.s32.totalorder %v2540, 0
      %v2893 = vsub.s32 0, %v2540
      %v2894 = vsel %vm2892, %v2893, %v2540
      %v2895 = vshrl.u32 %v2894, 5
      %v2896 = vand.u32 %v2894, 31
      %v2897 = vsub.s32 0, %v2896
      %v2898 = vsel %vm2892, %v2897, %v2896
      %vm2899 = vcmp.lt.s32.totalorder %v2541, 0
      %v2900 = vsub.s32 0, %v2541
      %v2901 = vsel %vm2899, %v2900, %v2541
      %v2902 = vshrl.u32 %v2901, 5
      %v2903 = vand.u32 %v2901, 31
      %v2904 = vsub.s32 0, %v2903
      %v2905 = vsel %vm2899, %v2904, %v2903
      %vm2906 = vcmp.lt.s32.totalorder %v2542, 0
      %v2907 = vsub.s32 0, %v2542
      %v2908 = vsel %vm2906, %v2907, %v2542
      %v2909 = vshrl.u32 %v2908, 5
      %v2910 = vand.u32 %v2908, 31
      %v2911 = vsub.s32 0, %v2910
      %v2912 = vsel %vm2906, %v2911, %v2910
      %vm2913 = vcmp.lt.s32.totalorder %v2543, 0
      %v2914 = vsub.s32 0, %v2543
      %v2915 = vsel %vm2913, %v2914, %v2543
      %v2916 = vshrl.u32 %v2915, 5
      %v2917 = vand.u32 %v2915, 31
      %v2918 = vsub.s32 0, %v2917
      %v2919 = vsel %vm2913, %v2918, %v2917
      %vm2920 = vcmp.lt.s32.totalorder %v2544, 0
      %v2921 = vsub.s32 0, %v2544
      %v2922 = vsel %vm2920, %v2921, %v2544
      %v2923 = vshrl.u32 %v2922, 5
      %v2924 = vand.u32 %v2922, 31
      %v2925 = vsub.s32 0, %v2924
      %v2926 = vsel %vm2920, %v2925, %v2924
      %vm2927 = vcmp.lt.s32.totalorder %v2545, 0
      %v2928 = vsub.s32 0, %v2545
      %v2929 = vsel %vm2927, %v2928, %v2545
      %v2930 = vshrl.u32 %v2929, 5
      %v2931 = vand.u32 %v2929, 31
      %v2932 = vsub.s32 0, %v2931
      %v2933 = vsel %vm2927, %v2932, %v2931
      %vm2934 = vcmp.lt.s32.totalorder %v2546, 0
      %v2935 = vsub.s32 0, %v2546
      %v2936 = vsel %vm2934, %v2935, %v2546
      %v2937 = vshrl.u32 %v2936, 5
      %v2938 = vand.u32 %v2936, 31
      %v2939 = vsub.s32 0, %v2938
      %v2940 = vsel %vm2934, %v2939, %v2938
      %vm2941 = vcmp.lt.s32.totalorder %v2547, 0
      %v2942 = vsub.s32 0, %v2547
      %v2943 = vsel %vm2941, %v2942, %v2547
      %v2944 = vshrl.u32 %v2943, 5
      %v2945 = vand.u32 %v2943, 31
      %v2946 = vsub.s32 0, %v2945
      %v2947 = vsel %vm2941, %v2946, %v2945
      %vm2948 = vcmp.lt.s32.totalorder %v2548, 0
      %v2949 = vsub.s32 0, %v2548
      %v2950 = vsel %vm2948, %v2949, %v2548
      %v2951 = vshrl.u32 %v2950, 5
      %v2952 = vand.u32 %v2950, 31
      %v2953 = vsub.s32 0, %v2952
      %v2954 = vsel %vm2948, %v2953, %v2952
      %vm2955 = vcmp.lt.s32.totalorder %v2549, 0
      %v2956 = vsub.s32 0, %v2549
      %v2957 = vsel %vm2955, %v2956, %v2549
      %v2958 = vshrl.u32 %v2957, 5
      %v2959 = vand.u32 %v2957, 31
      %v2960 = vsub.s32 0, %v2959
      %v2961 = vsel %vm2955, %v2960, %v2959
      %vm2962 = vcmp.lt.s32.totalorder %v2550, 0
      %v2963 = vsub.s32 0, %v2550
      %v2964 = vsel %vm2962, %v2963, %v2550
      %v2965 = vshrl.u32 %v2964, 5
      %v2966 = vand.u32 %v2964, 31
      %v2967 = vsub.s32 0, %v2966
      %v2968 = vsel %vm2962, %v2967, %v2966
      %vm2969 = vcmp.lt.s32.totalorder %v2551, 0
      %v2970 = vsub.s32 0, %v2551
      %v2971 = vsel %vm2969, %v2970, %v2551
      %v2972 = vshrl.u32 %v2971, 5
      %v2973 = vand.u32 %v2971, 31
      %v2974 = vsub.s32 0, %v2973
      %v2975 = vsel %vm2969, %v2974, %v2973
      %vm2976 = vcmp.lt.s32.totalorder %v2552, 0
      %v2977 = vsub.s32 0, %v2552
      %v2978 = vsel %vm2976, %v2977, %v2552
      %v2979 = vshrl.u32 %v2978, 5
      %v2980 = vand.u32 %v2978, 31
      %v2981 = vsub.s32 0, %v2980
      %v2982 = vsel %vm2976, %v2981, %v2980
      %vm2983 = vcmp.lt.s32.totalorder %v2553, 0
      %v2984 = vsub.s32 0, %v2553
      %v2985 = vsel %vm2983, %v2984, %v2553
      %v2986 = vshrl.u32 %v2985, 5
      %v2987 = vand.u32 %v2985, 31
      %v2988 = vsub.s32 0, %v2987
      %v2989 = vsel %vm2983, %v2988, %v2987
      %vm2990 = vcmp.lt.s32.totalorder %v2554, 0
      %v2991 = vsub.s32 0, %v2554
      %v2992 = vsel %vm2990, %v2991, %v2554
      %v2993 = vshrl.u32 %v2992, 5
      %v2994 = vand.u32 %v2992, 31
      %v2995 = vsub.s32 0, %v2994
      %v2996 = vsel %vm2990, %v2995, %v2994
      %vm2997 = vcmp.lt.s32.totalorder %v2555, 0
      %v2998 = vsub.s32 0, %v2555
      %v2999 = vsel %vm2997, %v2998, %v2555
      %v3000 = vshrl.u32 %v2999, 5
      %v3001 = vand.u32 %v2999, 31
      %v3002 = vsub.s32 0, %v3001
      %v3003 = vsel %vm2997, %v3002, %v3001
      %vm3004 = vcmp.ne.s32.totalorder %v2562, 0
      %vm3005 = vcmp.ne.s32.totalorder %v2569, 0
      %vm3006 = vcmp.ne.s32.totalorder %v2576, 0
      %vm3007 = vcmp.ne.s32.totalorder %v2583, 0
      %vm3008 = vcmp.ne.s32.totalorder %v2590, 0
      %vm3009 = vcmp.ne.s32.totalorder %v2597, 0
      %vm3010 = vcmp.ne.s32.totalorder %v2604, 0
      %vm3011 = vcmp.ne.s32.totalorder %v2611, 0
      %vm3012 = vcmp.ne.s32.totalorder %v2618, 0
      %vm3013 = vcmp.ne.s32.totalorder %v2625, 0
      %vm3014 = vcmp.ne.s32.totalorder %v2632, 0
      %vm3015 = vcmp.ne.s32.totalorder %v2639, 0
      %vm3016 = vcmp.ne.s32.totalorder %v2646, 0
      %vm3017 = vcmp.ne.s32.totalorder %v2653, 0
      %vm3018 = vcmp.ne.s32.totalorder %v2660, 0
      %vm3019 = vcmp.ne.s32.totalorder %v2667, 0
      %vm3020 = vcmp.ne.s32.totalorder %v2674, 0
      %vm3021 = vcmp.ne.s32.totalorder %v2681, 0
      %vm3022 = vcmp.ne.s32.totalorder %v2688, 0
      %vm3023 = vcmp.ne.s32.totalorder %v2695, 0
      %vm3024 = vcmp.ne.s32.totalorder %v2702, 0
      %vm3025 = vcmp.ne.s32.totalorder %v2709, 0
      %vm3026 = vcmp.ne.s32.totalorder %v2716, 0
      %vm3027 = vcmp.ne.s32.totalorder %v2723, 0
      %vm3028 = vcmp.ne.s32.totalorder %v2730, 0
      %vm3029 = vcmp.ne.s32.totalorder %v2737, 0
      %vm3030 = vcmp.ne.s32.totalorder %v2744, 0
      %vm3031 = vcmp.ne.s32.totalorder %v2751, 0
      %vm3032 = vcmp.ne.s32.totalorder %v2758, 0
      %vm3033 = vcmp.ne.s32.totalorder %v2765, 0
      %vm3034 = vcmp.ne.s32.totalorder %v2772, 0
      %vm3035 = vcmp.ne.s32.totalorder %v2779, 0
      %vm3036 = vcmp.ne.s32.totalorder %v2786, 0
      %vm3037 = vcmp.ne.s32.totalorder %v2793, 0
      %vm3038 = vcmp.ne.s32.totalorder %v2800, 0
      %vm3039 = vcmp.ne.s32.totalorder %v2807, 0
      %vm3040 = vcmp.ne.s32.totalorder %v2814, 0
      %vm3041 = vcmp.ne.s32.totalorder %v2821, 0
      %vm3042 = vcmp.ne.s32.totalorder %v2828, 0
      %vm3043 = vcmp.ne.s32.totalorder %v2835, 0
      %vm3044 = vcmp.ne.s32.totalorder %v2842, 0
      %vm3045 = vcmp.ne.s32.totalorder %v2849, 0
      %vm3046 = vcmp.ne.s32.totalorder %v2856, 0
      %vm3047 = vcmp.ne.s32.totalorder %v2863, 0
      %vm3048 = vcmp.ne.s32.totalorder %v2870, 0
      %vm3049 = vcmp.ne.s32.totalorder %v2877, 0
      %vm3050 = vcmp.ne.s32.totalorder %v2884, 0
      %vm3051 = vcmp.ne.s32.totalorder %v2891, 0
      %vm3052 = vcmp.ne.s32.totalorder %v2898, 0
      %vm3053 = vcmp.ne.s32.totalorder %v2905, 0
      %vm3054 = vcmp.ne.s32.totalorder %v2912, 0
      %vm3055 = vcmp.ne.s32.totalorder %v2919, 0
      %vm3056 = vcmp.ne.s32.totalorder %v2926, 0
      %vm3057 = vcmp.ne.s32.totalorder %v2933, 0
      %vm3058 = vcmp.ne.s32.totalorder %v2940, 0
      %vm3059 = vcmp.ne.s32.totalorder %v2947, 0
      %vm3060 = vcmp.ne.s32.totalorder %v2954, 0
      %vm3061 = vcmp.ne.s32.totalorder %v2961, 0
      %vm3062 = vcmp.ne.s32.totalorder %v2968, 0
      %vm3063 = vcmp.ne.s32.totalorder %v2975, 0
      %vm3064 = vcmp.ne.s32.totalorder %v2982, 0
      %vm3065 = vcmp.ne.s32.totalorder %v2989, 0
      %vm3066 = vcmp.ne.s32.totalorder %v2996, 0
      %vm3067 = vcmp.ne.s32.totalorder %v3003, 0
      %vm3068 = vcmp.lt.s32.totalorder %v2562, 0
      %vm3069 = vcmp.lt.s32.totalorder %v2569, 0
      %vm3070 = vcmp.lt.s32.totalorder %v2576, 0
      %vm3071 = vcmp.lt.s32.totalorder %v2583, 0
      %vm3072 = vcmp.lt.s32.totalorder %v2590, 0
      %vm3073 = vcmp.lt.s32.totalorder %v2597, 0
      %vm3074 = vcmp.lt.s32.totalorder %v2604, 0
      %vm3075 = vcmp.lt.s32.totalorder %v2611, 0
      %vm3076 = vcmp.lt.s32.totalorder %v2618, 0
      %vm3077 = vcmp.lt.s32.totalorder %v2625, 0
      %vm3078 = vcmp.lt.s32.totalorder %v2632, 0
      %vm3079 = vcmp.lt.s32.totalorder %v2639, 0
      %vm3080 = vcmp.lt.s32.totalorder %v2646, 0
      %vm3081 = vcmp.lt.s32.totalorder %v2653, 0
      %vm3082 = vcmp.lt.s32.totalorder %v2660, 0
      %vm3083 = vcmp.lt.s32.totalorder %v2667, 0
      %vm3084 = vcmp.lt.s32.totalorder %v2674, 0
      %vm3085 = vcmp.lt.s32.totalorder %v2681, 0
      %vm3086 = vcmp.lt.s32.totalorder %v2688, 0
      %vm3087 = vcmp.lt.s32.totalorder %v2695, 0
      %vm3088 = vcmp.lt.s32.totalorder %v2702, 0
      %vm3089 = vcmp.lt.s32.totalorder %v2709, 0
      %vm3090 = vcmp.lt.s32.totalorder %v2716, 0
      %vm3091 = vcmp.lt.s32.totalorder %v2723, 0
      %vm3092 = vcmp.lt.s32.totalorder %v2730, 0
      %vm3093 = vcmp.lt.s32.totalorder %v2737, 0
      %vm3094 = vcmp.lt.s32.totalorder %v2744, 0
      %vm3095 = vcmp.lt.s32.totalorder %v2751, 0
      %vm3096 = vcmp.lt.s32.totalorder %v2758, 0
      %vm3097 = vcmp.lt.s32.totalorder %v2765, 0
      %vm3098 = vcmp.lt.s32.totalorder %v2772, 0
      %vm3099 = vcmp.lt.s32.totalorder %v2779, 0
      %vm3100 = vcmp.lt.s32.totalorder %v2786, 0
      %vm3101 = vcmp.lt.s32.totalorder %v2793, 0
      %vm3102 = vcmp.lt.s32.totalorder %v2800, 0
      %vm3103 = vcmp.lt.s32.totalorder %v2807, 0
      %vm3104 = vcmp.lt.s32.totalorder %v2814, 0
      %vm3105 = vcmp.lt.s32.totalorder %v2821, 0
      %vm3106 = vcmp.lt.s32.totalorder %v2828, 0
      %vm3107 = vcmp.lt.s32.totalorder %v2835, 0
      %vm3108 = vcmp.lt.s32.totalorder %v2842, 0
      %vm3109 = vcmp.lt.s32.totalorder %v2849, 0
      %vm3110 = vcmp.lt.s32.totalorder %v2856, 0
      %vm3111 = vcmp.lt.s32.totalorder %v2863, 0
      %vm3112 = vcmp.lt.s32.totalorder %v2870, 0
      %vm3113 = vcmp.lt.s32.totalorder %v2877, 0
      %vm3114 = vcmp.lt.s32.totalorder %v2884, 0
      %vm3115 = vcmp.lt.s32.totalorder %v2891, 0
      %vm3116 = vcmp.lt.s32.totalorder %v2898, 0
      %vm3117 = vcmp.lt.s32.totalorder %v2905, 0
      %vm3118 = vcmp.lt.s32.totalorder %v2912, 0
      %vm3119 = vcmp.lt.s32.totalorder %v2919, 0
      %vm3120 = vcmp.lt.s32.totalorder %v2926, 0
      %vm3121 = vcmp.lt.s32.totalorder %v2933, 0
      %vm3122 = vcmp.lt.s32.totalorder %v2940, 0
      %vm3123 = vcmp.lt.s32.totalorder %v2947, 0
      %vm3124 = vcmp.lt.s32.totalorder %v2954, 0
      %vm3125 = vcmp.lt.s32.totalorder %v2961, 0
      %vm3126 = vcmp.lt.s32.totalorder %v2968, 0
      %vm3127 = vcmp.lt.s32.totalorder %v2975, 0
      %vm3128 = vcmp.lt.s32.totalorder %v2982, 0
      %vm3129 = vcmp.lt.s32.totalorder %v2989, 0
      %vm3130 = vcmp.lt.s32.totalorder %v2996, 0
      %vm3131 = vcmp.lt.s32.totalorder %v3003, 0
      %vm3132 = vmand %vm3068, %vm3004
      %vm3133 = vmand %vm3069, %vm3005
      %vm3134 = vmand %vm3070, %vm3006
      %vm3135 = vmand %vm3071, %vm3007
      %vm3136 = vmand %vm3072, %vm3008
      %vm3137 = vmand %vm3073, %vm3009
      %vm3138 = vmand %vm3074, %vm3010
      %vm3139 = vmand %vm3075, %vm3011
      %vm3140 = vmand %vm3076, %vm3012
      %vm3141 = vmand %vm3077, %vm3013
      %vm3142 = vmand %vm3078, %vm3014
      %vm3143 = vmand %vm3079, %vm3015
      %vm3144 = vmand %vm3080, %vm3016
      %vm3145 = vmand %vm3081, %vm3017
      %vm3146 = vmand %vm3082, %vm3018
      %vm3147 = vmand %vm3083, %vm3019
      %vm3148 = vmand %vm3084, %vm3020
      %vm3149 = vmand %vm3085, %vm3021
      %vm3150 = vmand %vm3086, %vm3022
      %vm3151 = vmand %vm3087, %vm3023
      %vm3152 = vmand %vm3088, %vm3024
      %vm3153 = vmand %vm3089, %vm3025
      %vm3154 = vmand %vm3090, %vm3026
      %vm3155 = vmand %vm3091, %vm3027
      %vm3156 = vmand %vm3092, %vm3028
      %vm3157 = vmand %vm3093, %vm3029
      %vm3158 = vmand %vm3094, %vm3030
      %vm3159 = vmand %vm3095, %vm3031
      %vm3160 = vmand %vm3096, %vm3032
      %vm3161 = vmand %vm3097, %vm3033
      %vm3162 = vmand %vm3098, %vm3034
      %vm3163 = vmand %vm3099, %vm3035
      %vm3164 = vmand %vm3100, %vm3036
      %vm3165 = vmand %vm3101, %vm3037
      %vm3166 = vmand %vm3102, %vm3038
      %vm3167 = vmand %vm3103, %vm3039
      %vm3168 = vmand %vm3104, %vm3040
      %vm3169 = vmand %vm3105, %vm3041
      %vm3170 = vmand %vm3106, %vm3042
      %vm3171 = vmand %vm3107, %vm3043
      %vm3172 = vmand %vm3108, %vm3044
      %vm3173 = vmand %vm3109, %vm3045
      %vm3174 = vmand %vm3110, %vm3046
      %vm3175 = vmand %vm3111, %vm3047
      %vm3176 = vmand %vm3112, %vm3048
      %vm3177 = vmand %vm3113, %vm3049
      %vm3178 = vmand %vm3114, %vm3050
      %vm3179 = vmand %vm3115, %vm3051
      %vm3180 = vmand %vm3116, %vm3052
      %vm3181 = vmand %vm3117, %vm3053
      %vm3182 = vmand %vm3118, %vm3054
      %vm3183 = vmand %vm3119, %vm3055
      %vm3184 = vmand %vm3120, %vm3056
      %vm3185 = vmand %vm3121, %vm3057
      %vm3186 = vmand %vm3122, %vm3058
      %vm3187 = vmand %vm3123, %vm3059
      %vm3188 = vmand %vm3124, %vm3060
      %vm3189 = vmand %vm3125, %vm3061
      %vm3190 = vmand %vm3126, %vm3062
      %vm3191 = vmand %vm3127, %vm3063
      %vm3192 = vmand %vm3128, %vm3064
      %vm3193 = vmand %vm3129, %vm3065
      %vm3194 = vmand %vm3130, %vm3066
      %vm3195 = vmand %vm3131, %vm3067
      %v3196 = vadd.s32 %v2562, 32
      %v3197 = vadd.s32 %v2569, 32
      %v3198 = vadd.s32 %v2576, 32
      %v3199 = vadd.s32 %v2583, 32
      %v3200 = vadd.s32 %v2590, 32
      %v3201 = vadd.s32 %v2597, 32
      %v3202 = vadd.s32 %v2604, 32
      %v3203 = vadd.s32 %v2611, 32
      %v3204 = vadd.s32 %v2618, 32
      %v3205 = vadd.s32 %v2625, 32
      %v3206 = vadd.s32 %v2632, 32
      %v3207 = vadd.s32 %v2639, 32
      %v3208 = vadd.s32 %v2646, 32
      %v3209 = vadd.s32 %v2653, 32
      %v3210 = vadd.s32 %v2660, 32
      %v3211 = vadd.s32 %v2667, 32
      %v3212 = vadd.s32 %v2674, 32
      %v3213 = vadd.s32 %v2681, 32
      %v3214 = vadd.s32 %v2688, 32
      %v3215 = vadd.s32 %v2695, 32
      %v3216 = vadd.s32 %v2702, 32
      %v3217 = vadd.s32 %v2709, 32
      %v3218 = vadd.s32 %v2716, 32
      %v3219 = vadd.s32 %v2723, 32
      %v3220 = vadd.s32 %v2730, 32
      %v3221 = vadd.s32 %v2737, 32
      %v3222 = vadd.s32 %v2744, 32
      %v3223 = vadd.s32 %v2751, 32
      %v3224 = vadd.s32 %v2758, 32
      %v3225 = vadd.s32 %v2765, 32
      %v3226 = vadd.s32 %v2772, 32
      %v3227 = vadd.s32 %v2779, 32
      %v3228 = vadd.s32 %v2786, 32
      %v3229 = vadd.s32 %v2793, 32
      %v3230 = vadd.s32 %v2800, 32
      %v3231 = vadd.s32 %v2807, 32
      %v3232 = vadd.s32 %v2814, 32
      %v3233 = vadd.s32 %v2821, 32
      %v3234 = vadd.s32 %v2828, 32
      %v3235 = vadd.s32 %v2835, 32
      %v3236 = vadd.s32 %v2842, 32
      %v3237 = vadd.s32 %v2849, 32
      %v3238 = vadd.s32 %v2856, 32
      %v3239 = vadd.s32 %v2863, 32
      %v3240 = vadd.s32 %v2870, 32
      %v3241 = vadd.s32 %v2877, 32
      %v3242 = vadd.s32 %v2884, 32
      %v3243 = vadd.s32 %v2891, 32
      %v3244 = vadd.s32 %v2898, 32
      %v3245 = vadd.s32 %v2905, 32
      %v3246 = vadd.s32 %v2912, 32
      %v3247 = vadd.s32 %v2919, 32
      %v3248 = vadd.s32 %v2926, 32
      %v3249 = vadd.s32 %v2933, 32
      %v3250 = vadd.s32 %v2940, 32
      %v3251 = vadd.s32 %v2947, 32
      %v3252 = vadd.s32 %v2954, 32
      %v3253 = vadd.s32 %v2961, 32
      %v3254 = vadd.s32 %v2968, 32
      %v3255 = vadd.s32 %v2975, 32
      %v3256 = vadd.s32 %v2982, 32
      %v3257 = vadd.s32 %v2989, 32
      %v3258 = vadd.s32 %v2996, 32
      %v3259 = vadd.s32 %v3003, 32
      %v3260 = vsel %vm3132, %v3196, %v2562
      %v3261 = vsel %vm3133, %v3197, %v2569
      %v3262 = vsel %vm3134, %v3198, %v2576
      %v3263 = vsel %vm3135, %v3199, %v2583
      %v3264 = vsel %vm3136, %v3200, %v2590
      %v3265 = vsel %vm3137, %v3201, %v2597
      %v3266 = vsel %vm3138, %v3202, %v2604
      %v3267 = vsel %vm3139, %v3203, %v2611
      %v3268 = vsel %vm3140, %v3204, %v2618
      %v3269 = vsel %vm3141, %v3205, %v2625
      %v3270 = vsel %vm3142, %v3206, %v2632
      %v3271 = vsel %vm3143, %v3207, %v2639
      %v3272 = vsel %vm3144, %v3208, %v2646
      %v3273 = vsel %vm3145, %v3209, %v2653
      %v3274 = vsel %vm3146, %v3210, %v2660
      %v3275 = vsel %vm3147, %v3211, %v2667
      %v3276 = vsel %vm3148, %v3212, %v2674
      %v3277 = vsel %vm3149, %v3213, %v2681
      %v3278 = vsel %vm3150, %v3214, %v2688
      %v3279 = vsel %vm3151, %v3215, %v2695
      %v3280 = vsel %vm3152, %v3216, %v2702
      %v3281 = vsel %vm3153, %v3217, %v2709
      %v3282 = vsel %vm3154, %v3218, %v2716
      %v3283 = vsel %vm3155, %v3219, %v2723
      %v3284 = vsel %vm3156, %v3220, %v2730
      %v3285 = vsel %vm3157, %v3221, %v2737
      %v3286 = vsel %vm3158, %v3222, %v2744
      %v3287 = vsel %vm3159, %v3223, %v2751
      %v3288 = vsel %vm3160, %v3224, %v2758
      %v3289 = vsel %vm3161, %v3225, %v2765
      %v3290 = vsel %vm3162, %v3226, %v2772
      %v3291 = vsel %vm3163, %v3227, %v2779
      %v3292 = vsel %vm3164, %v3228, %v2786
      %v3293 = vsel %vm3165, %v3229, %v2793
      %v3294 = vsel %vm3166, %v3230, %v2800
      %v3295 = vsel %vm3167, %v3231, %v2807
      %v3296 = vsel %vm3168, %v3232, %v2814
      %v3297 = vsel %vm3169, %v3233, %v2821
      %v3298 = vsel %vm3170, %v3234, %v2828
      %v3299 = vsel %vm3171, %v3235, %v2835
      %v3300 = vsel %vm3172, %v3236, %v2842
      %v3301 = vsel %vm3173, %v3237, %v2849
      %v3302 = vsel %vm3174, %v3238, %v2856
      %v3303 = vsel %vm3175, %v3239, %v2863
      %v3304 = vsel %vm3176, %v3240, %v2870
      %v3305 = vsel %vm3177, %v3241, %v2877
      %v3306 = vsel %vm3178, %v3242, %v2884
      %v3307 = vsel %vm3179, %v3243, %v2891
      %v3308 = vsel %vm3180, %v3244, %v2898
      %v3309 = vsel %vm3181, %v3245, %v2905
      %v3310 = vsel %vm3182, %v3246, %v2912
      %v3311 = vsel %vm3183, %v3247, %v2919
      %v3312 = vsel %vm3184, %v3248, %v2926
      %v3313 = vsel %vm3185, %v3249, %v2933
      %v3314 = vsel %vm3186, %v3250, %v2940
      %v3315 = vsel %vm3187, %v3251, %v2947
      %v3316 = vsel %vm3188, %v3252, %v2954
      %v3317 = vsel %vm3189, %v3253, %v2961
      %v3318 = vsel %vm3190, %v3254, %v2968
      %v3319 = vsel %vm3191, %v3255, %v2975
      %v3320 = vsel %vm3192, %v3256, %v2982
      %v3321 = vsel %vm3193, %v3257, %v2989
      %v3322 = vsel %vm3194, %v3258, %v2996
      %v3323 = vsel %vm3195, %v3259, %v3003
      %vm3324 = vcmp.lt.s32.totalorder %v3260, 16
      %vm3325 = vcmp.lt.s32.totalorder %v3261, 16
      %vm3326 = vcmp.lt.s32.totalorder %v3262, 16
      %vm3327 = vcmp.lt.s32.totalorder %v3263, 16
      %vm3328 = vcmp.lt.s32.totalorder %v3264, 16
      %vm3329 = vcmp.lt.s32.totalorder %v3265, 16
      %vm3330 = vcmp.lt.s32.totalorder %v3266, 16
      %vm3331 = vcmp.lt.s32.totalorder %v3267, 16
      %vm3332 = vcmp.lt.s32.totalorder %v3268, 16
      %vm3333 = vcmp.lt.s32.totalorder %v3269, 16
      %vm3334 = vcmp.lt.s32.totalorder %v3270, 16
      %vm3335 = vcmp.lt.s32.totalorder %v3271, 16
      %vm3336 = vcmp.lt.s32.totalorder %v3272, 16
      %vm3337 = vcmp.lt.s32.totalorder %v3273, 16
      %vm3338 = vcmp.lt.s32.totalorder %v3274, 16
      %vm3339 = vcmp.lt.s32.totalorder %v3275, 16
      %vm3340 = vcmp.lt.s32.totalorder %v3276, 16
      %vm3341 = vcmp.lt.s32.totalorder %v3277, 16
      %vm3342 = vcmp.lt.s32.totalorder %v3278, 16
      %vm3343 = vcmp.lt.s32.totalorder %v3279, 16
      %vm3344 = vcmp.lt.s32.totalorder %v3280, 16
      %vm3345 = vcmp.lt.s32.totalorder %v3281, 16
      %vm3346 = vcmp.lt.s32.totalorder %v3282, 16
      %vm3347 = vcmp.lt.s32.totalorder %v3283, 16
      %vm3348 = vcmp.lt.s32.totalorder %v3284, 16
      %vm3349 = vcmp.lt.s32.totalorder %v3285, 16
      %vm3350 = vcmp.lt.s32.totalorder %v3286, 16
      %vm3351 = vcmp.lt.s32.totalorder %v3287, 16
      %vm3352 = vcmp.lt.s32.totalorder %v3288, 16
      %vm3353 = vcmp.lt.s32.totalorder %v3289, 16
      %vm3354 = vcmp.lt.s32.totalorder %v3290, 16
      %vm3355 = vcmp.lt.s32.totalorder %v3291, 16
      %vm3356 = vcmp.lt.s32.totalorder %v3292, 16
      %vm3357 = vcmp.lt.s32.totalorder %v3293, 16
      %vm3358 = vcmp.lt.s32.totalorder %v3294, 16
      %vm3359 = vcmp.lt.s32.totalorder %v3295, 16
      %vm3360 = vcmp.lt.s32.totalorder %v3296, 16
      %vm3361 = vcmp.lt.s32.totalorder %v3297, 16
      %vm3362 = vcmp.lt.s32.totalorder %v3298, 16
      %vm3363 = vcmp.lt.s32.totalorder %v3299, 16
      %vm3364 = vcmp.lt.s32.totalorder %v3300, 16
      %vm3365 = vcmp.lt.s32.totalorder %v3301, 16
      %vm3366 = vcmp.lt.s32.totalorder %v3302, 16
      %vm3367 = vcmp.lt.s32.totalorder %v3303, 16
      %vm3368 = vcmp.lt.s32.totalorder %v3304, 16
      %vm3369 = vcmp.lt.s32.totalorder %v3305, 16
      %vm3370 = vcmp.lt.s32.totalorder %v3306, 16
      %vm3371 = vcmp.lt.s32.totalorder %v3307, 16
      %vm3372 = vcmp.lt.s32.totalorder %v3308, 16
      %vm3373 = vcmp.lt.s32.totalorder %v3309, 16
      %vm3374 = vcmp.lt.s32.totalorder %v3310, 16
      %vm3375 = vcmp.lt.s32.totalorder %v3311, 16
      %vm3376 = vcmp.lt.s32.totalorder %v3312, 16
      %vm3377 = vcmp.lt.s32.totalorder %v3313, 16
      %vm3378 = vcmp.lt.s32.totalorder %v3314, 16
      %vm3379 = vcmp.lt.s32.totalorder %v3315, 16
      %vm3380 = vcmp.lt.s32.totalorder %v3316, 16
      %vm3381 = vcmp.lt.s32.totalorder %v3317, 16
      %vm3382 = vcmp.lt.s32.totalorder %v3318, 16
      %vm3383 = vcmp.lt.s32.totalorder %v3319, 16
      %vm3384 = vcmp.lt.s32.totalorder %v3320, 16
      %vm3385 = vcmp.lt.s32.totalorder %v3321, 16
      %vm3386 = vcmp.lt.s32.totalorder %v3322, 16
      %vm3387 = vcmp.lt.s32.totalorder %v3323, 16
      %v3388 = vsel %vm3324, 1, 0
      %v3389 = vsel %vm3325, 1, 0
      %v3390 = vsel %vm3326, 1, 0
      %v3391 = vsel %vm3327, 1, 0
      %v3392 = vsel %vm3328, 1, 0
      %v3393 = vsel %vm3329, 1, 0
      %v3394 = vsel %vm3330, 1, 0
      %v3395 = vsel %vm3331, 1, 0
      %v3396 = vsel %vm3332, 1, 0
      %v3397 = vsel %vm3333, 1, 0
      %v3398 = vsel %vm3334, 1, 0
      %v3399 = vsel %vm3335, 1, 0
      %v3400 = vsel %vm3336, 1, 0
      %v3401 = vsel %vm3337, 1, 0
      %v3402 = vsel %vm3338, 1, 0
      %v3403 = vsel %vm3339, 1, 0
      %v3404 = vsel %vm3340, 1, 0
      %v3405 = vsel %vm3341, 1, 0
      %v3406 = vsel %vm3342, 1, 0
      %v3407 = vsel %vm3343, 1, 0
      %v3408 = vsel %vm3344, 1, 0
      %v3409 = vsel %vm3345, 1, 0
      %v3410 = vsel %vm3346, 1, 0
      %v3411 = vsel %vm3347, 1, 0
      %v3412 = vsel %vm3348, 1, 0
      %v3413 = vsel %vm3349, 1, 0
      %v3414 = vsel %vm3350, 1, 0
      %v3415 = vsel %vm3351, 1, 0
      %v3416 = vsel %vm3352, 1, 0
      %v3417 = vsel %vm3353, 1, 0
      %v3418 = vsel %vm3354, 1, 0
      %v3419 = vsel %vm3355, 1, 0
      %v3420 = vsel %vm3356, 1, 0
      %v3421 = vsel %vm3357, 1, 0
      %v3422 = vsel %vm3358, 1, 0
      %v3423 = vsel %vm3359, 1, 0
      %v3424 = vsel %vm3360, 1, 0
      %v3425 = vsel %vm3361, 1, 0
      %v3426 = vsel %vm3362, 1, 0
      %v3427 = vsel %vm3363, 1, 0
      %v3428 = vsel %vm3364, 1, 0
      %v3429 = vsel %vm3365, 1, 0
      %v3430 = vsel %vm3366, 1, 0
      %v3431 = vsel %vm3367, 1, 0
      %v3432 = vsel %vm3368, 1, 0
      %v3433 = vsel %vm3369, 1, 0
      %v3434 = vsel %vm3370, 1, 0
      %v3435 = vsel %vm3371, 1, 0
      %v3436 = vsel %vm3372, 1, 0
      %v3437 = vsel %vm3373, 1, 0
      %v3438 = vsel %vm3374, 1, 0
      %v3439 = vsel %vm3375, 1, 0
      %v3440 = vsel %vm3376, 1, 0
      %v3441 = vsel %vm3377, 1, 0
      %v3442 = vsel %vm3378, 1, 0
      %v3443 = vsel %vm3379, 1, 0
      %v3444 = vsel %vm3380, 1, 0
      %v3445 = vsel %vm3381, 1, 0
      %v3446 = vsel %vm3382, 1, 0
      %v3447 = vsel %vm3383, 1, 0
      %v3448 = vsel %vm3384, 1, 0
      %v3449 = vsel %vm3385, 1, 0
      %v3450 = vsel %vm3386, 1, 0
      %v3451 = vsel %vm3387, 1, 0
      %vm3452 = vcmp.eq.s32.totalorder %v3388, 1
      %vm3453 = vcmp.eq.s32.totalorder %v3389, 1
      %vm3454 = vcmp.eq.s32.totalorder %v3390, 1
      %vm3455 = vcmp.eq.s32.totalorder %v3391, 1
      %vm3456 = vcmp.eq.s32.totalorder %v3392, 1
      %vm3457 = vcmp.eq.s32.totalorder %v3393, 1
      %vm3458 = vcmp.eq.s32.totalorder %v3394, 1
      %vm3459 = vcmp.eq.s32.totalorder %v3395, 1
      %vm3460 = vcmp.eq.s32.totalorder %v3396, 1
      %vm3461 = vcmp.eq.s32.totalorder %v3397, 1
      %vm3462 = vcmp.eq.s32.totalorder %v3398, 1
      %vm3463 = vcmp.eq.s32.totalorder %v3399, 1
      %vm3464 = vcmp.eq.s32.totalorder %v3400, 1
      %vm3465 = vcmp.eq.s32.totalorder %v3401, 1
      %vm3466 = vcmp.eq.s32.totalorder %v3402, 1
      %vm3467 = vcmp.eq.s32.totalorder %v3403, 1
      %vm3468 = vcmp.eq.s32.totalorder %v3404, 1
      %vm3469 = vcmp.eq.s32.totalorder %v3405, 1
      %vm3470 = vcmp.eq.s32.totalorder %v3406, 1
      %vm3471 = vcmp.eq.s32.totalorder %v3407, 1
      %vm3472 = vcmp.eq.s32.totalorder %v3408, 1
      %vm3473 = vcmp.eq.s32.totalorder %v3409, 1
      %vm3474 = vcmp.eq.s32.totalorder %v3410, 1
      %vm3475 = vcmp.eq.s32.totalorder %v3411, 1
      %vm3476 = vcmp.eq.s32.totalorder %v3412, 1
      %vm3477 = vcmp.eq.s32.totalorder %v3413, 1
      %vm3478 = vcmp.eq.s32.totalorder %v3414, 1
      %vm3479 = vcmp.eq.s32.totalorder %v3415, 1
      %vm3480 = vcmp.eq.s32.totalorder %v3416, 1
      %vm3481 = vcmp.eq.s32.totalorder %v3417, 1
      %vm3482 = vcmp.eq.s32.totalorder %v3418, 1
      %vm3483 = vcmp.eq.s32.totalorder %v3419, 1
      %vm3484 = vcmp.eq.s32.totalorder %v3420, 1
      %vm3485 = vcmp.eq.s32.totalorder %v3421, 1
      %vm3486 = vcmp.eq.s32.totalorder %v3422, 1
      %vm3487 = vcmp.eq.s32.totalorder %v3423, 1
      %vm3488 = vcmp.eq.s32.totalorder %v3424, 1
      %vm3489 = vcmp.eq.s32.totalorder %v3425, 1
      %vm3490 = vcmp.eq.s32.totalorder %v3426, 1
      %vm3491 = vcmp.eq.s32.totalorder %v3427, 1
      %vm3492 = vcmp.eq.s32.totalorder %v3428, 1
      %vm3493 = vcmp.eq.s32.totalorder %v3429, 1
      %vm3494 = vcmp.eq.s32.totalorder %v3430, 1
      %vm3495 = vcmp.eq.s32.totalorder %v3431, 1
      %vm3496 = vcmp.eq.s32.totalorder %v3432, 1
      %vm3497 = vcmp.eq.s32.totalorder %v3433, 1
      %vm3498 = vcmp.eq.s32.totalorder %v3434, 1
      %vm3499 = vcmp.eq.s32.totalorder %v3435, 1
      %vm3500 = vcmp.eq.s32.totalorder %v3436, 1
      %vm3501 = vcmp.eq.s32.totalorder %v3437, 1
      %vm3502 = vcmp.eq.s32.totalorder %v3438, 1
      %vm3503 = vcmp.eq.s32.totalorder %v3439, 1
      %vm3504 = vcmp.eq.s32.totalorder %v3440, 1
      %vm3505 = vcmp.eq.s32.totalorder %v3441, 1
      %vm3506 = vcmp.eq.s32.totalorder %v3442, 1
      %vm3507 = vcmp.eq.s32.totalorder %v3443, 1
      %vm3508 = vcmp.eq.s32.totalorder %v3444, 1
      %vm3509 = vcmp.eq.s32.totalorder %v3445, 1
      %vm3510 = vcmp.eq.s32.totalorder %v3446, 1
      %vm3511 = vcmp.eq.s32.totalorder %v3447, 1
      %vm3512 = vcmp.eq.s32.totalorder %v3448, 1
      %vm3513 = vcmp.eq.s32.totalorder %v3449, 1
      %vm3514 = vcmp.eq.s32.totalorder %v3450, 1
      %vm3515 = vcmp.eq.s32.totalorder %v3451, 1
      %v3516 = vsel %vm3452, %v2427, 0.0
      %v3517 = vsel %vm3453, %v2428, 0.0
      %v3518 = vsel %vm3454, %v2429, 0.0
      %v3519 = vsel %vm3455, %v2430, 0.0
      %v3520 = vsel %vm3456, %v2431, 0.0
      %v3521 = vsel %vm3457, %v2432, 0.0
      %v3522 = vsel %vm3458, %v2433, 0.0
      %v3523 = vsel %vm3459, %v2434, 0.0
      %v3524 = vsel %vm3460, %v2435, 0.0
      %v3525 = vsel %vm3461, %v2436, 0.0
      %v3526 = vsel %vm3462, %v2437, 0.0
      %v3527 = vsel %vm3463, %v2438, 0.0
      %v3528 = vsel %vm3464, %v2439, 0.0
      %v3529 = vsel %vm3465, %v2440, 0.0
      %v3530 = vsel %vm3466, %v2441, 0.0
      %v3531 = vsel %vm3467, %v2442, 0.0
      %v3532 = vsel %vm3468, %v2443, 0.0
      %v3533 = vsel %vm3469, %v2444, 0.0
      %v3534 = vsel %vm3470, %v2445, 0.0
      %v3535 = vsel %vm3471, %v2446, 0.0
      %v3536 = vsel %vm3472, %v2447, 0.0
      %v3537 = vsel %vm3473, %v2448, 0.0
      %v3538 = vsel %vm3474, %v2449, 0.0
      %v3539 = vsel %vm3475, %v2450, 0.0
      %v3540 = vsel %vm3476, %v2451, 0.0
      %v3541 = vsel %vm3477, %v2452, 0.0
      %v3542 = vsel %vm3478, %v2453, 0.0
      %v3543 = vsel %vm3479, %v2454, 0.0
      %v3544 = vsel %vm3480, %v2455, 0.0
      %v3545 = vsel %vm3481, %v2456, 0.0
      %v3546 = vsel %vm3482, %v2457, 0.0
      %v3547 = vsel %vm3483, %v2458, 0.0
      %v3548 = vsel %vm3484, %v2459, 0.0
      %v3549 = vsel %vm3485, %v2460, 0.0
      %v3550 = vsel %vm3486, %v2461, 0.0
      %v3551 = vsel %vm3487, %v2462, 0.0
      %v3552 = vsel %vm3488, %v2463, 0.0
      %v3553 = vsel %vm3489, %v2464, 0.0
      %v3554 = vsel %vm3490, %v2465, 0.0
      %v3555 = vsel %vm3491, %v2466, 0.0
      %v3556 = vsel %vm3492, %v2467, 0.0
      %v3557 = vsel %vm3493, %v2468, 0.0
      %v3558 = vsel %vm3494, %v2469, 0.0
      %v3559 = vsel %vm3495, %v2470, 0.0
      %v3560 = vsel %vm3496, %v2471, 0.0
      %v3561 = vsel %vm3497, %v2472, 0.0
      %v3562 = vsel %vm3498, %v2473, 0.0
      %v3563 = vsel %vm3499, %v2474, 0.0
      %v3564 = vsel %vm3500, %v2475, 0.0
      %v3565 = vsel %vm3501, %v2476, 0.0
      %v3566 = vsel %vm3502, %v2477, 0.0
      %v3567 = vsel %vm3503, %v2478, 0.0
      %v3568 = vsel %vm3504, %v2479, 0.0
      %v3569 = vsel %vm3505, %v2480, 0.0
      %v3570 = vsel %vm3506, %v2481, 0.0
      %v3571 = vsel %vm3507, %v2482, 0.0
      %v3572 = vsel %vm3508, %v2483, 0.0
      %v3573 = vsel %vm3509, %v2484, 0.0
      %v3574 = vsel %vm3510, %v2485, 0.0
      %v3575 = vsel %vm3511, %v2486, 0.0
      %v3576 = vsel %vm3512, %v2487, 0.0
      %v3577 = vsel %vm3513, %v2488, 0.0
      %v3578 = vsel %vm3514, %v2489, 0.0
      %v3579 = vsel %vm3515, %v2490, 0.0
      %v3580 = vpack.c.bf16 %v3517, %v3516
      %v3581 = vpack.c.bf16 %v3519, %v3518
      %v3582 = vpack.c.bf16 %v3521, %v3520
      %v3583 = vpack.c.bf16 %v3523, %v3522
      %v3584 = vpack.c.bf16 %v3525, %v3524
      %v3585 = vpack.c.bf16 %v3527, %v3526
      %v3586 = vpack.c.bf16 %v3529, %v3528
      %v3587 = vpack.c.bf16 %v3531, %v3530
      %v3588 = vpack.c.bf16 %v3533, %v3532
      %v3589 = vpack.c.bf16 %v3535, %v3534
      %v3590 = vpack.c.bf16 %v3537, %v3536
      %v3591 = vpack.c.bf16 %v3539, %v3538
      %v3592 = vpack.c.bf16 %v3541, %v3540
      %v3593 = vpack.c.bf16 %v3543, %v3542
      %v3594 = vpack.c.bf16 %v3545, %v3544
      %v3595 = vpack.c.bf16 %v3547, %v3546
      %v3596 = vpack.c.bf16 %v3549, %v3548
      %v3597 = vpack.c.bf16 %v3551, %v3550
      %v3598 = vpack.c.bf16 %v3553, %v3552
      %v3599 = vpack.c.bf16 %v3555, %v3554
      %v3600 = vpack.c.bf16 %v3557, %v3556
      %v3601 = vpack.c.bf16 %v3559, %v3558
      %v3602 = vpack.c.bf16 %v3561, %v3560
      %v3603 = vpack.c.bf16 %v3563, %v3562
      %v3604 = vpack.c.bf16 %v3565, %v3564
      %v3605 = vpack.c.bf16 %v3567, %v3566
      %v3606 = vpack.c.bf16 %v3569, %v3568
      %v3607 = vpack.c.bf16 %v3571, %v3570
      %v3608 = vpack.c.bf16 %v3573, %v3572
      %v3609 = vpack.c.bf16 %v3575, %v3574
      %v3610 = vpack.c.bf16 %v3577, %v3576
      %v3611 = vpack.c.bf16 %v3579, %v3578
      %v3644 = vunpack.c.l.b16 %v3580
      %v3645 = vunpack.c.h.b16 %v3580
      %v3646 = vunpack.c.l.b16 %v3581
      %v3647 = vunpack.c.h.b16 %v3581
      %v3648 = vunpack.c.l.b16 %v3582
      %v3649 = vunpack.c.h.b16 %v3582
      %v3650 = vunpack.c.l.b16 %v3583
      %v3651 = vunpack.c.h.b16 %v3583
      %v3652 = vunpack.c.l.b16 %v3584
      %v3653 = vunpack.c.h.b16 %v3584
      %v3654 = vunpack.c.l.b16 %v3585
      %v3655 = vunpack.c.h.b16 %v3585
      %v3656 = vunpack.c.l.b16 %v3586
      %v3657 = vunpack.c.h.b16 %v3586
      %v3658 = vunpack.c.l.b16 %v3587
      %v3659 = vunpack.c.h.b16 %v3587
      %v3660 = vunpack.c.l.b16 %v3588
      %v3661 = vunpack.c.h.b16 %v3588
      %v3662 = vunpack.c.l.b16 %v3589
      %v3663 = vunpack.c.h.b16 %v3589
      %v3664 = vunpack.c.l.b16 %v3590
      %v3665 = vunpack.c.h.b16 %v3590
      %v3666 = vunpack.c.l.b16 %v3591
      %v3667 = vunpack.c.h.b16 %v3591
      %v3668 = vunpack.c.l.b16 %v3592
      %v3669 = vunpack.c.h.b16 %v3592
      %v3670 = vunpack.c.l.b16 %v3593
      %v3671 = vunpack.c.h.b16 %v3593
      %v3672 = vunpack.c.l.b16 %v3594
      %v3673 = vunpack.c.h.b16 %v3594
      %v3674 = vunpack.c.l.b16 %v3595
      %v3675 = vunpack.c.h.b16 %v3595
      %v3676 = vunpack.c.l.b16 %v3596
      %v3677 = vunpack.c.h.b16 %v3596
      %v3678 = vunpack.c.l.b16 %v3597
      %v3679 = vunpack.c.h.b16 %v3597
      %v3680 = vunpack.c.l.b16 %v3598
      %v3681 = vunpack.c.h.b16 %v3598
      %v3682 = vunpack.c.l.b16 %v3599
      %v3683 = vunpack.c.h.b16 %v3599
      %v3684 = vunpack.c.l.b16 %v3600
      %v3685 = vunpack.c.h.b16 %v3600
      %v3686 = vunpack.c.l.b16 %v3601
      %v3687 = vunpack.c.h.b16 %v3601
      %v3688 = vunpack.c.l.b16 %v3602
      %v3689 = vunpack.c.h.b16 %v3602
      %v3690 = vunpack.c.l.b16 %v3603
      %v3691 = vunpack.c.h.b16 %v3603
      %v3692 = vunpack.c.l.b16 %v3604
      %v3693 = vunpack.c.h.b16 %v3604
      %v3694 = vunpack.c.l.b16 %v3605
      %v3695 = vunpack.c.h.b16 %v3605
      %v3696 = vunpack.c.l.b16 %v3606
      %v3697 = vunpack.c.h.b16 %v3606
      %v3698 = vunpack.c.l.b16 %v3607
      %v3699 = vunpack.c.h.b16 %v3607
      %v3700 = vunpack.c.l.b16 %v3608
      %v3701 = vunpack.c.h.b16 %v3608
      %v3702 = vunpack.c.l.b16 %v3609
      %v3703 = vunpack.c.h.b16 %v3609
      %v3704 = vunpack.c.l.b16 %v3610
      %v3705 = vunpack.c.h.b16 %v3610
      %v3706 = vunpack.c.l.b16 %v3611
      %v3707 = vunpack.c.h.b16 %v3611
      %v3708 = vpack.c.b16 %v3644, %v3644
      %v3709 = vpack.c.b16 %v3645, %v3645
      %v3710 = vpack.c.b16 %v3646, %v3646
      %v3711 = vpack.c.b16 %v3647, %v3647
      %v3712 = vpack.c.b16 %v3648, %v3648
      %v3713 = vpack.c.b16 %v3649, %v3649
      %v3714 = vpack.c.b16 %v3650, %v3650
      %v3715 = vpack.c.b16 %v3651, %v3651
      %v3716 = vpack.c.b16 %v3652, %v3652
      %v3717 = vpack.c.b16 %v3653, %v3653
      %v3718 = vpack.c.b16 %v3654, %v3654
      %v3719 = vpack.c.b16 %v3655, %v3655
      %v3720 = vpack.c.b16 %v3656, %v3656
      %v3721 = vpack.c.b16 %v3657, %v3657
      %v3722 = vpack.c.b16 %v3658, %v3658
      %v3723 = vpack.c.b16 %v3659, %v3659
      %v3724 = vpack.c.b16 %v3660, %v3660
      %v3725 = vpack.c.b16 %v3661, %v3661
      %v3726 = vpack.c.b16 %v3662, %v3662
      %v3727 = vpack.c.b16 %v3663, %v3663
      %v3728 = vpack.c.b16 %v3664, %v3664
      %v3729 = vpack.c.b16 %v3665, %v3665
      %v3730 = vpack.c.b16 %v3666, %v3666
      %v3731 = vpack.c.b16 %v3667, %v3667
      %v3732 = vpack.c.b16 %v3668, %v3668
      %v3733 = vpack.c.b16 %v3669, %v3669
      %v3734 = vpack.c.b16 %v3670, %v3670
      %v3735 = vpack.c.b16 %v3671, %v3671
      %v3736 = vpack.c.b16 %v3672, %v3672
      %v3737 = vpack.c.b16 %v3673, %v3673
      %v3738 = vpack.c.b16 %v3674, %v3674
      %v3739 = vpack.c.b16 %v3675, %v3675
      %v3740 = vpack.c.b16 %v3676, %v3676
      %v3741 = vpack.c.b16 %v3677, %v3677
      %v3742 = vpack.c.b16 %v3678, %v3678
      %v3743 = vpack.c.b16 %v3679, %v3679
      %v3744 = vpack.c.b16 %v3680, %v3680
      %v3745 = vpack.c.b16 %v3681, %v3681
      %v3746 = vpack.c.b16 %v3682, %v3682
      %v3747 = vpack.c.b16 %v3683, %v3683
      %v3748 = vpack.c.b16 %v3684, %v3684
      %v3749 = vpack.c.b16 %v3685, %v3685
      %v3750 = vpack.c.b16 %v3686, %v3686
      %v3751 = vpack.c.b16 %v3687, %v3687
      %v3752 = vpack.c.b16 %v3688, %v3688
      %v3753 = vpack.c.b16 %v3689, %v3689
      %v3754 = vpack.c.b16 %v3690, %v3690
      %v3755 = vpack.c.b16 %v3691, %v3691
      %v3756 = vpack.c.b16 %v3692, %v3692
      %v3757 = vpack.c.b16 %v3693, %v3693
      %v3758 = vpack.c.b16 %v3694, %v3694
      %v3759 = vpack.c.b16 %v3695, %v3695
      %v3760 = vpack.c.b16 %v3696, %v3696
      %v3761 = vpack.c.b16 %v3697, %v3697
      %v3762 = vpack.c.b16 %v3698, %v3698
      %v3763 = vpack.c.b16 %v3699, %v3699
      %v3764 = vpack.c.b16 %v3700, %v3700
      %v3765 = vpack.c.b16 %v3701, %v3701
      %v3766 = vpack.c.b16 %v3702, %v3702
      %v3767 = vpack.c.b16 %v3703, %v3703
      %v3768 = vpack.c.b16 %v3704, %v3704
      %v3769 = vpack.c.b16 %v3705, %v3705
      %v3770 = vpack.c.b16 %v3706, %v3706
      %v3771 = vpack.c.b16 %v3707, %v3707
      %vm3836 = vcmask 257024
      %3837 = vst.msk [vmem:[%s332] sm:$0xf] %vm3836, %v3708
      %3838 = vst.msk [vmem:[%s332 + $0x4] sm:$0xf] %vm3836, %v3709
      %3839 = vst.msk [vmem:[%s332 + $0x8] sm:$0xf] %vm3836, %v3710
      %3840 = vst.msk [vmem:[%s332 + $0xc] sm:$0xf] %vm3836, %v3711
      %3841 = vst.msk [vmem:[%s332 + $0x10] sm:$0xf] %vm3836, %v3712
      %3842 = vst.msk [vmem:[%s332 + $0x14] sm:$0xf] %vm3836, %v3713
      %3843 = vst.msk [vmem:[%s332 + $0x18] sm:$0xf] %vm3836, %v3714
      %3844 = vst.msk [vmem:[%s332 + $0x1c] sm:$0xf] %vm3836, %v3715
      %3845 = vst.msk [vmem:[%s332 + $0x20] sm:$0xf] %vm3836, %v3716
      %3846 = vst.msk [vmem:[%s332 + $0x24] sm:$0xf] %vm3836, %v3717
      %3847 = vst.msk [vmem:[%s332 + $0x28] sm:$0xf] %vm3836, %v3718
      %3848 = vst.msk [vmem:[%s332 + $0x2c] sm:$0xf] %vm3836, %v3719
      %3849 = vst.msk [vmem:[%s332 + $0x30] sm:$0xf] %vm3836, %v3720
      %3850 = vst.msk [vmem:[%s332 + $0x34] sm:$0xf] %vm3836, %v3721
      %3851 = vst.msk [vmem:[%s332 + $0x38] sm:$0xf] %vm3836, %v3722
      %3852 = vst.msk [vmem:[%s332 + $0x3c] sm:$0xf] %vm3836, %v3723
      %3853 = vst.msk [vmem:[%s332 + $0x40] sm:$0xf] %vm3836, %v3724
      %3854 = vst.msk [vmem:[%s332 + $0x44] sm:$0xf] %vm3836, %v3725
      %3855 = vst.msk [vmem:[%s332 + $0x48] sm:$0xf] %vm3836, %v3726
      %3856 = vst.msk [vmem:[%s332 + $0x4c] sm:$0xf] %vm3836, %v3727
      %3857 = vst.msk [vmem:[%s332 + $0x50] sm:$0xf] %vm3836, %v3728
      %3858 = vst.msk [vmem:[%s332 + $0x54] sm:$0xf] %vm3836, %v3729
      %3859 = vst.msk [vmem:[%s332 + $0x58] sm:$0xf] %vm3836, %v3730
      %3860 = vst.msk [vmem:[%s332 + $0x5c] sm:$0xf] %vm3836, %v3731
      %3861 = vst.msk [vmem:[%s332 + $0x60] sm:$0xf] %vm3836, %v3732
      %3862 = vst.msk [vmem:[%s332 + $0x64] sm:$0xf] %vm3836, %v3733
      %3863 = vst.msk [vmem:[%s332 + $0x68] sm:$0xf] %vm3836, %v3734
      %3864 = vst.msk [vmem:[%s332 + $0x6c] sm:$0xf] %vm3836, %v3735
      %3865 = vst.msk [vmem:[%s332 + $0x70] sm:$0xf] %vm3836, %v3736
      %3866 = vst.msk [vmem:[%s332 + $0x74] sm:$0xf] %vm3836, %v3737
      %3867 = vst.msk [vmem:[%s332 + $0x78] sm:$0xf] %vm3836, %v3738
      %3868 = vst.msk [vmem:[%s332 + $0x7c] sm:$0xf] %vm3836, %v3739
      %3869 = vst.msk [vmem:[%s332 + $0x80] sm:$0xf] %vm3836, %v3740
      %3870 = vst.msk [vmem:[%s332 + $0x84] sm:$0xf] %vm3836, %v3741
      %3871 = vst.msk [vmem:[%s332 + $0x88] sm:$0xf] %vm3836, %v3742
      %3872 = vst.msk [vmem:[%s332 + $0x8c] sm:$0xf] %vm3836, %v3743
      %3873 = vst.msk [vmem:[%s332 + $0x90] sm:$0xf] %vm3836, %v3744
      %3874 = vst.msk [vmem:[%s332 + $0x94] sm:$0xf] %vm3836, %v3745
      %3875 = vst.msk [vmem:[%s332 + $0x98] sm:$0xf] %vm3836, %v3746
      %3876 = vst.msk [vmem:[%s332 + $0x9c] sm:$0xf] %vm3836, %v3747
      %3877 = vst.msk [vmem:[%s332 + $0xa0] sm:$0xf] %vm3836, %v3748
      %3878 = vst.msk [vmem:[%s332 + $0xa4] sm:$0xf] %vm3836, %v3749
      %3879 = vst.msk [vmem:[%s332 + $0xa8] sm:$0xf] %vm3836, %v3750
      %3880 = vst.msk [vmem:[%s332 + $0xac] sm:$0xf] %vm3836, %v3751
      %3881 = vst.msk [vmem:[%s332 + $0xb0] sm:$0xf] %vm3836, %v3752
      %3882 = vst.msk [vmem:[%s332 + $0xb4] sm:$0xf] %vm3836, %v3753
      %3883 = vst.msk [vmem:[%s332 + $0xb8] sm:$0xf] %vm3836, %v3754
      %3884 = vst.msk [vmem:[%s332 + $0xbc] sm:$0xf] %vm3836, %v3755
      %3885 = vst.msk [vmem:[%s332 + $0xc0] sm:$0xf] %vm3836, %v3756
      %3886 = vst.msk [vmem:[%s332 + $0xc4] sm:$0xf] %vm3836, %v3757
      %3887 = vst.msk [vmem:[%s332 + $0xc8] sm:$0xf] %vm3836, %v3758
      %3888 = vst.msk [vmem:[%s332 + $0xcc] sm:$0xf] %vm3836, %v3759
      %3889 = vst.msk [vmem:[%s332 + $0xd0] sm:$0xf] %vm3836, %v3760
      %3890 = vst.msk [vmem:[%s332 + $0xd4] sm:$0xf] %vm3836, %v3761
      %3891 = vst.msk [vmem:[%s332 + $0xd8] sm:$0xf] %vm3836, %v3762
      %3892 = vst.msk [vmem:[%s332 + $0xdc] sm:$0xf] %vm3836, %v3763
      %3893 = vst.msk [vmem:[%s332 + $0xe0] sm:$0xf] %vm3836, %v3764
      %3894 = vst.msk [vmem:[%s332 + $0xe4] sm:$0xf] %vm3836, %v3765
      %3895 = vst.msk [vmem:[%s332 + $0xe8] sm:$0xf] %vm3836, %v3766
      %3896 = vst.msk [vmem:[%s332 + $0xec] sm:$0xf] %vm3836, %v3767
      %3897 = vst.msk [vmem:[%s332 + $0xf0] sm:$0xf] %vm3836, %v3768
      %3898 = vst.msk [vmem:[%s332 + $0xf4] sm:$0xf] %vm3836, %v3769
      %3899 = vst.msk [vmem:[%s332 + $0xf8] sm:$0xf] %vm3836, %v3770
      %3900 = vst.msk [vmem:[%s332 + $0xfc] sm:$0xf] %vm3836, %v3771
      %s3901 = smul.u32 64, %s20
      %p3902 = scmp.lt.s32.totalorder %s19, 1
      %s3903 = scalar_select %p3902, %s19, 1
      %p3904 = scmp.lt.s32.totalorder %s3901, 63
      %s3905 = scalar_select %p3904, %s3901, 63
      %s3906 = smul.addr %s3903, 64
      %s3907 = sadd.s32 %s3905, %s3906
      %s3908 = smul.addr %s3907, 4
      %s3909 = scalar_lea.vmem %s4, %s3908
      // Predicated region
      $region37: #{variational_encoder_forward.5} parent=35 // pred_check
        %p3910 = pneg %p151
      $region38: #{variational_encoder_forward.5} parent=35 // pred_check_branch
        %3912 = sbr.rel (%p3910) target = $region40
      $region39: #{variational_encoder_forward.5} parent=35 // pred_region
        %s3913 = smul.u32 64, %s20
      $region40: #{variational_encoder_forward.5} parent=35 // pred_fallthru
        _
    $region36: #{variational_encoder_forward.5} parent=5 // pred_fallthru
      _
    %p3914 = scmp.le.s32.totalorder 2, %s10
    // Predicated region
    $region41: #{variational_encoder_forward.5} parent=5 // pred_check
      %p3915 = pneg %p3914
    $region42: #{variational_encoder_forward.5} parent=5 // pred_check_branch
      %3917 = sbr.rel (%p3915) target = $region44
    $region43: #{variational_encoder_forward.5} parent=5 // pred_region
      %s3918 = ssub.s32 %s10, 2
      // Predicated region
      $region45: #{variational_encoder_forward.5} parent=43 // pred_check
        %p3919 = pneg %p157
      $region46: #{variational_encoder_forward.5} parent=43 // pred_check_branch
        %3921 = sbr.rel (%p3919) target = $region48
      $region47: #{variational_encoder_forward.5} parent=43 // pred_region
        %s3922 = smul.u32 64, %s22
        %p3923 = scmp.lt.s32.totalorder %s21, 1
        %s3924 = scalar_select %p3923, %s21, 1
        %p3925 = scmp.lt.s32.totalorder %s3922, 63
        %s3926 = scalar_select %p3925, %s3922, 63
        %s3927 = smul.addr %s3924, 64
        %s3928 = sadd.s32 %s3926, %s3927
        %s3929 = smul.addr %s3928, 4
        %s3930 = scalar_lea.vmem %s4, %s3929
      $region48: #{variational_encoder_forward.5} parent=43 // pred_fallthru
        _
    $region44: #{variational_encoder_forward.5} parent=5 // pred_fallthru
      _
  $region6: #{variational_encoder_forward.5} parent=0 // loop_footer
    %s14 = sadd.s32 1, %s10
  $region7: #{variational_encoder_forward.5} parent=0 // loop_footer_branch
    %9 = sbr.rel target = $region3
  $region8: #{variational_encoder_forward.5} parent=0 // loop_exit
    _

// kernel: variational_encoder_forward.6
$region0: #{variational_encoder_forward.6}
  #allocation0 [shape = 'u32[]', space=smem, size = 0x4, offset = 0x4, fixed_abs, tag = 'smem constant byte address 0x4 - core index']
  #allocation1 [shape = 'u32[144,128]{1,0:T(1,128)}', space=vmem, size = 0x12000, scoped, tag = 'internal scratch']
  %s0 = inlined_call_operand.vmem [shape: bf16[2,144,128], index: 0, kind: input, shape index: {}, may-alias: {0,1}]
  %s1 = inlined_call_operand.vmem [shape: bf16[2,144,128], index: 1, kind: input, shape index: {}, may-alias: {0,1}]
  %s2 = inlined_call_operand.vmem [shape: bf16[2,2,128,64], index: 2, kind: input, shape index: {}]
  %s3 = inlined_call_operand.vmem [shape: f32[1,64], index: 3, kind: input, shape index: {}]
  %s4 = inlined_call_operand.vmem [shape: bf16[2,128,64], index: 4, kind: output, shape index: {}]
  %s5 = sld [smem:[#allocation0]]
  $region49: #{variational_encoder_forward.6} parent=0
    _
  %s7 = ssub.s32 1, %s5
  %s8 = scalar_select 0, %s7, %s5
  loop: start=0, step=1, limit=4
  $region2: #{variational_encoder_forward.6} parent=0 // loop_pre_header
    _
  $region3: #{variational_encoder_forward.6} parent=0 // loop_header
    %s10 = sphi 0, %s14
    %p11 = scmp.ge.s32.totalorder %s10, 4
    %s17 = sphi 0, %s29
    %s18 = sphi 0, %s25
    %s19 = sphi 0, %s17
    %s20 = sphi 0, %s18
    %s21 = sphi 0, %s19
    %s22 = sphi 0, %s20
    %s34 = sphi 0, %s36
    %s37 = sphi 0, %s34
    %s38 = sphi 0, %s37
    %s54 = sphi 0, %s38
    %s68 = sphi 0, %s70
    %s71 = sphi 0, %s68
    %s72 = sphi 0, %s71
    %s88 = sphi 0, %s72
    %s92 = sphi 0, %s92
    %s94 = sphi 0, %s92
    %s95 = sphi 0, %s94
    %s109 = sphi 0, %s95
    %s113 = sphi 0, %s113
    %s115 = sphi 0, %s113
    %s116 = sphi 0, %s115
    %s130 = sphi 0, %s116
    %s138 = sphi 0, %s140
    %s141 = sphi 0, %s138
    %s142 = sphi 0, %s141
    %s158 = sphi 0, %s142
  $region4: #{variational_encoder_forward.6} parent=0 // loop_header_branch
    %13 = sbr.rel (%p11) target = $region8
  $region5: #{variational_encoder_forward.6} parent=0 // loop_body
    %s15 = ssub.s32 %s10, 1
    %s16 = ssub.s32 %s10, 2
    %s23 = sadd.s32 1, %s18
    %p24 = scmp.ge.s32.totalorder %s23, 1
    %s25 = scalar_select %p24, 0, %s23
    %s26 = sadd.s32 1, %s17
    %s27 = scalar_select %p24, %s26, %s17
    %p28 = scmp.ge.s32.totalorder %s27, 2
    %s29 = scalar_select %p28, 0, %s27
    %s30 = ssub.s32 %s17, %s29
    %s31 = ssub.s32 %s18, %s25
    %s32 = sor.u32 %s30, %s31
    %p33 = scmp.eq.s32.totalorder %s32, 0
    %s35 = sadd.s32 %s34, 1
    %s36 = scalar_select %p33, %s34, %s35
    %p39 = pneg %p33
    %p40 = scmp.eq.s32.totalorder %s10, 1
    %p41 = por %p39, %p40
    %p42 = scmp.ne.s32.totalorder %s34, %s37
    %p43 = scmp.eq.s32.totalorder %s10, 0
    %p44 = por %p42, %p43
    %p45 = scmp.ne.s32.totalorder %s34, %s37
    %p46 = scmp.eq.s32.totalorder %s15, 1
    %p47 = por %p45, %p46
    %p48 = scmp.ne.s32.totalorder %s37, %s38
    %p49 = scmp.eq.s32.totalorder %s15, 0
    %p50 = por %p48, %p49
    %p51 = scmp.ne.s32.totalorder %s37, %s38
    %p52 = scmp.eq.s32.totalorder %s16, 1
    %p53 = por %p51, %p52
    %p55 = scmp.ne.s32.totalorder %s38, %s54
    %p56 = scmp.eq.s32.totalorder %s16, 0
    %p57 = por %p55, %p56
    %s58 = sadd.s32 %s18, 1
    %p59 = scmp.lt.s32.totalorder %s58, 1
    %s60 = scalar_select %p59, %s58, 1
    %s61 = sadd.s32 %s25, 1
    %p62 = scmp.lt.s32.totalorder %s61, 1
    %s63 = scalar_select %p62, %s61, 1
    %s64 = ssub.s32 %s17, %s29
    %s65 = ssub.s32 %s60, %s63
    %s66 = sor.u32 %s64, %s65
    %p67 = scmp.eq.s32.totalorder %s66, 0
    %s69 = sadd.s32 %s68, 1
    %s70 = scalar_select %p67, %s68, %s69
    %p73 = pneg %p67
    %p74 = scmp.eq.s32.totalorder %s10, 1
    %p75 = por %p73, %p74
    %p76 = scmp.ne.s32.totalorder %s68, %s71
    %p77 = scmp.eq.s32.totalorder %s10, 0
    %p78 = por %p76, %p77
    %p79 = scmp.ne.s32.totalorder %s68, %s71
    %p80 = scmp.eq.s32.totalorder %s15, 1
    %p81 = por %p79, %p80
    %p82 = scmp.ne.s32.totalorder %s71, %s72
    %p83 = scmp.eq.s32.totalorder %s15, 0
    %p84 = por %p82, %p83
    %p85 = scmp.ne.s32.totalorder %s71, %s72
    %p86 = scmp.eq.s32.totalorder %s16, 1
    %p87 = por %p85, %p86
    %p89 = scmp.ne.s32.totalorder %s72, %s88
    %p90 = scmp.eq.s32.totalorder %s16, 0
    %p91 = por %p89, %p90
    %s93 = sadd.s32 %s92, 1
    %p96 = scmp.eq.s32.totalorder %s10, 1
    %p97 = scmp.ne.s32.totalorder %s92, %s94
    %p98 = scmp.eq.s32.totalorder %s10, 0
    %p99 = por %p97, %p98
    %p100 = scmp.ne.s32.totalorder %s92, %s94
    %p101 = scmp.eq.s32.totalorder %s15, 1
    %p102 = por %p100, %p101
    %p103 = scmp.ne.s32.totalorder %s94, %s95
    %p104 = scmp.eq.s32.totalorder %s15, 0
    %p105 = por %p103, %p104
    %p106 = scmp.ne.s32.totalorder %s94, %s95
    %p107 = scmp.eq.s32.totalorder %s16, 1
    %p108 = por %p106, %p107
    %p110 = scmp.ne.s32.totalorder %s95, %s109
    %p111 = scmp.eq.s32.totalorder %s16, 0
    %p112 = por %p110, %p111
    %s114 = sadd.s32 %s113, 1
    %p117 = scmp.eq.s32.totalorder %s10, 1
    %p118 = scmp.ne.s32.totalorder %s113, %s115
    %p119 = scmp.eq.s32.totalorder %s10, 0
    %p120 = por %p118, %p119
    %p121 = scmp.ne.s32.totalorder %s113, %s115
    %p122 = scmp.eq.s32.totalorder %s15, 1
    %p123 = por %p121, %p122
    %p124 = scmp.ne.s32.totalorder %s115, %s116
    %p125 = scmp.eq.s32.totalorder %s15, 0
    %p126 = por %p124, %p125
    %p127 = scmp.ne.s32.totalorder %s115, %s116
    %p128 = scmp.eq.s32.totalorder %s16, 1
    %p129 = por %p127, %p128
    %p131 = scmp.ne.s32.totalorder %s116, %s130
    %p132 = scmp.eq.s32.totalorder %s16, 0
    %p133 = por %p131, %p132
    %s134 = ssub.s32 %s17, %s29
    %s135 = ssub.s32 %s18, %s25
    %s136 = sor.u32 %s134, %s135
    %p137 = scmp.eq.s32.totalorder %s136, 0
    %s139 = sadd.s32 %s138, 1
    %s140 = scalar_select %p137, %s138, %s139
    %p143 = pneg %p137
    %p144 = scmp.eq.s32.totalorder %s10, 1
    %p145 = por %p143, %p144
    %p146 = scmp.ne.s32.totalorder %s138, %s141
    %p147 = scmp.eq.s32.totalorder %s10, 0
    %p148 = por %p146, %p147
    %p149 = scmp.ne.s32.totalorder %s138, %s141
    %p150 = scmp.eq.s32.totalorder %s15, 1
    %p151 = por %p149, %p150
    %p152 = scmp.ne.s32.totalorder %s141, %s142
    %p153 = scmp.eq.s32.totalorder %s15, 0
    %p154 = por %p152, %p153
    %p155 = scmp.ne.s32.totalorder %s141, %s142
    %p156 = scmp.eq.s32.totalorder %s16, 1
    %p157 = por %p155, %p156
    %p159 = scmp.ne.s32.totalorder %s142, %s158
    %p160 = scmp.eq.s32.totalorder %s16, 0
    %p161 = por %p159, %p160
    %p162 = scmp.le.s32.totalorder 1, %s10
    %p163 = scmp.lt.s32.totalorder %s10, 3
    %p164 = pnand %p162, %p163
    %p165 = pneg %p164
    // Predicated region
    $region9: #{variational_encoder_forward.6} parent=5 // pred_check
      _
    $region10: #{variational_encoder_forward.6} parent=5 // pred_check_branch
      %167 = sbr.rel (%p164) target = $region12
    $region11: #{variational_encoder_forward.6} parent=5 // pred_region
      %s168 = ssub.s32 %s10, 1
      // Predicated region
      $region13: #{variational_encoder_forward.6} parent=11 // pred_check
        %p169 = pneg %p105
      $region14: #{variational_encoder_forward.6} parent=11 // pred_check_branch
        %171 = sbr.rel (%p169) target = $region16
      $region15: #{variational_encoder_forward.6} parent=11 // pred_region
        _
      $region16: #{variational_encoder_forward.6} parent=11 // pred_fallthru
        _
      // Predicated region
      $region17: #{variational_encoder_forward.6} parent=11 // pred_check
        %p172 = pneg %p126
      $region18: #{variational_encoder_forward.6} parent=11 // pred_check_branch
        %174 = sbr.rel (%p172) target = $region20
      $region19: #{variational_encoder_forward.6} parent=11 // pred_region
        _
      $region20: #{variational_encoder_forward.6} parent=11 // pred_fallthru
        _
    $region12: #{variational_encoder_forward.6} parent=5 // pred_fallthru
      _
    %p175 = scmp.lt.s32.totalorder %s10, 2
    // Predicated region
    $region21: #{variational_encoder_forward.6} parent=5 // pred_check
      %p176 = pneg %p175
    $region22: #{variational_encoder_forward.6} parent=5 // pred_check_branch
      %178 = sbr.rel (%p176) target = $region24
    $region23: #{variational_encoder_forward.6} parent=5 // pred_region
      // Predicated region
      $region25: #{variational_encoder_forward.6} parent=23 // pred_check
        %p179 = pneg %p44
      $region26: #{variational_encoder_forward.6} parent=23 // pred_check_branch
        %181 = sbr.rel (%p179) target = $region28
      $region27: #{variational_encoder_forward.6} parent=23 // pred_region
        %s182 = smul.u32 16, %s18
        %s183 = ssub.s32 18, %s182
        %p184 = scmp.lt.s32.totalorder %s183, 16
        %s185 = scalar_select %p184, %s183, 16
        %s186 = smul.u32 64, %s185
        %p187 = scmp.lt.s32.totalorder %s17, 1
        %s188 = scalar_select %p187, %s17, 1
        %p189 = scmp.lt.s32.totalorder %s182, 17
        %s190 = scalar_select %p189, %s182, 17
        %s191 = smul.addr %s188, 18
        %s192 = sadd.s32 %s190, %s191
        %s193 = smul.addr %s192, 4
        %s194 = scalar_lea.vmem %s0, %s193
        %s195 = smul.u32 16, %s18
        %s196 = ssub.s32 18, %s195
        %p197 = scmp.lt.s32.totalorder %s196, 16
        %s198 = scalar_select %p197, %s196, 16
        %s199 = smul.u32 64, %s198
      $region28: #{variational_encoder_forward.6} parent=23 // pred_fallthru
        _
      // Predicated region
      $region29: #{variational_encoder_forward.6} parent=23 // pred_check
        %p200 = pneg %p78
      $region30: #{variational_encoder_forward.6} parent=23 // pred_check_branch
        %202 = sbr.rel (%p200) target = $region32
      $region31: #{variational_encoder_forward.6} parent=23 // pred_region
        %s203 = sadd.s32 %s18, 1
        %p204 = scmp.lt.s32.totalorder %s203, 1
        %s205 = scalar_select %p204, %s203, 1
        %s206 = smul.u32 16, %s205
        %s207 = ssub.s32 18, %s206
        %p208 = scmp.lt.s32.totalorder %s207, 16
        %s209 = scalar_select %p208, %s207, 16
        %s210 = smul.u32 64, %s209
        %p211 = scmp.lt.s32.totalorder %s17, 1
        %s212 = scalar_select %p211, %s17, 1
        %p213 = scmp.lt.s32.totalorder %s206, 17
        %s214 = scalar_select %p213, %s206, 17
        %s215 = smul.addr %s212, 18
        %s216 = sadd.s32 %s214, %s215
        %s217 = smul.addr %s216, 4
        %s218 = scalar_lea.vmem %s1, %s217
        %s219 = sadd.s32 %s18, 1
        %p220 = scmp.lt.s32.totalorder %s219, 1
        %s221 = scalar_select %p220, %s219, 1
        %s222 = smul.u32 16, %s221
        %s223 = ssub.s32 18, %s222
        %p224 = scmp.lt.s32.totalorder %s223, 16
        %s225 = scalar_select %p224, %s223, 16
        %s226 = smul.u32 64, %s225
      $region32: #{variational_encoder_forward.6} parent=23 // pred_fallthru
        _
    $region24: #{variational_encoder_forward.6} parent=5 // pred_fallthru
      _
    %p227 = scmp.le.s32.totalorder 1, %s10
    %p228 = scmp.lt.s32.totalorder %s10, 3
    %p229 = pnand %p227, %p228
    %p230 = pneg %p229
    // Predicated region
    $region33: #{variational_encoder_forward.6} parent=5 // pred_check
      _
    $region34: #{variational_encoder_forward.6} parent=5 // pred_check_branch
      %232 = sbr.rel (%p229) target = $region36
    $region35: #{variational_encoder_forward.6} parent=5 // pred_region
      %s233 = ssub.s32 %s10, 1
      %s234 = smul.u32 16, %s20
      %s235 = ssub.s32 18, %s234
      %p236 = scmp.lt.s32.totalorder %s235, 16
      %s237 = scalar_select %p236, %s235, 16
      %s238 = smul.u32 64, %s237
      %p239 = scmp.lt.s32.totalorder %s19, 1
      %s240 = scalar_select %p239, %s19, 1
      %p241 = scmp.lt.s32.totalorder %s234, 17
      %s242 = scalar_select %p241, %s234, 17
      %s243 = smul.addr %s240, 18
      %s244 = sadd.s32 %s242, %s243
      %s245 = smul.addr %s244, 4
      %s246 = scalar_lea.vmem %s0, %s245
      %p247 = pneg %p50
      %p248 = pneg %p47
      %s249 = sadd.s32 %s20, 1
      %p250 = scmp.lt.s32.totalorder %s249, 1
      %s251 = scalar_select %p250, %s249, 1
      %s252 = smul.u32 16, %s251
      %s253 = ssub.s32 18, %s252
      %p254 = scmp.lt.s32.totalorder %s253, 16
      %s255 = scalar_select %p254, %s253, 16
      %s256 = smul.u32 64, %s255
      %p257 = scmp.lt.s32.totalorder %s19, 1
      %s258 = scalar_select %p257, %s19, 1
      %p259 = scmp.lt.s32.totalorder %s252, 17
      %s260 = scalar_select %p259, %s252, 17
      %s261 = smul.addr %s258, 18
      %s262 = sadd.s32 %s260, %s261
      %s263 = smul.addr %s262, 4
      %s264 = scalar_lea.vmem %s1, %s263
      %p265 = pneg %p84
      %p266 = pneg %p81
      %p267 = pneg %p105
      %p268 = pneg %p102
      %p269 = pneg %p126
      %p270 = pneg %p123
      %p271 = pneg %p154
      %p272 = pneg %p151
      %s273 = smul.u32 16, %s20
      %p274 = scmp.lt.s32.totalorder %s19, 1
      %s275 = scalar_select %p274, %s19, 1
      %p276 = scmp.lt.s32.totalorder %s273, 15
      %s277 = scalar_select %p276, %s273, 15
      %s278 = smul.addr %s275, 16
      %s279 = sadd.s32 %s277, %s278
      %s280 = smul.addr %s279, 4
      %s281 = scalar_lea.vmem %s4, %s280
      %s282 = smul.u32 16, %s20
      %s283 = ssub.s32 18, %s282
      %p284 = scmp.lt.s32.totalorder %s283, 16
      %s285 = scalar_select %p284, %s283, 16
      %s286 = smul.u32 64, %s285
      %p287 = scmp.lt.s32.totalorder %s19, 1
      %s288 = scalar_select %p287, %s19, 1
      %p289 = scmp.lt.s32.totalorder %s282, 17
      %s290 = scalar_select %p289, %s282, 17
      %s291 = smul.addr %s288, 18
      %s292 = sadd.s32 %s290, %s291
      %s293 = smul.addr %s292, 4
      %s294 = scalar_lea.vmem %s0, %s293
      %s295 = smul.u32 16, %s20
      %s296 = ssub.s32 18, %s295
      %p297 = scmp.lt.s32.totalorder %s296, 16
      %s298 = scalar_select %p297, %s296, 16
      %s299 = smul.u32 64, %s298
      %s300 = sadd.s32 %s20, 1
      %p301 = scmp.lt.s32.totalorder %s300, 1
      %s302 = scalar_select %p301, %s300, 1
      %s303 = smul.u32 16, %s302
      %s304 = ssub.s32 18, %s303
      %p305 = scmp.lt.s32.totalorder %s304, 16
      %s306 = scalar_select %p305, %s304, 16
      %s307 = smul.u32 64, %s306
      %p308 = scmp.lt.s32.totalorder %s19, 1
      %s309 = scalar_select %p308, %s19, 1
      %p310 = scmp.lt.s32.totalorder %s303, 17
      %s311 = scalar_select %p310, %s303, 17
      %s312 = smul.addr %s309, 18
      %s313 = sadd.s32 %s311, %s312
      %s314 = smul.addr %s313, 4
      %s315 = scalar_lea.vmem %s1, %s314
      %s316 = sadd.s32 %s20, 1
      %p317 = scmp.lt.s32.totalorder %s316, 1
      %s318 = scalar_select %p317, %s316, 1
      %s319 = smul.u32 16, %s318
      %s320 = ssub.s32 18, %s319
      %p321 = scmp.lt.s32.totalorder %s320, 16
      %s322 = scalar_select %p321, %s320, 16
      %s323 = smul.u32 64, %s322
      %s324 = smul.u32 16, %s20
      %p325 = scmp.lt.s32.totalorder %s19, 1
      %s326 = scalar_select %p325, %s19, 1
      %p327 = scmp.lt.s32.totalorder %s324, 15
      %s328 = scalar_select %p327, %s324, 15
      %s329 = smul.addr %s326, 16
      %s330 = sadd.s32 %s328, %s329
      %s331 = smul.addr %s330, 4
      %s332 = scalar_lea.vmem %s4, %s331
      %s333 = smul.u32 16, %s20
      %v335 = vld [vmem:[%s294] sm:$0xf]
      %v336 = vld [vmem:[%s294 + $0x4] sm:$0xf]
      %v337 = vld [vmem:[%s294 + $0x8] sm:$0xf]
      %v338 = vld [vmem:[%s294 + $0xc] sm:$0xf]
      %v339 = vld [vmem:[%s294 + $0x10] sm:$0xf]
      %v340 = vld [vmem:[%s294 + $0x14] sm:$0xf]
      %v341 = vld [vmem:[%s294 + $0x18] sm:$0xf]
      %v342 = vld [vmem:[%s294 + $0x1c] sm:$0xf]
      %v343 = vld [vmem:[%s294 + $0x20] sm:$0xf]
      %v344 = vld [vmem:[%s294 + $0x24] sm:$0xf]
      %v345 = vld [vmem:[%s294 + $0x28] sm:$0xf]
      %v346 = vld [vmem:[%s294 + $0x2c] sm:$0xf]
      %v347 = vld [vmem:[%s294 + $0x30] sm:$0xf]
      %v348 = vld [vmem:[%s294 + $0x34] sm:$0xf]
      %v349 = vld [vmem:[%s294 + $0x38] sm:$0xf]
      %v350 = vld [vmem:[%s294 + $0x3c] sm:$0xf]
      %v351 = vld [vmem:[%s315] sm:$0xf]
      %v352 = vld [vmem:[%s315 + $0x4] sm:$0xf]
      %v353 = vld [vmem:[%s315 + $0x8] sm:$0xf]
      %v354 = vld [vmem:[%s315 + $0xc] sm:$0xf]
      %v371 = vunpack.c.l.b16 %v335
      %v372 = vunpack.c.l.b16 %v336
      %v373 = vunpack.c.l.b16 %v337
      %v374 = vunpack.c.l.b16 %v338
      %v375 = vunpack.c.l.b16 %v339
      %v376 = vunpack.c.l.b16 %v340
      %v377 = vunpack.c.l.b16 %v341
      %v378 = vunpack.c.l.b16 %v342
      %v379 = vunpack.c.l.b16 %v343
      %v380 = vunpack.c.l.b16 %v344
      %v381 = vunpack.c.l.b16 %v345
      %v382 = vunpack.c.l.b16 %v346
      %v383 = vunpack.c.l.b16 %v347
      %v384 = vunpack.c.l.b16 %v348
      %v385 = vunpack.c.l.b16 %v349
      %v386 = vunpack.c.l.b16 %v350
      %v387 = vpack.c.b16 %v372, %v371
      %v388 = vpack.c.b16 %v374, %v373
      %v389 = vpack.c.b16 %v376, %v375
      %v390 = vpack.c.b16 %v378, %v377
      %v391 = vpack.c.b16 %v380, %v379
      %v392 = vpack.c.b16 %v382, %v381
      %v393 = vpack.c.b16 %v384, %v383
      %v394 = vpack.c.b16 %v386, %v385
      %v407 = vunpack.c.l.b16 %v351
      %v408 = vunpack.c.l.b16 %v352
      %v409 = vunpack.c.l.b16 %v353
      %v410 = vunpack.c.l.b16 %v354
      %v411 = vpack.c.b16 %v408, %v407
      %v412 = vpack.c.b16 %v410, %v409
      %v414 = vld [vmem:[%s2] sm:$0xf]
      %v415 = vld [vmem:[%s2 + $0x4] sm:$0xf]
      %v416 = vld [vmem:[%s2 + $0x8] sm:$0xf]
      %v417 = vld [vmem:[%s2 + $0xc] sm:$0xf]
      %v418 = vld [vmem:[%s2 + $0x10] sm:$0xf]
      %v419 = vld [vmem:[%s2 + $0x14] sm:$0xf]
      %v420 = vld [vmem:[%s2 + $0x18] sm:$0xf]
      %v421 = vld [vmem:[%s2 + $0x1c] sm:$0xf]
      %v422 = vld [vmem:[%s2 + $0x20] sm:$0xf]
      %v423 = vld [vmem:[%s2 + $0x24] sm:$0xf]
      %v424 = vld [vmem:[%s2 + $0x28] sm:$0xf]
      %v425 = vld [vmem:[%s2 + $0x2c] sm:$0xf]
      %v426 = vld [vmem:[%s2 + $0x30] sm:$0xf]
      %v427 = vld [vmem:[%s2 + $0x34] sm:$0xf]
      %v428 = vld [vmem:[%s2 + $0x38] sm:$0xf]
      %v429 = vld [vmem:[%s2 + $0x3c] sm:$0xf]
      %s430 = scalar_lea.vmem %s2, 64
      %v431 = vld [vmem:[%s430] sm:$0xf]
      %v432 = vld [vmem:[%s430 + $0x4] sm:$0xf]
      %v433 = vld [vmem:[%s430 + $0x8] sm:$0xf]
      %v434 = vld [vmem:[%s430 + $0xc] sm:$0xf]
      %v435 = vld [vmem:[%s430 + $0x10] sm:$0xf]
      %v436 = vld [vmem:[%s430 + $0x14] sm:$0xf]
      %v437 = vld [vmem:[%s430 + $0x18] sm:$0xf]
      %v438 = vld [vmem:[%s430 + $0x1c] sm:$0xf]
      %v439 = vld [vmem:[%s430 + $0x20] sm:$0xf]
      %v440 = vld [vmem:[%s430 + $0x24] sm:$0xf]
      %v441 = vld [vmem:[%s430 + $0x28] sm:$0xf]
      %v442 = vld [vmem:[%s430 + $0x2c] sm:$0xf]
      %v443 = vld [vmem:[%s430 + $0x30] sm:$0xf]
      %v444 = vld [vmem:[%s430 + $0x34] sm:$0xf]
      %v445 = vld [vmem:[%s430 + $0x38] sm:$0xf]
      %v446 = vld [vmem:[%s430 + $0x3c] sm:$0xf]
      %vm447 = vsmask.f32 7424
      %v449 = vshrl.u32 %v387, 16
      %v451 = vshll.u32 %v387, 16
      %v453 = vrot.slane %v451, 1
      %v454 = vor.u32 %v449, %v453
      %v456 = vshll.u32 %v388, 16
      %v458 = vrot.slane %v456, 1
      %v459 = vsel %vm447, %v454, %v458
      %v460 = vshrl.u32 %v388, 16
      %v462 = vor.u32 %v460, %v458
      %v464 = vshll.u32 %v389, 16
      %v466 = vrot.slane %v464, 1
      %v467 = vsel %vm447, %v462, %v466
      %v468 = vshrl.u32 %v389, 16
      %v470 = vor.u32 %v468, %v466
      %v472 = vshll.u32 %v390, 16
      %v474 = vrot.slane %v472, 1
      %v475 = vsel %vm447, %v470, %v474
      %v476 = vshrl.u32 %v390, 16
      %v478 = vor.u32 %v476, %v474
      %v480 = vshll.u32 %v391, 16
      %v482 = vrot.slane %v480, 1
      %v483 = vsel %vm447, %v478, %v482
      %v484 = vshrl.u32 %v391, 16
      %v486 = vor.u32 %v484, %v482
      %v488 = vshll.u32 %v392, 16
      %v490 = vrot.slane %v488, 1
      %v491 = vsel %vm447, %v486, %v490
      %v492 = vshrl.u32 %v392, 16
      %v494 = vor.u32 %v492, %v490
      %v496 = vshll.u32 %v393, 16
      %v498 = vrot.slane %v496, 1
      %v499 = vsel %vm447, %v494, %v498
      %v500 = vshrl.u32 %v393, 16
      %v502 = vor.u32 %v500, %v498
      %v504 = vshll.u32 %v394, 16
      %v506 = vrot.slane %v504, 1
      %v507 = vsel %vm447, %v502, %v506
      %v508 = vshrl.u32 %v394, 16
      %v510 = vor.u32 %v508, %v506
      %v512 = vshll.u32 %v411, 16
      %v514 = vrot.slane %v512, 1
      %v515 = vsel %vm447, %v510, %v514
      %v540 = vunpack.c.l.b16 %v431
      %v541 = vunpack.c.l.b16 %v432
      %v542 = vunpack.c.l.b16 %v433
      %v543 = vunpack.c.l.b16 %v434
      %v544 = vunpack.c.l.b16 %v435
      %v545 = vunpack.c.l.b16 %v436
      %v546 = vunpack.c.l.b16 %v437
      %v547 = vunpack.c.l.b16 %v438
      %v548 = vunpack.c.l.b16 %v439
      %v549 = vunpack.c.l.b16 %v440
      %v550 = vunpack.c.l.b16 %v441
      %v551 = vunpack.c.l.b16 %v442
      %v552 = vunpack.c.l.b16 %v443
      %v553 = vunpack.c.l.b16 %v444
      %v554 = vunpack.c.l.b16 %v445
      %v555 = vunpack.c.l.b16 %v446
      %v556 = vpack.c.b16 %v541, %v540
      %v557 = vpack.c.b16 %v543, %v542
      %v558 = vpack.c.b16 %v545, %v544
      %v559 = vpack.c.b16 %v547, %v546
      %v560 = vpack.c.b16 %v549, %v548
      %v561 = vpack.c.b16 %v551, %v550
      %v562 = vpack.c.b16 %v553, %v552
      %v563 = vpack.c.b16 %v555, %v554
      %572 = vmatprep.subr.bf16.mxu0 0
      %573 = vmatpush1.bf16.msra.mxu0 %v556
      %574 = vmatprep.subr.bf16.mxu0 0
      %575 = vmatpush1.bf16.msra.mxu0 %v557
      %576 = vmatprep.subr.bf16.mxu0 0
      %577 = vmatpush1.bf16.msra.mxu0 %v558
      %578 = vmatprep.subr.bf16.mxu0 0
      %579 = vmatpush1.bf16.msra.mxu0 %v559
      %580 = vmatprep.subr.bf16.mxu0 0
      %581 = vmatpush1.bf16.msra.mxu0 %v560
      %582 = vmatprep.subr.bf16.mxu0 0
      %583 = vmatpush1.bf16.msra.mxu0 %v561
      %584 = vmatprep.subr.bf16.mxu0 0
      %585 = vmatpush1.bf16.msra.mxu0 %v562
      %586 = vmatprep.subr.bf16.mxu0 0
      %587 = vmatpush1.bf16.msra.mxu0 %v563
      %588 = vmatprep.subr.bf16.mxu0 0
      %589 = vmatpush1.bf16.msra.mxu0 0
      %590 = vmatprep.subr.bf16.mxu0 0
      %591 = vmatpush1.bf16.msra.mxu0 0
      %592 = vmatprep.subr.bf16.mxu0 0
      %593 = vmatpush1.bf16.msra.mxu0 0
      %594 = vmatprep.subr.bf16.mxu0 0
      %595 = vmatpush1.bf16.msra.mxu0 0
      %596 = vmatprep.subr.bf16.mxu0 0
      %597 = vmatpush1.bf16.msra.mxu0 0
      %598 = vmatprep.subr.bf16.mxu0 0
      %599 = vmatpush1.bf16.msra.mxu0 0
      %600 = vmatprep.subr.bf16.mxu0 0
      %601 = vmatpush1.bf16.msra.mxu0 0
      %602 = vmatprep.subr.bf16.mxu0 0
      %603 = vmatpush1.bf16.msra.mxu0 0
      %604 = vmatprep.mubr.bf16.mxu0 0
      %605 = vmatmul.mubr.bf16.gmra.mrb[0].mxu0 %v459
      %v606 = vpop.f32.mrb[0].mxu0
      %v607 = vadd.f32 0.0, %v606
      %v608 = vpop.f32.mrb[0].mxu0
      %v609 = vpop.f32.mrb[0].mxu0
      %v610 = vadd.f32 0.0, %v609
      %v611 = vpop.f32.mrb[0].mxu0
      %612 = vmatprep.mubr.bf16.mxu0 0
      %613 = vmatmul.mubr.bf16.gmra.mrb[0].mxu0 %v467
      %v614 = vpop.f32.mrb[0].mxu0
      %v615 = vadd.f32 0.0, %v614
      %v616 = vpop.f32.mrb[0].mxu0
      %v617 = vpop.f32.mrb[0].mxu0
      %v618 = vadd.f32 0.0, %v617
      %v619 = vpop.f32.mrb[0].mxu0
      %620 = vmatprep.mubr.bf16.mxu0 0
      %621 = vmatmul.mubr.bf16.gmra.mrb[0].mxu0 %v475
      %v622 = vpop.f32.mrb[0].mxu0
      %v623 = vadd.f32 0.0, %v622
      %v624 = vpop.f32.mrb[0].mxu0
      %v625 = vpop.f32.mrb[0].mxu0
      %v626 = vadd.f32 0.0, %v625
      %v627 = vpop.f32.mrb[0].mxu0
      %628 = vmatprep.mubr.bf16.mxu0 0
      %629 = vmatmul.mubr.bf16.gmra.mrb[0].mxu0 %v483
      %v630 = vpop.f32.mrb[0].mxu0
      %v631 = vadd.f32 0.0, %v630
      %v632 = vpop.f32.mrb[0].mxu0
      %v633 = vpop.f32.mrb[0].mxu0
      %v634 = vadd.f32 0.0, %v633
      %v635 = vpop.f32.mrb[0].mxu0
      %636 = vmatprep.mubr.bf16.mxu0 0
      %637 = vmatmul.mubr.bf16.gmra.mrb[0].mxu0 %v491
      %v638 = vpop.f32.mrb[0].mxu0
      %v639 = vadd.f32 0.0, %v638
      %v640 = vpop.f32.mrb[0].mxu0
      %v641 = vpop.f32.mrb[0].mxu0
      %v642 = vadd.f32 0.0, %v641
      %v643 = vpop.f32.mrb[0].mxu0
      %644 = vmatprep.mubr.bf16.mxu0 0
      %645 = vmatmul.mubr.bf16.gmra.mrb[0].mxu0 %v499
      %v646 = vpop.f32.mrb[0].mxu0
      %v647 = vadd.f32 0.0, %v646
      %v648 = vpop.f32.mrb[0].mxu0
      %v649 = vpop.f32.mrb[0].mxu0
      %v650 = vadd.f32 0.0, %v649
      %v651 = vpop.f32.mrb[0].mxu0
      %652 = vmatprep.mubr.bf16.mxu0 0
      %653 = vmatmul.mubr.bf16.gmra.mrb[0].mxu0 %v507
      %v654 = vpop.f32.mrb[0].mxu0
      %v655 = vadd.f32 0.0, %v654
      %v656 = vpop.f32.mrb[0].mxu0
      %v657 = vpop.f32.mrb[0].mxu0
      %v658 = vadd.f32 0.0, %v657
      %v659 = vpop.f32.mrb[0].mxu0
      %660 = vmatprep.mubr.bf16.mxu0 0
      %661 = vmatmul.mubr.bf16.gmra.mrb[0].mxu0 %v515
      %v662 = vpop.f32.mrb[0].mxu0
      %v663 = vadd.f32 0.0, %v662
      %v664 = vpop.f32.mrb[0].mxu0
      %v665 = vpop.f32.mrb[0].mxu0
      %v666 = vadd.f32 0.0, %v665
      %v667 = vpop.f32.mrb[0].mxu0
      %668 = vdwg.mxu0
      %v685 = vunpack.c.l.b16 %v414
      %v686 = vunpack.c.l.b16 %v415
      %v687 = vunpack.c.l.b16 %v416
      %v688 = vunpack.c.l.b16 %v417
      %v689 = vunpack.c.l.b16 %v418
      %v690 = vunpack.c.l.b16 %v419
      %v691 = vunpack.c.l.b16 %v420
      %v692 = vunpack.c.l.b16 %v421
      %v693 = vunpack.c.l.b16 %v422
      %v694 = vunpack.c.l.b16 %v423
      %v695 = vunpack.c.l.b16 %v424
      %v696 = vunpack.c.l.b16 %v425
      %v697 = vunpack.c.l.b16 %v426
      %v698 = vunpack.c.l.b16 %v427
      %v699 = vunpack.c.l.b16 %v428
      %v700 = vunpack.c.l.b16 %v429
      %v701 = vpack.c.b16 %v686, %v685
      %v702 = vpack.c.b16 %v688, %v687
      %v703 = vpack.c.b16 %v690, %v689
      %v704 = vpack.c.b16 %v692, %v691
      %v705 = vpack.c.b16 %v694, %v693
      %v706 = vpack.c.b16 %v696, %v695
      %v707 = vpack.c.b16 %v698, %v697
      %v708 = vpack.c.b16 %v700, %v699
      %717 = vmatprep.subr.bf16.mxu0 0
      %718 = vmatpush1.bf16.msra.mxu0 %v701
      %719 = vmatprep.subr.bf16.mxu0 0
      %720 = vmatpush1.bf16.msra.mxu0 %v702
      %721 = vmatprep.subr.bf16.mxu0 0
      %722 = vmatpush1.bf16.msra.mxu0 %v703
      %723 = vmatprep.subr.bf16.mxu0 0
      %724 = vmatpush1.bf16.msra.mxu0 %v704
      %725 = vmatprep.subr.bf16.mxu0 0
      %726 = vmatpush1.bf16.msra.mxu0 %v705
      %727 = vmatprep.subr.bf16.mxu0 0
      %728 = vmatpush1.bf16.msra.mxu0 %v706
      %729 = vmatprep.subr.bf16.mxu0 0
      %730 = vmatpush1.bf16.msra.mxu0 %v707
      %731 = vmatprep.subr.bf16.mxu0 0
      %732 = vmatpush1.bf16.msra.mxu0 %v708
      %733 = vmatprep.subr.bf16.mxu0 0
      %734 = vmatpush1.bf16.msra.mxu0 0
      %735 = vmatprep.subr.bf16.mxu0 0
      %736 = vmatpush1.bf16.msra.mxu0 0
      %737 = vmatprep.subr.bf16.mxu0 0
      %738 = vmatpush1.bf16.msra.mxu0 0
      %739 = vmatprep.subr.bf16.mxu0 0
      %740 = vmatpush1.bf16.msra.mxu0 0
      %741 = vmatprep.subr.bf16.mxu0 0
      %742 = vmatpush1.bf16.msra.mxu0 0
      %743 = vmatprep.subr.bf16.mxu0 0
      %744 = vmatpush1.bf16.msra.mxu0 0
      %745 = vmatprep.subr.bf16.mxu0 0
      %746 = vmatpush1.bf16.msra.mxu0 0
      %747 = vmatprep.subr.bf16.mxu0 0
      %748 = vmatpush1.bf16.msra.mxu0 0
      %749 = vmatprep.mubr.bf16.mxu0 0
      %750 = vmatmul.mubr.bf16.gmra.mrb[0].mxu0 %v387
      %v751 = vpop.f32.mrb[0].mxu0
      %v752 = vadd.f32 %v607, %v751
      %v753 = vpop.f32.mrb[0].mxu0
      %v754 = vpop.f32.mrb[0].mxu0
      %v755 = vadd.f32 %v610, %v754
      %v756 = vpop.f32.mrb[0].mxu0
      %757 = vmatprep.mubr.bf16.mxu0 0
      %758 = vmatmul.mubr.bf16.gmra.mrb[0].mxu0 %v388
      %v759 = vpop.f32.mrb[0].mxu0
      %v760 = vadd.f32 %v615, %v759
      %v761 = vpop.f32.mrb[0].mxu0
      %v762 = vpop.f32.mrb[0].mxu0
      %v763 = vadd.f32 %v618, %v762
      %v764 = vpop.f32.mrb[0].mxu0
      %765 = vmatprep.mubr.bf16.mxu0 0
      %766 = vmatmul.mubr.bf16.gmra.mrb[0].mxu0 %v389
      %v767 = vpop.f32.mrb[0].mxu0
      %v768 = vadd.f32 %v623, %v767
      %v769 = vpop.f32.mrb[0].mxu0
      %v770 = vpop.f32.mrb[0].mxu0
      %v771 = vadd.f32 %v626, %v770
      %v772 = vpop.f32.mrb[0].mxu0
      %773 = vmatprep.mubr.bf16.mxu0 0
      %774 = vmatmul.mubr.bf16.gmra.mrb[0].mxu0 %v390
      %v775 = vpop.f32.mrb[0].mxu0
      %v776 = vadd.f32 %v631, %v775
      %v777 = vpop.f32.mrb[0].mxu0
      %v778 = vpop.f32.mrb[0].mxu0
      %v779 = vadd.f32 %v634, %v778
      %v780 = vpop.f32.mrb[0].mxu0
      %781 = vmatprep.mubr.bf16.mxu0 0
      %782 = vmatmul.mubr.bf16.gmra.mrb[0].mxu0 %v391
      %v783 = vpop.f32.mrb[0].mxu0
      %v784 = vadd.f32 %v639, %v783
      %v785 = vpop.f32.mrb[0].mxu0
      %v786 = vpop.f32.mrb[0].mxu0
      %v787 = vadd.f32 %v642, %v786
      %v788 = vpop.f32.mrb[0].mxu0
      %789 = vmatprep.mubr.bf16.mxu0 0
      %790 = vmatmul.mubr.bf16.gmra.mrb[0].mxu0 %v392
      %v791 = vpop.f32.mrb[0].mxu0
      %v792 = vadd.f32 %v647, %v791
      %v793 = vpop.f32.mrb[0].mxu0
      %v794 = vpop.f32.mrb[0].mxu0
      %v795 = vadd.f32 %v650, %v794
      %v796 = vpop.f32.mrb[0].mxu0
      %797 = vmatprep.mubr.bf16.mxu0 0
      %798 = vmatmul.mubr.bf16.gmra.mrb[0].mxu0 %v393
      %v799 = vpop.f32.mrb[0].mxu0
      %v800 = vadd.f32 %v655, %v799
      %v801 = vpop.f32.mrb[0].mxu0
      %v802 = vpop.f32.mrb[0].mxu0
      %v803 = vadd.f32 %v658, %v802
      %v804 = vpop.f32.mrb[0].mxu0
      %805 = vmatprep.mubr.bf16.mxu0 0
      %806 = vmatmul.mubr.bf16.gmra.mrb[0].mxu0 %v394
      %v807 = vpop.f32.mrb[0].mxu0
      %v808 = vadd.f32 %v663, %v807
      %v809 = vpop.f32.mrb[0].mxu0
      %v810 = vpop.f32.mrb[0].mxu0
      %v811 = vadd.f32 %v666, %v810
      %v812 = vpop.f32.mrb[0].mxu0
      %813 = vdwg.mxu0
      %s814 = scalar_lea.vmem %s2, 128
      %v815 = vld [vmem:[%s814] sm:$0xf]
      %v816 = vld [vmem:[%s814 + $0x4] sm:$0xf]
      %v817 = vld [vmem:[%s814 + $0x8] sm:$0xf]
      %v818 = vld [vmem:[%s814 + $0xc] sm:$0xf]
      %v819 = vld [vmem:[%s814 + $0x10] sm:$0xf]
      %v820 = vld [vmem:[%s814 + $0x14] sm:$0xf]
      %v821 = vld [vmem:[%s814 + $0x18] sm:$0xf]
      %v822 = vld [vmem:[%s814 + $0x1c] sm:$0xf]
      %v823 = vld [vmem:[%s814 + $0x20] sm:$0xf]
      %v824 = vld [vmem:[%s814 + $0x24] sm:$0xf]
      %v825 = vld [vmem:[%s814 + $0x28] sm:$0xf]
      %v826 = vld [vmem:[%s814 + $0x2c] sm:$0xf]
      %v827 = vld [vmem:[%s814 + $0x30] sm:$0xf]
      %v828 = vld [vmem:[%s814 + $0x34] sm:$0xf]
      %v829 = vld [vmem:[%s814 + $0x38] sm:$0xf]
      %v830 = vld [vmem:[%s814 + $0x3c] sm:$0xf]
      %v847 = vunpack.c.l.b16 %v815
      %v848 = vunpack.c.l.b16 %v816
      %v849 = vunpack.c.l.b16 %v817
      %v850 = vunpack.c.l.b16 %v818
      %v851 = vunpack.c.l.b16 %v819
      %v852 = vunpack.c.l.b16 %v820
      %v853 = vunpack.c.l.b16 %v821
      %v854 = vunpack.c.l.b16 %v822
      %v855 = vunpack.c.l.b16 %v823
      %v856 = vunpack.c.l.b16 %v824
      %v857 = vunpack.c.l.b16 %v825
      %v858 = vunpack.c.l.b16 %v826
      %v859 = vunpack.c.l.b16 %v827
      %v860 = vunpack.c.l.b16 %v828
      %v861 = vunpack.c.l.b16 %v829
      %v862 = vunpack.c.l.b16 %v830
      %v863 = vpack.c.b16 %v848, %v847
      %v864 = vpack.c.b16 %v850, %v849
      %v865 = vpack.c.b16 %v852, %v851
      %v866 = vpack.c.b16 %v854, %v853
      %v867 = vpack.c.b16 %v856, %v855
      %v868 = vpack.c.b16 %v858, %v857
      %v869 = vpack.c.b16 %v860, %v859
      %v870 = vpack.c.b16 %v862, %v861
      %879 = vmatprep.subr.bf16.mxu0 0
      %880 = vmatpush1.bf16.msra.mxu0 %v863
      %881 = vmatprep.subr.bf16.mxu0 0
      %882 = vmatpush1.bf16.msra.mxu0 %v864
      %883 = vmatprep.subr.bf16.mxu0 0
      %884 = vmatpush1.bf16.msra.mxu0 %v865
      %885 = vmatprep.subr.bf16.mxu0 0
      %886 = vmatpush1.bf16.msra.mxu0 %v866
      %887 = vmatprep.subr.bf16.mxu0 0
      %888 = vmatpush1.bf16.msra.mxu0 %v867
      %889 = vmatprep.subr.bf16.mxu0 0
      %890 = vmatpush1.bf16.msra.mxu0 %v868
      %891 = vmatprep.subr.bf16.mxu0 0
      %892 = vmatpush1.bf16.msra.mxu0 %v869
      %893 = vmatprep.subr.bf16.mxu0 0
      %894 = vmatpush1.bf16.msra.mxu0 %v870
      %895 = vmatprep.subr.bf16.mxu0 0
      %896 = vmatpush1.bf16.msra.mxu0 0
      %897 = vmatprep.subr.bf16.mxu0 0
      %898 = vmatpush1.bf16.msra.mxu0 0
      %899 = vmatprep.subr.bf16.mxu0 0
      %900 = vmatpush1.bf16.msra.mxu0 0
      %901 = vmatprep.subr.bf16.mxu0 0
      %902 = vmatpush1.bf16.msra.mxu0 0
      %903 = vmatprep.subr.bf16.mxu0 0
      %904 = vmatpush1.bf16.msra.mxu0 0
      %905 = vmatprep.subr.bf16.mxu0 0
      %906 = vmatpush1.bf16.msra.mxu0 0
      %907 = vmatprep.subr.bf16.mxu0 0
      %908 = vmatpush1.bf16.msra.mxu0 0
      %909 = vmatprep.subr.bf16.mxu0 0
      %910 = vmatpush1.bf16.msra.mxu0 0
      %911 = vmatprep.mubr.bf16.mxu0 0
      %912 = vmatmul.mubr.bf16.gmra.mrb[0].mxu0 %v388
      %v913 = vpop.f32.mrb[0].mxu0
      %v914 = vadd.f32 0.0, %v913
      %v915 = vpop.f32.mrb[0].mxu0
      %v916 = vpop.f32.mrb[0].mxu0
      %v917 = vadd.f32 0.0, %v916
      %v918 = vpop.f32.mrb[0].mxu0
      %919 = vmatprep.mubr.bf16.mxu0 0
      %920 = vmatmul.mubr.bf16.gmra.mrb[0].mxu0 %v389
      %v921 = vpop.f32.mrb[0].mxu0
      %v922 = vadd.f32 0.0, %v921
      %v923 = vpop.f32.mrb[0].mxu0
      %v924 = vpop.f32.mrb[0].mxu0
      %v925 = vadd.f32 0.0, %v924
      %v926 = vpop.f32.mrb[0].mxu0
      %927 = vmatprep.mubr.bf16.mxu0 0
      %928 = vmatmul.mubr.bf16.gmra.mrb[0].mxu0 %v390
      %v929 = vpop.f32.mrb[0].mxu0
      %v930 = vadd.f32 0.0, %v929
      %v931 = vpop.f32.mrb[0].mxu0
      %v932 = vpop.f32.mrb[0].mxu0
      %v933 = vadd.f32 0.0, %v932
      %v934 = vpop.f32.mrb[0].mxu0
      %935 = vmatprep.mubr.bf16.mxu0 0
      %936 = vmatmul.mubr.bf16.gmra.mrb[0].mxu0 %v391
      %v937 = vpop.f32.mrb[0].mxu0
      %v938 = vadd.f32 0.0, %v937
      %v939 = vpop.f32.mrb[0].mxu0
      %v940 = vpop.f32.mrb[0].mxu0
      %v941 = vadd.f32 0.0, %v940
      %v942 = vpop.f32.mrb[0].mxu0
      %943 = vmatprep.mubr.bf16.mxu0 0
      %944 = vmatmul.mubr.bf16.gmra.mrb[0].mxu0 %v392
      %v945 = vpop.f32.mrb[0].mxu0
      %v946 = vadd.f32 0.0, %v945
      %v947 = vpop.f32.mrb[0].mxu0
      %v948 = vpop.f32.mrb[0].mxu0
      %v949 = vadd.f32 0.0, %v948
      %v950 = vpop.f32.mrb[0].mxu0
      %951 = vmatprep.mubr.bf16.mxu0 0
      %952 = vmatmul.mubr.bf16.gmra.mrb[0].mxu0 %v393
      %v953 = vpop.f32.mrb[0].mxu0
      %v954 = vadd.f32 0.0, %v953
      %v955 = vpop.f32.mrb[0].mxu0
      %v956 = vpop.f32.mrb[0].mxu0
      %v957 = vadd.f32 0.0, %v956
      %v958 = vpop.f32.mrb[0].mxu0
      %959 = vmatprep.mubr.bf16.mxu0 0
      %960 = vmatmul.mubr.bf16.gmra.mrb[0].mxu0 %v394
      %v961 = vpop.f32.mrb[0].mxu0
      %v962 = vadd.f32 0.0, %v961
      %v963 = vpop.f32.mrb[0].mxu0
      %v964 = vpop.f32.mrb[0].mxu0
      %v965 = vadd.f32 0.0, %v964
      %v966 = vpop.f32.mrb[0].mxu0
      %967 = vmatprep.mubr.bf16.mxu0 0
      %968 = vmatmul.mubr.bf16.gmra.mrb[0].mxu0 %v411
      %v969 = vpop.f32.mrb[0].mxu0
      %v970 = vadd.f32 0.0, %v969
      %v971 = vpop.f32.mrb[0].mxu0
      %v972 = vpop.f32.mrb[0].mxu0
      %v973 = vadd.f32 0.0, %v972
      %v974 = vpop.f32.mrb[0].mxu0
      %975 = vdwg.mxu0
      %v976 = vadd.f32 %v752, %v914
      %v977 = vadd.f32 %v755, %v917
      %v978 = vadd.f32 %v760, %v922
      %v979 = vadd.f32 %v763, %v925
      %v980 = vadd.f32 %v768, %v930
      %v981 = vadd.f32 %v771, %v933
      %v982 = vadd.f32 %v776, %v938
      %v983 = vadd.f32 %v779, %v941
      %v984 = vadd.f32 %v784, %v946
      %v985 = vadd.f32 %v787, %v949
      %v986 = vadd.f32 %v792, %v954
      %v987 = vadd.f32 %v795, %v957
      %v988 = vadd.f32 %v800, %v962
      %v989 = vadd.f32 %v803, %v965
      %v990 = vadd.f32 %v808, %v970
      %v991 = vadd.f32 %v811, %v973
      %s992 = scalar_lea.vmem %s2, 192
      %v993 = vld [vmem:[%s992] sm:$0xf]
      %v994 = vld [vmem:[%s992 + $0x4] sm:$0xf]
      %v995 = vld [vmem:[%s992 + $0x8] sm:$0xf]
      %v996 = vld [vmem:[%s992 + $0xc] sm:$0xf]
      %v997 = vld [vmem:[%s992 + $0x10] sm:$0xf]
      %v998 = vld [vmem:[%s992 + $0x14] sm:$0xf]
      %v999 = vld [vmem:[%s992 + $0x18] sm:$0xf]
      %v1000 = vld [vmem:[%s992 + $0x1c] sm:$0xf]
      %v1001 = vld [vmem:[%s992 + $0x20] sm:$0xf]
      %v1002 = vld [vmem:[%s992 + $0x24] sm:$0xf]
      %v1003 = vld [vmem:[%s992 + $0x28] sm:$0xf]
      %v1004 = vld [vmem:[%s992 + $0x2c] sm:$0xf]
      %v1005 = vld [vmem:[%s992 + $0x30] sm:$0xf]
      %v1006 = vld [vmem:[%s992 + $0x34] sm:$0xf]
      %v1007 = vld [vmem:[%s992 + $0x38] sm:$0xf]
      %v1008 = vld [vmem:[%s992 + $0x3c] sm:$0xf]
      %v1009 = vshrl.u32 %v411, 16
      %v1011 = vor.u32 %v1009, %v514
      %v1013 = vshll.u32 %v412, 16
      %v1015 = vrot.slane %v1013, 1
      %v1016 = vsel %vm447, %v1011, %v1015
      %v1034 = vunpack.c.l.b16 %v993
      %v1035 = vunpack.c.l.b16 %v994
      %v1036 = vunpack.c.l.b16 %v995
      %v1037 = vunpack.c.l.b16 %v996
      %v1038 = vunpack.c.l.b16 %v997
      %v1039 = vunpack.c.l.b16 %v998
      %v1040 = vunpack.c.l.b16 %v999
      %v1041 = vunpack.c.l.b16 %v1000
      %v1042 = vunpack.c.l.b16 %v1001
      %v1043 = vunpack.c.l.b16 %v1002
      %v1044 = vunpack.c.l.b16 %v1003
      %v1045 = vunpack.c.l.b16 %v1004
      %v1046 = vunpack.c.l.b16 %v1005
      %v1047 = vunpack.c.l.b16 %v1006
      %v1048 = vunpack.c.l.b16 %v1007
      %v1049 = vunpack.c.l.b16 %v1008
      %v1050 = vpack.c.b16 %v1035, %v1034
      %v1051 = vpack.c.b16 %v1037, %v1036
      %v1052 = vpack.c.b16 %v1039, %v1038
      %v1053 = vpack.c.b16 %v1041, %v1040
      %v1054 = vpack.c.b16 %v1043, %v1042
      %v1055 = vpack.c.b16 %v1045, %v1044
      %v1056 = vpack.c.b16 %v1047, %v1046
      %v1057 = vpack.c.b16 %v1049, %v1048
      %1066 = vmatprep.subr.bf16.mxu0 0
      %1067 = vmatpush1.bf16.msra.mxu0 %v1050
      %1068 = vmatprep.subr.bf16.mxu0 0
      %1069 = vmatpush1.bf16.msra.mxu0 %v1051
      %1070 = vmatprep.subr.bf16.mxu0 0
      %1071 = vmatpush1.bf16.msra.mxu0 %v1052
      %1072 = vmatprep.subr.bf16.mxu0 0
      %1073 = vmatpush1.bf16.msra.mxu0 %v1053
      %1074 = vmatprep.subr.bf16.mxu0 0
      %1075 = vmatpush1.bf16.msra.mxu0 %v1054
      %1076 = vmatprep.subr.bf16.mxu0 0
      %1077 = vmatpush1.bf16.msra.mxu0 %v1055
      %1078 = vmatprep.subr.bf16.mxu0 0
      %1079 = vmatpush1.bf16.msra.mxu0 %v1056
      %1080 = vmatprep.subr.bf16.mxu0 0
      %1081 = vmatpush1.bf16.msra.mxu0 %v1057
      %1082 = vmatprep.subr.bf16.mxu0 0
      %1083 = vmatpush1.bf16.msra.mxu0 0
      %1084 = vmatprep.subr.bf16.mxu0 0
      %1085 = vmatpush1.bf16.msra.mxu0 0
      %1086 = vmatprep.subr.bf16.mxu0 0
      %1087 = vmatpush1.bf16.msra.mxu0 0
      %1088 = vmatprep.subr.bf16.mxu0 0
      %1089 = vmatpush1.bf16.msra.mxu0 0
      %1090 = vmatprep.subr.bf16.mxu0 0
      %1091 = vmatpush1.bf16.msra.mxu0 0
      %1092 = vmatprep.subr.bf16.mxu0 0
      %1093 = vmatpush1.bf16.msra.mxu0 0
      %1094 = vmatprep.subr.bf16.mxu0 0
      %1095 = vmatpush1.bf16.msra.mxu0 0
      %1096 = vmatprep.subr.bf16.mxu0 0
      %1097 = vmatpush1.bf16.msra.mxu0 0
      %1098 = vmatprep.mubr.bf16.mxu0 0
      %1099 = vmatmul.mubr.bf16.gmra.mrb[0].mxu0 %v467
      %v1100 = vpop.f32.mrb[0].mxu0
      %v1101 = vadd.f32 0.0, %v1100
      %v1102 = vpop.f32.mrb[0].mxu0
      %v1103 = vpop.f32.mrb[0].mxu0
      %v1104 = vadd.f32 0.0, %v1103
      %v1105 = vpop.f32.mrb[0].mxu0
      %1106 = vmatprep.mubr.bf16.mxu0 0
      %1107 = vmatmul.mubr.bf16.gmra.mrb[0].mxu0 %v475
      %v1108 = vpop.f32.mrb[0].mxu0
      %v1109 = vadd.f32 0.0, %v1108
      %v1110 = vpop.f32.mrb[0].mxu0
      %v1111 = vpop.f32.mrb[0].mxu0
      %v1112 = vadd.f32 0.0, %v1111
      %v1113 = vpop.f32.mrb[0].mxu0
      %1114 = vmatprep.mubr.bf16.mxu0 0
      %1115 = vmatmul.mubr.bf16.gmra.mrb[0].mxu0 %v483
      %v1116 = vpop.f32.mrb[0].mxu0
      %v1117 = vadd.f32 0.0, %v1116
      %v1118 = vpop.f32.mrb[0].mxu0
      %v1119 = vpop.f32.mrb[0].mxu0
      %v1120 = vadd.f32 0.0, %v1119
      %v1121 = vpop.f32.mrb[0].mxu0
      %1122 = vmatprep.mubr.bf16.mxu0 0
      %1123 = vmatmul.mubr.bf16.gmra.mrb[0].mxu0 %v491
      %v1124 = vpop.f32.mrb[0].mxu0
      %v1125 = vadd.f32 0.0, %v1124
      %v1126 = vpop.f32.mrb[0].mxu0
      %v1127 = vpop.f32.mrb[0].mxu0
      %v1128 = vadd.f32 0.0, %v1127
      %v1129 = vpop.f32.mrb[0].mxu0
      %1130 = vmatprep.mubr.bf16.mxu0 0
      %1131 = vmatmul.mubr.bf16.gmra.mrb[0].mxu0 %v499
      %v1132 = vpop.f32.mrb[0].mxu0
      %v1133 = vadd.f32 0.0, %v1132
      %v1134 = vpop.f32.mrb[0].mxu0
      %v1135 = vpop.f32.mrb[0].mxu0
      %v1136 = vadd.f32 0.0, %v1135
      %v1137 = vpop.f32.mrb[0].mxu0
      %1138 = vmatprep.mubr.bf16.mxu0 0
      %1139 = vmatmul.mubr.bf16.gmra.mrb[0].mxu0 %v507
      %v1140 = vpop.f32.mrb[0].mxu0
      %v1141 = vadd.f32 0.0, %v1140
      %v1142 = vpop.f32.mrb[0].mxu0
      %v1143 = vpop.f32.mrb[0].mxu0
      %v1144 = vadd.f32 0.0, %v1143
      %v1145 = vpop.f32.mrb[0].mxu0
      %1146 = vmatprep.mubr.bf16.mxu0 0
      %1147 = vmatmul.mubr.bf16.gmra.mrb[0].mxu0 %v515
      %v1148 = vpop.f32.mrb[0].mxu0
      %v1149 = vadd.f32 0.0, %v1148
      %v1150 = vpop.f32.mrb[0].mxu0
      %v1151 = vpop.f32.mrb[0].mxu0
      %v1152 = vadd.f32 0.0, %v1151
      %v1153 = vpop.f32.mrb[0].mxu0
      %1154 = vmatprep.mubr.bf16.mxu0 0
      %1155 = vmatmul.mubr.bf16.gmra.mrb[0].mxu0 %v1016
      %v1156 = vpop.f32.mrb[0].mxu0
      %v1157 = vadd.f32 0.0, %v1156
      %v1158 = vpop.f32.mrb[0].mxu0
      %v1159 = vpop.f32.mrb[0].mxu0
      %v1160 = vadd.f32 0.0, %v1159
      %v1161 = vpop.f32.mrb[0].mxu0
      %1162 = vdwg.mxu0
      %v1163 = vadd.f32 %v976, %v1101
      %v1164 = vadd.f32 %v977, %v1104
      %v1165 = vadd.f32 %v978, %v1109
      %v1166 = vadd.f32 %v979, %v1112
      %v1167 = vadd.f32 %v980, %v1117
      %v1168 = vadd.f32 %v981, %v1120
      %v1169 = vadd.f32 %v982, %v1125
      %v1170 = vadd.f32 %v983, %v1128
      %v1171 = vadd.f32 %v984, %v1133
      %v1172 = vadd.f32 %v985, %v1136
      %v1173 = vadd.f32 %v986, %v1141
      %v1174 = vadd.f32 %v987, %v1144
      %v1175 = vadd.f32 %v988, %v1149
      %v1176 = vadd.f32 %v989, %v1152
      %v1177 = vadd.f32 %v990, %v1157
      %v1178 = vadd.f32 %v991, %v1160
      %v1179 = vld [vmem:[%s3] sm:$0x1]
      %v1181 = vlaneseq
      %v1182 = vshrl.u32 %v1181, 7
      %v1183 = vsub.s32 0, %v1182
      %v1184 = vrot.slane %v1179, %v1183
      %v1186 = vadd.f32 %v1163, %v1184
      %v1187 = vadd.f32 %v1164, %v1184
      %v1188 = vadd.f32 %v1165, %v1184
      %v1189 = vadd.f32 %v1166, %v1184
      %v1190 = vadd.f32 %v1167, %v1184
      %v1191 = vadd.f32 %v1168, %v1184
      %v1192 = vadd.f32 %v1169, %v1184
      %v1193 = vadd.f32 %v1170, %v1184
      %v1194 = vadd.f32 %v1171, %v1184
      %v1195 = vadd.f32 %v1172, %v1184
      %v1196 = vadd.f32 %v1173, %v1184
      %v1197 = vadd.f32 %v1174, %v1184
      %v1198 = vadd.f32 %v1175, %v1184
      %v1199 = vadd.f32 %v1176, %v1184
      %v1200 = vadd.f32 %v1177, %v1184
      %v1201 = vadd.f32 %v1178, %v1184
      %v1202 = vmax.f32 %v1186, 0.0
      %v1203 = vmax.f32 %v1187, 0.0
      %v1204 = vmax.f32 %v1188, 0.0
      %v1205 = vmax.f32 %v1189, 0.0
      %v1206 = vmax.f32 %v1190, 0.0
      %v1207 = vmax.f32 %v1191, 0.0
      %v1208 = vmax.f32 %v1192, 0.0
      %v1209 = vmax.f32 %v1193, 0.0
      %v1210 = vmax.f32 %v1194, 0.0
      %v1211 = vmax.f32 %v1195, 0.0
      %v1212 = vmax.f32 %v1196, 0.0
      %v1213 = vmax.f32 %v1197, 0.0
      %v1214 = vmax.f32 %v1198, 0.0
      %v1215 = vmax.f32 %v1199, 0.0
      %v1216 = vmax.f32 %v1200, 0.0
      %v1217 = vmax.f32 %v1201, 0.0
      %v1218 = vlaneseq
      %v1219 = vshrl.u32 %v1218, 7
      %v1220 = vadd.s32 %v1219, 8
      %v1221 = vadd.s32 %v1219, 16
      %v1222 = vadd.s32 %v1219, 24
      %v1223 = vadd.s32 %v1219, 32
      %v1224 = vadd.s32 %v1219, 40
      %v1225 = vadd.s32 %v1219, 48
      %v1226 = vadd.s32 %v1219, 56
      %v1227 = vadd.s32 %v1219, 64
      %v1228 = vadd.s32 %v1219, 72
      %v1229 = vadd.s32 %v1219, 80
      %v1230 = vadd.s32 %v1219, 88
      %v1231 = vadd.s32 %v1219, 96
      %v1232 = vadd.s32 %v1219, 104
      %v1233 = vadd.s32 %v1219, 112
      %v1234 = vadd.s32 %v1219, 120
      %vm1235 = vcmp.lt.s32.totalorder %v1219, 0
      %v1236 = vsub.s32 0, %v1219
      %v1237 = vsel %vm1235, %v1236, %v1219
      %v1238 = vshrl.u32 %v1237, 4
      %v1239 = vand.u32 %v1237, 15
      %v1240 = vsub.s32 0, %v1239
      %v1241 = vsel %vm1235, %v1240, %v1239
      %vm1242 = vcmp.lt.s32.totalorder %v1220, 0
      %v1243 = vsub.s32 0, %v1220
      %v1244 = vsel %vm1242, %v1243, %v1220
      %v1245 = vshrl.u32 %v1244, 4
      %v1246 = vand.u32 %v1244, 15
      %v1247 = vsub.s32 0, %v1246
      %v1248 = vsel %vm1242, %v1247, %v1246
      %vm1249 = vcmp.lt.s32.totalorder %v1221, 0
      %v1250 = vsub.s32 0, %v1221
      %v1251 = vsel %vm1249, %v1250, %v1221
      %v1252 = vshrl.u32 %v1251, 4
      %v1253 = vand.u32 %v1251, 15
      %v1254 = vsub.s32 0, %v1253
      %v1255 = vsel %vm1249, %v1254, %v1253
      %vm1256 = vcmp.lt.s32.totalorder %v1222, 0
      %v1257 = vsub.s32 0, %v1222
      %v1258 = vsel %vm1256, %v1257, %v1222
      %v1259 = vshrl.u32 %v1258, 4
      %v1260 = vand.u32 %v1258, 15
      %v1261 = vsub.s32 0, %v1260
      %v1262 = vsel %vm1256, %v1261, %v1260
      %vm1263 = vcmp.lt.s32.totalorder %v1223, 0
      %v1264 = vsub.s32 0, %v1223
      %v1265 = vsel %vm1263, %v1264, %v1223
      %v1266 = vshrl.u32 %v1265, 4
      %v1267 = vand.u32 %v1265, 15
      %v1268 = vsub.s32 0, %v1267
      %v1269 = vsel %vm1263, %v1268, %v1267
      %vm1270 = vcmp.lt.s32.totalorder %v1224, 0
      %v1271 = vsub.s32 0, %v1224
      %v1272 = vsel %vm1270, %v1271, %v1224
      %v1273 = vshrl.u32 %v1272, 4
      %v1274 = vand.u32 %v1272, 15
      %v1275 = vsub.s32 0, %v1274
      %v1276 = vsel %vm1270, %v1275, %v1274
      %vm1277 = vcmp.lt.s32.totalorder %v1225, 0
      %v1278 = vsub.s32 0, %v1225
      %v1279 = vsel %vm1277, %v1278, %v1225
      %v1280 = vshrl.u32 %v1279, 4
      %v1281 = vand.u32 %v1279, 15
      %v1282 = vsub.s32 0, %v1281
      %v1283 = vsel %vm1277, %v1282, %v1281
      %vm1284 = vcmp.lt.s32.totalorder %v1226, 0
      %v1285 = vsub.s32 0, %v1226
      %v1286 = vsel %vm1284, %v1285, %v1226
      %v1287 = vshrl.u32 %v1286, 4
      %v1288 = vand.u32 %v1286, 15
      %v1289 = vsub.s32 0, %v1288
      %v1290 = vsel %vm1284, %v1289, %v1288
      %vm1291 = vcmp.lt.s32.totalorder %v1227, 0
      %v1292 = vsub.s32 0, %v1227
      %v1293 = vsel %vm1291, %v1292, %v1227
      %v1294 = vshrl.u32 %v1293, 4
      %v1295 = vand.u32 %v1293, 15
      %v1296 = vsub.s32 0, %v1295
      %v1297 = vsel %vm1291, %v1296, %v1295
      %vm1298 = vcmp.lt.s32.totalorder %v1228, 0
      %v1299 = vsub.s32 0, %v1228
      %v1300 = vsel %vm1298, %v1299, %v1228
      %v1301 = vshrl.u32 %v1300, 4
      %v1302 = vand.u32 %v1300, 15
      %v1303 = vsub.s32 0, %v1302
      %v1304 = vsel %vm1298, %v1303, %v1302
      %vm1305 = vcmp.lt.s32.totalorder %v1229, 0
      %v1306 = vsub.s32 0, %v1229
      %v1307 = vsel %vm1305, %v1306, %v1229
      %v1308 = vshrl.u32 %v1307, 4
      %v1309 = vand.u32 %v1307, 15
      %v1310 = vsub.s32 0, %v1309
      %v1311 = vsel %vm1305, %v1310, %v1309
      %vm1312 = vcmp.lt.s32.totalorder %v1230, 0
      %v1313 = vsub.s32 0, %v1230
      %v1314 = vsel %vm1312, %v1313, %v1230
      %v1315 = vshrl.u32 %v1314, 4
      %v1316 = vand.u32 %v1314, 15
      %v1317 = vsub.s32 0, %v1316
      %v1318 = vsel %vm1312, %v1317, %v1316
      %vm1319 = vcmp.lt.s32.totalorder %v1231, 0
      %v1320 = vsub.s32 0, %v1231
      %v1321 = vsel %vm1319, %v1320, %v1231
      %v1322 = vshrl.u32 %v1321, 4
      %v1323 = vand.u32 %v1321, 15
      %v1324 = vsub.s32 0, %v1323
      %v1325 = vsel %vm1319, %v1324, %v1323
      %vm1326 = vcmp.lt.s32.totalorder %v1232, 0
      %v1327 = vsub.s32 0, %v1232
      %v1328 = vsel %vm1326, %v1327, %v1232
      %v1329 = vshrl.u32 %v1328, 4
      %v1330 = vand.u32 %v1328, 15
      %v1331 = vsub.s32 0, %v1330
      %v1332 = vsel %vm1326, %v1331, %v1330
      %vm1333 = vcmp.lt.s32.totalorder %v1233, 0
      %v1334 = vsub.s32 0, %v1233
      %v1335 = vsel %vm1333, %v1334, %v1233
      %v1336 = vshrl.u32 %v1335, 4
      %v1337 = vand.u32 %v1335, 15
      %v1338 = vsub.s32 0, %v1337
      %v1339 = vsel %vm1333, %v1338, %v1337
      %vm1340 = vcmp.lt.s32.totalorder %v1234, 0
      %v1341 = vsub.s32 0, %v1234
      %v1342 = vsel %vm1340, %v1341, %v1234
      %v1343 = vshrl.u32 %v1342, 4
      %v1344 = vand.u32 %v1342, 15
      %v1345 = vsub.s32 0, %v1344
      %v1346 = vsel %vm1340, %v1345, %v1344
      %vm1347 = vcmp.ne.s32.totalorder %v1241, 0
      %vm1348 = vcmp.ne.s32.totalorder %v1248, 0
      %vm1349 = vcmp.ne.s32.totalorder %v1255, 0
      %vm1350 = vcmp.ne.s32.totalorder %v1262, 0
      %vm1351 = vcmp.ne.s32.totalorder %v1269, 0
      %vm1352 = vcmp.ne.s32.totalorder %v1276, 0
      %vm1353 = vcmp.ne.s32.totalorder %v1283, 0
      %vm1354 = vcmp.ne.s32.totalorder %v1290, 0
      %vm1355 = vcmp.ne.s32.totalorder %v1297, 0
      %vm1356 = vcmp.ne.s32.totalorder %v1304, 0
      %vm1357 = vcmp.ne.s32.totalorder %v1311, 0
      %vm1358 = vcmp.ne.s32.totalorder %v1318, 0
      %vm1359 = vcmp.ne.s32.totalorder %v1325, 0
      %vm1360 = vcmp.ne.s32.totalorder %v1332, 0
      %vm1361 = vcmp.ne.s32.totalorder %v1339, 0
      %vm1362 = vcmp.ne.s32.totalorder %v1346, 0
      %vm1363 = vcmp.lt.s32.totalorder %v1241, 0
      %vm1364 = vcmp.lt.s32.totalorder %v1248, 0
      %vm1365 = vcmp.lt.s32.totalorder %v1255, 0
      %vm1366 = vcmp.lt.s32.totalorder %v1262, 0
      %vm1367 = vcmp.lt.s32.totalorder %v1269, 0
      %vm1368 = vcmp.lt.s32.totalorder %v1276, 0
      %vm1369 = vcmp.lt.s32.totalorder %v1283, 0
      %vm1370 = vcmp.lt.s32.totalorder %v1290, 0
      %vm1371 = vcmp.lt.s32.totalorder %v1297, 0
      %vm1372 = vcmp.lt.s32.totalorder %v1304, 0
      %vm1373 = vcmp.lt.s32.totalorder %v1311, 0
      %vm1374 = vcmp.lt.s32.totalorder %v1318, 0
      %vm1375 = vcmp.lt.s32.totalorder %v1325, 0
      %vm1376 = vcmp.lt.s32.totalorder %v1332, 0
      %vm1377 = vcmp.lt.s32.totalorder %v1339, 0
      %vm1378 = vcmp.lt.s32.totalorder %v1346, 0
      %vm1379 = vmand %vm1363, %vm1347
      %vm1380 = vmand %vm1364, %vm1348
      %vm1381 = vmand %vm1365, %vm1349
      %vm1382 = vmand %vm1366, %vm1350
      %vm1383 = vmand %vm1367, %vm1351
      %vm1384 = vmand %vm1368, %vm1352
      %vm1385 = vmand %vm1369, %vm1353
      %vm1386 = vmand %vm1370, %vm1354
      %vm1387 = vmand %vm1371, %vm1355
      %vm1388 = vmand %vm1372, %vm1356
      %vm1389 = vmand %vm1373, %vm1357
      %vm1390 = vmand %vm1374, %vm1358
      %vm1391 = vmand %vm1375, %vm1359
      %vm1392 = vmand %vm1376, %vm1360
      %vm1393 = vmand %vm1377, %vm1361
      %vm1394 = vmand %vm1378, %vm1362
      %v1395 = vadd.s32 %v1241, 16
      %v1396 = vadd.s32 %v1248, 16
      %v1397 = vadd.s32 %v1255, 16
      %v1398 = vadd.s32 %v1262, 16
      %v1399 = vadd.s32 %v1269, 16
      %v1400 = vadd.s32 %v1276, 16
      %v1401 = vadd.s32 %v1283, 16
      %v1402 = vadd.s32 %v1290, 16
      %v1403 = vadd.s32 %v1297, 16
      %v1404 = vadd.s32 %v1304, 16
      %v1405 = vadd.s32 %v1311, 16
      %v1406 = vadd.s32 %v1318, 16
      %v1407 = vadd.s32 %v1325, 16
      %v1408 = vadd.s32 %v1332, 16
      %v1409 = vadd.s32 %v1339, 16
      %v1410 = vadd.s32 %v1346, 16
      %v1411 = vsel %vm1379, %v1395, %v1241
      %v1412 = vsel %vm1380, %v1396, %v1248
      %v1413 = vsel %vm1381, %v1397, %v1255
      %v1414 = vsel %vm1382, %v1398, %v1262
      %v1415 = vsel %vm1383, %v1399, %v1269
      %v1416 = vsel %vm1384, %v1400, %v1276
      %v1417 = vsel %vm1385, %v1401, %v1283
      %v1418 = vsel %vm1386, %v1402, %v1290
      %v1419 = vsel %vm1387, %v1403, %v1297
      %v1420 = vsel %vm1388, %v1404, %v1304
      %v1421 = vsel %vm1389, %v1405, %v1311
      %v1422 = vsel %vm1390, %v1406, %v1318
      %v1423 = vsel %vm1391, %v1407, %v1325
      %v1424 = vsel %vm1392, %v1408, %v1332
      %v1425 = vsel %vm1393, %v1409, %v1339
      %v1426 = vsel %vm1394, %v1410, %v1346
      %vm1427 = vcmp.lt.s32.totalorder %v1411, 8
      %vm1428 = vcmp.lt.s32.totalorder %v1412, 8
      %vm1429 = vcmp.lt.s32.totalorder %v1413, 8
      %vm1430 = vcmp.lt.s32.totalorder %v1414, 8
      %vm1431 = vcmp.lt.s32.totalorder %v1415, 8
      %vm1432 = vcmp.lt.s32.totalorder %v1416, 8
      %vm1433 = vcmp.lt.s32.totalorder %v1417, 8
      %vm1434 = vcmp.lt.s32.totalorder %v1418, 8
      %vm1435 = vcmp.lt.s32.totalorder %v1419, 8
      %vm1436 = vcmp.lt.s32.totalorder %v1420, 8
      %vm1437 = vcmp.lt.s32.totalorder %v1421, 8
      %vm1438 = vcmp.lt.s32.totalorder %v1422, 8
      %vm1439 = vcmp.lt.s32.totalorder %v1423, 8
      %vm1440 = vcmp.lt.s32.totalorder %v1424, 8
      %vm1441 = vcmp.lt.s32.totalorder %v1425, 8
      %vm1442 = vcmp.lt.s32.totalorder %v1426, 8
      %v1443 = vsel %vm1427, 1, 0
      %v1444 = vsel %vm1428, 1, 0
      %v1445 = vsel %vm1429, 1, 0
      %v1446 = vsel %vm1430, 1, 0
      %v1447 = vsel %vm1431, 1, 0
      %v1448 = vsel %vm1432, 1, 0
      %v1449 = vsel %vm1433, 1, 0
      %v1450 = vsel %vm1434, 1, 0
      %v1451 = vsel %vm1435, 1, 0
      %v1452 = vsel %vm1436, 1, 0
      %v1453 = vsel %vm1437, 1, 0
      %v1454 = vsel %vm1438, 1, 0
      %v1455 = vsel %vm1439, 1, 0
      %v1456 = vsel %vm1440, 1, 0
      %v1457 = vsel %vm1441, 1, 0
      %v1458 = vsel %vm1442, 1, 0
      %vm1459 = vcmp.eq.s32.totalorder %v1443, 1
      %vm1460 = vcmp.eq.s32.totalorder %v1444, 1
      %vm1461 = vcmp.eq.s32.totalorder %v1445, 1
      %vm1462 = vcmp.eq.s32.totalorder %v1446, 1
      %vm1463 = vcmp.eq.s32.totalorder %v1447, 1
      %vm1464 = vcmp.eq.s32.totalorder %v1448, 1
      %vm1465 = vcmp.eq.s32.totalorder %v1449, 1
      %vm1466 = vcmp.eq.s32.totalorder %v1450, 1
      %vm1467 = vcmp.eq.s32.totalorder %v1451, 1
      %vm1468 = vcmp.eq.s32.totalorder %v1452, 1
      %vm1469 = vcmp.eq.s32.totalorder %v1453, 1
      %vm1470 = vcmp.eq.s32.totalorder %v1454, 1
      %vm1471 = vcmp.eq.s32.totalorder %v1455, 1
      %vm1472 = vcmp.eq.s32.totalorder %v1456, 1
      %vm1473 = vcmp.eq.s32.totalorder %v1457, 1
      %vm1474 = vcmp.eq.s32.totalorder %v1458, 1
      %v1475 = vsel %vm1459, %v1202, 0.0
      %v1476 = vsel %vm1460, %v1203, 0.0
      %v1477 = vsel %vm1461, %v1204, 0.0
      %v1478 = vsel %vm1462, %v1205, 0.0
      %v1479 = vsel %vm1463, %v1206, 0.0
      %v1480 = vsel %vm1464, %v1207, 0.0
      %v1481 = vsel %vm1465, %v1208, 0.0
      %v1482 = vsel %vm1466, %v1209, 0.0
      %v1483 = vsel %vm1467, %v1210, 0.0
      %v1484 = vsel %vm1468, %v1211, 0.0
      %v1485 = vsel %vm1469, %v1212, 0.0
      %v1486 = vsel %vm1470, %v1213, 0.0
      %v1487 = vsel %vm1471, %v1214, 0.0
      %v1488 = vsel %vm1472, %v1215, 0.0
      %v1489 = vsel %vm1473, %v1216, 0.0
      %v1490 = vsel %vm1474, %v1217, 0.0
      %v1491 = vpack.c.bf16 %v1476, %v1475
      %v1492 = vpack.c.bf16 %v1478, %v1477
      %v1493 = vpack.c.bf16 %v1480, %v1479
      %v1494 = vpack.c.bf16 %v1482, %v1481
      %v1495 = vpack.c.bf16 %v1484, %v1483
      %v1496 = vpack.c.bf16 %v1486, %v1485
      %v1497 = vpack.c.bf16 %v1488, %v1487
      %v1498 = vpack.c.bf16 %v1490, %v1489
      %v1507 = vunpack.c.l.b16 %v1491
      %v1508 = vunpack.c.h.b16 %v1491
      %v1509 = vunpack.c.l.b16 %v1492
      %v1510 = vunpack.c.h.b16 %v1492
      %v1511 = vunpack.c.l.b16 %v1493
      %v1512 = vunpack.c.h.b16 %v1493
      %v1513 = vunpack.c.l.b16 %v1494
      %v1514 = vunpack.c.h.b16 %v1494
      %v1515 = vunpack.c.l.b16 %v1495
      %v1516 = vunpack.c.h.b16 %v1495
      %v1517 = vunpack.c.l.b16 %v1496
      %v1518 = vunpack.c.h.b16 %v1496
      %v1519 = vunpack.c.l.b16 %v1497
      %v1520 = vunpack.c.h.b16 %v1497
      %v1521 = vunpack.c.l.b16 %v1498
      %v1522 = vunpack.c.h.b16 %v1498
      %v1523 = vpack.c.b16 %v1507, %v1507
      %v1524 = vpack.c.b16 %v1508, %v1508
      %v1525 = vpack.c.b16 %v1509, %v1509
      %v1526 = vpack.c.b16 %v1510, %v1510
      %v1527 = vpack.c.b16 %v1511, %v1511
      %v1528 = vpack.c.b16 %v1512, %v1512
      %v1529 = vpack.c.b16 %v1513, %v1513
      %v1530 = vpack.c.b16 %v1514, %v1514
      %v1531 = vpack.c.b16 %v1515, %v1515
      %v1532 = vpack.c.b16 %v1516, %v1516
      %v1533 = vpack.c.b16 %v1517, %v1517
      %v1534 = vpack.c.b16 %v1518, %v1518
      %v1535 = vpack.c.b16 %v1519, %v1519
      %v1536 = vpack.c.b16 %v1520, %v1520
      %v1537 = vpack.c.b16 %v1521, %v1521
      %v1538 = vpack.c.b16 %v1522, %v1522
      %vm1555 = vcmask 519168
      %1556 = vst.msk [vmem:[%s332] sm:$0xf] %vm1555, %v1523
      %1557 = vst.msk [vmem:[%s332 + $0x4] sm:$0xf] %vm1555, %v1524
      %1558 = vst.msk [vmem:[%s332 + $0x8] sm:$0xf] %vm1555, %v1525
      %1559 = vst.msk [vmem:[%s332 + $0xc] sm:$0xf] %vm1555, %v1526
      %1560 = vst.msk [vmem:[%s332 + $0x10] sm:$0xf] %vm1555, %v1527
      %1561 = vst.msk [vmem:[%s332 + $0x14] sm:$0xf] %vm1555, %v1528
      %1562 = vst.msk [vmem:[%s332 + $0x18] sm:$0xf] %vm1555, %v1529
      %1563 = vst.msk [vmem:[%s332 + $0x1c] sm:$0xf] %vm1555, %v1530
      %1564 = vst.msk [vmem:[%s332 + $0x20] sm:$0xf] %vm1555, %v1531
      %1565 = vst.msk [vmem:[%s332 + $0x24] sm:$0xf] %vm1555, %v1532
      %1566 = vst.msk [vmem:[%s332 + $0x28] sm:$0xf] %vm1555, %v1533
      %1567 = vst.msk [vmem:[%s332 + $0x2c] sm:$0xf] %vm1555, %v1534
      %1568 = vst.msk [vmem:[%s332 + $0x30] sm:$0xf] %vm1555, %v1535
      %1569 = vst.msk [vmem:[%s332 + $0x34] sm:$0xf] %vm1555, %v1536
      %1570 = vst.msk [vmem:[%s332 + $0x38] sm:$0xf] %vm1555, %v1537
      %1571 = vst.msk [vmem:[%s332 + $0x3c] sm:$0xf] %vm1555, %v1538
      %s1572 = smul.u32 16, %s20
      %p1573 = scmp.lt.s32.totalorder %s19, 1
      %s1574 = scalar_select %p1573, %s19, 1
      %p1575 = scmp.lt.s32.totalorder %s1572, 15
      %s1576 = scalar_select %p1575, %s1572, 15
      %s1577 = smul.addr %s1574, 16
      %s1578 = sadd.s32 %s1576, %s1577
      %s1579 = smul.addr %s1578, 4
      %s1580 = scalar_lea.vmem %s4, %s1579
      // Predicated region
      $region37: #{variational_encoder_forward.6} parent=35 // pred_check
        %p1581 = pneg %p151
      $region38: #{variational_encoder_forward.6} parent=35 // pred_check_branch
        %1583 = sbr.rel (%p1581) target = $region40
      $region39: #{variational_encoder_forward.6} parent=35 // pred_region
        %s1584 = smul.u32 16, %s20
      $region40: #{variational_encoder_forward.6} parent=35 // pred_fallthru
        _
    $region36: #{variational_encoder_forward.6} parent=5 // pred_fallthru
      _
    %p1585 = scmp.le.s32.totalorder 2, %s10
    // Predicated region
    $region41: #{variational_encoder_forward.6} parent=5 // pred_check
      %p1586 = pneg %p1585
    $region42: #{variational_encoder_forward.6} parent=5 // pred_check_branch
      %1588 = sbr.rel (%p1586) target = $region44
    $region43: #{variational_encoder_forward.6} parent=5 // pred_region
      %s1589 = ssub.s32 %s10, 2
      // Predicated region
      $region45: #{variational_encoder_forward.6} parent=43 // pred_check
        %p1590 = pneg %p157
      $region46: #{variational_encoder_forward.6} parent=43 // pred_check_branch
        %1592 = sbr.rel (%p1590) target = $region48
      $region47: #{variational_encoder_forward.6} parent=43 // pred_region
        %s1593 = smul.u32 16, %s22
        %p1594 = scmp.lt.s32.totalorder %s21, 1
        %s1595 = scalar_select %p1594, %s21, 1
        %p1596 = scmp.lt.s32.totalorder %s1593, 15
        %s1597 = scalar_select %p1596, %s1593, 15
        %s1598 = smul.addr %s1595, 16
        %s1599 = sadd.s32 %s1597, %s1598
        %s1600 = smul.addr %s1599, 4
        %s1601 = scalar_lea.vmem %s4, %s1600
      $region48: #{variational_encoder_forward.6} parent=43 // pred_fallthru
        _
    $region44: #{variational_encoder_forward.6} parent=5 // pred_fallthru
      _
  $region6: #{variational_encoder_forward.6} parent=0 // loop_footer
    %s14 = sadd.s32 1, %s10
  $region7: #{variational_encoder_forward.6} parent=0 // loop_footer_branch
    %9 = sbr.rel target = $region3
  $region8: #{variational_encoder_forward.6} parent=0 // loop_exit
    _

// kernel: variational_encoder_forward.7
$region0: #{variational_encoder_forward.7}
  #allocation0 [shape = 'u32[]', space=smem, size = 0x4, offset = 0x4, fixed_abs, tag = 'smem constant byte address 0x4 - core index']
  #allocation1 [shape = 'u32[144,128]{1,0:T(1,128)}', space=vmem, size = 0x12000, scoped, tag = 'internal scratch']
  %s0 = inlined_call_operand.vmem [shape: bf16[2,80,256], index: 0, kind: input, shape index: {}, may-alias: {0,1}]
  %s1 = inlined_call_operand.vmem [shape: bf16[2,80,256], index: 1, kind: input, shape index: {}, may-alias: {0,1}]
  %s2 = inlined_call_operand.vmem [shape: bf16[2,2,256,128], index: 2, kind: input, shape index: {}]
  %s3 = inlined_call_operand.vmem [shape: f32[1,128], index: 3, kind: input, shape index: {}]
  %s4 = inlined_call_operand.vmem [shape: bf16[2,64,128], index: 4, kind: output, shape index: {}]
  %s5 = sld [smem:[#allocation0]]
  $region49: #{variational_encoder_forward.7} parent=0
    _
  %s7 = ssub.s32 1, %s5
  %s8 = scalar_select 0, %s7, %s5
  loop: start=0, step=1, limit=4
  $region2: #{variational_encoder_forward.7} parent=0 // loop_pre_header
    _
  $region3: #{variational_encoder_forward.7} parent=0 // loop_header
    %s10 = sphi 0, %s14
    %p11 = scmp.ge.s32.totalorder %s10, 4
    %s17 = sphi 0, %s29
    %s18 = sphi 0, %s25
    %s19 = sphi 0, %s17
    %s20 = sphi 0, %s18
    %s21 = sphi 0, %s19
    %s22 = sphi 0, %s20
    %s34 = sphi 0, %s36
    %s37 = sphi 0, %s34
    %s38 = sphi 0, %s37
    %s54 = sphi 0, %s38
    %s68 = sphi 0, %s70
    %s71 = sphi 0, %s68
    %s72 = sphi 0, %s71
    %s88 = sphi 0, %s72
    %s92 = sphi 0, %s92
    %s94 = sphi 0, %s92
    %s95 = sphi 0, %s94
    %s109 = sphi 0, %s95
    %s113 = sphi 0, %s113
    %s115 = sphi 0, %s113
    %s116 = sphi 0, %s115
    %s130 = sphi 0, %s116
    %s138 = sphi 0, %s140
    %s141 = sphi 0, %s138
    %s142 = sphi 0, %s141
    %s158 = sphi 0, %s142
  $region4: #{variational_encoder_forward.7} parent=0 // loop_header_branch
    %13 = sbr.rel (%p11) target = $region8
  $region5: #{variational_encoder_forward.7} parent=0 // loop_body
    %s15 = ssub.s32 %s10, 1
    %s16 = ssub.s32 %s10, 2
    %s23 = sadd.s32 1, %s18
    %p24 = scmp.ge.s32.totalorder %s23, 1
    %s25 = scalar_select %p24, 0, %s23
    %s26 = sadd.s32 1, %s17
    %s27 = scalar_select %p24, %s26, %s17
    %p28 = scmp.ge.s32.totalorder %s27, 2
    %s29 = scalar_select %p28, 0, %s27
    %s30 = ssub.s32 %s17, %s29
    %s31 = ssub.s32 %s18, %s25
    %s32 = sor.u32 %s30, %s31
    %p33 = scmp.eq.s32.totalorder %s32, 0
    %s35 = sadd.s32 %s34, 1
    %s36 = scalar_select %p33, %s34, %s35
    %p39 = pneg %p33
    %p40 = scmp.eq.s32.totalorder %s10, 1
    %p41 = por %p39, %p40
    %p42 = scmp.ne.s32.totalorder %s34, %s37
    %p43 = scmp.eq.s32.totalorder %s10, 0
    %p44 = por %p42, %p43
    %p45 = scmp.ne.s32.totalorder %s34, %s37
    %p46 = scmp.eq.s32.totalorder %s15, 1
    %p47 = por %p45, %p46
    %p48 = scmp.ne.s32.totalorder %s37, %s38
    %p49 = scmp.eq.s32.totalorder %s15, 0
    %p50 = por %p48, %p49
    %p51 = scmp.ne.s32.totalorder %s37, %s38
    %p52 = scmp.eq.s32.totalorder %s16, 1
    %p53 = por %p51, %p52
    %p55 = scmp.ne.s32.totalorder %s38, %s54
    %p56 = scmp.eq.s32.totalorder %s16, 0
    %p57 = por %p55, %p56
    %s58 = sadd.s32 %s18, 1
    %p59 = scmp.lt.s32.totalorder %s58, 1
    %s60 = scalar_select %p59, %s58, 1
    %s61 = sadd.s32 %s25, 1
    %p62 = scmp.lt.s32.totalorder %s61, 1
    %s63 = scalar_select %p62, %s61, 1
    %s64 = ssub.s32 %s17, %s29
    %s65 = ssub.s32 %s60, %s63
    %s66 = sor.u32 %s64, %s65
    %p67 = scmp.eq.s32.totalorder %s66, 0
    %s69 = sadd.s32 %s68, 1
    %s70 = scalar_select %p67, %s68, %s69
    %p73 = pneg %p67
    %p74 = scmp.eq.s32.totalorder %s10, 1
    %p75 = por %p73, %p74
    %p76 = scmp.ne.s32.totalorder %s68, %s71
    %p77 = scmp.eq.s32.totalorder %s10, 0
    %p78 = por %p76, %p77
    %p79 = scmp.ne.s32.totalorder %s68, %s71
    %p80 = scmp.eq.s32.totalorder %s15, 1
    %p81 = por %p79, %p80
    %p82 = scmp.ne.s32.totalorder %s71, %s72
    %p83 = scmp.eq.s32.totalorder %s15, 0
    %p84 = por %p82, %p83
    %p85 = scmp.ne.s32.totalorder %s71, %s72
    %p86 = scmp.eq.s32.totalorder %s16, 1
    %p87 = por %p85, %p86
    %p89 = scmp.ne.s32.totalorder %s72, %s88
    %p90 = scmp.eq.s32.totalorder %s16, 0
    %p91 = por %p89, %p90
    %s93 = sadd.s32 %s92, 1
    %p96 = scmp.eq.s32.totalorder %s10, 1
    %p97 = scmp.ne.s32.totalorder %s92, %s94
    %p98 = scmp.eq.s32.totalorder %s10, 0
    %p99 = por %p97, %p98
    %p100 = scmp.ne.s32.totalorder %s92, %s94
    %p101 = scmp.eq.s32.totalorder %s15, 1
    %p102 = por %p100, %p101
    %p103 = scmp.ne.s32.totalorder %s94, %s95
    %p104 = scmp.eq.s32.totalorder %s15, 0
    %p105 = por %p103, %p104
    %p106 = scmp.ne.s32.totalorder %s94, %s95
    %p107 = scmp.eq.s32.totalorder %s16, 1
    %p108 = por %p106, %p107
    %p110 = scmp.ne.s32.totalorder %s95, %s109
    %p111 = scmp.eq.s32.totalorder %s16, 0
    %p112 = por %p110, %p111
    %s114 = sadd.s32 %s113, 1
    %p117 = scmp.eq.s32.totalorder %s10, 1
    %p118 = scmp.ne.s32.totalorder %s113, %s115
    %p119 = scmp.eq.s32.totalorder %s10, 0
    %p120 = por %p118, %p119
    %p121 = scmp.ne.s32.totalorder %s113, %s115
    %p122 = scmp.eq.s32.totalorder %s15, 1
    %p123 = por %p121, %p122
    %p124 = scmp.ne.s32.totalorder %s115, %s116
    %p125 = scmp.eq.s32.totalorder %s15, 0
    %p126 = por %p124, %p125
    %p127 = scmp.ne.s32.totalorder %s115, %s116
    %p128 = scmp.eq.s32.totalorder %s16, 1
    %p129 = por %p127, %p128
    %p131 = scmp.ne.s32.totalorder %s116, %s130
    %p132 = scmp.eq.s32.totalorder %s16, 0
    %p133 = por %p131, %p132
    %s134 = ssub.s32 %s17, %s29
    %s135 = ssub.s32 %s18, %s25
    %s136 = sor.u32 %s134, %s135
    %p137 = scmp.eq.s32.totalorder %s136, 0
    %s139 = sadd.s32 %s138, 1
    %s140 = scalar_select %p137, %s138, %s139
    %p143 = pneg %p137
    %p144 = scmp.eq.s32.totalorder %s10, 1
    %p145 = por %p143, %p144
    %p146 = scmp.ne.s32.totalorder %s138, %s141
    %p147 = scmp.eq.s32.totalorder %s10, 0
    %p148 = por %p146, %p147
    %p149 = scmp.ne.s32.totalorder %s138, %s141
    %p150 = scmp.eq.s32.totalorder %s15, 1
    %p151 = por %p149, %p150
    %p152 = scmp.ne.s32.totalorder %s141, %s142
    %p153 = scmp.eq.s32.totalorder %s15, 0
    %p154 = por %p152, %p153
    %p155 = scmp.ne.s32.totalorder %s141, %s142
    %p156 = scmp.eq.s32.totalorder %s16, 1
    %p157 = por %p155, %p156
    %p159 = scmp.ne.s32.totalorder %s142, %s158
    %p160 = scmp.eq.s32.totalorder %s16, 0
    %p161 = por %p159, %p160
    %p162 = scmp.le.s32.totalorder 1, %s10
    %p163 = scmp.lt.s32.totalorder %s10, 3
    %p164 = pnand %p162, %p163
    %p165 = pneg %p164
    // Predicated region
    $region9: #{variational_encoder_forward.7} parent=5 // pred_check
      _
    $region10: #{variational_encoder_forward.7} parent=5 // pred_check_branch
      %167 = sbr.rel (%p164) target = $region12
    $region11: #{variational_encoder_forward.7} parent=5 // pred_region
      %s168 = ssub.s32 %s10, 1
      // Predicated region
      $region13: #{variational_encoder_forward.7} parent=11 // pred_check
        %p169 = pneg %p105
      $region14: #{variational_encoder_forward.7} parent=11 // pred_check_branch
        %171 = sbr.rel (%p169) target = $region16
      $region15: #{variational_encoder_forward.7} parent=11 // pred_region
        _
      $region16: #{variational_encoder_forward.7} parent=11 // pred_fallthru
        _
      // Predicated region
      $region17: #{variational_encoder_forward.7} parent=11 // pred_check
        %p172 = pneg %p126
      $region18: #{variational_encoder_forward.7} parent=11 // pred_check_branch
        %174 = sbr.rel (%p172) target = $region20
      $region19: #{variational_encoder_forward.7} parent=11 // pred_region
        _
      $region20: #{variational_encoder_forward.7} parent=11 // pred_fallthru
        _
    $region12: #{variational_encoder_forward.7} parent=5 // pred_fallthru
      _
    %p175 = scmp.lt.s32.totalorder %s10, 2
    // Predicated region
    $region21: #{variational_encoder_forward.7} parent=5 // pred_check
      %p176 = pneg %p175
    $region22: #{variational_encoder_forward.7} parent=5 // pred_check_branch
      %178 = sbr.rel (%p176) target = $region24
    $region23: #{variational_encoder_forward.7} parent=5 // pred_region
      // Predicated region
      $region25: #{variational_encoder_forward.7} parent=23 // pred_check
        %p179 = pneg %p44
      $region26: #{variational_encoder_forward.7} parent=23 // pred_check_branch
        %181 = sbr.rel (%p179) target = $region28
      $region27: #{variational_encoder_forward.7} parent=23 // pred_region
        %s182 = smul.u32 8, %s18
        %s183 = ssub.s32 10, %s182
        %p184 = scmp.lt.s32.totalorder %s183, 8
        %s185 = scalar_select %p184, %s183, 8
        %s186 = smul.u32 64, %s185
        %s187 = smul.u32 %s186, 2
        %p188 = scmp.lt.s32.totalorder %s17, 1
        %s189 = scalar_select %p188, %s17, 1
        %p190 = scmp.lt.s32.totalorder %s182, 9
        %s191 = scalar_select %p190, %s182, 9
        %s192 = smul.addr %s191, 2
        %s193 = smul.addr %s189, 20
        %s194 = sadd.s32 %s192, %s193
        %s195 = smul.addr %s194, 4
        %s196 = scalar_lea.vmem %s0, %s195
        %s197 = smul.u32 8, %s18
        %s198 = ssub.s32 10, %s197
        %p199 = scmp.lt.s32.totalorder %s198, 8
        %s200 = scalar_select %p199, %s198, 8
        %s201 = smul.u32 64, %s200
        %s202 = smul.u32 %s201, 2
      $region28: #{variational_encoder_forward.7} parent=23 // pred_fallthru
        _
      // Predicated region
      $region29: #{variational_encoder_forward.7} parent=23 // pred_check
        %p203 = pneg %p78
      $region30: #{variational_encoder_forward.7} parent=23 // pred_check_branch
        %205 = sbr.rel (%p203) target = $region32
      $region31: #{variational_encoder_forward.7} parent=23 // pred_region
        %s206 = sadd.s32 %s18, 1
        %p207 = scmp.lt.s32.totalorder %s206, 1
        %s208 = scalar_select %p207, %s206, 1
        %s209 = smul.u32 8, %s208
        %s210 = ssub.s32 10, %s209
        %p211 = scmp.lt.s32.totalorder %s210, 8
        %s212 = scalar_select %p211, %s210, 8
        %s213 = smul.u32 64, %s212
        %s214 = smul.u32 %s213, 2
        %p215 = scmp.lt.s32.totalorder %s17, 1
        %s216 = scalar_select %p215, %s17, 1
        %p217 = scmp.lt.s32.totalorder %s209, 9
        %s218 = scalar_select %p217, %s209, 9
        %s219 = smul.addr %s218, 2
        %s220 = smul.addr %s216, 20
        %s221 = sadd.s32 %s219, %s220
        %s222 = smul.addr %s221, 4
        %s223 = scalar_lea.vmem %s1, %s222
        %s224 = sadd.s32 %s18, 1
        %p225 = scmp.lt.s32.totalorder %s224, 1
        %s226 = scalar_select %p225, %s224, 1
        %s227 = smul.u32 8, %s226
        %s228 = ssub.s32 10, %s227
        %p229 = scmp.lt.s32.totalorder %s228, 8
        %s230 = scalar_select %p229, %s228, 8
        %s231 = smul.u32 64, %s230
        %s232 = smul.u32 %s231, 2
      $region32: #{variational_encoder_forward.7} parent=23 // pred_fallthru
        _
    $region24: #{variational_encoder_forward.7} parent=5 // pred_fallthru
      _
    %p233 = scmp.le.s32.totalorder 1, %s10
    %p234 = scmp.lt.s32.totalorder %s10, 3
    %p235 = pnand %p233, %p234
    %p236 = pneg %p235
    // Predicated region
    $region33: #{variational_encoder_forward.7} parent=5 // pred_check
      _
    $region34: #{variational_encoder_forward.7} parent=5 // pred_check_branch
      %238 = sbr.rel (%p235) target = $region36
    $region35: #{variational_encoder_forward.7} parent=5 // pred_region
      %s239 = ssub.s32 %s10, 1
      %s240 = smul.u32 8, %s20
      %s241 = ssub.s32 10, %s240
      %p242 = scmp.lt.s32.totalorder %s241, 8
      %s243 = scalar_select %p242, %s241, 8
      %s244 = smul.u32 64, %s243
      %s245 = smul.u32 %s244, 2
      %p246 = scmp.lt.s32.totalorder %s19, 1
      %s247 = scalar_select %p246, %s19, 1
      %p248 = scmp.lt.s32.totalorder %s240, 9
      %s249 = scalar_select %p248, %s240, 9
      %s250 = smul.addr %s249, 2
      %s251 = smul.addr %s247, 20
      %s252 = sadd.s32 %s250, %s251
      %s253 = smul.addr %s252, 4
      %s254 = scalar_lea.vmem %s0, %s253
      %p255 = pneg %p50
      %p256 = pneg %p47
      %s257 = sadd.s32 %s20, 1
      %p258 = scmp.lt.s32.totalorder %s257, 1
      %s259 = scalar_select %p258, %s257, 1
      %s260 = smul.u32 8, %s259
      %s261 = ssub.s32 10, %s260
      %p262 = scmp.lt.s32.totalorder %s261, 8
      %s263 = scalar_select %p262, %s261, 8
      %s264 = smul.u32 64, %s263
      %s265 = smul.u32 %s264, 2
      %p266 = scmp.lt.s32.totalorder %s19, 1
      %s267 = scalar_select %p266, %s19, 1
      %p268 = scmp.lt.s32.totalorder %s260, 9
      %s269 = scalar_select %p268, %s260, 9
      %s270 = smul.addr %s269, 2
      %s271 = smul.addr %s267, 20
      %s272 = sadd.s32 %s270, %s271
      %s273 = smul.addr %s272, 4
      %s274 = scalar_lea.vmem %s1, %s273
      %p275 = pneg %p84
      %p276 = pneg %p81
      %p277 = pneg %p105
      %p278 = pneg %p102
      %p279 = pneg %p126
      %p280 = pneg %p123
      %p281 = pneg %p154
      %p282 = pneg %p151
      %s283 = smul.u32 8, %s20
      %p284 = scmp.lt.s32.totalorder %s19, 1
      %s285 = scalar_select %p284, %s19, 1
      %p286 = scmp.lt.s32.totalorder %s283, 7
      %s287 = scalar_select %p286, %s283, 7
      %s288 = smul.addr %s285, 8
      %s289 = sadd.s32 %s287, %s288
      %s290 = smul.addr %s289, 4
      %s291 = scalar_lea.vmem %s4, %s290
      %s292 = smul.u32 8, %s20
      %s293 = ssub.s32 10, %s292
      %p294 = scmp.lt.s32.totalorder %s293, 8
      %s295 = scalar_select %p294, %s293, 8
      %s296 = smul.u32 64, %s295
      %s297 = smul.u32 %s296, 2
      %p298 = scmp.lt.s32.totalorder %s19, 1
      %s299 = scalar_select %p298, %s19, 1
      %p300 = scmp.lt.s32.totalorder %s292, 9
      %s301 = scalar_select %p300, %s292, 9
      %s302 = smul.addr %s301, 2
      %s303 = smul.addr %s299, 20
      %s304 = sadd.s32 %s302, %s303
      %s305 = smul.addr %s304, 4
      %s306 = scalar_lea.vmem %s0, %s305
      %s307 = smul.u32 8, %s20
      %s308 = ssub.s32 10, %s307
      %p309 = scmp.lt.s32.totalorder %s308, 8
      %s310 = scalar_select %p309, %s308, 8
      %s311 = smul.u32 64, %s310
      %s312 = smul.u32 %s311, 2
      %s313 = sadd.s32 %s20, 1
      %p314 = scmp.lt.s32.totalorder %s313, 1
      %s315 = scalar_select %p314, %s313, 1
      %s316 = smul.u32 8, %s315
      %s317 = ssub.s32 10, %s316
      %p318 = scmp.lt.s32.totalorder %s317, 8
      %s319 = scalar_select %p318, %s317, 8
      %s320 = smul.u32 64, %s319
      %s321 = smul.u32 %s320, 2
      %p322 = scmp.lt.s32.totalorder %s19, 1
      %s323 = scalar_select %p322, %s19, 1
      %p324 = scmp.lt.s32.totalorder %s316, 9
      %s325 = scalar_select %p324, %s316, 9
      %s326 = smul.addr %s325, 2
      %s327 = smul.addr %s323, 20
      %s328 = sadd.s32 %s326, %s327
      %s329 = smul.addr %s328, 4
      %s330 = scalar_lea.vmem %s1, %s329
      %s331 = sadd.s32 %s20, 1
      %p332 = scmp.lt.s32.totalorder %s331, 1
      %s333 = scalar_select %p332, %s331, 1
      %s334 = smul.u32 8, %s333
      %s335 = ssub.s32 10, %s334
      %p336 = scmp.lt.s32.totalorder %s335, 8
      %s337 = scalar_select %p336, %s335, 8
      %s338 = smul.u32 64, %s337
      %s339 = smul.u32 %s338, 2
      %s340 = smul.u32 8, %s20
      %p341 = scmp.lt.s32.totalorder %s19, 1
      %s342 = scalar_select %p341, %s19, 1
      %p343 = scmp.lt.s32.totalorder %s340, 7
      %s344 = scalar_select %p343, %s340, 7
      %s345 = smul.addr %s342, 8
      %s346 = sadd.s32 %s344, %s345
      %s347 = smul.addr %s346, 4
      %s348 = scalar_lea.vmem %s4, %s347
      %s349 = smul.u32 8, %s20
      %v351 = vld [vmem:[%s306] sm:$0xff]
      %v352 = vld [vmem:[%s306 + $0x8] sm:$0xff]
      %v353 = vld [vmem:[%s306 + $0x10] sm:$0xff]
      %v354 = vld [vmem:[%s306 + $0x18] sm:$0xff]
      %v355 = vld [vmem:[%s306 + $0x20] sm:$0xff]
      %v356 = vld [vmem:[%s306 + $0x28] sm:$0xff]
      %v357 = vld [vmem:[%s306 + $0x30] sm:$0xff]
      %v358 = vld [vmem:[%s306 + $0x38] sm:$0xff]
      %v359 = vld [vmem:[%s330] sm:$0xff]
      %v360 = vld [vmem:[%s330 + $0x8] sm:$0xff]
      %v361 = vld [vmem:[%s330 + $0x10] sm:$0xff]
      %v362 = vld [vmem:[%s330 + $0x18] sm:$0xff]
      %v371 = vunpack.c.l.b16 %v351
      %v372 = vunpack.c.h.b16 %v351
      %v373 = vunpack.c.l.b16 %v352
      %v374 = vunpack.c.h.b16 %v352
      %v375 = vunpack.c.l.b16 %v353
      %v376 = vunpack.c.h.b16 %v353
      %v377 = vunpack.c.l.b16 %v354
      %v378 = vunpack.c.h.b16 %v354
      %v379 = vunpack.c.l.b16 %v355
      %v380 = vunpack.c.h.b16 %v355
      %v381 = vunpack.c.l.b16 %v356
      %v382 = vunpack.c.h.b16 %v356
      %v383 = vunpack.c.l.b16 %v357
      %v384 = vunpack.c.h.b16 %v357
      %v385 = vunpack.c.l.b16 %v358
      %v386 = vunpack.c.h.b16 %v358
      %v387 = vpack.c.b16 %v373, %v371
      %v388 = vpack.c.b16 %v374, %v372
      %v389 = vpack.c.b16 %v377, %v375
      %v390 = vpack.c.b16 %v378, %v376
      %v391 = vpack.c.b16 %v381, %v379
      %v392 = vpack.c.b16 %v382, %v380
      %v393 = vpack.c.b16 %v385, %v383
      %v394 = vpack.c.b16 %v386, %v384
      %v407 = vunpack.c.l.b16 %v359
      %v408 = vunpack.c.h.b16 %v359
      %v409 = vunpack.c.l.b16 %v360
      %v410 = vunpack.c.h.b16 %v360
      %v411 = vunpack.c.l.b16 %v361
      %v412 = vunpack.c.h.b16 %v361
      %v413 = vunpack.c.l.b16 %v362
      %v414 = vunpack.c.h.b16 %v362
      %v415 = vpack.c.b16 %v409, %v407
      %v416 = vpack.c.b16 %v410, %v408
      %v417 = vpack.c.b16 %v413, %v411
      %v418 = vpack.c.b16 %v414, %v412
      %v421 = vld [vmem:[%s2] sm:$0xf]
      %v422 = vld [vmem:[%s2 + $0x4] sm:$0xf]
      %v423 = vld [vmem:[%s2 + $0x8] sm:$0xf]
      %v424 = vld [vmem:[%s2 + $0xc] sm:$0xf]
      %v425 = vld [vmem:[%s2 + $0x10] sm:$0xf]
      %v426 = vld [vmem:[%s2 + $0x14] sm:$0xf]
      %v427 = vld [vmem:[%s2 + $0x18] sm:$0xf]
      %v428 = vld [vmem:[%s2 + $0x1c] sm:$0xf]
      %v429 = vld [vmem:[%s2 + $0x20] sm:$0xf]
      %v430 = vld [vmem:[%s2 + $0x24] sm:$0xf]
      %v431 = vld [vmem:[%s2 + $0x28] sm:$0xf]
      %v432 = vld [vmem:[%s2 + $0x2c] sm:$0xf]
      %v433 = vld [vmem:[%s2 + $0x30] sm:$0xf]
      %v434 = vld [vmem:[%s2 + $0x34] sm:$0xf]
      %v435 = vld [vmem:[%s2 + $0x38] sm:$0xf]
      %v436 = vld [vmem:[%s2 + $0x3c] sm:$0xf]
      %v437 = vld [vmem:[%s2 + $0x40] sm:$0xf]
      %v438 = vld [vmem:[%s2 + $0x44] sm:$0xf]
      %v439 = vld [vmem:[%s2 + $0x48] sm:$0xf]
      %v440 = vld [vmem:[%s2 + $0x4c] sm:$0xf]
      %v441 = vld [vmem:[%s2 + $0x50] sm:$0xf]
      %v442 = vld [vmem:[%s2 + $0x54] sm:$0xf]
      %v443 = vld [vmem:[%s2 + $0x58] sm:$0xf]
      %v444 = vld [vmem:[%s2 + $0x5c] sm:$0xf]
      %v445 = vld [vmem:[%s2 + $0x60] sm:$0xf]
      %v446 = vld [vmem:[%s2 + $0x64] sm:$0xf]
      %v447 = vld [vmem:[%s2 + $0x68] sm:$0xf]
      %v448 = vld [vmem:[%s2 + $0x6c] sm:$0xf]
      %v449 = vld [vmem:[%s2 + $0x70] sm:$0xf]
      %v450 = vld [vmem:[%s2 + $0x74] sm:$0xf]
      %v451 = vld [vmem:[%s2 + $0x78] sm:$0xf]
      %v452 = vld [vmem:[%s2 + $0x7c] sm:$0xf]
      %s453 = scalar_lea.vmem %s2, 128
      %v454 = vld [vmem:[%s453] sm:$0xf]
      %v455 = vld [vmem:[%s453 + $0x4] sm:$0xf]
      %v456 = vld [vmem:[%s453 + $0x8] sm:$0xf]
      %v457 = vld [vmem:[%s453 + $0xc] sm:$0xf]
      %v458 = vld [vmem:[%s453 + $0x10] sm:$0xf]
      %v459 = vld [vmem:[%s453 + $0x14] sm:$0xf]
      %v460 = vld [vmem:[%s453 + $0x18] sm:$0xf]
      %v461 = vld [vmem:[%s453 + $0x1c] sm:$0xf]
      %v462 = vld [vmem:[%s453 + $0x20] sm:$0xf]
      %v463 = vld [vmem:[%s453 + $0x24] sm:$0xf]
      %v464 = vld [vmem:[%s453 + $0x28] sm:$0xf]
      %v465 = vld [vmem:[%s453 + $0x2c] sm:$0xf]
      %v466 = vld [vmem:[%s453 + $0x30] sm:$0xf]
      %v467 = vld [vmem:[%s453 + $0x34] sm:$0xf]
      %v468 = vld [vmem:[%s453 + $0x38] sm:$0xf]
      %v469 = vld [vmem:[%s453 + $0x3c] sm:$0xf]
      %v470 = vld [vmem:[%s453 + $0x40] sm:$0xf]
      %v471 = vld [vmem:[%s453 + $0x44] sm:$0xf]
      %v472 = vld [vmem:[%s453 + $0x48] sm:$0xf]
      %v473 = vld [vmem:[%s453 + $0x4c] sm:$0xf]
      %v474 = vld [vmem:[%s453 + $0x50] sm:$0xf]
      %v475 = vld [vmem:[%s453 + $0x54] sm:$0xf]
      %v476 = vld [vmem:[%s453 + $0x58] sm:$0xf]
      %v477 = vld [vmem:[%s453 + $0x5c] sm:$0xf]
      %v478 = vld [vmem:[%s453 + $0x60] sm:$0xf]
      %v479 = vld [vmem:[%s453 + $0x64] sm:$0xf]
      %v480 = vld [vmem:[%s453 + $0x68] sm:$0xf]
      %v481 = vld [vmem:[%s453 + $0x6c] sm:$0xf]
      %v482 = vld [vmem:[%s453 + $0x70] sm:$0xf]
      %v483 = vld [vmem:[%s453 + $0x74] sm:$0xf]
      %v484 = vld [vmem:[%s453 + $0x78] sm:$0xf]
      %v485 = vld [vmem:[%s453 + $0x7c] sm:$0xf]
      %vm486 = vsmask.f32 7424
      %v488 = vshrl.u32 %v387, 16
      %v490 = vshll.u32 %v387, 16
      %v492 = vrot.slane %v490, 1
      %v493 = vor.u32 %v488, %v492
      %v495 = vshll.u32 %v389, 16
      %v497 = vrot.slane %v495, 1
      %v498 = vsel %vm486, %v493, %v497
      %v500 = vshrl.u32 %v388, 16
      %v502 = vshll.u32 %v388, 16
      %v504 = vrot.slane %v502, 1
      %v505 = vor.u32 %v500, %v504
      %v507 = vshll.u32 %v390, 16
      %v509 = vrot.slane %v507, 1
      %v510 = vsel %vm486, %v505, %v509
      %v511 = vshrl.u32 %v389, 16
      %v513 = vor.u32 %v511, %v497
      %v515 = vshll.u32 %v391, 16
      %v517 = vrot.slane %v515, 1
      %v518 = vsel %vm486, %v513, %v517
      %v519 = vshrl.u32 %v390, 16
      %v521 = vor.u32 %v519, %v509
      %v523 = vshll.u32 %v392, 16
      %v525 = vrot.slane %v523, 1
      %v526 = vsel %vm486, %v521, %v525
      %v527 = vshrl.u32 %v391, 16
      %v529 = vor.u32 %v527, %v517
      %v531 = vshll.u32 %v393, 16
      %v533 = vrot.slane %v531, 1
      %v534 = vsel %vm486, %v529, %v533
      %v535 = vshrl.u32 %v392, 16
      %v537 = vor.u32 %v535, %v525
      %v539 = vshll.u32 %v394, 16
      %v541 = vrot.slane %v539, 1
      %v542 = vsel %vm486, %v537, %v541
      %v543 = vshrl.u32 %v393, 16
      %v545 = vor.u32 %v543, %v533
      %v547 = vshll.u32 %v415, 16
      %v549 = vrot.slane %v547, 1
      %v550 = vsel %vm486, %v545, %v549
      %v551 = vshrl.u32 %v394, 16
      %v553 = vor.u32 %v551, %v541
      %v555 = vshll.u32 %v416, 16
      %v557 = vrot.slane %v555, 1
      %v558 = vsel %vm486, %v553, %v557
      %v599 = vunpack.c.l.b16 %v454
      %v600 = vunpack.c.l.b16 %v455
      %v601 = vunpack.c.l.b16 %v456
      %v602 = vunpack.c.l.b16 %v457
      %v603 = vunpack.c.l.b16 %v458
      %v604 = vunpack.c.l.b16 %v459
      %v605 = vunpack.c.l.b16 %v460
      %v606 = vunpack.c.l.b16 %v461
      %v607 = vunpack.c.l.b16 %v462
      %v608 = vunpack.c.l.b16 %v463
      %v609 = vunpack.c.l.b16 %v464
      %v610 = vunpack.c.l.b16 %v465
      %v611 = vunpack.c.l.b16 %v466
      %v612 = vunpack.c.l.b16 %v467
      %v613 = vunpack.c.l.b16 %v468
      %v614 = vunpack.c.l.b16 %v469
      %v615 = vunpack.c.l.b16 %v470
      %v616 = vunpack.c.l.b16 %v471
      %v617 = vunpack.c.l.b16 %v472
      %v618 = vunpack.c.l.b16 %v473
      %v619 = vunpack.c.l.b16 %v474
      %v620 = vunpack.c.l.b16 %v475
      %v621 = vunpack.c.l.b16 %v476
      %v622 = vunpack.c.l.b16 %v477
      %v623 = vunpack.c.l.b16 %v478
      %v624 = vunpack.c.l.b16 %v479
      %v625 = vunpack.c.l.b16 %v480
      %v626 = vunpack.c.l.b16 %v481
      %v627 = vunpack.c.l.b16 %v482
      %v628 = vunpack.c.l.b16 %v483
      %v629 = vunpack.c.l.b16 %v484
      %v630 = vunpack.c.l.b16 %v485
      %v631 = vpack.c.b16 %v600, %v599
      %v632 = vpack.c.b16 %v602, %v601
      %v633 = vpack.c.b16 %v604, %v603
      %v634 = vpack.c.b16 %v606, %v605
      %v635 = vpack.c.b16 %v608, %v607
      %v636 = vpack.c.b16 %v610, %v609
      %v637 = vpack.c.b16 %v612, %v611
      %v638 = vpack.c.b16 %v614, %v613
      %v639 = vpack.c.b16 %v616, %v615
      %v640 = vpack.c.b16 %v618, %v617
      %v641 = vpack.c.b16 %v620, %v619
      %v642 = vpack.c.b16 %v622, %v621
      %v643 = vpack.c.b16 %v624, %v623
      %v644 = vpack.c.b16 %v626, %v625
      %v645 = vpack.c.b16 %v628, %v627
      %v646 = vpack.c.b16 %v630, %v629
      %663 = vmatprep.subr.bf16.mxu0 0
      %664 = vmatpush1.bf16.msra.mxu0 %v631
      %665 = vmatprep.subr.bf16.mxu0 0
      %666 = vmatpush1.bf16.msra.mxu0 %v632
      %667 = vmatprep.subr.bf16.mxu0 0
      %668 = vmatpush1.bf16.msra.mxu0 %v633
      %669 = vmatprep.subr.bf16.mxu0 0
      %670 = vmatpush1.bf16.msra.mxu0 %v634
      %671 = vmatprep.subr.bf16.mxu0 0
      %672 = vmatpush1.bf16.msra.mxu0 %v635
      %673 = vmatprep.subr.bf16.mxu0 0
      %674 = vmatpush1.bf16.msra.mxu0 %v636
      %675 = vmatprep.subr.bf16.mxu0 0
      %676 = vmatpush1.bf16.msra.mxu0 %v637
      %677 = vmatprep.subr.bf16.mxu0 0
      %678 = vmatpush1.bf16.msra.mxu0 %v638
      %679 = vmatprep.subr.bf16.mxu0 0
      %680 = vmatpush1.bf16.msra.mxu0 %v639
      %681 = vmatprep.subr.bf16.mxu0 0
      %682 = vmatpush1.bf16.msra.mxu0 %v640
      %683 = vmatprep.subr.bf16.mxu0 0
      %684 = vmatpush1.bf16.msra.mxu0 %v641
      %685 = vmatprep.subr.bf16.mxu0 0
      %686 = vmatpush1.bf16.msra.mxu0 %v642
      %687 = vmatprep.subr.bf16.mxu0 0
      %688 = vmatpush1.bf16.msra.mxu0 %v643
      %689 = vmatprep.subr.bf16.mxu0 0
      %690 = vmatpush1.bf16.msra.mxu0 %v644
      %691 = vmatprep.subr.bf16.mxu0 0
      %692 = vmatpush1.bf16.msra.mxu0 %v645
      %693 = vmatprep.subr.bf16.mxu0 0
      %694 = vmatpush1.bf16.msra.mxu0 %v646
      %695 = vmatprep.mubr.bf16.mxu0 %v510
      %696 = vmatmul.mubr.bf16.gmra.mrb[0].mxu0 %v498
      %v697 = vpop.f32.mrb[0].mxu0
      %v698 = vadd.f32 0.0, %v697
      %v699 = vpop.f32.mrb[0].mxu0
      %v700 = vpop.f32.mrb[0].mxu0
      %v701 = vadd.f32 0.0, %v700
      %v702 = vpop.f32.mrb[0].mxu0
      %703 = vmatprep.mubr.bf16.mxu0 %v526
      %704 = vmatmul.mubr.bf16.gmra.mrb[0].mxu0 %v518
      %v705 = vpop.f32.mrb[0].mxu0
      %v706 = vadd.f32 0.0, %v705
      %v707 = vpop.f32.mrb[0].mxu0
      %v708 = vpop.f32.mrb[0].mxu0
      %v709 = vadd.f32 0.0, %v708
      %v710 = vpop.f32.mrb[0].mxu0
      %711 = vmatprep.mubr.bf16.mxu0 %v542
      %712 = vmatmul.mubr.bf16.gmra.mrb[0].mxu0 %v534
      %v713 = vpop.f32.mrb[0].mxu0
      %v714 = vadd.f32 0.0, %v713
      %v715 = vpop.f32.mrb[0].mxu0
      %v716 = vpop.f32.mrb[0].mxu0
      %v717 = vadd.f32 0.0, %v716
      %v718 = vpop.f32.mrb[0].mxu0
      %719 = vmatprep.mubr.bf16.mxu0 %v558
      %720 = vmatmul.mubr.bf16.gmra.mrb[0].mxu0 %v550
      %v721 = vpop.f32.mrb[0].mxu0
      %v722 = vadd.f32 0.0, %v721
      %v723 = vpop.f32.mrb[0].mxu0
      %v724 = vpop.f32.mrb[0].mxu0
      %v725 = vadd.f32 0.0, %v724
      %v726 = vpop.f32.mrb[0].mxu0
      %727 = vdwg.mxu0
      %v760 = vunpack.c.l.b16 %v421
      %v761 = vunpack.c.l.b16 %v422
      %v762 = vunpack.c.l.b16 %v423
      %v763 = vunpack.c.l.b16 %v424
      %v764 = vunpack.c.l.b16 %v425
      %v765 = vunpack.c.l.b16 %v426
      %v766 = vunpack.c.l.b16 %v427
      %v767 = vunpack.c.l.b16 %v428
      %v768 = vunpack.c.l.b16 %v429
      %v769 = vunpack.c.l.b16 %v430
      %v770 = vunpack.c.l.b16 %v431
      %v771 = vunpack.c.l.b16 %v432
      %v772 = vunpack.c.l.b16 %v433
      %v773 = vunpack.c.l.b16 %v434
      %v774 = vunpack.c.l.b16 %v435
      %v775 = vunpack.c.l.b16 %v436
      %v776 = vunpack.c.l.b16 %v437
      %v777 = vunpack.c.l.b16 %v438
      %v778 = vunpack.c.l.b16 %v439
      %v779 = vunpack.c.l.b16 %v440
      %v780 = vunpack.c.l.b16 %v441
      %v781 = vunpack.c.l.b16 %v442
      %v782 = vunpack.c.l.b16 %v443
      %v783 = vunpack.c.l.b16 %v444
      %v784 = vunpack.c.l.b16 %v445
      %v785 = vunpack.c.l.b16 %v446
      %v786 = vunpack.c.l.b16 %v447
      %v787 = vunpack.c.l.b16 %v448
      %v788 = vunpack.c.l.b16 %v449
      %v789 = vunpack.c.l.b16 %v450
      %v790 = vunpack.c.l.b16 %v451
      %v791 = vunpack.c.l.b16 %v452
      %v792 = vpack.c.b16 %v761, %v760
      %v793 = vpack.c.b16 %v763, %v762
      %v794 = vpack.c.b16 %v765, %v764
      %v795 = vpack.c.b16 %v767, %v766
      %v796 = vpack.c.b16 %v769, %v768
      %v797 = vpack.c.b16 %v771, %v770
      %v798 = vpack.c.b16 %v773, %v772
      %v799 = vpack.c.b16 %v775, %v774
      %v800 = vpack.c.b16 %v777, %v776
      %v801 = vpack.c.b16 %v779, %v778
      %v802 = vpack.c.b16 %v781, %v780
      %v803 = vpack.c.b16 %v783, %v782
      %v804 = vpack.c.b16 %v785, %v784
      %v805 = vpack.c.b16 %v787, %v786
      %v806 = vpack.c.b16 %v789, %v788
      %v807 = vpack.c.b16 %v791, %v790
      %824 = vmatprep.subr.bf16.mxu0 0
      %825 = vmatpush1.bf16.msra.mxu0 %v792
      %826 = vmatprep.subr.bf16.mxu0 0
      %827 = vmatpush1.bf16.msra.mxu0 %v793
      %828 = vmatprep.subr.bf16.mxu0 0
      %829 = vmatpush1.bf16.msra.mxu0 %v794
      %830 = vmatprep.subr.bf16.mxu0 0
      %831 = vmatpush1.bf16.msra.mxu0 %v795
      %832 = vmatprep.subr.bf16.mxu0 0
      %833 = vmatpush1.bf16.msra.mxu0 %v796
      %834 = vmatprep.subr.bf16.mxu0 0
      %835 = vmatpush1.bf16.msra.mxu0 %v797
      %836 = vmatprep.subr.bf16.mxu0 0
      %837 = vmatpush1.bf16.msra.mxu0 %v798
      %838 = vmatprep.subr.bf16.mxu0 0
      %839 = vmatpush1.bf16.msra.mxu0 %v799
      %840 = vmatprep.subr.bf16.mxu0 0
      %841 = vmatpush1.bf16.msra.mxu0 %v800
      %842 = vmatprep.subr.bf16.mxu0 0
      %843 = vmatpush1.bf16.msra.mxu0 %v801
      %844 = vmatprep.subr.bf16.mxu0 0
      %845 = vmatpush1.bf16.msra.mxu0 %v802
      %846 = vmatprep.subr.bf16.mxu0 0
      %847 = vmatpush1.bf16.msra.mxu0 %v803
      %848 = vmatprep.subr.bf16.mxu0 0
      %849 = vmatpush1.bf16.msra.mxu0 %v804
      %850 = vmatprep.subr.bf16.mxu0 0
      %851 = vmatpush1.bf16.msra.mxu0 %v805
      %852 = vmatprep.subr.bf16.mxu0 0
      %853 = vmatpush1.bf16.msra.mxu0 %v806
      %854 = vmatprep.subr.bf16.mxu0 0
      %855 = vmatpush1.bf16.msra.mxu0 %v807
      %856 = vmatprep.mubr.bf16.mxu0 %v388
      %857 = vmatmul.mubr.bf16.gmra.mrb[0].mxu0 %v387
      %v858 = vpop.f32.mrb[0].mxu0
      %v859 = vadd.f32 %v698, %v858
      %v860 = vpop.f32.mrb[0].mxu0
      %v861 = vpop.f32.mrb[0].mxu0
      %v862 = vadd.f32 %v701, %v861
      %v863 = vpop.f32.mrb[0].mxu0
      %864 = vmatprep.mubr.bf16.mxu0 %v390
      %865 = vmatmul.mubr.bf16.gmra.mrb[0].mxu0 %v389
      %v866 = vpop.f32.mrb[0].mxu0
      %v867 = vadd.f32 %v706, %v866
      %v868 = vpop.f32.mrb[0].mxu0
      %v869 = vpop.f32.mrb[0].mxu0
      %v870 = vadd.f32 %v709, %v869
      %v871 = vpop.f32.mrb[0].mxu0
      %872 = vmatprep.mubr.bf16.mxu0 %v392
      %873 = vmatmul.mubr.bf16.gmra.mrb[0].mxu0 %v391
      %v874 = vpop.f32.mrb[0].mxu0
      %v875 = vadd.f32 %v714, %v874
      %v876 = vpop.f32.mrb[0].mxu0
      %v877 = vpop.f32.mrb[0].mxu0
      %v878 = vadd.f32 %v717, %v877
      %v879 = vpop.f32.mrb[0].mxu0
      %880 = vmatprep.mubr.bf16.mxu0 %v394
      %881 = vmatmul.mubr.bf16.gmra.mrb[0].mxu0 %v393
      %v882 = vpop.f32.mrb[0].mxu0
      %v883 = vadd.f32 %v722, %v882
      %v884 = vpop.f32.mrb[0].mxu0
      %v885 = vpop.f32.mrb[0].mxu0
      %v886 = vadd.f32 %v725, %v885
      %v887 = vpop.f32.mrb[0].mxu0
      %888 = vdwg.mxu0
      %s889 = scalar_lea.vmem %s2, 256
      %v890 = vld [vmem:[%s889] sm:$0xf]
      %v891 = vld [vmem:[%s889 + $0x4] sm:$0xf]
      %v892 = vld [vmem:[%s889 + $0x8] sm:$0xf]
      %v893 = vld [vmem:[%s889 + $0xc] sm:$0xf]
      %v894 = vld [vmem:[%s889 + $0x10] sm:$0xf]
      %v895 = vld [vmem:[%s889 + $0x14] sm:$0xf]
      %v896 = vld [vmem:[%s889 + $0x18] sm:$0xf]
      %v897 = vld [vmem:[%s889 + $0x1c] sm:$0xf]
      %v898 = vld [vmem:[%s889 + $0x20] sm:$0xf]
      %v899 = vld [vmem:[%s889 + $0x24] sm:$0xf]
      %v900 = vld [vmem:[%s889 + $0x28] sm:$0xf]
      %v901 = vld [vmem:[%s889 + $0x2c] sm:$0xf]
      %v902 = vld [vmem:[%s889 + $0x30] sm:$0xf]
      %v903 = vld [vmem:[%s889 + $0x34] sm:$0xf]
      %v904 = vld [vmem:[%s889 + $0x38] sm:$0xf]
      %v905 = vld [vmem:[%s889 + $0x3c] sm:$0xf]
      %v906 = vld [vmem:[%s889 + $0x40] sm:$0xf]
      %v907 = vld [vmem:[%s889 + $0x44] sm:$0xf]
      %v908 = vld [vmem:[%s889 + $0x48] sm:$0xf]
      %v909 = vld [vmem:[%s889 + $0x4c] sm:$0xf]
      %v910 = vld [vmem:[%s889 + $0x50] sm:$0xf]
      %v911 = vld [vmem:[%s889 + $0x54] sm:$0xf]
      %v912 = vld [vmem:[%s889 + $0x58] sm:$0xf]
      %v913 = vld [vmem:[%s889 + $0x5c] sm:$0xf]
      %v914 = vld [vmem:[%s889 + $0x60] sm:$0xf]
      %v915 = vld [vmem:[%s889 + $0x64] sm:$0xf]
      %v916 = vld [vmem:[%s889 + $0x68] sm:$0xf]
      %v917 = vld [vmem:[%s889 + $0x6c] sm:$0xf]
      %v918 = vld [vmem:[%s889 + $0x70] sm:$0xf]
      %v919 = vld [vmem:[%s889 + $0x74] sm:$0xf]
      %v920 = vld [vmem:[%s889 + $0x78] sm:$0xf]
      %v921 = vld [vmem:[%s889 + $0x7c] sm:$0xf]
      %v954 = vunpack.c.l.b16 %v890
      %v955 = vunpack.c.l.b16 %v891
      %v956 = vunpack.c.l.b16 %v892
      %v957 = vunpack.c.l.b16 %v893
      %v958 = vunpack.c.l.b16 %v894
      %v959 = vunpack.c.l.b16 %v895
      %v960 = vunpack.c.l.b16 %v896
      %v961 = vunpack.c.l.b16 %v897
      %v962 = vunpack.c.l.b16 %v898
      %v963 = vunpack.c.l.b16 %v899
      %v964 = vunpack.c.l.b16 %v900
      %v965 = vunpack.c.l.b16 %v901
      %v966 = vunpack.c.l.b16 %v902
      %v967 = vunpack.c.l.b16 %v903
      %v968 = vunpack.c.l.b16 %v904
      %v969 = vunpack.c.l.b16 %v905
      %v970 = vunpack.c.l.b16 %v906
      %v971 = vunpack.c.l.b16 %v907
      %v972 = vunpack.c.l.b16 %v908
      %v973 = vunpack.c.l.b16 %v909
      %v974 = vunpack.c.l.b16 %v910
      %v975 = vunpack.c.l.b16 %v911
      %v976 = vunpack.c.l.b16 %v912
      %v977 = vunpack.c.l.b16 %v913
      %v978 = vunpack.c.l.b16 %v914
      %v979 = vunpack.c.l.b16 %v915
      %v980 = vunpack.c.l.b16 %v916
      %v981 = vunpack.c.l.b16 %v917
      %v982 = vunpack.c.l.b16 %v918
      %v983 = vunpack.c.l.b16 %v919
      %v984 = vunpack.c.l.b16 %v920
      %v985 = vunpack.c.l.b16 %v921
      %v986 = vpack.c.b16 %v955, %v954
      %v987 = vpack.c.b16 %v957, %v956
      %v988 = vpack.c.b16 %v959, %v958
      %v989 = vpack.c.b16 %v961, %v960
      %v990 = vpack.c.b16 %v963, %v962
      %v991 = vpack.c.b16 %v965, %v964
      %v992 = vpack.c.b16 %v967, %v966
      %v993 = vpack.c.b16 %v969, %v968
      %v994 = vpack.c.b16 %v971, %v970
      %v995 = vpack.c.b16 %v973, %v972
      %v996 = vpack.c.b16 %v975, %v974
      %v997 = vpack.c.b16 %v977, %v976
      %v998 = vpack.c.b16 %v979, %v978
      %v999 = vpack.c.b16 %v981, %v980
      %v1000 = vpack.c.b16 %v983, %v982
      %v1001 = vpack.c.b16 %v985, %v984
      %1018 = vmatprep.subr.bf16.mxu0 0
      %1019 = vmatpush1.bf16.msra.mxu0 %v986
      %1020 = vmatprep.subr.bf16.mxu0 0
      %1021 = vmatpush1.bf16.msra.mxu0 %v987
      %1022 = vmatprep.subr.bf16.mxu0 0
      %1023 = vmatpush1.bf16.msra.mxu0 %v988
      %1024 = vmatprep.subr.bf16.mxu0 0
      %1025 = vmatpush1.bf16.msra.mxu0 %v989
      %1026 = vmatprep.subr.bf16.mxu0 0
      %1027 = vmatpush1.bf16.msra.mxu0 %v990
      %1028 = vmatprep.subr.bf16.mxu0 0
      %1029 = vmatpush1.bf16.msra.mxu0 %v991
      %1030 = vmatprep.subr.bf16.mxu0 0
      %1031 = vmatpush1.bf16.msra.mxu0 %v992
      %1032 = vmatprep.subr.bf16.mxu0 0
      %1033 = vmatpush1.bf16.msra.mxu0 %v993
      %1034 = vmatprep.subr.bf16.mxu0 0
      %1035 = vmatpush1.bf16.msra.mxu0 %v994
      %1036 = vmatprep.subr.bf16.mxu0 0
      %1037 = vmatpush1.bf16.msra.mxu0 %v995
      %1038 = vmatprep.subr.bf16.mxu0 0
      %1039 = vmatpush1.bf16.msra.mxu0 %v996
      %1040 = vmatprep.subr.bf16.mxu0 0
      %1041 = vmatpush1.bf16.msra.mxu0 %v997
      %1042 = vmatprep.subr.bf16.mxu0 0
      %1043 = vmatpush1.bf16.msra.mxu0 %v998
      %1044 = vmatprep.subr.bf16.mxu0 0
      %1045 = vmatpush1.bf16.msra.mxu0 %v999
      %1046 = vmatprep.subr.bf16.mxu0 0
      %1047 = vmatpush1.bf16.msra.mxu0 %v1000
      %1048 = vmatprep.subr.bf16.mxu0 0
      %1049 = vmatpush1.bf16.msra.mxu0 %v1001
      %1050 = vmatprep.mubr.bf16.mxu0 %v390
      %1051 = vmatmul.mubr.bf16.gmra.mrb[0].mxu0 %v389
      %v1052 = vpop.f32.mrb[0].mxu0
      %v1053 = vadd.f32 0.0, %v1052
      %v1054 = vpop.f32.mrb[0].mxu0
      %v1055 = vpop.f32.mrb[0].mxu0
      %v1056 = vadd.f32 0.0, %v1055
      %v1057 = vpop.f32.mrb[0].mxu0
      %1058 = vmatprep.mubr.bf16.mxu0 %v392
      %1059 = vmatmul.mubr.bf16.gmra.mrb[0].mxu0 %v391
      %v1060 = vpop.f32.mrb[0].mxu0
      %v1061 = vadd.f32 0.0, %v1060
      %v1062 = vpop.f32.mrb[0].mxu0
      %v1063 = vpop.f32.mrb[0].mxu0
      %v1064 = vadd.f32 0.0, %v1063
      %v1065 = vpop.f32.mrb[0].mxu0
      %1066 = vmatprep.mubr.bf16.mxu0 %v394
      %1067 = vmatmul.mubr.bf16.gmra.mrb[0].mxu0 %v393
      %v1068 = vpop.f32.mrb[0].mxu0
      %v1069 = vadd.f32 0.0, %v1068
      %v1070 = vpop.f32.mrb[0].mxu0
      %v1071 = vpop.f32.mrb[0].mxu0
      %v1072 = vadd.f32 0.0, %v1071
      %v1073 = vpop.f32.mrb[0].mxu0
      %1074 = vmatprep.mubr.bf16.mxu0 %v416
      %1075 = vmatmul.mubr.bf16.gmra.mrb[0].mxu0 %v415
      %v1076 = vpop.f32.mrb[0].mxu0
      %v1077 = vadd.f32 0.0, %v1076
      %v1078 = vpop.f32.mrb[0].mxu0
      %v1079 = vpop.f32.mrb[0].mxu0
      %v1080 = vadd.f32 0.0, %v1079
      %v1081 = vpop.f32.mrb[0].mxu0
      %1082 = vdwg.mxu0
      %v1083 = vadd.f32 %v859, %v1053
      %v1084 = vadd.f32 %v862, %v1056
      %v1085 = vadd.f32 %v867, %v1061
      %v1086 = vadd.f32 %v870, %v1064
      %v1087 = vadd.f32 %v875, %v1069
      %v1088 = vadd.f32 %v878, %v1072
      %v1089 = vadd.f32 %v883, %v1077
      %v1090 = vadd.f32 %v886, %v1080
      %s1091 = scalar_lea.vmem %s2, 384
      %v1092 = vld [vmem:[%s1091] sm:$0xf]
      %v1093 = vld [vmem:[%s1091 + $0x4] sm:$0xf]
      %v1094 = vld [vmem:[%s1091 + $0x8] sm:$0xf]
      %v1095 = vld [vmem:[%s1091 + $0xc] sm:$0xf]
      %v1096 = vld [vmem:[%s1091 + $0x10] sm:$0xf]
      %v1097 = vld [vmem:[%s1091 + $0x14] sm:$0xf]
      %v1098 = vld [vmem:[%s1091 + $0x18] sm:$0xf]
      %v1099 = vld [vmem:[%s1091 + $0x1c] sm:$0xf]
      %v1100 = vld [vmem:[%s1091 + $0x20] sm:$0xf]
      %v1101 = vld [vmem:[%s1091 + $0x24] sm:$0xf]
      %v1102 = vld [vmem:[%s1091 + $0x28] sm:$0xf]
      %v1103 = vld [vmem:[%s1091 + $0x2c] sm:$0xf]
      %v1104 = vld [vmem:[%s1091 + $0x30] sm:$0xf]
      %v1105 = vld [vmem:[%s1091 + $0x34] sm:$0xf]
      %v1106 = vld [vmem:[%s1091 + $0x38] sm:$0xf]
      %v1107 = vld [vmem:[%s1091 + $0x3c] sm:$0xf]
      %v1108 = vld [vmem:[%s1091 + $0x40] sm:$0xf]
      %v1109 = vld [vmem:[%s1091 + $0x44] sm:$0xf]
      %v1110 = vld [vmem:[%s1091 + $0x48] sm:$0xf]
      %v1111 = vld [vmem:[%s1091 + $0x4c] sm:$0xf]
      %v1112 = vld [vmem:[%s1091 + $0x50] sm:$0xf]
      %v1113 = vld [vmem:[%s1091 + $0x54] sm:$0xf]
      %v1114 = vld [vmem:[%s1091 + $0x58] sm:$0xf]
      %v1115 = vld [vmem:[%s1091 + $0x5c] sm:$0xf]
      %v1116 = vld [vmem:[%s1091 + $0x60] sm:$0xf]
      %v1117 = vld [vmem:[%s1091 + $0x64] sm:$0xf]
      %v1118 = vld [vmem:[%s1091 + $0x68] sm:$0xf]
      %v1119 = vld [vmem:[%s1091 + $0x6c] sm:$0xf]
      %v1120 = vld [vmem:[%s1091 + $0x70] sm:$0xf]
      %v1121 = vld [vmem:[%s1091 + $0x74] sm:$0xf]
      %v1122 = vld [vmem:[%s1091 + $0x78] sm:$0xf]
      %v1123 = vld [vmem:[%s1091 + $0x7c] sm:$0xf]
      %v1124 = vshrl.u32 %v415, 16
      %v1126 = vor.u32 %v1124, %v549
      %v1128 = vshll.u32 %v417, 16
      %v1130 = vrot.slane %v1128, 1
      %v1131 = vsel %vm486, %v1126, %v1130
      %v1132 = vshrl.u32 %v416, 16
      %v1134 = vor.u32 %v1132, %v557
      %v1136 = vshll.u32 %v418, 16
      %v1138 = vrot.slane %v1136, 1
      %v1139 = vsel %vm486, %v1134, %v1138
      %v1174 = vunpack.c.l.b16 %v1092
      %v1175 = vunpack.c.l.b16 %v1093
      %v1176 = vunpack.c.l.b16 %v1094
      %v1177 = vunpack.c.l.b16 %v1095
      %v1178 = vunpack.c.l.b16 %v1096
      %v1179 = vunpack.c.l.b16 %v1097
      %v1180 = vunpack.c.l.b16 %v1098
      %v1181 = vunpack.c.l.b16 %v1099
      %v1182 = vunpack.c.l.b16 %v1100
      %v1183 = vunpack.c.l.b16 %v1101
      %v1184 = vunpack.c.l.b16 %v1102
      %v1185 = vunpack.c.l.b16 %v1103
      %v1186 = vunpack.c.l.b16 %v1104
      %v1187 = vunpack.c.l.b16 %v1105
      %v1188 = vunpack.c.l.b16 %v1106
      %v1189 = vunpack.c.l.b16 %v1107
      %v1190 = vunpack.c.l.b16 %v1108
      %v1191 = vunpack.c.l.b16 %v1109
      %v1192 = vunpack.c.l.b16 %v1110
      %v1193 = vunpack.c.l.b16 %v1111
      %v1194 = vunpack.c.l.b16 %v1112
      %v1195 = vunpack.c.l.b16 %v1113
      %v1196 = vunpack.c.l.b16 %v1114
      %v1197 = vunpack.c.l.b16 %v1115
      %v1198 = vunpack.c.l.b16 %v1116
      %v1199 = vunpack.c.l.b16 %v1117
      %v1200 = vunpack.c.l.b16 %v1118
      %v1201 = vunpack.c.l.b16 %v1119
      %v1202 = vunpack.c.l.b16 %v1120
      %v1203 = vunpack.c.l.b16 %v1121
      %v1204 = vunpack.c.l.b16 %v1122
      %v1205 = vunpack.c.l.b16 %v1123
      %v1206 = vpack.c.b16 %v1175, %v1174
      %v1207 = vpack.c.b16 %v1177, %v1176
      %v1208 = vpack.c.b16 %v1179, %v1178
      %v1209 = vpack.c.b16 %v1181, %v1180
      %v1210 = vpack.c.b16 %v1183, %v1182
      %v1211 = vpack.c.b16 %v1185, %v1184
      %v1212 = vpack.c.b16 %v1187, %v1186
      %v1213 = vpack.c.b16 %v1189, %v1188
      %v1214 = vpack.c.b16 %v1191, %v1190
      %v1215 = vpack.c.b16 %v1193, %v1192
      %v1216 = vpack.c.b16 %v1195, %v1194
      %v1217 = vpack.c.b16 %v1197, %v1196
      %v1218 = vpack.c.b16 %v1199, %v1198
      %v1219 = vpack.c.b16 %v1201, %v1200
      %v1220 = vpack.c.b16 %v1203, %v1202
      %v1221 = vpack.c.b16 %v1205, %v1204
      %1238 = vmatprep.subr.bf16.mxu0 0
      %1239 = vmatpush1.bf16.msra.mxu0 %v1206
      %1240 = vmatprep.subr.bf16.mxu0 0
      %1241 = vmatpush1.bf16.msra.mxu0 %v1207
      %1242 = vmatprep.subr.bf16.mxu0 0
      %1243 = vmatpush1.bf16.msra.mxu0 %v1208
      %1244 = vmatprep.subr.bf16.mxu0 0
      %1245 = vmatpush1.bf16.msra.mxu0 %v1209
      %1246 = vmatprep.subr.bf16.mxu0 0
      %1247 = vmatpush1.bf16.msra.mxu0 %v1210
      %1248 = vmatprep.subr.bf16.mxu0 0
      %1249 = vmatpush1.bf16.msra.mxu0 %v1211
      %1250 = vmatprep.subr.bf16.mxu0 0
      %1251 = vmatpush1.bf16.msra.mxu0 %v1212
      %1252 = vmatprep.subr.bf16.mxu0 0
      %1253 = vmatpush1.bf16.msra.mxu0 %v1213
      %1254 = vmatprep.subr.bf16.mxu0 0
      %1255 = vmatpush1.bf16.msra.mxu0 %v1214
      %1256 = vmatprep.subr.bf16.mxu0 0
      %1257 = vmatpush1.bf16.msra.mxu0 %v1215
      %1258 = vmatprep.subr.bf16.mxu0 0
      %1259 = vmatpush1.bf16.msra.mxu0 %v1216
      %1260 = vmatprep.subr.bf16.mxu0 0
      %1261 = vmatpush1.bf16.msra.mxu0 %v1217
      %1262 = vmatprep.subr.bf16.mxu0 0
      %1263 = vmatpush1.bf16.msra.mxu0 %v1218
      %1264 = vmatprep.subr.bf16.mxu0 0
      %1265 = vmatpush1.bf16.msra.mxu0 %v1219
      %1266 = vmatprep.subr.bf16.mxu0 0
      %1267 = vmatpush1.bf16.msra.mxu0 %v1220
      %1268 = vmatprep.subr.bf16.mxu0 0
      %1269 = vmatpush1.bf16.msra.mxu0 %v1221
      %1270 = vmatprep.mubr.bf16.mxu0 %v526
      %1271 = vmatmul.mubr.bf16.gmra.mrb[0].mxu0 %v518
      %v1272 = vpop.f32.mrb[0].mxu0
      %v1273 = vadd.f32 0.0, %v1272
      %v1274 = vpop.f32.mrb[0].mxu0
      %v1275 = vpop.f32.mrb[0].mxu0
      %v1276 = vadd.f32 0.0, %v1275
      %v1277 = vpop.f32.mrb[0].mxu0
      %1278 = vmatprep.mubr.bf16.mxu0 %v542
      %1279 = vmatmul.mubr.bf16.gmra.mrb[0].mxu0 %v534
      %v1280 = vpop.f32.mrb[0].mxu0
      %v1281 = vadd.f32 0.0, %v1280
      %v1282 = vpop.f32.mrb[0].mxu0
      %v1283 = vpop.f32.mrb[0].mxu0
      %v1284 = vadd.f32 0.0, %v1283
      %v1285 = vpop.f32.mrb[0].mxu0
      %1286 = vmatprep.mubr.bf16.mxu0 %v558
      %1287 = vmatmul.mubr.bf16.gmra.mrb[0].mxu0 %v550
      %v1288 = vpop.f32.mrb[0].mxu0
      %v1289 = vadd.f32 0.0, %v1288
      %v1290 = vpop.f32.mrb[0].mxu0
      %v1291 = vpop.f32.mrb[0].mxu0
      %v1292 = vadd.f32 0.0, %v1291
      %v1293 = vpop.f32.mrb[0].mxu0
      %1294 = vmatprep.mubr.bf16.mxu0 %v1139
      %1295 = vmatmul.mubr.bf16.gmra.mrb[0].mxu0 %v1131
      %v1296 = vpop.f32.mrb[0].mxu0
      %v1297 = vadd.f32 0.0, %v1296
      %v1298 = vpop.f32.mrb[0].mxu0
      %v1299 = vpop.f32.mrb[0].mxu0
      %v1300 = vadd.f32 0.0, %v1299
      %v1301 = vpop.f32.mrb[0].mxu0
      %1302 = vdwg.mxu0
      %v1303 = vadd.f32 %v1083, %v1273
      %v1304 = vadd.f32 %v1084, %v1276
      %v1305 = vadd.f32 %v1085, %v1281
      %v1306 = vadd.f32 %v1086, %v1284
      %v1307 = vadd.f32 %v1087, %v1289
      %v1308 = vadd.f32 %v1088, %v1292
      %v1309 = vadd.f32 %v1089, %v1297
      %v1310 = vadd.f32 %v1090, %v1300
      %v1311 = vld [vmem:[%s3] sm:$0x1]
      %v1313 = vlaneseq
      %v1314 = vshrl.u32 %v1313, 7
      %v1315 = vsub.s32 0, %v1314
      %v1316 = vrot.slane %v1311, %v1315
      %v1318 = vadd.f32 %v1303, %v1316
      %v1319 = vadd.f32 %v1304, %v1316
      %v1320 = vadd.f32 %v1305, %v1316
      %v1321 = vadd.f32 %v1306, %v1316
      %v1322 = vadd.f32 %v1307, %v1316
      %v1323 = vadd.f32 %v1308, %v1316
      %v1324 = vadd.f32 %v1309, %v1316
      %v1325 = vadd.f32 %v1310, %v1316
      %v1326 = vmax.f32 %v1318, 0.0
      %v1327 = vmax.f32 %v1319, 0.0
      %v1328 = vmax.f32 %v1320, 0.0
      %v1329 = vmax.f32 %v1321, 0.0
      %v1330 = vmax.f32 %v1322, 0.0
      %v1331 = vmax.f32 %v1323, 0.0
      %v1332 = vmax.f32 %v1324, 0.0
      %v1333 = vmax.f32 %v1325, 0.0
      %v1334 = vlaneseq
      %v1335 = vshrl.u32 %v1334, 7
      %v1336 = vadd.s32 %v1335, 8
      %v1337 = vadd.s32 %v1335, 16
      %v1338 = vadd.s32 %v1335, 24
      %v1339 = vadd.s32 %v1335, 32
      %v1340 = vadd.s32 %v1335, 40
      %v1341 = vadd.s32 %v1335, 48
      %v1342 = vadd.s32 %v1335, 56
      %vm1343 = vcmp.lt.s32.totalorder %v1335, 0
      %v1344 = vsub.s32 0, %v1335
      %v1345 = vsel %vm1343, %v1344, %v1335
      %v1346 = vshrl.u32 %v1345, 4
      %v1347 = vand.u32 %v1345, 15
      %v1348 = vsub.s32 0, %v1347
      %v1349 = vsel %vm1343, %v1348, %v1347
      %vm1350 = vcmp.lt.s32.totalorder %v1336, 0
      %v1351 = vsub.s32 0, %v1336
      %v1352 = vsel %vm1350, %v1351, %v1336
      %v1353 = vshrl.u32 %v1352, 4
      %v1354 = vand.u32 %v1352, 15
      %v1355 = vsub.s32 0, %v1354
      %v1356 = vsel %vm1350, %v1355, %v1354
      %vm1357 = vcmp.lt.s32.totalorder %v1337, 0
      %v1358 = vsub.s32 0, %v1337
      %v1359 = vsel %vm1357, %v1358, %v1337
      %v1360 = vshrl.u32 %v1359, 4
      %v1361 = vand.u32 %v1359, 15
      %v1362 = vsub.s32 0, %v1361
      %v1363 = vsel %vm1357, %v1362, %v1361
      %vm1364 = vcmp.lt.s32.totalorder %v1338, 0
      %v1365 = vsub.s32 0, %v1338
      %v1366 = vsel %vm1364, %v1365, %v1338
      %v1367 = vshrl.u32 %v1366, 4
      %v1368 = vand.u32 %v1366, 15
      %v1369 = vsub.s32 0, %v1368
      %v1370 = vsel %vm1364, %v1369, %v1368
      %vm1371 = vcmp.lt.s32.totalorder %v1339, 0
      %v1372 = vsub.s32 0, %v1339
      %v1373 = vsel %vm1371, %v1372, %v1339
      %v1374 = vshrl.u32 %v1373, 4
      %v1375 = vand.u32 %v1373, 15
      %v1376 = vsub.s32 0, %v1375
      %v1377 = vsel %vm1371, %v1376, %v1375
      %vm1378 = vcmp.lt.s32.totalorder %v1340, 0
      %v1379 = vsub.s32 0, %v1340
      %v1380 = vsel %vm1378, %v1379, %v1340
      %v1381 = vshrl.u32 %v1380, 4
      %v1382 = vand.u32 %v1380, 15
      %v1383 = vsub.s32 0, %v1382
      %v1384 = vsel %vm1378, %v1383, %v1382
      %vm1385 = vcmp.lt.s32.totalorder %v1341, 0
      %v1386 = vsub.s32 0, %v1341
      %v1387 = vsel %vm1385, %v1386, %v1341
      %v1388 = vshrl.u32 %v1387, 4
      %v1389 = vand.u32 %v1387, 15
      %v1390 = vsub.s32 0, %v1389
      %v1391 = vsel %vm1385, %v1390, %v1389
      %vm1392 = vcmp.lt.s32.totalorder %v1342, 0
      %v1393 = vsub.s32 0, %v1342
      %v1394 = vsel %vm1392, %v1393, %v1342
      %v1395 = vshrl.u32 %v1394, 4
      %v1396 = vand.u32 %v1394, 15
      %v1397 = vsub.s32 0, %v1396
      %v1398 = vsel %vm1392, %v1397, %v1396
      %vm1399 = vcmp.ne.s32.totalorder %v1349, 0
      %vm1400 = vcmp.ne.s32.totalorder %v1356, 0
      %vm1401 = vcmp.ne.s32.totalorder %v1363, 0
      %vm1402 = vcmp.ne.s32.totalorder %v1370, 0
      %vm1403 = vcmp.ne.s32.totalorder %v1377, 0
      %vm1404 = vcmp.ne.s32.totalorder %v1384, 0
      %vm1405 = vcmp.ne.s32.totalorder %v1391, 0
      %vm1406 = vcmp.ne.s32.totalorder %v1398, 0
      %vm1407 = vcmp.lt.s32.totalorder %v1349, 0
      %vm1408 = vcmp.lt.s32.totalorder %v1356, 0
      %vm1409 = vcmp.lt.s32.totalorder %v1363, 0
      %vm1410 = vcmp.lt.s32.totalorder %v1370, 0
      %vm1411 = vcmp.lt.s32.totalorder %v1377, 0
      %vm1412 = vcmp.lt.s32.totalorder %v1384, 0
      %vm1413 = vcmp.lt.s32.totalorder %v1391, 0
      %vm1414 = vcmp.lt.s32.totalorder %v1398, 0
      %vm1415 = vmand %vm1407, %vm1399
      %vm1416 = vmand %vm1408, %vm1400
      %vm1417 = vmand %vm1409, %vm1401
      %vm1418 = vmand %vm1410, %vm1402
      %vm1419 = vmand %vm1411, %vm1403
      %vm1420 = vmand %vm1412, %vm1404
      %vm1421 = vmand %vm1413, %vm1405
      %vm1422 = vmand %vm1414, %vm1406
      %v1423 = vadd.s32 %v1349, 16
      %v1424 = vadd.s32 %v1356, 16
      %v1425 = vadd.s32 %v1363, 16
      %v1426 = vadd.s32 %v1370, 16
      %v1427 = vadd.s32 %v1377, 16
      %v1428 = vadd.s32 %v1384, 16
      %v1429 = vadd.s32 %v1391, 16
      %v1430 = vadd.s32 %v1398, 16
      %v1431 = vsel %vm1415, %v1423, %v1349
      %v1432 = vsel %vm1416, %v1424, %v1356
      %v1433 = vsel %vm1417, %v1425, %v1363
      %v1434 = vsel %vm1418, %v1426, %v1370
      %v1435 = vsel %vm1419, %v1427, %v1377
      %v1436 = vsel %vm1420, %v1428, %v1384
      %v1437 = vsel %vm1421, %v1429, %v1391
      %v1438 = vsel %vm1422, %v1430, %v1398
      %vm1439 = vcmp.lt.s32.totalorder %v1431, 4
      %vm1440 = vcmp.lt.s32.totalorder %v1432, 4
      %vm1441 = vcmp.lt.s32.totalorder %v1433, 4
      %vm1442 = vcmp.lt.s32.totalorder %v1434, 4
      %vm1443 = vcmp.lt.s32.totalorder %v1435, 4
      %vm1444 = vcmp.lt.s32.totalorder %v1436, 4
      %vm1445 = vcmp.lt.s32.totalorder %v1437, 4
      %vm1446 = vcmp.lt.s32.totalorder %v1438, 4
      %v1447 = vsel %vm1439, 1, 0
      %v1448 = vsel %vm1440, 1, 0
      %v1449 = vsel %vm1441, 1, 0
      %v1450 = vsel %vm1442, 1, 0
      %v1451 = vsel %vm1443, 1, 0
      %v1452 = vsel %vm1444, 1, 0
      %v1453 = vsel %vm1445, 1, 0
      %v1454 = vsel %vm1446, 1, 0
      %vm1455 = vcmp.eq.s32.totalorder %v1447, 1
      %vm1456 = vcmp.eq.s32.totalorder %v1448, 1
      %vm1457 = vcmp.eq.s32.totalorder %v1449, 1
      %vm1458 = vcmp.eq.s32.totalorder %v1450, 1
      %vm1459 = vcmp.eq.s32.totalorder %v1451, 1
      %vm1460 = vcmp.eq.s32.totalorder %v1452, 1
      %vm1461 = vcmp.eq.s32.totalorder %v1453, 1
      %vm1462 = vcmp.eq.s32.totalorder %v1454, 1
      %v1463 = vsel %vm1455, %v1326, 0.0
      %v1464 = vsel %vm1456, %v1327, 0.0
      %v1465 = vsel %vm1457, %v1328, 0.0
      %v1466 = vsel %vm1458, %v1329, 0.0
      %v1467 = vsel %vm1459, %v1330, 0.0
      %v1468 = vsel %vm1460, %v1331, 0.0
      %v1469 = vsel %vm1461, %v1332, 0.0
      %v1470 = vsel %vm1462, %v1333, 0.0
      %v1471 = vpack.c.bf16 %v1464, %v1463
      %v1472 = vpack.c.bf16 %v1466, %v1465
      %v1473 = vpack.c.bf16 %v1468, %v1467
      %v1474 = vpack.c.bf16 %v1470, %v1469
      %v1479 = vunpack.c.l.b16 %v1471
      %v1480 = vunpack.c.h.b16 %v1471
      %v1481 = vunpack.c.l.b16 %v1472
      %v1482 = vunpack.c.h.b16 %v1472
      %v1483 = vunpack.c.l.b16 %v1473
      %v1484 = vunpack.c.h.b16 %v1473
      %v1485 = vunpack.c.l.b16 %v1474
      %v1486 = vunpack.c.h.b16 %v1474
      %v1487 = vpack.c.b16 %v1479, %v1479
      %v1488 = vpack.c.b16 %v1480, %v1480
      %v1489 = vpack.c.b16 %v1481, %v1481
      %v1490 = vpack.c.b16 %v1482, %v1482
      %v1491 = vpack.c.b16 %v1483, %v1483
      %v1492 = vpack.c.b16 %v1484, %v1484
      %v1493 = vpack.c.b16 %v1485, %v1485
      %v1494 = vpack.c.b16 %v1486, %v1486
      %1503 = vst [vmem:[%s348] sm:$0xf] %v1487
      %1504 = vst [vmem:[%s348 + $0x4] sm:$0xf] %v1488
      %1505 = vst [vmem:[%s348 + $0x8] sm:$0xf] %v1489
      %1506 = vst [vmem:[%s348 + $0xc] sm:$0xf] %v1490
      %1507 = vst [vmem:[%s348 + $0x10] sm:$0xf] %v1491
      %1508 = vst [vmem:[%s348 + $0x14] sm:$0xf] %v1492
      %1509 = vst [vmem:[%s348 + $0x18] sm:$0xf] %v1493
      %1510 = vst [vmem:[%s348 + $0x1c] sm:$0xf] %v1494
      %s1511 = smul.u32 8, %s20
      %p1512 = scmp.lt.s32.totalorder %s19, 1
      %s1513 = scalar_select %p1512, %s19, 1
      %p1514 = scmp.lt.s32.totalorder %s1511, 7
      %s1515 = scalar_select %p1514, %s1511, 7
      %s1516 = smul.addr %s1513, 8
      %s1517 = sadd.s32 %s1515, %s1516
      %s1518 = smul.addr %s1517, 4
      %s1519 = scalar_lea.vmem %s4, %s1518
      // Predicated region
      $region37: #{variational_encoder_forward.7} parent=35 // pred_check
        %p1520 = pneg %p151
      $region38: #{variational_encoder_forward.7} parent=35 // pred_check_branch
        %1522 = sbr.rel (%p1520) target = $region40
      $region39: #{variational_encoder_forward.7} parent=35 // pred_region
        %s1523 = smul.u32 8, %s20
      $region40: #{variational_encoder_forward.7} parent=35 // pred_fallthru
        _
    $region36: #{variational_encoder_forward.7} parent=5 // pred_fallthru
      _
    %p1524 = scmp.le.s32.totalorder 2, %s10
    // Predicated region
    $region41: #{variational_encoder_forward.7} parent=5 // pred_check
      %p1525 = pneg %p1524
    $region42: #{variational_encoder_forward.7} parent=5 // pred_check_branch
      %1527 = sbr.rel (%p1525) target = $region44
    $region43: #{variational_encoder_forward.7} parent=5 // pred_region
      %s1528 = ssub.s32 %s10, 2
      // Predicated region
      $region45: #{variational_encoder_forward.7} parent=43 // pred_check
        %p1529 = pneg %p157
      $region46: #{variational_encoder_forward.7} parent=43 // pred_check_branch
        %1531 = sbr.rel (%p1529) target = $region48
      $region47: #{variational_encoder_forward.7} parent=43 // pred_region
        %s1532 = smul.u32 8, %s22
        %p1533 = scmp.lt.s32.totalorder %s21, 1
        %s1534 = scalar_select %p1533, %s21, 1
        %p1535 = scmp.lt.s32.totalorder %s1532, 7
        %s1536 = scalar_select %p1535, %s1532, 7
        %s1537 = smul.addr %s1534, 8
        %s1538 = sadd.s32 %s1536, %s1537
        %s1539 = smul.addr %s1538, 4
        %s1540 = scalar_lea.vmem %s4, %s1539
      $region48: #{variational_encoder_forward.7} parent=43 // pred_fallthru
        _
    $region44: #{variational_encoder_forward.7} parent=5 // pred_fallthru
      _
  $region6: #{variational_encoder_forward.7} parent=0 // loop_footer
    %s14 = sadd.s32 1, %s10
  $region7: #{variational_encoder_forward.7} parent=0 // loop_footer_branch
    %9 = sbr.rel target = $region3
  $region8: #{variational_encoder_forward.7} parent=0 // loop_exit
    _

// kernel: variational_encoder_forward.8
$region0: #{variational_encoder_forward.8}
  #allocation0 [shape = 'u32[]', space=smem, size = 0x4, offset = 0x4, fixed_abs, tag = 'smem constant byte address 0x4 - core index']
  #allocation1 [shape = 'u32[144,128]{1,0:T(1,128)}', space=vmem, size = 0x12000, scoped, tag = 'internal scratch']
  %s0 = inlined_call_operand.vmem [shape: bf16[2,48,512], index: 0, kind: input, shape index: {}, may-alias: {0,1}]
  %s1 = inlined_call_operand.vmem [shape: bf16[2,48,512], index: 1, kind: input, shape index: {}, may-alias: {0,1}]
  %s2 = inlined_call_operand.vmem [shape: bf16[2,2,512,256], index: 2, kind: input, shape index: {}]
  %s3 = inlined_call_operand.vmem [shape: f32[1,256], index: 3, kind: input, shape index: {}]
  %s4 = inlined_call_operand.vmem [shape: bf16[2,32,256], index: 4, kind: output, shape index: {}]
  %s5 = sld [smem:[#allocation0]]
  $region49: #{variational_encoder_forward.8} parent=0
    _
  %s7 = ssub.s32 1, %s5
  %s8 = scalar_select 0, %s7, %s5
  loop: start=0, step=1, limit=4
  $region2: #{variational_encoder_forward.8} parent=0 // loop_pre_header
    _
  $region3: #{variational_encoder_forward.8} parent=0 // loop_header
    %s10 = sphi 0, %s14
    %p11 = scmp.ge.s32.totalorder %s10, 4
    %s17 = sphi 0, %s29
    %s18 = sphi 0, %s25
    %s19 = sphi 0, %s17
    %s20 = sphi 0, %s18
    %s21 = sphi 0, %s19
    %s22 = sphi 0, %s20
    %s34 = sphi 0, %s36
    %s37 = sphi 0, %s34
    %s38 = sphi 0, %s37
    %s54 = sphi 0, %s38
    %s68 = sphi 0, %s70
    %s71 = sphi 0, %s68
    %s72 = sphi 0, %s71
    %s88 = sphi 0, %s72
    %s92 = sphi 0, %s92
    %s94 = sphi 0, %s92
    %s95 = sphi 0, %s94
    %s109 = sphi 0, %s95
    %s113 = sphi 0, %s113
    %s115 = sphi 0, %s113
    %s116 = sphi 0, %s115
    %s130 = sphi 0, %s116
    %s138 = sphi 0, %s140
    %s141 = sphi 0, %s138
    %s142 = sphi 0, %s141
    %s158 = sphi 0, %s142
  $region4: #{variational_encoder_forward.8} parent=0 // loop_header_branch
    %13 = sbr.rel (%p11) target = $region8
  $region5: #{variational_encoder_forward.8} parent=0 // loop_body
    %s15 = ssub.s32 %s10, 1
    %s16 = ssub.s32 %s10, 2
    %s23 = sadd.s32 1, %s18
    %p24 = scmp.ge.s32.totalorder %s23, 1
    %s25 = scalar_select %p24, 0, %s23
    %s26 = sadd.s32 1, %s17
    %s27 = scalar_select %p24, %s26, %s17
    %p28 = scmp.ge.s32.totalorder %s27, 2
    %s29 = scalar_select %p28, 0, %s27
    %s30 = ssub.s32 %s17, %s29
    %s31 = ssub.s32 %s18, %s25
    %s32 = sor.u32 %s30, %s31
    %p33 = scmp.eq.s32.totalorder %s32, 0
    %s35 = sadd.s32 %s34, 1
    %s36 = scalar_select %p33, %s34, %s35
    %p39 = pneg %p33
    %p40 = scmp.eq.s32.totalorder %s10, 1
    %p41 = por %p39, %p40
    %p42 = scmp.ne.s32.totalorder %s34, %s37
    %p43 = scmp.eq.s32.totalorder %s10, 0
    %p44 = por %p42, %p43
    %p45 = scmp.ne.s32.totalorder %s34, %s37
    %p46 = scmp.eq.s32.totalorder %s15, 1
    %p47 = por %p45, %p46
    %p48 = scmp.ne.s32.totalorder %s37, %s38
    %p49 = scmp.eq.s32.totalorder %s15, 0
    %p50 = por %p48, %p49
    %p51 = scmp.ne.s32.totalorder %s37, %s38
    %p52 = scmp.eq.s32.totalorder %s16, 1
    %p53 = por %p51, %p52
    %p55 = scmp.ne.s32.totalorder %s38, %s54
    %p56 = scmp.eq.s32.totalorder %s16, 0
    %p57 = por %p55, %p56
    %s58 = sadd.s32 %s18, 1
    %p59 = scmp.lt.s32.totalorder %s58, 1
    %s60 = scalar_select %p59, %s58, 1
    %s61 = sadd.s32 %s25, 1
    %p62 = scmp.lt.s32.totalorder %s61, 1
    %s63 = scalar_select %p62, %s61, 1
    %s64 = ssub.s32 %s17, %s29
    %s65 = ssub.s32 %s60, %s63
    %s66 = sor.u32 %s64, %s65
    %p67 = scmp.eq.s32.totalorder %s66, 0
    %s69 = sadd.s32 %s68, 1
    %s70 = scalar_select %p67, %s68, %s69
    %p73 = pneg %p67
    %p74 = scmp.eq.s32.totalorder %s10, 1
    %p75 = por %p73, %p74
    %p76 = scmp.ne.s32.totalorder %s68, %s71
    %p77 = scmp.eq.s32.totalorder %s10, 0
    %p78 = por %p76, %p77
    %p79 = scmp.ne.s32.totalorder %s68, %s71
    %p80 = scmp.eq.s32.totalorder %s15, 1
    %p81 = por %p79, %p80
    %p82 = scmp.ne.s32.totalorder %s71, %s72
    %p83 = scmp.eq.s32.totalorder %s15, 0
    %p84 = por %p82, %p83
    %p85 = scmp.ne.s32.totalorder %s71, %s72
    %p86 = scmp.eq.s32.totalorder %s16, 1
    %p87 = por %p85, %p86
    %p89 = scmp.ne.s32.totalorder %s72, %s88
    %p90 = scmp.eq.s32.totalorder %s16, 0
    %p91 = por %p89, %p90
    %s93 = sadd.s32 %s92, 1
    %p96 = scmp.eq.s32.totalorder %s10, 1
    %p97 = scmp.ne.s32.totalorder %s92, %s94
    %p98 = scmp.eq.s32.totalorder %s10, 0
    %p99 = por %p97, %p98
    %p100 = scmp.ne.s32.totalorder %s92, %s94
    %p101 = scmp.eq.s32.totalorder %s15, 1
    %p102 = por %p100, %p101
    %p103 = scmp.ne.s32.totalorder %s94, %s95
    %p104 = scmp.eq.s32.totalorder %s15, 0
    %p105 = por %p103, %p104
    %p106 = scmp.ne.s32.totalorder %s94, %s95
    %p107 = scmp.eq.s32.totalorder %s16, 1
    %p108 = por %p106, %p107
    %p110 = scmp.ne.s32.totalorder %s95, %s109
    %p111 = scmp.eq.s32.totalorder %s16, 0
    %p112 = por %p110, %p111
    %s114 = sadd.s32 %s113, 1
    %p117 = scmp.eq.s32.totalorder %s10, 1
    %p118 = scmp.ne.s32.totalorder %s113, %s115
    %p119 = scmp.eq.s32.totalorder %s10, 0
    %p120 = por %p118, %p119
    %p121 = scmp.ne.s32.totalorder %s113, %s115
    %p122 = scmp.eq.s32.totalorder %s15, 1
    %p123 = por %p121, %p122
    %p124 = scmp.ne.s32.totalorder %s115, %s116
    %p125 = scmp.eq.s32.totalorder %s15, 0
    %p126 = por %p124, %p125
    %p127 = scmp.ne.s32.totalorder %s115, %s116
    %p128 = scmp.eq.s32.totalorder %s16, 1
    %p129 = por %p127, %p128
    %p131 = scmp.ne.s32.totalorder %s116, %s130
    %p132 = scmp.eq.s32.totalorder %s16, 0
    %p133 = por %p131, %p132
    %s134 = ssub.s32 %s17, %s29
    %s135 = ssub.s32 %s18, %s25
    %s136 = sor.u32 %s134, %s135
    %p137 = scmp.eq.s32.totalorder %s136, 0
    %s139 = sadd.s32 %s138, 1
    %s140 = scalar_select %p137, %s138, %s139
    %p143 = pneg %p137
    %p144 = scmp.eq.s32.totalorder %s10, 1
    %p145 = por %p143, %p144
    %p146 = scmp.ne.s32.totalorder %s138, %s141
    %p147 = scmp.eq.s32.totalorder %s10, 0
    %p148 = por %p146, %p147
    %p149 = scmp.ne.s32.totalorder %s138, %s141
    %p150 = scmp.eq.s32.totalorder %s15, 1
    %p151 = por %p149, %p150
    %p152 = scmp.ne.s32.totalorder %s141, %s142
    %p153 = scmp.eq.s32.totalorder %s15, 0
    %p154 = por %p152, %p153
    %p155 = scmp.ne.s32.totalorder %s141, %s142
    %p156 = scmp.eq.s32.totalorder %s16, 1
    %p157 = por %p155, %p156
    %p159 = scmp.ne.s32.totalorder %s142, %s158
    %p160 = scmp.eq.s32.totalorder %s16, 0
    %p161 = por %p159, %p160
    %p162 = scmp.le.s32.totalorder 1, %s10
    %p163 = scmp.lt.s32.totalorder %s10, 3
    %p164 = pnand %p162, %p163
    %p165 = pneg %p164
    // Predicated region
    $region9: #{variational_encoder_forward.8} parent=5 // pred_check
      _
    $region10: #{variational_encoder_forward.8} parent=5 // pred_check_branch
      %167 = sbr.rel (%p164) target = $region12
    $region11: #{variational_encoder_forward.8} parent=5 // pred_region
      %s168 = ssub.s32 %s10, 1
      // Predicated region
      $region13: #{variational_encoder_forward.8} parent=11 // pred_check
        %p169 = pneg %p105
      $region14: #{variational_encoder_forward.8} parent=11 // pred_check_branch
        %171 = sbr.rel (%p169) target = $region16
      $region15: #{variational_encoder_forward.8} parent=11 // pred_region
        _
      $region16: #{variational_encoder_forward.8} parent=11 // pred_fallthru
        _
      // Predicated region
      $region17: #{variational_encoder_forward.8} parent=11 // pred_check
        %p172 = pneg %p126
      $region18: #{variational_encoder_forward.8} parent=11 // pred_check_branch
        %174 = sbr.rel (%p172) target = $region20
      $region19: #{variational_encoder_forward.8} parent=11 // pred_region
        _
      $region20: #{variational_encoder_forward.8} parent=11 // pred_fallthru
        _
    $region12: #{variational_encoder_forward.8} parent=5 // pred_fallthru
      _
    %p175 = scmp.lt.s32.totalorder %s10, 2
    // Predicated region
    $region21: #{variational_encoder_forward.8} parent=5 // pred_check
      %p176 = pneg %p175
    $region22: #{variational_encoder_forward.8} parent=5 // pred_check_branch
      %178 = sbr.rel (%p176) target = $region24
    $region23: #{variational_encoder_forward.8} parent=5 // pred_region
      // Predicated region
      $region25: #{variational_encoder_forward.8} parent=23 // pred_check
        %p179 = pneg %p44
      $region26: #{variational_encoder_forward.8} parent=23 // pred_check_branch
        %181 = sbr.rel (%p179) target = $region28
      $region27: #{variational_encoder_forward.8} parent=23 // pred_region
        %s182 = smul.u32 4, %s18
        %s183 = ssub.s32 6, %s182
        %p184 = scmp.lt.s32.totalorder %s183, 4
        %s185 = scalar_select %p184, %s183, 4
        %s186 = smul.u32 64, %s185
        %s187 = smul.u32 %s186, 4
        %p188 = scmp.lt.s32.totalorder %s17, 1
        %s189 = scalar_select %p188, %s17, 1
        %p190 = scmp.lt.s32.totalorder %s182, 5
        %s191 = scalar_select %p190, %s182, 5
        %s192 = smul.addr %s191, 4
        %s193 = smul.addr %s189, 24
        %s194 = sadd.s32 %s192, %s193
        %s195 = smul.addr %s194, 4
        %s196 = scalar_lea.vmem %s0, %s195
        %s197 = smul.u32 4, %s18
        %s198 = ssub.s32 6, %s197
        %p199 = scmp.lt.s32.totalorder %s198, 4
        %s200 = scalar_select %p199, %s198, 4
        %s201 = smul.u32 64, %s200
        %s202 = smul.u32 %s201, 4
      $region28: #{variational_encoder_forward.8} parent=23 // pred_fallthru
        _
      // Predicated region
      $region29: #{variational_encoder_forward.8} parent=23 // pred_check
        %p203 = pneg %p78
      $region30: #{variational_encoder_forward.8} parent=23 // pred_check_branch
        %205 = sbr.rel (%p203) target = $region32
      $region31: #{variational_encoder_forward.8} parent=23 // pred_region
        %s206 = sadd.s32 %s18, 1
        %p207 = scmp.lt.s32.totalorder %s206, 1
        %s208 = scalar_select %p207, %s206, 1
        %s209 = smul.u32 4, %s208
        %s210 = ssub.s32 6, %s209
        %p211 = scmp.lt.s32.totalorder %s210, 4
        %s212 = scalar_select %p211, %s210, 4
        %s213 = smul.u32 64, %s212
        %s214 = smul.u32 %s213, 4
        %p215 = scmp.lt.s32.totalorder %s17, 1
        %s216 = scalar_select %p215, %s17, 1
        %p217 = scmp.lt.s32.totalorder %s209, 5
        %s218 = scalar_select %p217, %s209, 5
        %s219 = smul.addr %s218, 4
        %s220 = smul.addr %s216, 24
        %s221 = sadd.s32 %s219, %s220
        %s222 = smul.addr %s221, 4
        %s223 = scalar_lea.vmem %s1, %s222
        %s224 = sadd.s32 %s18, 1
        %p225 = scmp.lt.s32.totalorder %s224, 1
        %s226 = scalar_select %p225, %s224, 1
        %s227 = smul.u32 4, %s226
        %s228 = ssub.s32 6, %s227
        %p229 = scmp.lt.s32.totalorder %s228, 4
        %s230 = scalar_select %p229, %s228, 4
        %s231 = smul.u32 64, %s230
        %s232 = smul.u32 %s231, 4
      $region32: #{variational_encoder_forward.8} parent=23 // pred_fallthru
        _
    $region24: #{variational_encoder_forward.8} parent=5 // pred_fallthru
      _
    %p233 = scmp.le.s32.totalorder 1, %s10
    %p234 = scmp.lt.s32.totalorder %s10, 3
    %p235 = pnand %p233, %p234
    %p236 = pneg %p235
    // Predicated region
    $region33: #{variational_encoder_forward.8} parent=5 // pred_check
      _
    $region34: #{variational_encoder_forward.8} parent=5 // pred_check_branch
      %238 = sbr.rel (%p235) target = $region36
    $region35: #{variational_encoder_forward.8} parent=5 // pred_region
      %s239 = ssub.s32 %s10, 1
      %s240 = smul.u32 4, %s20
      %s241 = ssub.s32 6, %s240
      %p242 = scmp.lt.s32.totalorder %s241, 4
      %s243 = scalar_select %p242, %s241, 4
      %s244 = smul.u32 64, %s243
      %s245 = smul.u32 %s244, 4
      %p246 = scmp.lt.s32.totalorder %s19, 1
      %s247 = scalar_select %p246, %s19, 1
      %p248 = scmp.lt.s32.totalorder %s240, 5
      %s249 = scalar_select %p248, %s240, 5
      %s250 = smul.addr %s249, 4
      %s251 = smul.addr %s247, 24
      %s252 = sadd.s32 %s250, %s251
      %s253 = smul.addr %s252, 4
      %s254 = scalar_lea.vmem %s0, %s253
      %p255 = pneg %p50
      %p256 = pneg %p47
      %s257 = sadd.s32 %s20, 1
      %p258 = scmp.lt.s32.totalorder %s257, 1
      %s259 = scalar_select %p258, %s257, 1
      %s260 = smul.u32 4, %s259
      %s261 = ssub.s32 6, %s260
      %p262 = scmp.lt.s32.totalorder %s261, 4
      %s263 = scalar_select %p262, %s261, 4
      %s264 = smul.u32 64, %s263
      %s265 = smul.u32 %s264, 4
      %p266 = scmp.lt.s32.totalorder %s19, 1
      %s267 = scalar_select %p266, %s19, 1
      %p268 = scmp.lt.s32.totalorder %s260, 5
      %s269 = scalar_select %p268, %s260, 5
      %s270 = smul.addr %s269, 4
      %s271 = smul.addr %s267, 24
      %s272 = sadd.s32 %s270, %s271
      %s273 = smul.addr %s272, 4
      %s274 = scalar_lea.vmem %s1, %s273
      %p275 = pneg %p84
      %p276 = pneg %p81
      %p277 = pneg %p105
      %p278 = pneg %p102
      %p279 = pneg %p126
      %p280 = pneg %p123
      %p281 = pneg %p154
      %p282 = pneg %p151
      %s283 = smul.u32 4, %s20
      %p284 = scmp.lt.s32.totalorder %s19, 1
      %s285 = scalar_select %p284, %s19, 1
      %p286 = scmp.lt.s32.totalorder %s283, 3
      %s287 = scalar_select %p286, %s283, 3
      %s288 = smul.addr %s287, 2
      %s289 = smul.addr %s285, 8
      %s290 = sadd.s32 %s288, %s289
      %s291 = smul.addr %s290, 4
      %s292 = scalar_lea.vmem %s4, %s291
      %s293 = smul.u32 4, %s20
      %s294 = ssub.s32 6, %s293
      %p295 = scmp.lt.s32.totalorder %s294, 4
      %s296 = scalar_select %p295, %s294, 4
      %s297 = smul.u32 64, %s296
      %s298 = smul.u32 %s297, 4
      %p299 = scmp.lt.s32.totalorder %s19, 1
      %s300 = scalar_select %p299, %s19, 1
      %p301 = scmp.lt.s32.totalorder %s293, 5
      %s302 = scalar_select %p301, %s293, 5
      %s303 = smul.addr %s302, 4
      %s304 = smul.addr %s300, 24
      %s305 = sadd.s32 %s303, %s304
      %s306 = smul.addr %s305, 4
      %s307 = scalar_lea.vmem %s0, %s306
      %s308 = smul.u32 4, %s20
      %s309 = ssub.s32 6, %s308
      %p310 = scmp.lt.s32.totalorder %s309, 4
      %s311 = scalar_select %p310, %s309, 4
      %s312 = smul.u32 64, %s311
      %s313 = smul.u32 %s312, 4
      %s314 = sadd.s32 %s20, 1
      %p315 = scmp.lt.s32.totalorder %s314, 1
      %s316 = scalar_select %p315, %s314, 1
      %s317 = smul.u32 4, %s316
      %s318 = ssub.s32 6, %s317
      %p319 = scmp.lt.s32.totalorder %s318, 4
      %s320 = scalar_select %p319, %s318, 4
      %s321 = smul.u32 64, %s320
      %s322 = smul.u32 %s321, 4
      %p323 = scmp.lt.s32.totalorder %s19, 1
      %s324 = scalar_select %p323, %s19, 1
      %p325 = scmp.lt.s32.totalorder %s317, 5
      %s326 = scalar_select %p325, %s317, 5
      %s327 = smul.addr %s326, 4
      %s328 = smul.addr %s324, 24
      %s329 = sadd.s32 %s327, %s328
      %s330 = smul.addr %s329, 4
      %s331 = scalar_lea.vmem %s1, %s330
      %s332 = sadd.s32 %s20, 1
      %p333 = scmp.lt.s32.totalorder %s332, 1
      %s334 = scalar_select %p333, %s332, 1
      %s335 = smul.u32 4, %s334
      %s336 = ssub.s32 6, %s335
      %p337 = scmp.lt.s32.totalorder %s336, 4
      %s338 = scalar_select %p337, %s336, 4
      %s339 = smul.u32 64, %s338
      %s340 = smul.u32 %s339, 4
      %s341 = smul.u32 4, %s20
      %p342 = scmp.lt.s32.totalorder %s19, 1
      %s343 = scalar_select %p342, %s19, 1
      %p344 = scmp.lt.s32.totalorder %s341, 3
      %s345 = scalar_select %p344, %s341, 3
      %s346 = smul.addr %s345, 2
      %s347 = smul.addr %s343, 8
      %s348 = sadd.s32 %s346, %s347
      %s349 = smul.addr %s348, 4
      %s350 = scalar_lea.vmem %s4, %s349
      %s351 = smul.u32 4, %s20
      %v352 = vld [vmem:[%s307] sm:$0xff]
      %v353 = vld [vmem:[%s307 + $0x8] sm:$0xff]
      %v354 = vld [vmem:[%s307 + $0x10] sm:$0xff]
      %v355 = vld [vmem:[%s307 + $0x18] sm:$0xff]
      %v356 = vld [vmem:[%s307 + $0x20] sm:$0xff]
      %v357 = vld [vmem:[%s307 + $0x28] sm:$0xff]
      %v358 = vld [vmem:[%s307 + $0x30] sm:$0xff]
      %v359 = vld [vmem:[%s307 + $0x38] sm:$0xff]
      %v360 = vld [vmem:[%s331] sm:$0xff]
      %v361 = vld [vmem:[%s331 + $0x8] sm:$0xff]
      %v362 = vld [vmem:[%s331 + $0x10] sm:$0xff]
      %v363 = vld [vmem:[%s331 + $0x18] sm:$0xff]
      %v364 = vld [vmem:[%s331 + $0x20] sm:$0xff]
      %v365 = vld [vmem:[%s331 + $0x28] sm:$0xff]
      %v366 = vld [vmem:[%s331 + $0x30] sm:$0xff]
      %v367 = vld [vmem:[%s331 + $0x38] sm:$0xff]
      %v376 = vunpack.c.l.b16 %v352
      %v377 = vunpack.c.h.b16 %v352
      %v378 = vunpack.c.l.b16 %v353
      %v379 = vunpack.c.h.b16 %v353
      %v380 = vunpack.c.l.b16 %v354
      %v381 = vunpack.c.h.b16 %v354
      %v382 = vunpack.c.l.b16 %v355
      %v383 = vunpack.c.h.b16 %v355
      %v384 = vunpack.c.l.b16 %v356
      %v385 = vunpack.c.h.b16 %v356
      %v386 = vunpack.c.l.b16 %v357
      %v387 = vunpack.c.h.b16 %v357
      %v388 = vunpack.c.l.b16 %v358
      %v389 = vunpack.c.h.b16 %v358
      %v390 = vunpack.c.l.b16 %v359
      %v391 = vunpack.c.h.b16 %v359
      %v392 = vpack.c.b16 %v380, %v376
      %v393 = vpack.c.b16 %v381, %v377
      %v394 = vpack.c.b16 %v382, %v378
      %v395 = vpack.c.b16 %v383, %v379
      %v396 = vpack.c.b16 %v388, %v384
      %v397 = vpack.c.b16 %v389, %v385
      %v398 = vpack.c.b16 %v390, %v386
      %v399 = vpack.c.b16 %v391, %v387
      %v416 = vunpack.c.l.b16 %v360
      %v417 = vunpack.c.h.b16 %v360
      %v418 = vunpack.c.l.b16 %v361
      %v419 = vunpack.c.h.b16 %v361
      %v420 = vunpack.c.l.b16 %v362
      %v421 = vunpack.c.h.b16 %v362
      %v422 = vunpack.c.l.b16 %v363
      %v423 = vunpack.c.h.b16 %v363
      %v424 = vunpack.c.l.b16 %v364
      %v425 = vunpack.c.h.b16 %v364
      %v426 = vunpack.c.l.b16 %v365
      %v427 = vunpack.c.h.b16 %v365
      %v428 = vunpack.c.l.b16 %v366
      %v429 = vunpack.c.h.b16 %v366
      %v430 = vunpack.c.l.b16 %v367
      %v431 = vunpack.c.h.b16 %v367
      %v432 = vpack.c.b16 %v420, %v416
      %v433 = vpack.c.b16 %v421, %v417
      %v434 = vpack.c.b16 %v422, %v418
      %v435 = vpack.c.b16 %v423, %v419
      %v436 = vpack.c.b16 %v428, %v424
      %v437 = vpack.c.b16 %v429, %v425
      %v438 = vpack.c.b16 %v430, %v426
      %v439 = vpack.c.b16 %v431, %v427
      %v444 = vld [vmem:[%s2] sm:$0xff]
      %v445 = vld [vmem:[%s2 + $0x8] sm:$0xff]
      %v446 = vld [vmem:[%s2 + $0x10] sm:$0xff]
      %v447 = vld [vmem:[%s2 + $0x18] sm:$0xff]
      %v448 = vld [vmem:[%s2 + $0x20] sm:$0xff]
      %v449 = vld [vmem:[%s2 + $0x28] sm:$0xff]
      %v450 = vld [vmem:[%s2 + $0x30] sm:$0xff]
      %v451 = vld [vmem:[%s2 + $0x38] sm:$0xff]
      %v452 = vld [vmem:[%s2 + $0x40] sm:$0xff]
      %v453 = vld [vmem:[%s2 + $0x48] sm:$0xff]
      %v454 = vld [vmem:[%s2 + $0x50] sm:$0xff]
      %v455 = vld [vmem:[%s2 + $0x58] sm:$0xff]
      %v456 = vld [vmem:[%s2 + $0x60] sm:$0xff]
      %v457 = vld [vmem:[%s2 + $0x68] sm:$0xff]
      %v458 = vld [vmem:[%s2 + $0x70] sm:$0xff]
      %v459 = vld [vmem:[%s2 + $0x78] sm:$0xff]
      %v460 = vld [vmem:[%s2 + $0x80] sm:$0xff]
      %v461 = vld [vmem:[%s2 + $0x88] sm:$0xff]
      %v462 = vld [vmem:[%s2 + $0x90] sm:$0xff]
      %v463 = vld [vmem:[%s2 + $0x98] sm:$0xff]
      %v464 = vld [vmem:[%s2 + $0xa0] sm:$0xff]
      %v465 = vld [vmem:[%s2 + $0xa8] sm:$0xff]
      %v466 = vld [vmem:[%s2 + $0xb0] sm:$0xff]
      %v467 = vld [vmem:[%s2 + $0xb8] sm:$0xff]
      %v468 = vld [vmem:[%s2 + $0xc0] sm:$0xff]
      %v469 = vld [vmem:[%s2 + $0xc8] sm:$0xff]
      %v470 = vld [vmem:[%s2 + $0xd0] sm:$0xff]
      %v471 = vld [vmem:[%s2 + $0xd8] sm:$0xff]
      %v472 = vld [vmem:[%s2 + $0xe0] sm:$0xff]
      %v473 = vld [vmem:[%s2 + $0xe8] sm:$0xff]
      %v474 = vld [vmem:[%s2 + $0xf0] sm:$0xff]
      %v475 = vld [vmem:[%s2 + $0xf8] sm:$0xff]
      %v476 = vld [vmem:[%s2 + $0x100] sm:$0xff]
      %v477 = vld [vmem:[%s2 + $0x108] sm:$0xff]
      %v478 = vld [vmem:[%s2 + $0x110] sm:$0xff]
      %v479 = vld [vmem:[%s2 + $0x118] sm:$0xff]
      %v480 = vld [vmem:[%s2 + $0x120] sm:$0xff]
      %v481 = vld [vmem:[%s2 + $0x128] sm:$0xff]
      %v482 = vld [vmem:[%s2 + $0x130] sm:$0xff]
      %v483 = vld [vmem:[%s2 + $0x138] sm:$0xff]
      %v484 = vld [vmem:[%s2 + $0x140] sm:$0xff]
      %v485 = vld [vmem:[%s2 + $0x148] sm:$0xff]
      %v486 = vld [vmem:[%s2 + $0x150] sm:$0xff]
      %v487 = vld [vmem:[%s2 + $0x158] sm:$0xff]
      %v488 = vld [vmem:[%s2 + $0x160] sm:$0xff]
      %v489 = vld [vmem:[%s2 + $0x168] sm:$0xff]
      %v490 = vld [vmem:[%s2 + $0x170] sm:$0xff]
      %v491 = vld [vmem:[%s2 + $0x178] sm:$0xff]
      %v492 = vld [vmem:[%s2 + $0x180] sm:$0xff]
      %v493 = vld [vmem:[%s2 + $0x188] sm:$0xff]
      %v494 = vld [vmem:[%s2 + $0x190] sm:$0xff]
      %v495 = vld [vmem:[%s2 + $0x198] sm:$0xff]
      %v496 = vld [vmem:[%s2 + $0x1a0] sm:$0xff]
      %v497 = vld [vmem:[%s2 + $0x1a8] sm:$0xff]
      %v498 = vld [vmem:[%s2 + $0x1b0] sm:$0xff]
      %v499 = vld [vmem:[%s2 + $0x1b8] sm:$0xff]
      %v500 = vld [vmem:[%s2 + $0x1c0] sm:$0xff]
      %v501 = vld [vmem:[%s2 + $0x1c8] sm:$0xff]
      %v502 = vld [vmem:[%s2 + $0x1d0] sm:$0xff]
      %v503 = vld [vmem:[%s2 + $0x1d8] sm:$0xff]
      %v504 = vld [vmem:[%s2 + $0x1e0] sm:$0xff]
      %v505 = vld [vmem:[%s2 + $0x1e8] sm:$0xff]
      %v506 = vld [vmem:[%s2 + $0x1f0] sm:$0xff]
      %v507 = vld [vmem:[%s2 + $0x1f8] sm:$0xff]
      %s508 = scalar_lea.vmem %s2, 512
      %v509 = vld [vmem:[%s508] sm:$0xff]
      %v510 = vld [vmem:[%s508 + $0x8] sm:$0xff]
      %v511 = vld [vmem:[%s508 + $0x10] sm:$0xff]
      %v512 = vld [vmem:[%s508 + $0x18] sm:$0xff]
      %v513 = vld [vmem:[%s508 + $0x20] sm:$0xff]
      %v514 = vld [vmem:[%s508 + $0x28] sm:$0xff]
      %v515 = vld [vmem:[%s508 + $0x30] sm:$0xff]
      %v516 = vld [vmem:[%s508 + $0x38] sm:$0xff]
      %v517 = vld [vmem:[%s508 + $0x40] sm:$0xff]
      %v518 = vld [vmem:[%s508 + $0x48] sm:$0xff]
      %v519 = vld [vmem:[%s508 + $0x50] sm:$0xff]
      %v520 = vld [vmem:[%s508 + $0x58] sm:$0xff]
      %v521 = vld [vmem:[%s508 + $0x60] sm:$0xff]
      %v522 = vld [vmem:[%s508 + $0x68] sm:$0xff]
      %v523 = vld [vmem:[%s508 + $0x70] sm:$0xff]
      %v524 = vld [vmem:[%s508 + $0x78] sm:$0xff]
      %v525 = vld [vmem:[%s508 + $0x80] sm:$0xff]
      %v526 = vld [vmem:[%s508 + $0x88] sm:$0xff]
      %v527 = vld [vmem:[%s508 + $0x90] sm:$0xff]
      %v528 = vld [vmem:[%s508 + $0x98] sm:$0xff]
      %v529 = vld [vmem:[%s508 + $0xa0] sm:$0xff]
      %v530 = vld [vmem:[%s508 + $0xa8] sm:$0xff]
      %v531 = vld [vmem:[%s508 + $0xb0] sm:$0xff]
      %v532 = vld [vmem:[%s508 + $0xb8] sm:$0xff]
      %v533 = vld [vmem:[%s508 + $0xc0] sm:$0xff]
      %v534 = vld [vmem:[%s508 + $0xc8] sm:$0xff]
      %v535 = vld [vmem:[%s508 + $0xd0] sm:$0xff]
      %v536 = vld [vmem:[%s508 + $0xd8] sm:$0xff]
      %v537 = vld [vmem:[%s508 + $0xe0] sm:$0xff]
      %v538 = vld [vmem:[%s508 + $0xe8] sm:$0xff]
      %v539 = vld [vmem:[%s508 + $0xf0] sm:$0xff]
      %v540 = vld [vmem:[%s508 + $0xf8] sm:$0xff]
      %v541 = vld [vmem:[%s508 + $0x100] sm:$0xff]
      %v542 = vld [vmem:[%s508 + $0x108] sm:$0xff]
      %v543 = vld [vmem:[%s508 + $0x110] sm:$0xff]
      %v544 = vld [vmem:[%s508 + $0x118] sm:$0xff]
      %v545 = vld [vmem:[%s508 + $0x120] sm:$0xff]
      %v546 = vld [vmem:[%s508 + $0x128] sm:$0xff]
      %v547 = vld [vmem:[%s508 + $0x130] sm:$0xff]
      %v548 = vld [vmem:[%s508 + $0x138] sm:$0xff]
      %v549 = vld [vmem:[%s508 + $0x140] sm:$0xff]
      %v550 = vld [vmem:[%s508 + $0x148] sm:$0xff]
      %v551 = vld [vmem:[%s508 + $0x150] sm:$0xff]
      %v552 = vld [vmem:[%s508 + $0x158] sm:$0xff]
      %v553 = vld [vmem:[%s508 + $0x160] sm:$0xff]
      %v554 = vld [vmem:[%s508 + $0x168] sm:$0xff]
      %v555 = vld [vmem:[%s508 + $0x170] sm:$0xff]
      %v556 = vld [vmem:[%s508 + $0x178] sm:$0xff]
      %v557 = vld [vmem:[%s508 + $0x180] sm:$0xff]
      %v558 = vld [vmem:[%s508 + $0x188] sm:$0xff]
      %v559 = vld [vmem:[%s508 + $0x190] sm:$0xff]
      %v560 = vld [vmem:[%s508 + $0x198] sm:$0xff]
      %v561 = vld [vmem:[%s508 + $0x1a0] sm:$0xff]
      %v562 = vld [vmem:[%s508 + $0x1a8] sm:$0xff]
      %v563 = vld [vmem:[%s508 + $0x1b0] sm:$0xff]
      %v564 = vld [vmem:[%s508 + $0x1b8] sm:$0xff]
      %v565 = vld [vmem:[%s508 + $0x1c0] sm:$0xff]
      %v566 = vld [vmem:[%s508 + $0x1c8] sm:$0xff]
      %v567 = vld [vmem:[%s508 + $0x1d0] sm:$0xff]
      %v568 = vld [vmem:[%s508 + $0x1d8] sm:$0xff]
      %v569 = vld [vmem:[%s508 + $0x1e0] sm:$0xff]
      %v570 = vld [vmem:[%s508 + $0x1e8] sm:$0xff]
      %v571 = vld [vmem:[%s508 + $0x1f0] sm:$0xff]
      %v572 = vld [vmem:[%s508 + $0x1f8] sm:$0xff]
      %vm573 = vsmask.f32 7424
      %v575 = vshrl.u32 %v392, 16
      %v577 = vshll.u32 %v392, 16
      %v579 = vrot.slane %v577, 1
      %v580 = vor.u32 %v575, %v579
      %v582 = vshll.u32 %v396, 16
      %v584 = vrot.slane %v582, 1
      %v585 = vsel %vm573, %v580, %v584
      %v587 = vshrl.u32 %v393, 16
      %v589 = vshll.u32 %v393, 16
      %v591 = vrot.slane %v589, 1
      %v592 = vor.u32 %v587, %v591
      %v594 = vshll.u32 %v397, 16
      %v596 = vrot.slane %v594, 1
      %v597 = vsel %vm573, %v592, %v596
      %v599 = vshrl.u32 %v394, 16
      %v601 = vshll.u32 %v394, 16
      %v603 = vrot.slane %v601, 1
      %v604 = vor.u32 %v599, %v603
      %v606 = vshll.u32 %v398, 16
      %v608 = vrot.slane %v606, 1
      %v609 = vsel %vm573, %v604, %v608
      %v611 = vshrl.u32 %v395, 16
      %v613 = vshll.u32 %v395, 16
      %v615 = vrot.slane %v613, 1
      %v616 = vor.u32 %v611, %v615
      %v618 = vshll.u32 %v399, 16
      %v620 = vrot.slane %v618, 1
      %v621 = vsel %vm573, %v616, %v620
      %v622 = vshrl.u32 %v396, 16
      %v624 = vor.u32 %v622, %v584
      %v626 = vshll.u32 %v432, 16
      %v628 = vrot.slane %v626, 1
      %v629 = vsel %vm573, %v624, %v628
      %v630 = vshrl.u32 %v397, 16
      %v632 = vor.u32 %v630, %v596
      %v634 = vshll.u32 %v433, 16
      %v636 = vrot.slane %v634, 1
      %v637 = vsel %vm573, %v632, %v636
      %v638 = vshrl.u32 %v398, 16
      %v640 = vor.u32 %v638, %v608
      %v642 = vshll.u32 %v434, 16
      %v644 = vrot.slane %v642, 1
      %v645 = vsel %vm573, %v640, %v644
      %v646 = vshrl.u32 %v399, 16
      %v648 = vor.u32 %v646, %v620
      %v650 = vshll.u32 %v435, 16
      %v652 = vrot.slane %v650, 1
      %v653 = vsel %vm573, %v648, %v652
      %v726 = vunpack.c.l.b16 %v509
      %v727 = vunpack.c.h.b16 %v509
      %v728 = vunpack.c.l.b16 %v510
      %v729 = vunpack.c.h.b16 %v510
      %v730 = vunpack.c.l.b16 %v511
      %v731 = vunpack.c.h.b16 %v511
      %v732 = vunpack.c.l.b16 %v512
      %v733 = vunpack.c.h.b16 %v512
      %v734 = vunpack.c.l.b16 %v513
      %v735 = vunpack.c.h.b16 %v513
      %v736 = vunpack.c.l.b16 %v514
      %v737 = vunpack.c.h.b16 %v514
      %v738 = vunpack.c.l.b16 %v515
      %v739 = vunpack.c.h.b16 %v515
      %v740 = vunpack.c.l.b16 %v516
      %v741 = vunpack.c.h.b16 %v516
      %v742 = vunpack.c.l.b16 %v517
      %v743 = vunpack.c.h.b16 %v517
      %v744 = vunpack.c.l.b16 %v518
      %v745 = vunpack.c.h.b16 %v518
      %v746 = vunpack.c.l.b16 %v519
      %v747 = vunpack.c.h.b16 %v519
      %v748 = vunpack.c.l.b16 %v520
      %v749 = vunpack.c.h.b16 %v520
      %v750 = vunpack.c.l.b16 %v521
      %v751 = vunpack.c.h.b16 %v521
      %v752 = vunpack.c.l.b16 %v522
      %v753 = vunpack.c.h.b16 %v522
      %v754 = vunpack.c.l.b16 %v523
      %v755 = vunpack.c.h.b16 %v523
      %v756 = vunpack.c.l.b16 %v524
      %v757 = vunpack.c.h.b16 %v524
      %v758 = vunpack.c.l.b16 %v525
      %v759 = vunpack.c.h.b16 %v525
      %v760 = vunpack.c.l.b16 %v526
      %v761 = vunpack.c.h.b16 %v526
      %v762 = vunpack.c.l.b16 %v527
      %v763 = vunpack.c.h.b16 %v527
      %v764 = vunpack.c.l.b16 %v528
      %v765 = vunpack.c.h.b16 %v528
      %v766 = vunpack.c.l.b16 %v529
      %v767 = vunpack.c.h.b16 %v529
      %v768 = vunpack.c.l.b16 %v530
      %v769 = vunpack.c.h.b16 %v530
      %v770 = vunpack.c.l.b16 %v531
      %v771 = vunpack.c.h.b16 %v531
      %v772 = vunpack.c.l.b16 %v532
      %v773 = vunpack.c.h.b16 %v532
      %v774 = vunpack.c.l.b16 %v533
      %v775 = vunpack.c.h.b16 %v533
      %v776 = vunpack.c.l.b16 %v534
      %v777 = vunpack.c.h.b16 %v534
      %v778 = vunpack.c.l.b16 %v535
      %v779 = vunpack.c.h.b16 %v535
      %v780 = vunpack.c.l.b16 %v536
      %v781 = vunpack.c.h.b16 %v536
      %v782 = vunpack.c.l.b16 %v537
      %v783 = vunpack.c.h.b16 %v537
      %v784 = vunpack.c.l.b16 %v538
      %v785 = vunpack.c.h.b16 %v538
      %v786 = vunpack.c.l.b16 %v539
      %v787 = vunpack.c.h.b16 %v539
      %v788 = vunpack.c.l.b16 %v540
      %v789 = vunpack.c.h.b16 %v540
      %v790 = vunpack.c.l.b16 %v541
      %v791 = vunpack.c.h.b16 %v541
      %v792 = vunpack.c.l.b16 %v542
      %v793 = vunpack.c.h.b16 %v542
      %v794 = vunpack.c.l.b16 %v543
      %v795 = vunpack.c.h.b16 %v543
      %v796 = vunpack.c.l.b16 %v544
      %v797 = vunpack.c.h.b16 %v544
      %v798 = vunpack.c.l.b16 %v545
      %v799 = vunpack.c.h.b16 %v545
      %v800 = vunpack.c.l.b16 %v546
      %v801 = vunpack.c.h.b16 %v546
      %v802 = vunpack.c.l.b16 %v547
      %v803 = vunpack.c.h.b16 %v547
      %v804 = vunpack.c.l.b16 %v548
      %v805 = vunpack.c.h.b16 %v548
      %v806 = vunpack.c.l.b16 %v549
      %v807 = vunpack.c.h.b16 %v549
      %v808 = vunpack.c.l.b16 %v550
      %v809 = vunpack.c.h.b16 %v550
      %v810 = vunpack.c.l.b16 %v551
      %v811 = vunpack.c.h.b16 %v551
      %v812 = vunpack.c.l.b16 %v552
      %v813 = vunpack.c.h.b16 %v552
      %v814 = vunpack.c.l.b16 %v553
      %v815 = vunpack.c.h.b16 %v553
      %v816 = vunpack.c.l.b16 %v554
      %v817 = vunpack.c.h.b16 %v554
      %v818 = vunpack.c.l.b16 %v555
      %v819 = vunpack.c.h.b16 %v555
      %v820 = vunpack.c.l.b16 %v556
      %v821 = vunpack.c.h.b16 %v556
      %v822 = vunpack.c.l.b16 %v557
      %v823 = vunpack.c.h.b16 %v557
      %v824 = vunpack.c.l.b16 %v558
      %v825 = vunpack.c.h.b16 %v558
      %v826 = vunpack.c.l.b16 %v559
      %v827 = vunpack.c.h.b16 %v559
      %v828 = vunpack.c.l.b16 %v560
      %v829 = vunpack.c.h.b16 %v560
      %v830 = vunpack.c.l.b16 %v561
      %v831 = vunpack.c.h.b16 %v561
      %v832 = vunpack.c.l.b16 %v562
      %v833 = vunpack.c.h.b16 %v562
      %v834 = vunpack.c.l.b16 %v563
      %v835 = vunpack.c.h.b16 %v563
      %v836 = vunpack.c.l.b16 %v564
      %v837 = vunpack.c.h.b16 %v564
      %v838 = vunpack.c.l.b16 %v565
      %v839 = vunpack.c.h.b16 %v565
      %v840 = vunpack.c.l.b16 %v566
      %v841 = vunpack.c.h.b16 %v566
      %v842 = vunpack.c.l.b16 %v567
      %v843 = vunpack.c.h.b16 %v567
      %v844 = vunpack.c.l.b16 %v568
      %v845 = vunpack.c.h.b16 %v568
      %v846 = vunpack.c.l.b16 %v569
      %v847 = vunpack.c.h.b16 %v569
      %v848 = vunpack.c.l.b16 %v570
      %v849 = vunpack.c.h.b16 %v570
      %v850 = vunpack.c.l.b16 %v571
      %v851 = vunpack.c.h.b16 %v571
      %v852 = vunpack.c.l.b16 %v572
      %v853 = vunpack.c.h.b16 %v572
      %v854 = vpack.c.b16 %v728, %v726
      %v855 = vpack.c.b16 %v729, %v727
      %v856 = vpack.c.b16 %v732, %v730
      %v857 = vpack.c.b16 %v733, %v731
      %v858 = vpack.c.b16 %v736, %v734
      %v859 = vpack.c.b16 %v737, %v735
      %v860 = vpack.c.b16 %v740, %v738
      %v861 = vpack.c.b16 %v741, %v739
      %v862 = vpack.c.b16 %v744, %v742
      %v863 = vpack.c.b16 %v745, %v743
      %v864 = vpack.c.b16 %v748, %v746
      %v865 = vpack.c.b16 %v749, %v747
      %v866 = vpack.c.b16 %v752, %v750
      %v867 = vpack.c.b16 %v753, %v751
      %v868 = vpack.c.b16 %v756, %v754
      %v869 = vpack.c.b16 %v757, %v755
      %v870 = vpack.c.b16 %v760, %v758
      %v871 = vpack.c.b16 %v761, %v759
      %v872 = vpack.c.b16 %v764, %v762
      %v873 = vpack.c.b16 %v765, %v763
      %v874 = vpack.c.b16 %v768, %v766
      %v875 = vpack.c.b16 %v769, %v767
      %v876 = vpack.c.b16 %v772, %v770
      %v877 = vpack.c.b16 %v773, %v771
      %v878 = vpack.c.b16 %v776, %v774
      %v879 = vpack.c.b16 %v777, %v775
      %v880 = vpack.c.b16 %v780, %v778
      %v881 = vpack.c.b16 %v781, %v779
      %v882 = vpack.c.b16 %v784, %v782
      %v883 = vpack.c.b16 %v785, %v783
      %v884 = vpack.c.b16 %v788, %v786
      %v885 = vpack.c.b16 %v789, %v787
      %v886 = vpack.c.b16 %v792, %v790
      %v887 = vpack.c.b16 %v793, %v791
      %v888 = vpack.c.b16 %v796, %v794
      %v889 = vpack.c.b16 %v797, %v795
      %v890 = vpack.c.b16 %v800, %v798
      %v891 = vpack.c.b16 %v801, %v799
      %v892 = vpack.c.b16 %v804, %v802
      %v893 = vpack.c.b16 %v805, %v803
      %v894 = vpack.c.b16 %v808, %v806
      %v895 = vpack.c.b16 %v809, %v807
      %v896 = vpack.c.b16 %v812, %v810
      %v897 = vpack.c.b16 %v813, %v811
      %v898 = vpack.c.b16 %v816, %v814
      %v899 = vpack.c.b16 %v817, %v815
      %v900 = vpack.c.b16 %v820, %v818
      %v901 = vpack.c.b16 %v821, %v819
      %v902 = vpack.c.b16 %v824, %v822
      %v903 = vpack.c.b16 %v825, %v823
      %v904 = vpack.c.b16 %v828, %v826
      %v905 = vpack.c.b16 %v829, %v827
      %v906 = vpack.c.b16 %v832, %v830
      %v907 = vpack.c.b16 %v833, %v831
      %v908 = vpack.c.b16 %v836, %v834
      %v909 = vpack.c.b16 %v837, %v835
      %v910 = vpack.c.b16 %v840, %v838
      %v911 = vpack.c.b16 %v841, %v839
      %v912 = vpack.c.b16 %v844, %v842
      %v913 = vpack.c.b16 %v845, %v843
      %v914 = vpack.c.b16 %v848, %v846
      %v915 = vpack.c.b16 %v849, %v847
      %v916 = vpack.c.b16 %v852, %v850
      %v917 = vpack.c.b16 %v853, %v851
      %982 = vmatprep.subr.bf16.mxu0 %v855
      %983 = vmatpush1.bf16.msra.mxu0 %v854
      %984 = vmatprep.subr.bf16.mxu0 %v857
      %985 = vmatpush1.bf16.msra.mxu0 %v856
      %986 = vmatprep.subr.bf16.mxu0 %v859
      %987 = vmatpush1.bf16.msra.mxu0 %v858
      %988 = vmatprep.subr.bf16.mxu0 %v861
      %989 = vmatpush1.bf16.msra.mxu0 %v860
      %990 = vmatprep.subr.bf16.mxu0 %v863
      %991 = vmatpush1.bf16.msra.mxu0 %v862
      %992 = vmatprep.subr.bf16.mxu0 %v865
      %993 = vmatpush1.bf16.msra.mxu0 %v864
      %994 = vmatprep.subr.bf16.mxu0 %v867
      %995 = vmatpush1.bf16.msra.mxu0 %v866
      %996 = vmatprep.subr.bf16.mxu0 %v869
      %997 = vmatpush1.bf16.msra.mxu0 %v868
      %998 = vmatprep.subr.bf16.mxu0 %v871
      %999 = vmatpush1.bf16.msra.mxu0 %v870
      %1000 = vmatprep.subr.bf16.mxu0 %v873
      %1001 = vmatpush1.bf16.msra.mxu0 %v872
      %1002 = vmatprep.subr.bf16.mxu0 %v875
      %1003 = vmatpush1.bf16.msra.mxu0 %v874
      %1004 = vmatprep.subr.bf16.mxu0 %v877
      %1005 = vmatpush1.bf16.msra.mxu0 %v876
      %1006 = vmatprep.subr.bf16.mxu0 %v879
      %1007 = vmatpush1.bf16.msra.mxu0 %v878
      %1008 = vmatprep.subr.bf16.mxu0 %v881
      %1009 = vmatpush1.bf16.msra.mxu0 %v880
      %1010 = vmatprep.subr.bf16.mxu0 %v883
      %1011 = vmatpush1.bf16.msra.mxu0 %v882
      %1012 = vmatprep.subr.bf16.mxu0 %v885
      %1013 = vmatpush1.bf16.msra.mxu0 %v884
      %1014 = vmatprep.mubr.bf16.mxu0 %v597
      %1015 = vmatmul.mubr.bf16.gmra.mrb[0].mxu0 %v585
      %v1016 = vpop.f32.mrb[0].mxu0
      %v1017 = vadd.f32 0.0, %v1016
      %v1018 = vpop.f32.mrb[0].mxu0
      %v1019 = vadd.f32 0.0, %v1018
      %v1020 = vpop.f32.mrb[0].mxu0
      %v1021 = vadd.f32 0.0, %v1020
      %v1022 = vpop.f32.mrb[0].mxu0
      %v1023 = vadd.f32 0.0, %v1022
      %1024 = vmatprep.mubr.bf16.mxu0 %v637
      %1025 = vmatmul.mubr.bf16.gmra.mrb[0].mxu0 %v629
      %v1026 = vpop.f32.mrb[0].mxu0
      %v1027 = vadd.f32 0.0, %v1026
      %v1028 = vpop.f32.mrb[0].mxu0
      %v1029 = vadd.f32 0.0, %v1028
      %v1030 = vpop.f32.mrb[0].mxu0
      %v1031 = vadd.f32 0.0, %v1030
      %v1032 = vpop.f32.mrb[0].mxu0
      %v1033 = vadd.f32 0.0, %v1032
      %1034 = vdwg.mxu0
      %1035 = vmatprep.subr.bf16.mxu0 %v887
      %1036 = vmatpush1.bf16.msra.mxu0 %v886
      %1037 = vmatprep.subr.bf16.mxu0 %v889
      %1038 = vmatpush1.bf16.msra.mxu0 %v888
      %1039 = vmatprep.subr.bf16.mxu0 %v891
      %1040 = vmatpush1.bf16.msra.mxu0 %v890
      %1041 = vmatprep.subr.bf16.mxu0 %v893
      %1042 = vmatpush1.bf16.msra.mxu0 %v892
      %1043 = vmatprep.subr.bf16.mxu0 %v895
      %1044 = vmatpush1.bf16.msra.mxu0 %v894
      %1045 = vmatprep.subr.bf16.mxu0 %v897
      %1046 = vmatpush1.bf16.msra.mxu0 %v896
      %1047 = vmatprep.subr.bf16.mxu0 %v899
      %1048 = vmatpush1.bf16.msra.mxu0 %v898
      %1049 = vmatprep.subr.bf16.mxu0 %v901
      %1050 = vmatpush1.bf16.msra.mxu0 %v900
      %1051 = vmatprep.subr.bf16.mxu0 %v903
      %1052 = vmatpush1.bf16.msra.mxu0 %v902
      %1053 = vmatprep.subr.bf16.mxu0 %v905
      %1054 = vmatpush1.bf16.msra.mxu0 %v904
      %1055 = vmatprep.subr.bf16.mxu0 %v907
      %1056 = vmatpush1.bf16.msra.mxu0 %v906
      %1057 = vmatprep.subr.bf16.mxu0 %v909
      %1058 = vmatpush1.bf16.msra.mxu0 %v908
      %1059 = vmatprep.subr.bf16.mxu0 %v911
      %1060 = vmatpush1.bf16.msra.mxu0 %v910
      %1061 = vmatprep.subr.bf16.mxu0 %v913
      %1062 = vmatpush1.bf16.msra.mxu0 %v912
      %1063 = vmatprep.subr.bf16.mxu0 %v915
      %1064 = vmatpush1.bf16.msra.mxu0 %v914
      %1065 = vmatprep.subr.bf16.mxu0 %v917
      %1066 = vmatpush1.bf16.msra.mxu0 %v916
      %1067 = vmatprep.mubr.bf16.mxu0 %v621
      %1068 = vmatmul.mubr.bf16.gmra.mrb[0].mxu0 %v609
      %v1069 = vpop.f32.mrb[0].mxu0
      %v1070 = vadd.f32 %v1017, %v1069
      %v1071 = vpop.f32.mrb[0].mxu0
      %v1072 = vadd.f32 %v1019, %v1071
      %v1073 = vpop.f32.mrb[0].mxu0
      %v1074 = vadd.f32 %v1021, %v1073
      %v1075 = vpop.f32.mrb[0].mxu0
      %v1076 = vadd.f32 %v1023, %v1075
      %1077 = vmatprep.mubr.bf16.mxu0 %v653
      %1078 = vmatmul.mubr.bf16.gmra.mrb[0].mxu0 %v645
      %v1079 = vpop.f32.mrb[0].mxu0
      %v1080 = vadd.f32 %v1027, %v1079
      %v1081 = vpop.f32.mrb[0].mxu0
      %v1082 = vadd.f32 %v1029, %v1081
      %v1083 = vpop.f32.mrb[0].mxu0
      %v1084 = vadd.f32 %v1031, %v1083
      %v1085 = vpop.f32.mrb[0].mxu0
      %v1086 = vadd.f32 %v1033, %v1085
      %1087 = vdwg.mxu0
      %v1152 = vunpack.c.l.b16 %v444
      %v1153 = vunpack.c.h.b16 %v444
      %v1154 = vunpack.c.l.b16 %v445
      %v1155 = vunpack.c.h.b16 %v445
      %v1156 = vunpack.c.l.b16 %v446
      %v1157 = vunpack.c.h.b16 %v446
      %v1158 = vunpack.c.l.b16 %v447
      %v1159 = vunpack.c.h.b16 %v447
      %v1160 = vunpack.c.l.b16 %v448
      %v1161 = vunpack.c.h.b16 %v448
      %v1162 = vunpack.c.l.b16 %v449
      %v1163 = vunpack.c.h.b16 %v449
      %v1164 = vunpack.c.l.b16 %v450
      %v1165 = vunpack.c.h.b16 %v450
      %v1166 = vunpack.c.l.b16 %v451
      %v1167 = vunpack.c.h.b16 %v451
      %v1168 = vunpack.c.l.b16 %v452
      %v1169 = vunpack.c.h.b16 %v452
      %v1170 = vunpack.c.l.b16 %v453
      %v1171 = vunpack.c.h.b16 %v453
      %v1172 = vunpack.c.l.b16 %v454
      %v1173 = vunpack.c.h.b16 %v454
      %v1174 = vunpack.c.l.b16 %v455
      %v1175 = vunpack.c.h.b16 %v455
      %v1176 = vunpack.c.l.b16 %v456
      %v1177 = vunpack.c.h.b16 %v456
      %v1178 = vunpack.c.l.b16 %v457
      %v1179 = vunpack.c.h.b16 %v457
      %v1180 = vunpack.c.l.b16 %v458
      %v1181 = vunpack.c.h.b16 %v458
      %v1182 = vunpack.c.l.b16 %v459
      %v1183 = vunpack.c.h.b16 %v459
      %v1184 = vunpack.c.l.b16 %v460
      %v1185 = vunpack.c.h.b16 %v460
      %v1186 = vunpack.c.l.b16 %v461
      %v1187 = vunpack.c.h.b16 %v461
      %v1188 = vunpack.c.l.b16 %v462
      %v1189 = vunpack.c.h.b16 %v462
      %v1190 = vunpack.c.l.b16 %v463
      %v1191 = vunpack.c.h.b16 %v463
      %v1192 = vunpack.c.l.b16 %v464
      %v1193 = vunpack.c.h.b16 %v464
      %v1194 = vunpack.c.l.b16 %v465
      %v1195 = vunpack.c.h.b16 %v465
      %v1196 = vunpack.c.l.b16 %v466
      %v1197 = vunpack.c.h.b16 %v466
      %v1198 = vunpack.c.l.b16 %v467
      %v1199 = vunpack.c.h.b16 %v467
      %v1200 = vunpack.c.l.b16 %v468
      %v1201 = vunpack.c.h.b16 %v468
      %v1202 = vunpack.c.l.b16 %v469
      %v1203 = vunpack.c.h.b16 %v469
      %v1204 = vunpack.c.l.b16 %v470
      %v1205 = vunpack.c.h.b16 %v470
      %v1206 = vunpack.c.l.b16 %v471
      %v1207 = vunpack.c.h.b16 %v471
      %v1208 = vunpack.c.l.b16 %v472
      %v1209 = vunpack.c.h.b16 %v472
      %v1210 = vunpack.c.l.b16 %v473
      %v1211 = vunpack.c.h.b16 %v473
      %v1212 = vunpack.c.l.b16 %v474
      %v1213 = vunpack.c.h.b16 %v474
      %v1214 = vunpack.c.l.b16 %v475
      %v1215 = vunpack.c.h.b16 %v475
      %v1216 = vunpack.c.l.b16 %v476
      %v1217 = vunpack.c.h.b16 %v476
      %v1218 = vunpack.c.l.b16 %v477
      %v1219 = vunpack.c.h.b16 %v477
      %v1220 = vunpack.c.l.b16 %v478
      %v1221 = vunpack.c.h.b16 %v478
      %v1222 = vunpack.c.l.b16 %v479
      %v1223 = vunpack.c.h.b16 %v479
      %v1224 = vunpack.c.l.b16 %v480
      %v1225 = vunpack.c.h.b16 %v480
      %v1226 = vunpack.c.l.b16 %v481
      %v1227 = vunpack.c.h.b16 %v481
      %v1228 = vunpack.c.l.b16 %v482
      %v1229 = vunpack.c.h.b16 %v482
      %v1230 = vunpack.c.l.b16 %v483
      %v1231 = vunpack.c.h.b16 %v483
      %v1232 = vunpack.c.l.b16 %v484
      %v1233 = vunpack.c.h.b16 %v484
      %v1234 = vunpack.c.l.b16 %v485
      %v1235 = vunpack.c.h.b16 %v485
      %v1236 = vunpack.c.l.b16 %v486
      %v1237 = vunpack.c.h.b16 %v486
      %v1238 = vunpack.c.l.b16 %v487
      %v1239 = vunpack.c.h.b16 %v487
      %v1240 = vunpack.c.l.b16 %v488
      %v1241 = vunpack.c.h.b16 %v488
      %v1242 = vunpack.c.l.b16 %v489
      %v1243 = vunpack.c.h.b16 %v489
      %v1244 = vunpack.c.l.b16 %v490
      %v1245 = vunpack.c.h.b16 %v490
      %v1246 = vunpack.c.l.b16 %v491
      %v1247 = vunpack.c.h.b16 %v491
      %v1248 = vunpack.c.l.b16 %v492
      %v1249 = vunpack.c.h.b16 %v492
      %v1250 = vunpack.c.l.b16 %v493
      %v1251 = vunpack.c.h.b16 %v493
      %v1252 = vunpack.c.l.b16 %v494
      %v1253 = vunpack.c.h.b16 %v494
      %v1254 = vunpack.c.l.b16 %v495
      %v1255 = vunpack.c.h.b16 %v495
      %v1256 = vunpack.c.l.b16 %v496
      %v1257 = vunpack.c.h.b16 %v496
      %v1258 = vunpack.c.l.b16 %v497
      %v1259 = vunpack.c.h.b16 %v497
      %v1260 = vunpack.c.l.b16 %v498
      %v1261 = vunpack.c.h.b16 %v498
      %v1262 = vunpack.c.l.b16 %v499
      %v1263 = vunpack.c.h.b16 %v499
      %v1264 = vunpack.c.l.b16 %v500
      %v1265 = vunpack.c.h.b16 %v500
      %v1266 = vunpack.c.l.b16 %v501
      %v1267 = vunpack.c.h.b16 %v501
      %v1268 = vunpack.c.l.b16 %v502
      %v1269 = vunpack.c.h.b16 %v502
      %v1270 = vunpack.c.l.b16 %v503
      %v1271 = vunpack.c.h.b16 %v503
      %v1272 = vunpack.c.l.b16 %v504
      %v1273 = vunpack.c.h.b16 %v504
      %v1274 = vunpack.c.l.b16 %v505
      %v1275 = vunpack.c.h.b16 %v505
      %v1276 = vunpack.c.l.b16 %v506
      %v1277 = vunpack.c.h.b16 %v506
      %v1278 = vunpack.c.l.b16 %v507
      %v1279 = vunpack.c.h.b16 %v507
      %v1280 = vpack.c.b16 %v1154, %v1152
      %v1281 = vpack.c.b16 %v1155, %v1153
      %v1282 = vpack.c.b16 %v1158, %v1156
      %v1283 = vpack.c.b16 %v1159, %v1157
      %v1284 = vpack.c.b16 %v1162, %v1160
      %v1285 = vpack.c.b16 %v1163, %v1161
      %v1286 = vpack.c.b16 %v1166, %v1164
      %v1287 = vpack.c.b16 %v1167, %v1165
      %v1288 = vpack.c.b16 %v1170, %v1168
      %v1289 = vpack.c.b16 %v1171, %v1169
      %v1290 = vpack.c.b16 %v1174, %v1172
      %v1291 = vpack.c.b16 %v1175, %v1173
      %v1292 = vpack.c.b16 %v1178, %v1176
      %v1293 = vpack.c.b16 %v1179, %v1177
      %v1294 = vpack.c.b16 %v1182, %v1180
      %v1295 = vpack.c.b16 %v1183, %v1181
      %v1296 = vpack.c.b16 %v1186, %v1184
      %v1297 = vpack.c.b16 %v1187, %v1185
      %v1298 = vpack.c.b16 %v1190, %v1188
      %v1299 = vpack.c.b16 %v1191, %v1189
      %v1300 = vpack.c.b16 %v1194, %v1192
      %v1301 = vpack.c.b16 %v1195, %v1193
      %v1302 = vpack.c.b16 %v1198, %v1196
      %v1303 = vpack.c.b16 %v1199, %v1197
      %v1304 = vpack.c.b16 %v1202, %v1200
      %v1305 = vpack.c.b16 %v1203, %v1201
      %v1306 = vpack.c.b16 %v1206, %v1204
      %v1307 = vpack.c.b16 %v1207, %v1205
      %v1308 = vpack.c.b16 %v1210, %v1208
      %v1309 = vpack.c.b16 %v1211, %v1209
      %v1310 = vpack.c.b16 %v1214, %v1212
      %v1311 = vpack.c.b16 %v1215, %v1213
      %v1312 = vpack.c.b16 %v1218, %v1216
      %v1313 = vpack.c.b16 %v1219, %v1217
      %v1314 = vpack.c.b16 %v1222, %v1220
      %v1315 = vpack.c.b16 %v1223, %v1221
      %v1316 = vpack.c.b16 %v1226, %v1224
      %v1317 = vpack.c.b16 %v1227, %v1225
      %v1318 = vpack.c.b16 %v1230, %v1228
      %v1319 = vpack.c.b16 %v1231, %v1229
      %v1320 = vpack.c.b16 %v1234, %v1232
      %v1321 = vpack.c.b16 %v1235, %v1233
      %v1322 = vpack.c.b16 %v1238, %v1236
      %v1323 = vpack.c.b16 %v1239, %v1237
      %v1324 = vpack.c.b16 %v1242, %v1240
      %v1325 = vpack.c.b16 %v1243, %v1241
      %v1326 = vpack.c.b16 %v1246, %v1244
      %v1327 = vpack.c.b16 %v1247, %v1245
      %v1328 = vpack.c.b16 %v1250, %v1248
      %v1329 = vpack.c.b16 %v1251, %v1249
      %v1330 = vpack.c.b16 %v1254, %v1252
      %v1331 = vpack.c.b16 %v1255, %v1253
      %v1332 = vpack.c.b16 %v1258, %v1256
      %v1333 = vpack.c.b16 %v1259, %v1257
      %v1334 = vpack.c.b16 %v1262, %v1260
      %v1335 = vpack.c.b16 %v1263, %v1261
      %v1336 = vpack.c.b16 %v1266, %v1264
      %v1337 = vpack.c.b16 %v1267, %v1265
      %v1338 = vpack.c.b16 %v1270, %v1268
      %v1339 = vpack.c.b16 %v1271, %v1269
      %v1340 = vpack.c.b16 %v1274, %v1272
      %v1341 = vpack.c.b16 %v1275, %v1273
      %v1342 = vpack.c.b16 %v1278, %v1276
      %v1343 = vpack.c.b16 %v1279, %v1277
      %1408 = vmatprep.subr.bf16.mxu0 %v1281
      %1409 = vmatpush1.bf16.msra.mxu0 %v1280
      %1410 = vmatprep.subr.bf16.mxu0 %v1283
      %1411 = vmatpush1.bf16.msra.mxu0 %v1282
      %1412 = vmatprep.subr.bf16.mxu0 %v1285
      %1413 = vmatpush1.bf16.msra.mxu0 %v1284
      %1414 = vmatprep.subr.bf16.mxu0 %v1287
      %1415 = vmatpush1.bf16.msra.mxu0 %v1286
      %1416 = vmatprep.subr.bf16.mxu0 %v1289
      %1417 = vmatpush1.bf16.msra.mxu0 %v1288
      %1418 = vmatprep.subr.bf16.mxu0 %v1291
      %1419 = vmatpush1.bf16.msra.mxu0 %v1290
      %1420 = vmatprep.subr.bf16.mxu0 %v1293
      %1421 = vmatpush1.bf16.msra.mxu0 %v1292
      %1422 = vmatprep.subr.bf16.mxu0 %v1295
      %1423 = vmatpush1.bf16.msra.mxu0 %v1294
      %1424 = vmatprep.subr.bf16.mxu0 %v1297
      %1425 = vmatpush1.bf16.msra.mxu0 %v1296
      %1426 = vmatprep.subr.bf16.mxu0 %v1299
      %1427 = vmatpush1.bf16.msra.mxu0 %v1298
      %1428 = vmatprep.subr.bf16.mxu0 %v1301
      %1429 = vmatpush1.bf16.msra.mxu0 %v1300
      %1430 = vmatprep.subr.bf16.mxu0 %v1303
      %1431 = vmatpush1.bf16.msra.mxu0 %v1302
      %1432 = vmatprep.subr.bf16.mxu0 %v1305
      %1433 = vmatpush1.bf16.msra.mxu0 %v1304
      %1434 = vmatprep.subr.bf16.mxu0 %v1307
      %1435 = vmatpush1.bf16.msra.mxu0 %v1306
      %1436 = vmatprep.subr.bf16.mxu0 %v1309
      %1437 = vmatpush1.bf16.msra.mxu0 %v1308
      %1438 = vmatprep.subr.bf16.mxu0 %v1311
      %1439 = vmatpush1.bf16.msra.mxu0 %v1310
      %1440 = vmatprep.mubr.bf16.mxu0 %v393
      %1441 = vmatmul.mubr.bf16.gmra.mrb[0].mxu0 %v392
      %v1442 = vpop.f32.mrb[0].mxu0
      %v1443 = vadd.f32 %v1070, %v1442
      %v1444 = vpop.f32.mrb[0].mxu0
      %v1445 = vadd.f32 %v1072, %v1444
      %v1446 = vpop.f32.mrb[0].mxu0
      %v1447 = vadd.f32 %v1074, %v1446
      %v1448 = vpop.f32.mrb[0].mxu0
      %v1449 = vadd.f32 %v1076, %v1448
      %1450 = vmatprep.mubr.bf16.mxu0 %v397
      %1451 = vmatmul.mubr.bf16.gmra.mrb[0].mxu0 %v396
      %v1452 = vpop.f32.mrb[0].mxu0
      %v1453 = vadd.f32 %v1080, %v1452
      %v1454 = vpop.f32.mrb[0].mxu0
      %v1455 = vadd.f32 %v1082, %v1454
      %v1456 = vpop.f32.mrb[0].mxu0
      %v1457 = vadd.f32 %v1084, %v1456
      %v1458 = vpop.f32.mrb[0].mxu0
      %v1459 = vadd.f32 %v1086, %v1458
      %1460 = vdwg.mxu0
      %1461 = vmatprep.subr.bf16.mxu0 %v1313
      %1462 = vmatpush1.bf16.msra.mxu0 %v1312
      %1463 = vmatprep.subr.bf16.mxu0 %v1315
      %1464 = vmatpush1.bf16.msra.mxu0 %v1314
      %1465 = vmatprep.subr.bf16.mxu0 %v1317
      %1466 = vmatpush1.bf16.msra.mxu0 %v1316
      %1467 = vmatprep.subr.bf16.mxu0 %v1319
      %1468 = vmatpush1.bf16.msra.mxu0 %v1318
      %1469 = vmatprep.subr.bf16.mxu0 %v1321
      %1470 = vmatpush1.bf16.msra.mxu0 %v1320
      %1471 = vmatprep.subr.bf16.mxu0 %v1323
      %1472 = vmatpush1.bf16.msra.mxu0 %v1322
      %1473 = vmatprep.subr.bf16.mxu0 %v1325
      %1474 = vmatpush1.bf16.msra.mxu0 %v1324
      %1475 = vmatprep.subr.bf16.mxu0 %v1327
      %1476 = vmatpush1.bf16.msra.mxu0 %v1326
      %1477 = vmatprep.subr.bf16.mxu0 %v1329
      %1478 = vmatpush1.bf16.msra.mxu0 %v1328
      %1479 = vmatprep.subr.bf16.mxu0 %v1331
      %1480 = vmatpush1.bf16.msra.mxu0 %v1330
      %1481 = vmatprep.subr.bf16.mxu0 %v1333
      %1482 = vmatpush1.bf16.msra.mxu0 %v1332
      %1483 = vmatprep.subr.bf16.mxu0 %v1335
      %1484 = vmatpush1.bf16.msra.mxu0 %v1334
      %1485 = vmatprep.subr.bf16.mxu0 %v1337
      %1486 = vmatpush1.bf16.msra.mxu0 %v1336
      %1487 = vmatprep.subr.bf16.mxu0 %v1339
      %1488 = vmatpush1.bf16.msra.mxu0 %v1338
      %1489 = vmatprep.subr.bf16.mxu0 %v1341
      %1490 = vmatpush1.bf16.msra.mxu0 %v1340
      %1491 = vmatprep.subr.bf16.mxu0 %v1343
      %1492 = vmatpush1.bf16.msra.mxu0 %v1342
      %1493 = vmatprep.mubr.bf16.mxu0 %v395
      %1494 = vmatmul.mubr.bf16.gmra.mrb[0].mxu0 %v394
      %v1495 = vpop.f32.mrb[0].mxu0
      %v1496 = vadd.f32 %v1443, %v1495
      %v1497 = vpop.f32.mrb[0].mxu0
      %v1498 = vadd.f32 %v1445, %v1497
      %v1499 = vpop.f32.mrb[0].mxu0
      %v1500 = vadd.f32 %v1447, %v1499
      %v1501 = vpop.f32.mrb[0].mxu0
      %v1502 = vadd.f32 %v1449, %v1501
      %1503 = vmatprep.mubr.bf16.mxu0 %v399
      %1504 = vmatmul.mubr.bf16.gmra.mrb[0].mxu0 %v398
      %v1505 = vpop.f32.mrb[0].mxu0
      %v1506 = vadd.f32 %v1453, %v1505
      %v1507 = vpop.f32.mrb[0].mxu0
      %v1508 = vadd.f32 %v1455, %v1507
      %v1509 = vpop.f32.mrb[0].mxu0
      %v1510 = vadd.f32 %v1457, %v1509
      %v1511 = vpop.f32.mrb[0].mxu0
      %v1512 = vadd.f32 %v1459, %v1511
      %1513 = vdwg.mxu0
      %s1514 = scalar_lea.vmem %s2, 1024
      %v1515 = vld [vmem:[%s1514] sm:$0xff]
      %v1516 = vld [vmem:[%s1514 + $0x8] sm:$0xff]
      %v1517 = vld [vmem:[%s1514 + $0x10] sm:$0xff]
      %v1518 = vld [vmem:[%s1514 + $0x18] sm:$0xff]
      %v1519 = vld [vmem:[%s1514 + $0x20] sm:$0xff]
      %v1520 = vld [vmem:[%s1514 + $0x28] sm:$0xff]
      %v1521 = vld [vmem:[%s1514 + $0x30] sm:$0xff]
      %v1522 = vld [vmem:[%s1514 + $0x38] sm:$0xff]
      %v1523 = vld [vmem:[%s1514 + $0x40] sm:$0xff]
      %v1524 = vld [vmem:[%s1514 + $0x48] sm:$0xff]
      %v1525 = vld [vmem:[%s1514 + $0x50] sm:$0xff]
      %v1526 = vld [vmem:[%s1514 + $0x58] sm:$0xff]
      %v1527 = vld [vmem:[%s1514 + $0x60] sm:$0xff]
      %v1528 = vld [vmem:[%s1514 + $0x68] sm:$0xff]
      %v1529 = vld [vmem:[%s1514 + $0x70] sm:$0xff]
      %v1530 = vld [vmem:[%s1514 + $0x78] sm:$0xff]
      %v1531 = vld [vmem:[%s1514 + $0x80] sm:$0xff]
      %v1532 = vld [vmem:[%s1514 + $0x88] sm:$0xff]
      %v1533 = vld [vmem:[%s1514 + $0x90] sm:$0xff]
      %v1534 = vld [vmem:[%s1514 + $0x98] sm:$0xff]
      %v1535 = vld [vmem:[%s1514 + $0xa0] sm:$0xff]
      %v1536 = vld [vmem:[%s1514 + $0xa8] sm:$0xff]
      %v1537 = vld [vmem:[%s1514 + $0xb0] sm:$0xff]
      %v1538 = vld [vmem:[%s1514 + $0xb8] sm:$0xff]
      %v1539 = vld [vmem:[%s1514 + $0xc0] sm:$0xff]
      %v1540 = vld [vmem:[%s1514 + $0xc8] sm:$0xff]
      %v1541 = vld [vmem:[%s1514 + $0xd0] sm:$0xff]
      %v1542 = vld [vmem:[%s1514 + $0xd8] sm:$0xff]
      %v1543 = vld [vmem:[%s1514 + $0xe0] sm:$0xff]
      %v1544 = vld [vmem:[%s1514 + $0xe8] sm:$0xff]
      %v1545 = vld [vmem:[%s1514 + $0xf0] sm:$0xff]
      %v1546 = vld [vmem:[%s1514 + $0xf8] sm:$0xff]
      %v1547 = vld [vmem:[%s1514 + $0x100] sm:$0xff]
      %v1548 = vld [vmem:[%s1514 + $0x108] sm:$0xff]
      %v1549 = vld [vmem:[%s1514 + $0x110] sm:$0xff]
      %v1550 = vld [vmem:[%s1514 + $0x118] sm:$0xff]
      %v1551 = vld [vmem:[%s1514 + $0x120] sm:$0xff]
      %v1552 = vld [vmem:[%s1514 + $0x128] sm:$0xff]
      %v1553 = vld [vmem:[%s1514 + $0x130] sm:$0xff]
      %v1554 = vld [vmem:[%s1514 + $0x138] sm:$0xff]
      %v1555 = vld [vmem:[%s1514 + $0x140] sm:$0xff]
      %v1556 = vld [vmem:[%s1514 + $0x148] sm:$0xff]
      %v1557 = vld [vmem:[%s1514 + $0x150] sm:$0xff]
      %v1558 = vld [vmem:[%s1514 + $0x158] sm:$0xff]
      %v1559 = vld [vmem:[%s1514 + $0x160] sm:$0xff]
      %v1560 = vld [vmem:[%s1514 + $0x168] sm:$0xff]
      %v1561 = vld [vmem:[%s1514 + $0x170] sm:$0xff]
      %v1562 = vld [vmem:[%s1514 + $0x178] sm:$0xff]
      %v1563 = vld [vmem:[%s1514 + $0x180] sm:$0xff]
      %v1564 = vld [vmem:[%s1514 + $0x188] sm:$0xff]
      %v1565 = vld [vmem:[%s1514 + $0x190] sm:$0xff]
      %v1566 = vld [vmem:[%s1514 + $0x198] sm:$0xff]
      %v1567 = vld [vmem:[%s1514 + $0x1a0] sm:$0xff]
      %v1568 = vld [vmem:[%s1514 + $0x1a8] sm:$0xff]
      %v1569 = vld [vmem:[%s1514 + $0x1b0] sm:$0xff]
      %v1570 = vld [vmem:[%s1514 + $0x1b8] sm:$0xff]
      %v1571 = vld [vmem:[%s1514 + $0x1c0] sm:$0xff]
      %v1572 = vld [vmem:[%s1514 + $0x1c8] sm:$0xff]
      %v1573 = vld [vmem:[%s1514 + $0x1d0] sm:$0xff]
      %v1574 = vld [vmem:[%s1514 + $0x1d8] sm:$0xff]
      %v1575 = vld [vmem:[%s1514 + $0x1e0] sm:$0xff]
      %v1576 = vld [vmem:[%s1514 + $0x1e8] sm:$0xff]
      %v1577 = vld [vmem:[%s1514 + $0x1f0] sm:$0xff]
      %v1578 = vld [vmem:[%s1514 + $0x1f8] sm:$0xff]
      %v1643 = vunpack.c.l.b16 %v1515
      %v1644 = vunpack.c.h.b16 %v1515
      %v1645 = vunpack.c.l.b16 %v1516
      %v1646 = vunpack.c.h.b16 %v1516
      %v1647 = vunpack.c.l.b16 %v1517
      %v1648 = vunpack.c.h.b16 %v1517
      %v1649 = vunpack.c.l.b16 %v1518
      %v1650 = vunpack.c.h.b16 %v1518
      %v1651 = vunpack.c.l.b16 %v1519
      %v1652 = vunpack.c.h.b16 %v1519
      %v1653 = vunpack.c.l.b16 %v1520
      %v1654 = vunpack.c.h.b16 %v1520
      %v1655 = vunpack.c.l.b16 %v1521
      %v1656 = vunpack.c.h.b16 %v1521
      %v1657 = vunpack.c.l.b16 %v1522
      %v1658 = vunpack.c.h.b16 %v1522
      %v1659 = vunpack.c.l.b16 %v1523
      %v1660 = vunpack.c.h.b16 %v1523
      %v1661 = vunpack.c.l.b16 %v1524
      %v1662 = vunpack.c.h.b16 %v1524
      %v1663 = vunpack.c.l.b16 %v1525
      %v1664 = vunpack.c.h.b16 %v1525
      %v1665 = vunpack.c.l.b16 %v1526
      %v1666 = vunpack.c.h.b16 %v1526
      %v1667 = vunpack.c.l.b16 %v1527
      %v1668 = vunpack.c.h.b16 %v1527
      %v1669 = vunpack.c.l.b16 %v1528
      %v1670 = vunpack.c.h.b16 %v1528
      %v1671 = vunpack.c.l.b16 %v1529
      %v1672 = vunpack.c.h.b16 %v1529
      %v1673 = vunpack.c.l.b16 %v1530
      %v1674 = vunpack.c.h.b16 %v1530
      %v1675 = vunpack.c.l.b16 %v1531
      %v1676 = vunpack.c.h.b16 %v1531
      %v1677 = vunpack.c.l.b16 %v1532
      %v1678 = vunpack.c.h.b16 %v1532
      %v1679 = vunpack.c.l.b16 %v1533
      %v1680 = vunpack.c.h.b16 %v1533
      %v1681 = vunpack.c.l.b16 %v1534
      %v1682 = vunpack.c.h.b16 %v1534
      %v1683 = vunpack.c.l.b16 %v1535
      %v1684 = vunpack.c.h.b16 %v1535
      %v1685 = vunpack.c.l.b16 %v1536
      %v1686 = vunpack.c.h.b16 %v1536
      %v1687 = vunpack.c.l.b16 %v1537
      %v1688 = vunpack.c.h.b16 %v1537
      %v1689 = vunpack.c.l.b16 %v1538
      %v1690 = vunpack.c.h.b16 %v1538
      %v1691 = vunpack.c.l.b16 %v1539
      %v1692 = vunpack.c.h.b16 %v1539
      %v1693 = vunpack.c.l.b16 %v1540
      %v1694 = vunpack.c.h.b16 %v1540
      %v1695 = vunpack.c.l.b16 %v1541
      %v1696 = vunpack.c.h.b16 %v1541
      %v1697 = vunpack.c.l.b16 %v1542
      %v1698 = vunpack.c.h.b16 %v1542
      %v1699 = vunpack.c.l.b16 %v1543
      %v1700 = vunpack.c.h.b16 %v1543
      %v1701 = vunpack.c.l.b16 %v1544
      %v1702 = vunpack.c.h.b16 %v1544
      %v1703 = vunpack.c.l.b16 %v1545
      %v1704 = vunpack.c.h.b16 %v1545
      %v1705 = vunpack.c.l.b16 %v1546
      %v1706 = vunpack.c.h.b16 %v1546
      %v1707 = vunpack.c.l.b16 %v1547
      %v1708 = vunpack.c.h.b16 %v1547
      %v1709 = vunpack.c.l.b16 %v1548
      %v1710 = vunpack.c.h.b16 %v1548
      %v1711 = vunpack.c.l.b16 %v1549
      %v1712 = vunpack.c.h.b16 %v1549
      %v1713 = vunpack.c.l.b16 %v1550
      %v1714 = vunpack.c.h.b16 %v1550
      %v1715 = vunpack.c.l.b16 %v1551
      %v1716 = vunpack.c.h.b16 %v1551
      %v1717 = vunpack.c.l.b16 %v1552
      %v1718 = vunpack.c.h.b16 %v1552
      %v1719 = vunpack.c.l.b16 %v1553
      %v1720 = vunpack.c.h.b16 %v1553
      %v1721 = vunpack.c.l.b16 %v1554
      %v1722 = vunpack.c.h.b16 %v1554
      %v1723 = vunpack.c.l.b16 %v1555
      %v1724 = vunpack.c.h.b16 %v1555
      %v1725 = vunpack.c.l.b16 %v1556
      %v1726 = vunpack.c.h.b16 %v1556
      %v1727 = vunpack.c.l.b16 %v1557
      %v1728 = vunpack.c.h.b16 %v1557
      %v1729 = vunpack.c.l.b16 %v1558
      %v1730 = vunpack.c.h.b16 %v1558
      %v1731 = vunpack.c.l.b16 %v1559
      %v1732 = vunpack.c.h.b16 %v1559
      %v1733 = vunpack.c.l.b16 %v1560
      %v1734 = vunpack.c.h.b16 %v1560
      %v1735 = vunpack.c.l.b16 %v1561
      %v1736 = vunpack.c.h.b16 %v1561
      %v1737 = vunpack.c.l.b16 %v1562
      %v1738 = vunpack.c.h.b16 %v1562
      %v1739 = vunpack.c.l.b16 %v1563
      %v1740 = vunpack.c.h.b16 %v1563
      %v1741 = vunpack.c.l.b16 %v1564
      %v1742 = vunpack.c.h.b16 %v1564
      %v1743 = vunpack.c.l.b16 %v1565
      %v1744 = vunpack.c.h.b16 %v1565
      %v1745 = vunpack.c.l.b16 %v1566
      %v1746 = vunpack.c.h.b16 %v1566
      %v1747 = vunpack.c.l.b16 %v1567
      %v1748 = vunpack.c.h.b16 %v1567
      %v1749 = vunpack.c.l.b16 %v1568
      %v1750 = vunpack.c.h.b16 %v1568
      %v1751 = vunpack.c.l.b16 %v1569
      %v1752 = vunpack.c.h.b16 %v1569
      %v1753 = vunpack.c.l.b16 %v1570
      %v1754 = vunpack.c.h.b16 %v1570
      %v1755 = vunpack.c.l.b16 %v1571
      %v1756 = vunpack.c.h.b16 %v1571
      %v1757 = vunpack.c.l.b16 %v1572
      %v1758 = vunpack.c.h.b16 %v1572
      %v1759 = vunpack.c.l.b16 %v1573
      %v1760 = vunpack.c.h.b16 %v1573
      %v1761 = vunpack.c.l.b16 %v1574
      %v1762 = vunpack.c.h.b16 %v1574
      %v1763 = vunpack.c.l.b16 %v1575
      %v1764 = vunpack.c.h.b16 %v1575
      %v1765 = vunpack.c.l.b16 %v1576
      %v1766 = vunpack.c.h.b16 %v1576
      %v1767 = vunpack.c.l.b16 %v1577
      %v1768 = vunpack.c.h.b16 %v1577
      %v1769 = vunpack.c.l.b16 %v1578
      %v1770 = vunpack.c.h.b16 %v1578
      %v1771 = vpack.c.b16 %v1645, %v1643
      %v1772 = vpack.c.b16 %v1646, %v1644
      %v1773 = vpack.c.b16 %v1649, %v1647
      %v1774 = vpack.c.b16 %v1650, %v1648
      %v1775 = vpack.c.b16 %v1653, %v1651
      %v1776 = vpack.c.b16 %v1654, %v1652
      %v1777 = vpack.c.b16 %v1657, %v1655
      %v1778 = vpack.c.b16 %v1658, %v1656
      %v1779 = vpack.c.b16 %v1661, %v1659
      %v1780 = vpack.c.b16 %v1662, %v1660
      %v1781 = vpack.c.b16 %v1665, %v1663
      %v1782 = vpack.c.b16 %v1666, %v1664
      %v1783 = vpack.c.b16 %v1669, %v1667
      %v1784 = vpack.c.b16 %v1670, %v1668
      %v1785 = vpack.c.b16 %v1673, %v1671
      %v1786 = vpack.c.b16 %v1674, %v1672
      %v1787 = vpack.c.b16 %v1677, %v1675
      %v1788 = vpack.c.b16 %v1678, %v1676
      %v1789 = vpack.c.b16 %v1681, %v1679
      %v1790 = vpack.c.b16 %v1682, %v1680
      %v1791 = vpack.c.b16 %v1685, %v1683
      %v1792 = vpack.c.b16 %v1686, %v1684
      %v1793 = vpack.c.b16 %v1689, %v1687
      %v1794 = vpack.c.b16 %v1690, %v1688
      %v1795 = vpack.c.b16 %v1693, %v1691
      %v1796 = vpack.c.b16 %v1694, %v1692
      %v1797 = vpack.c.b16 %v1697, %v1695
      %v1798 = vpack.c.b16 %v1698, %v1696
      %v1799 = vpack.c.b16 %v1701, %v1699
      %v1800 = vpack.c.b16 %v1702, %v1700
      %v1801 = vpack.c.b16 %v1705, %v1703
      %v1802 = vpack.c.b16 %v1706, %v1704
      %v1803 = vpack.c.b16 %v1709, %v1707
      %v1804 = vpack.c.b16 %v1710, %v1708
      %v1805 = vpack.c.b16 %v1713, %v1711
      %v1806 = vpack.c.b16 %v1714, %v1712
      %v1807 = vpack.c.b16 %v1717, %v1715
      %v1808 = vpack.c.b16 %v1718, %v1716
      %v1809 = vpack.c.b16 %v1721, %v1719
      %v1810 = vpack.c.b16 %v1722, %v1720
      %v1811 = vpack.c.b16 %v1725, %v1723
      %v1812 = vpack.c.b16 %v1726, %v1724
      %v1813 = vpack.c.b16 %v1729, %v1727
      %v1814 = vpack.c.b16 %v1730, %v1728
      %v1815 = vpack.c.b16 %v1733, %v1731
      %v1816 = vpack.c.b16 %v1734, %v1732
      %v1817 = vpack.c.b16 %v1737, %v1735
      %v1818 = vpack.c.b16 %v1738, %v1736
      %v1819 = vpack.c.b16 %v1741, %v1739
      %v1820 = vpack.c.b16 %v1742, %v1740
      %v1821 = vpack.c.b16 %v1745, %v1743
      %v1822 = vpack.c.b16 %v1746, %v1744
      %v1823 = vpack.c.b16 %v1749, %v1747
      %v1824 = vpack.c.b16 %v1750, %v1748
      %v1825 = vpack.c.b16 %v1753, %v1751
      %v1826 = vpack.c.b16 %v1754, %v1752
      %v1827 = vpack.c.b16 %v1757, %v1755
      %v1828 = vpack.c.b16 %v1758, %v1756
      %v1829 = vpack.c.b16 %v1761, %v1759
      %v1830 = vpack.c.b16 %v1762, %v1760
      %v1831 = vpack.c.b16 %v1765, %v1763
      %v1832 = vpack.c.b16 %v1766, %v1764
      %v1833 = vpack.c.b16 %v1769, %v1767
      %v1834 = vpack.c.b16 %v1770, %v1768
      %1899 = vmatprep.subr.bf16.mxu0 %v1772
      %1900 = vmatpush1.bf16.msra.mxu0 %v1771
      %1901 = vmatprep.subr.bf16.mxu0 %v1774
      %1902 = vmatpush1.bf16.msra.mxu0 %v1773
      %1903 = vmatprep.subr.bf16.mxu0 %v1776
      %1904 = vmatpush1.bf16.msra.mxu0 %v1775
      %1905 = vmatprep.subr.bf16.mxu0 %v1778
      %1906 = vmatpush1.bf16.msra.mxu0 %v1777
      %1907 = vmatprep.subr.bf16.mxu0 %v1780
      %1908 = vmatpush1.bf16.msra.mxu0 %v1779
      %1909 = vmatprep.subr.bf16.mxu0 %v1782
      %1910 = vmatpush1.bf16.msra.mxu0 %v1781
      %1911 = vmatprep.subr.bf16.mxu0 %v1784
      %1912 = vmatpush1.bf16.msra.mxu0 %v1783
      %1913 = vmatprep.subr.bf16.mxu0 %v1786
      %1914 = vmatpush1.bf16.msra.mxu0 %v1785
      %1915 = vmatprep.subr.bf16.mxu0 %v1788
      %1916 = vmatpush1.bf16.msra.mxu0 %v1787
      %1917 = vmatprep.subr.bf16.mxu0 %v1790
      %1918 = vmatpush1.bf16.msra.mxu0 %v1789
      %1919 = vmatprep.subr.bf16.mxu0 %v1792
      %1920 = vmatpush1.bf16.msra.mxu0 %v1791
      %1921 = vmatprep.subr.bf16.mxu0 %v1794
      %1922 = vmatpush1.bf16.msra.mxu0 %v1793
      %1923 = vmatprep.subr.bf16.mxu0 %v1796
      %1924 = vmatpush1.bf16.msra.mxu0 %v1795
      %1925 = vmatprep.subr.bf16.mxu0 %v1798
      %1926 = vmatpush1.bf16.msra.mxu0 %v1797
      %1927 = vmatprep.subr.bf16.mxu0 %v1800
      %1928 = vmatpush1.bf16.msra.mxu0 %v1799
      %1929 = vmatprep.subr.bf16.mxu0 %v1802
      %1930 = vmatpush1.bf16.msra.mxu0 %v1801
      %1931 = vmatprep.mubr.bf16.mxu0 %v397
      %1932 = vmatmul.mubr.bf16.gmra.mrb[0].mxu0 %v396
      %v1933 = vpop.f32.mrb[0].mxu0
      %v1934 = vadd.f32 0.0, %v1933
      %v1935 = vpop.f32.mrb[0].mxu0
      %v1936 = vadd.f32 0.0, %v1935
      %v1937 = vpop.f32.mrb[0].mxu0
      %v1938 = vadd.f32 0.0, %v1937
      %v1939 = vpop.f32.mrb[0].mxu0
      %v1940 = vadd.f32 0.0, %v1939
      %1941 = vmatprep.mubr.bf16.mxu0 %v433
      %1942 = vmatmul.mubr.bf16.gmra.mrb[0].mxu0 %v432
      %v1943 = vpop.f32.mrb[0].mxu0
      %v1944 = vadd.f32 0.0, %v1943
      %v1945 = vpop.f32.mrb[0].mxu0
      %v1946 = vadd.f32 0.0, %v1945
      %v1947 = vpop.f32.mrb[0].mxu0
      %v1948 = vadd.f32 0.0, %v1947
      %v1949 = vpop.f32.mrb[0].mxu0
      %v1950 = vadd.f32 0.0, %v1949
      %1951 = vdwg.mxu0
      %1952 = vmatprep.subr.bf16.mxu0 %v1804
      %1953 = vmatpush1.bf16.msra.mxu0 %v1803
      %1954 = vmatprep.subr.bf16.mxu0 %v1806
      %1955 = vmatpush1.bf16.msra.mxu0 %v1805
      %1956 = vmatprep.subr.bf16.mxu0 %v1808
      %1957 = vmatpush1.bf16.msra.mxu0 %v1807
      %1958 = vmatprep.subr.bf16.mxu0 %v1810
      %1959 = vmatpush1.bf16.msra.mxu0 %v1809
      %1960 = vmatprep.subr.bf16.mxu0 %v1812
      %1961 = vmatpush1.bf16.msra.mxu0 %v1811
      %1962 = vmatprep.subr.bf16.mxu0 %v1814
      %1963 = vmatpush1.bf16.msra.mxu0 %v1813
      %1964 = vmatprep.subr.bf16.mxu0 %v1816
      %1965 = vmatpush1.bf16.msra.mxu0 %v1815
      %1966 = vmatprep.subr.bf16.mxu0 %v1818
      %1967 = vmatpush1.bf16.msra.mxu0 %v1817
      %1968 = vmatprep.subr.bf16.mxu0 %v1820
      %1969 = vmatpush1.bf16.msra.mxu0 %v1819
      %1970 = vmatprep.subr.bf16.mxu0 %v1822
      %1971 = vmatpush1.bf16.msra.mxu0 %v1821
      %1972 = vmatprep.subr.bf16.mxu0 %v1824
      %1973 = vmatpush1.bf16.msra.mxu0 %v1823
      %1974 = vmatprep.subr.bf16.mxu0 %v1826
      %1975 = vmatpush1.bf16.msra.mxu0 %v1825
      %1976 = vmatprep.subr.bf16.mxu0 %v1828
      %1977 = vmatpush1.bf16.msra.mxu0 %v1827
      %1978 = vmatprep.subr.bf16.mxu0 %v1830
      %1979 = vmatpush1.bf16.msra.mxu0 %v1829
      %1980 = vmatprep.subr.bf16.mxu0 %v1832
      %1981 = vmatpush1.bf16.msra.mxu0 %v1831
      %1982 = vmatprep.subr.bf16.mxu0 %v1834
      %1983 = vmatpush1.bf16.msra.mxu0 %v1833
      %1984 = vmatprep.mubr.bf16.mxu0 %v399
      %1985 = vmatmul.mubr.bf16.gmra.mrb[0].mxu0 %v398
      %v1986 = vpop.f32.mrb[0].mxu0
      %v1987 = vadd.f32 %v1934, %v1986
      %v1988 = vpop.f32.mrb[0].mxu0
      %v1989 = vadd.f32 %v1936, %v1988
      %v1990 = vpop.f32.mrb[0].mxu0
      %v1991 = vadd.f32 %v1938, %v1990
      %v1992 = vpop.f32.mrb[0].mxu0
      %v1993 = vadd.f32 %v1940, %v1992
      %1994 = vmatprep.mubr.bf16.mxu0 %v435
      %1995 = vmatmul.mubr.bf16.gmra.mrb[0].mxu0 %v434
      %v1996 = vpop.f32.mrb[0].mxu0
      %v1997 = vadd.f32 %v1944, %v1996
      %v1998 = vpop.f32.mrb[0].mxu0
      %v1999 = vadd.f32 %v1946, %v1998
      %v2000 = vpop.f32.mrb[0].mxu0
      %v2001 = vadd.f32 %v1948, %v2000
      %v2002 = vpop.f32.mrb[0].mxu0
      %v2003 = vadd.f32 %v1950, %v2002
      %2004 = vdwg.mxu0
      %v2005 = vadd.f32 %v1496, %v1987
      %v2006 = vadd.f32 %v1498, %v1989
      %v2007 = vadd.f32 %v1500, %v1991
      %v2008 = vadd.f32 %v1502, %v1993
      %v2009 = vadd.f32 %v1506, %v1997
      %v2010 = vadd.f32 %v1508, %v1999
      %v2011 = vadd.f32 %v1510, %v2001
      %v2012 = vadd.f32 %v1512, %v2003
      %s2013 = scalar_lea.vmem %s2, 1536
      %v2014 = vld [vmem:[%s2013] sm:$0xff]
      %v2015 = vld [vmem:[%s2013 + $0x8] sm:$0xff]
      %v2016 = vld [vmem:[%s2013 + $0x10] sm:$0xff]
      %v2017 = vld [vmem:[%s2013 + $0x18] sm:$0xff]
      %v2018 = vld [vmem:[%s2013 + $0x20] sm:$0xff]
      %v2019 = vld [vmem:[%s2013 + $0x28] sm:$0xff]
      %v2020 = vld [vmem:[%s2013 + $0x30] sm:$0xff]
      %v2021 = vld [vmem:[%s2013 + $0x38] sm:$0xff]
      %v2022 = vld [vmem:[%s2013 + $0x40] sm:$0xff]
      %v2023 = vld [vmem:[%s2013 + $0x48] sm:$0xff]
      %v2024 = vld [vmem:[%s2013 + $0x50] sm:$0xff]
      %v2025 = vld [vmem:[%s2013 + $0x58] sm:$0xff]
      %v2026 = vld [vmem:[%s2013 + $0x60] sm:$0xff]
      %v2027 = vld [vmem:[%s2013 + $0x68] sm:$0xff]
      %v2028 = vld [vmem:[%s2013 + $0x70] sm:$0xff]
      %v2029 = vld [vmem:[%s2013 + $0x78] sm:$0xff]
      %v2030 = vld [vmem:[%s2013 + $0x80] sm:$0xff]
      %v2031 = vld [vmem:[%s2013 + $0x88] sm:$0xff]
      %v2032 = vld [vmem:[%s2013 + $0x90] sm:$0xff]
      %v2033 = vld [vmem:[%s2013 + $0x98] sm:$0xff]
      %v2034 = vld [vmem:[%s2013 + $0xa0] sm:$0xff]
      %v2035 = vld [vmem:[%s2013 + $0xa8] sm:$0xff]
      %v2036 = vld [vmem:[%s2013 + $0xb0] sm:$0xff]
      %v2037 = vld [vmem:[%s2013 + $0xb8] sm:$0xff]
      %v2038 = vld [vmem:[%s2013 + $0xc0] sm:$0xff]
      %v2039 = vld [vmem:[%s2013 + $0xc8] sm:$0xff]
      %v2040 = vld [vmem:[%s2013 + $0xd0] sm:$0xff]
      %v2041 = vld [vmem:[%s2013 + $0xd8] sm:$0xff]
      %v2042 = vld [vmem:[%s2013 + $0xe0] sm:$0xff]
      %v2043 = vld [vmem:[%s2013 + $0xe8] sm:$0xff]
      %v2044 = vld [vmem:[%s2013 + $0xf0] sm:$0xff]
      %v2045 = vld [vmem:[%s2013 + $0xf8] sm:$0xff]
      %v2046 = vld [vmem:[%s2013 + $0x100] sm:$0xff]
      %v2047 = vld [vmem:[%s2013 + $0x108] sm:$0xff]
      %v2048 = vld [vmem:[%s2013 + $0x110] sm:$0xff]
      %v2049 = vld [vmem:[%s2013 + $0x118] sm:$0xff]
      %v2050 = vld [vmem:[%s2013 + $0x120] sm:$0xff]
      %v2051 = vld [vmem:[%s2013 + $0x128] sm:$0xff]
      %v2052 = vld [vmem:[%s2013 + $0x130] sm:$0xff]
      %v2053 = vld [vmem:[%s2013 + $0x138] sm:$0xff]
      %v2054 = vld [vmem:[%s2013 + $0x140] sm:$0xff]
      %v2055 = vld [vmem:[%s2013 + $0x148] sm:$0xff]
      %v2056 = vld [vmem:[%s2013 + $0x150] sm:$0xff]
      %v2057 = vld [vmem:[%s2013 + $0x158] sm:$0xff]
      %v2058 = vld [vmem:[%s2013 + $0x160] sm:$0xff]
      %v2059 = vld [vmem:[%s2013 + $0x168] sm:$0xff]
      %v2060 = vld [vmem:[%s2013 + $0x170] sm:$0xff]
      %v2061 = vld [vmem:[%s2013 + $0x178] sm:$0xff]
      %v2062 = vld [vmem:[%s2013 + $0x180] sm:$0xff]
      %v2063 = vld [vmem:[%s2013 + $0x188] sm:$0xff]
      %v2064 = vld [vmem:[%s2013 + $0x190] sm:$0xff]
      %v2065 = vld [vmem:[%s2013 + $0x198] sm:$0xff]
      %v2066 = vld [vmem:[%s2013 + $0x1a0] sm:$0xff]
      %v2067 = vld [vmem:[%s2013 + $0x1a8] sm:$0xff]
      %v2068 = vld [vmem:[%s2013 + $0x1b0] sm:$0xff]
      %v2069 = vld [vmem:[%s2013 + $0x1b8] sm:$0xff]
      %v2070 = vld [vmem:[%s2013 + $0x1c0] sm:$0xff]
      %v2071 = vld [vmem:[%s2013 + $0x1c8] sm:$0xff]
      %v2072 = vld [vmem:[%s2013 + $0x1d0] sm:$0xff]
      %v2073 = vld [vmem:[%s2013 + $0x1d8] sm:$0xff]
      %v2074 = vld [vmem:[%s2013 + $0x1e0] sm:$0xff]
      %v2075 = vld [vmem:[%s2013 + $0x1e8] sm:$0xff]
      %v2076 = vld [vmem:[%s2013 + $0x1f0] sm:$0xff]
      %v2077 = vld [vmem:[%s2013 + $0x1f8] sm:$0xff]
      %v2078 = vshrl.u32 %v432, 16
      %v2080 = vor.u32 %v2078, %v628
      %v2082 = vshll.u32 %v436, 16
      %v2084 = vrot.slane %v2082, 1
      %v2085 = vsel %vm573, %v2080, %v2084
      %v2086 = vshrl.u32 %v433, 16
      %v2088 = vor.u32 %v2086, %v636
      %v2090 = vshll.u32 %v437, 16
      %v2092 = vrot.slane %v2090, 1
      %v2093 = vsel %vm573, %v2088, %v2092
      %v2094 = vshrl.u32 %v434, 16
      %v2096 = vor.u32 %v2094, %v644
      %v2098 = vshll.u32 %v438, 16
      %v2100 = vrot.slane %v2098, 1
      %v2101 = vsel %vm573, %v2096, %v2100
      %v2102 = vshrl.u32 %v435, 16
      %v2104 = vor.u32 %v2102, %v652
      %v2106 = vshll.u32 %v439, 16
      %v2108 = vrot.slane %v2106, 1
      %v2109 = vsel %vm573, %v2104, %v2108
      %v2178 = vunpack.c.l.b16 %v2014
      %v2179 = vunpack.c.h.b16 %v2014
      %v2180 = vunpack.c.l.b16 %v2015
      %v2181 = vunpack.c.h.b16 %v2015
      %v2182 = vunpack.c.l.b16 %v2016
      %v2183 = vunpack.c.h.b16 %v2016
      %v2184 = vunpack.c.l.b16 %v2017
      %v2185 = vunpack.c.h.b16 %v2017
      %v2186 = vunpack.c.l.b16 %v2018
      %v2187 = vunpack.c.h.b16 %v2018
      %v2188 = vunpack.c.l.b16 %v2019
      %v2189 = vunpack.c.h.b16 %v2019
      %v2190 = vunpack.c.l.b16 %v2020
      %v2191 = vunpack.c.h.b16 %v2020
      %v2192 = vunpack.c.l.b16 %v2021
      %v2193 = vunpack.c.h.b16 %v2021
      %v2194 = vunpack.c.l.b16 %v2022
      %v2195 = vunpack.c.h.b16 %v2022
      %v2196 = vunpack.c.l.b16 %v2023
      %v2197 = vunpack.c.h.b16 %v2023
      %v2198 = vunpack.c.l.b16 %v2024
      %v2199 = vunpack.c.h.b16 %v2024
      %v2200 = vunpack.c.l.b16 %v2025
      %v2201 = vunpack.c.h.b16 %v2025
      %v2202 = vunpack.c.l.b16 %v2026
      %v2203 = vunpack.c.h.b16 %v2026
      %v2204 = vunpack.c.l.b16 %v2027
      %v2205 = vunpack.c.h.b16 %v2027
      %v2206 = vunpack.c.l.b16 %v2028
      %v2207 = vunpack.c.h.b16 %v2028
      %v2208 = vunpack.c.l.b16 %v2029
      %v2209 = vunpack.c.h.b16 %v2029
      %v2210 = vunpack.c.l.b16 %v2030
      %v2211 = vunpack.c.h.b16 %v2030
      %v2212 = vunpack.c.l.b16 %v2031
      %v2213 = vunpack.c.h.b16 %v2031
      %v2214 = vunpack.c.l.b16 %v2032
      %v2215 = vunpack.c.h.b16 %v2032
      %v2216 = vunpack.c.l.b16 %v2033
      %v2217 = vunpack.c.h.b16 %v2033
      %v2218 = vunpack.c.l.b16 %v2034
      %v2219 = vunpack.c.h.b16 %v2034
      %v2220 = vunpack.c.l.b16 %v2035
      %v2221 = vunpack.c.h.b16 %v2035
      %v2222 = vunpack.c.l.b16 %v2036
      %v2223 = vunpack.c.h.b16 %v2036
      %v2224 = vunpack.c.l.b16 %v2037
      %v2225 = vunpack.c.h.b16 %v2037
      %v2226 = vunpack.c.l.b16 %v2038
      %v2227 = vunpack.c.h.b16 %v2038
      %v2228 = vunpack.c.l.b16 %v2039
      %v2229 = vunpack.c.h.b16 %v2039
      %v2230 = vunpack.c.l.b16 %v2040
      %v2231 = vunpack.c.h.b16 %v2040
      %v2232 = vunpack.c.l.b16 %v2041
      %v2233 = vunpack.c.h.b16 %v2041
      %v2234 = vunpack.c.l.b16 %v2042
      %v2235 = vunpack.c.h.b16 %v2042
      %v2236 = vunpack.c.l.b16 %v2043
      %v2237 = vunpack.c.h.b16 %v2043
      %v2238 = vunpack.c.l.b16 %v2044
      %v2239 = vunpack.c.h.b16 %v2044
      %v2240 = vunpack.c.l.b16 %v2045
      %v2241 = vunpack.c.h.b16 %v2045
      %v2242 = vunpack.c.l.b16 %v2046
      %v2243 = vunpack.c.h.b16 %v2046
      %v2244 = vunpack.c.l.b16 %v2047
      %v2245 = vunpack.c.h.b16 %v2047
      %v2246 = vunpack.c.l.b16 %v2048
      %v2247 = vunpack.c.h.b16 %v2048
      %v2248 = vunpack.c.l.b16 %v2049
      %v2249 = vunpack.c.h.b16 %v2049
      %v2250 = vunpack.c.l.b16 %v2050
      %v2251 = vunpack.c.h.b16 %v2050
      %v2252 = vunpack.c.l.b16 %v2051
      %v2253 = vunpack.c.h.b16 %v2051
      %v2254 = vunpack.c.l.b16 %v2052
      %v2255 = vunpack.c.h.b16 %v2052
      %v2256 = vunpack.c.l.b16 %v2053
      %v2257 = vunpack.c.h.b16 %v2053
      %v2258 = vunpack.c.l.b16 %v2054
      %v2259 = vunpack.c.h.b16 %v2054
      %v2260 = vunpack.c.l.b16 %v2055
      %v2261 = vunpack.c.h.b16 %v2055
      %v2262 = vunpack.c.l.b16 %v2056
      %v2263 = vunpack.c.h.b16 %v2056
      %v2264 = vunpack.c.l.b16 %v2057
      %v2265 = vunpack.c.h.b16 %v2057
      %v2266 = vunpack.c.l.b16 %v2058
      %v2267 = vunpack.c.h.b16 %v2058
      %v2268 = vunpack.c.l.b16 %v2059
      %v2269 = vunpack.c.h.b16 %v2059
      %v2270 = vunpack.c.l.b16 %v2060
      %v2271 = vunpack.c.h.b16 %v2060
      %v2272 = vunpack.c.l.b16 %v2061
      %v2273 = vunpack.c.h.b16 %v2061
      %v2274 = vunpack.c.l.b16 %v2062
      %v2275 = vunpack.c.h.b16 %v2062
      %v2276 = vunpack.c.l.b16 %v2063
      %v2277 = vunpack.c.h.b16 %v2063
      %v2278 = vunpack.c.l.b16 %v2064
      %v2279 = vunpack.c.h.b16 %v2064
      %v2280 = vunpack.c.l.b16 %v2065
      %v2281 = vunpack.c.h.b16 %v2065
      %v2282 = vunpack.c.l.b16 %v2066
      %v2283 = vunpack.c.h.b16 %v2066
      %v2284 = vunpack.c.l.b16 %v2067
      %v2285 = vunpack.c.h.b16 %v2067
      %v2286 = vunpack.c.l.b16 %v2068
      %v2287 = vunpack.c.h.b16 %v2068
      %v2288 = vunpack.c.l.b16 %v2069
      %v2289 = vunpack.c.h.b16 %v2069
      %v2290 = vunpack.c.l.b16 %v2070
      %v2291 = vunpack.c.h.b16 %v2070
      %v2292 = vunpack.c.l.b16 %v2071
      %v2293 = vunpack.c.h.b16 %v2071
      %v2294 = vunpack.c.l.b16 %v2072
      %v2295 = vunpack.c.h.b16 %v2072
      %v2296 = vunpack.c.l.b16 %v2073
      %v2297 = vunpack.c.h.b16 %v2073
      %v2298 = vunpack.c.l.b16 %v2074
      %v2299 = vunpack.c.h.b16 %v2074
      %v2300 = vunpack.c.l.b16 %v2075
      %v2301 = vunpack.c.h.b16 %v2075
      %v2302 = vunpack.c.l.b16 %v2076
      %v2303 = vunpack.c.h.b16 %v2076
      %v2304 = vunpack.c.l.b16 %v2077
      %v2305 = vunpack.c.h.b16 %v2077
      %v2306 = vpack.c.b16 %v2180, %v2178
      %v2307 = vpack.c.b16 %v2181, %v2179
      %v2308 = vpack.c.b16 %v2184, %v2182
      %v2309 = vpack.c.b16 %v2185, %v2183
      %v2310 = vpack.c.b16 %v2188, %v2186
      %v2311 = vpack.c.b16 %v2189, %v2187
      %v2312 = vpack.c.b16 %v2192, %v2190
      %v2313 = vpack.c.b16 %v2193, %v2191
      %v2314 = vpack.c.b16 %v2196, %v2194
      %v2315 = vpack.c.b16 %v2197, %v2195
      %v2316 = vpack.c.b16 %v2200, %v2198
      %v2317 = vpack.c.b16 %v2201, %v2199
      %v2318 = vpack.c.b16 %v2204, %v2202
      %v2319 = vpack.c.b16 %v2205, %v2203
      %v2320 = vpack.c.b16 %v2208, %v2206
      %v2321 = vpack.c.b16 %v2209, %v2207
      %v2322 = vpack.c.b16 %v2212, %v2210
      %v2323 = vpack.c.b16 %v2213, %v2211
      %v2324 = vpack.c.b16 %v2216, %v2214
      %v2325 = vpack.c.b16 %v2217, %v2215
      %v2326 = vpack.c.b16 %v2220, %v2218
      %v2327 = vpack.c.b16 %v2221, %v2219
      %v2328 = vpack.c.b16 %v2224, %v2222
      %v2329 = vpack.c.b16 %v2225, %v2223
      %v2330 = vpack.c.b16 %v2228, %v2226
      %v2331 = vpack.c.b16 %v2229, %v2227
      %v2332 = vpack.c.b16 %v2232, %v2230
      %v2333 = vpack.c.b16 %v2233, %v2231
      %v2334 = vpack.c.b16 %v2236, %v2234
      %v2335 = vpack.c.b16 %v2237, %v2235
      %v2336 = vpack.c.b16 %v2240, %v2238
      %v2337 = vpack.c.b16 %v2241, %v2239
      %v2338 = vpack.c.b16 %v2244, %v2242
      %v2339 = vpack.c.b16 %v2245, %v2243
      %v2340 = vpack.c.b16 %v2248, %v2246
      %v2341 = vpack.c.b16 %v2249, %v2247
      %v2342 = vpack.c.b16 %v2252, %v2250
      %v2343 = vpack.c.b16 %v2253, %v2251
      %v2344 = vpack.c.b16 %v2256, %v2254
      %v2345 = vpack.c.b16 %v2257, %v2255
      %v2346 = vpack.c.b16 %v2260, %v2258
      %v2347 = vpack.c.b16 %v2261, %v2259
      %v2348 = vpack.c.b16 %v2264, %v2262
      %v2349 = vpack.c.b16 %v2265, %v2263
      %v2350 = vpack.c.b16 %v2268, %v2266
      %v2351 = vpack.c.b16 %v2269, %v2267
      %v2352 = vpack.c.b16 %v2272, %v2270
      %v2353 = vpack.c.b16 %v2273, %v2271
      %v2354 = vpack.c.b16 %v2276, %v2274
      %v2355 = vpack.c.b16 %v2277, %v2275
      %v2356 = vpack.c.b16 %v2280, %v2278
      %v2357 = vpack.c.b16 %v2281, %v2279
      %v2358 = vpack.c.b16 %v2284, %v2282
      %v2359 = vpack.c.b16 %v2285, %v2283
      %v2360 = vpack.c.b16 %v2288, %v2286
      %v2361 = vpack.c.b16 %v2289, %v2287
      %v2362 = vpack.c.b16 %v2292, %v2290
      %v2363 = vpack.c.b16 %v2293, %v2291
      %v2364 = vpack.c.b16 %v2296, %v2294
      %v2365 = vpack.c.b16 %v2297, %v2295
      %v2366 = vpack.c.b16 %v2300, %v2298
      %v2367 = vpack.c.b16 %v2301, %v2299
      %v2368 = vpack.c.b16 %v2304, %v2302
      %v2369 = vpack.c.b16 %v2305, %v2303
      %2434 = vmatprep.subr.bf16.mxu0 %v2307
      %2435 = vmatpush1.bf16.msra.mxu0 %v2306
      %2436 = vmatprep.subr.bf16.mxu0 %v2309
      %2437 = vmatpush1.bf16.msra.mxu0 %v2308
      %2438 = vmatprep.subr.bf16.mxu0 %v2311
      %2439 = vmatpush1.bf16.msra.mxu0 %v2310
      %2440 = vmatprep.subr.bf16.mxu0 %v2313
      %2441 = vmatpush1.bf16.msra.mxu0 %v2312
      %2442 = vmatprep.subr.bf16.mxu0 %v2315
      %2443 = vmatpush1.bf16.msra.mxu0 %v2314
      %2444 = vmatprep.subr.bf16.mxu0 %v2317
      %2445 = vmatpush1.bf16.msra.mxu0 %v2316
      %2446 = vmatprep.subr.bf16.mxu0 %v2319
      %2447 = vmatpush1.bf16.msra.mxu0 %v2318
      %2448 = vmatprep.subr.bf16.mxu0 %v2321
      %2449 = vmatpush1.bf16.msra.mxu0 %v2320
      %2450 = vmatprep.subr.bf16.mxu0 %v2323
      %2451 = vmatpush1.bf16.msra.mxu0 %v2322
      %2452 = vmatprep.subr.bf16.mxu0 %v2325
      %2453 = vmatpush1.bf16.msra.mxu0 %v2324
      %2454 = vmatprep.subr.bf16.mxu0 %v2327
      %2455 = vmatpush1.bf16.msra.mxu0 %v2326
      %2456 = vmatprep.subr.bf16.mxu0 %v2329
      %2457 = vmatpush1.bf16.msra.mxu0 %v2328
      %2458 = vmatprep.subr.bf16.mxu0 %v2331
      %2459 = vmatpush1.bf16.msra.mxu0 %v2330
      %2460 = vmatprep.subr.bf16.mxu0 %v2333
      %2461 = vmatpush1.bf16.msra.mxu0 %v2332
      %2462 = vmatprep.subr.bf16.mxu0 %v2335
      %2463 = vmatpush1.bf16.msra.mxu0 %v2334
      %2464 = vmatprep.subr.bf16.mxu0 %v2337
      %2465 = vmatpush1.bf16.msra.mxu0 %v2336
      %2466 = vmatprep.mubr.bf16.mxu0 %v637
      %2467 = vmatmul.mubr.bf16.gmra.mrb[0].mxu0 %v629
      %v2468 = vpop.f32.mrb[0].mxu0
      %v2469 = vadd.f32 0.0, %v2468
      %v2470 = vpop.f32.mrb[0].mxu0
      %v2471 = vadd.f32 0.0, %v2470
      %v2472 = vpop.f32.mrb[0].mxu0
      %v2473 = vadd.f32 0.0, %v2472
      %v2474 = vpop.f32.mrb[0].mxu0
      %v2475 = vadd.f32 0.0, %v2474
      %2476 = vmatprep.mubr.bf16.mxu0 %v2093
      %2477 = vmatmul.mubr.bf16.gmra.mrb[0].mxu0 %v2085
      %v2478 = vpop.f32.mrb[0].mxu0
      %v2479 = vadd.f32 0.0, %v2478
      %v2480 = vpop.f32.mrb[0].mxu0
      %v2481 = vadd.f32 0.0, %v2480
      %v2482 = vpop.f32.mrb[0].mxu0
      %v2483 = vadd.f32 0.0, %v2482
      %v2484 = vpop.f32.mrb[0].mxu0
      %v2485 = vadd.f32 0.0, %v2484
      %2486 = vdwg.mxu0
      %2487 = vmatprep.subr.bf16.mxu0 %v2339
      %2488 = vmatpush1.bf16.msra.mxu0 %v2338
      %2489 = vmatprep.subr.bf16.mxu0 %v2341
      %2490 = vmatpush1.bf16.msra.mxu0 %v2340
      %2491 = vmatprep.subr.bf16.mxu0 %v2343
      %2492 = vmatpush1.bf16.msra.mxu0 %v2342
      %2493 = vmatprep.subr.bf16.mxu0 %v2345
      %2494 = vmatpush1.bf16.msra.mxu0 %v2344
      %2495 = vmatprep.subr.bf16.mxu0 %v2347
      %2496 = vmatpush1.bf16.msra.mxu0 %v2346
      %2497 = vmatprep.subr.bf16.mxu0 %v2349
      %2498 = vmatpush1.bf16.msra.mxu0 %v2348
      %2499 = vmatprep.subr.bf16.mxu0 %v2351
      %2500 = vmatpush1.bf16.msra.mxu0 %v2350
      %2501 = vmatprep.subr.bf16.mxu0 %v2353
      %2502 = vmatpush1.bf16.msra.mxu0 %v2352
      %2503 = vmatprep.subr.bf16.mxu0 %v2355
      %2504 = vmatpush1.bf16.msra.mxu0 %v2354
      %2505 = vmatprep.subr.bf16.mxu0 %v2357
      %2506 = vmatpush1.bf16.msra.mxu0 %v2356
      %2507 = vmatprep.subr.bf16.mxu0 %v2359
      %2508 = vmatpush1.bf16.msra.mxu0 %v2358
      %2509 = vmatprep.subr.bf16.mxu0 %v2361
      %2510 = vmatpush1.bf16.msra.mxu0 %v2360
      %2511 = vmatprep.subr.bf16.mxu0 %v2363
      %2512 = vmatpush1.bf16.msra.mxu0 %v2362
      %2513 = vmatprep.subr.bf16.mxu0 %v2365
      %2514 = vmatpush1.bf16.msra.mxu0 %v2364
      %2515 = vmatprep.subr.bf16.mxu0 %v2367
      %2516 = vmatpush1.bf16.msra.mxu0 %v2366
      %2517 = vmatprep.subr.bf16.mxu0 %v2369
      %2518 = vmatpush1.bf16.msra.mxu0 %v2368
      %2519 = vmatprep.mubr.bf16.mxu0 %v653
      %2520 = vmatmul.mubr.bf16.gmra.mrb[0].mxu0 %v645
      %v2521 = vpop.f32.mrb[0].mxu0
      %v2522 = vadd.f32 %v2469, %v2521
      %v2523 = vpop.f32.mrb[0].mxu0
      %v2524 = vadd.f32 %v2471, %v2523
      %v2525 = vpop.f32.mrb[0].mxu0
      %v2526 = vadd.f32 %v2473, %v2525
      %v2527 = vpop.f32.mrb[0].mxu0
      %v2528 = vadd.f32 %v2475, %v2527
      %2529 = vmatprep.mubr.bf16.mxu0 %v2109
      %2530 = vmatmul.mubr.bf16.gmra.mrb[0].mxu0 %v2101
      %v2531 = vpop.f32.mrb[0].mxu0
      %v2532 = vadd.f32 %v2479, %v2531
      %v2533 = vpop.f32.mrb[0].mxu0
      %v2534 = vadd.f32 %v2481, %v2533
      %v2535 = vpop.f32.mrb[0].mxu0
      %v2536 = vadd.f32 %v2483, %v2535
      %v2537 = vpop.f32.mrb[0].mxu0
      %v2538 = vadd.f32 %v2485, %v2537
      %2539 = vdwg.mxu0
      %v2540 = vadd.f32 %v2005, %v2522
      %v2541 = vadd.f32 %v2006, %v2524
      %v2542 = vadd.f32 %v2007, %v2526
      %v2543 = vadd.f32 %v2008, %v2528
      %v2544 = vadd.f32 %v2009, %v2532
      %v2545 = vadd.f32 %v2010, %v2534
      %v2546 = vadd.f32 %v2011, %v2536
      %v2547 = vadd.f32 %v2012, %v2538
      %v2548 = vld [vmem:[%s3] sm:$0x3]
      %v2550 = vlaneseq
      %v2551 = vshrl.u32 %v2550, 7
      %v2552 = vsub.s32 0, %v2551
      %v2553 = vrot.slane %v2548, %v2552
      %v2554 = vlaneseq
      %v2555 = vshrl.u32 %v2554, 7
      %v2556 = vsub.s32 1, %v2555
      %v2557 = vrot.slane %v2548, %v2556
      %v2560 = vadd.f32 %v2540, %v2553
      %v2561 = vadd.f32 %v2541, %v2557
      %v2562 = vadd.f32 %v2542, %v2553
      %v2563 = vadd.f32 %v2543, %v2557
      %v2564 = vadd.f32 %v2544, %v2553
      %v2565 = vadd.f32 %v2545, %v2557
      %v2566 = vadd.f32 %v2546, %v2553
      %v2567 = vadd.f32 %v2547, %v2557
      %v2568 = vmax.f32 %v2560, 0.0
      %v2569 = vmax.f32 %v2561, 0.0
      %v2570 = vmax.f32 %v2562, 0.0
      %v2571 = vmax.f32 %v2563, 0.0
      %v2572 = vmax.f32 %v2564, 0.0
      %v2573 = vmax.f32 %v2565, 0.0
      %v2574 = vmax.f32 %v2566, 0.0
      %v2575 = vmax.f32 %v2567, 0.0
      %v2576 = vlaneseq
      %v2577 = vshrl.u32 %v2576, 7
      %v2578 = vadd.s32 %v2577, 8
      %v2579 = vadd.s32 %v2577, 16
      %v2580 = vadd.s32 %v2577, 24
      %vm2581 = vcmp.lt.s32.totalorder %v2577, 0
      %v2582 = vsub.s32 0, %v2577
      %v2583 = vsel %vm2581, %v2582, %v2577
      %v2584 = vshrl.u32 %v2583, 4
      %v2585 = vand.u32 %v2583, 15
      %v2586 = vsub.s32 0, %v2585
      %v2587 = vsel %vm2581, %v2586, %v2585
      %vm2588 = vcmp.lt.s32.totalorder %v2578, 0
      %v2589 = vsub.s32 0, %v2578
      %v2590 = vsel %vm2588, %v2589, %v2578
      %v2591 = vshrl.u32 %v2590, 4
      %v2592 = vand.u32 %v2590, 15
      %v2593 = vsub.s32 0, %v2592
      %v2594 = vsel %vm2588, %v2593, %v2592
      %vm2595 = vcmp.lt.s32.totalorder %v2579, 0
      %v2596 = vsub.s32 0, %v2579
      %v2597 = vsel %vm2595, %v2596, %v2579
      %v2598 = vshrl.u32 %v2597, 4
      %v2599 = vand.u32 %v2597, 15
      %v2600 = vsub.s32 0, %v2599
      %v2601 = vsel %vm2595, %v2600, %v2599
      %vm2602 = vcmp.lt.s32.totalorder %v2580, 0
      %v2603 = vsub.s32 0, %v2580
      %v2604 = vsel %vm2602, %v2603, %v2580
      %v2605 = vshrl.u32 %v2604, 4
      %v2606 = vand.u32 %v2604, 15
      %v2607 = vsub.s32 0, %v2606
      %v2608 = vsel %vm2602, %v2607, %v2606
      %vm2609 = vcmp.ne.s32.totalorder %v2587, 0
      %vm2610 = vcmp.ne.s32.totalorder %v2594, 0
      %vm2611 = vcmp.ne.s32.totalorder %v2601, 0
      %vm2612 = vcmp.ne.s32.totalorder %v2608, 0
      %vm2613 = vcmp.lt.s32.totalorder %v2587, 0
      %vm2614 = vcmp.lt.s32.totalorder %v2594, 0
      %vm2615 = vcmp.lt.s32.totalorder %v2601, 0
      %vm2616 = vcmp.lt.s32.totalorder %v2608, 0
      %vm2617 = vmand %vm2613, %vm2609
      %vm2618 = vmand %vm2614, %vm2610
      %vm2619 = vmand %vm2615, %vm2611
      %vm2620 = vmand %vm2616, %vm2612
      %v2621 = vadd.s32 %v2587, 16
      %v2622 = vadd.s32 %v2594, 16
      %v2623 = vadd.s32 %v2601, 16
      %v2624 = vadd.s32 %v2608, 16
      %v2625 = vsel %vm2617, %v2621, %v2587
      %v2626 = vsel %vm2618, %v2622, %v2594
      %v2627 = vsel %vm2619, %v2623, %v2601
      %v2628 = vsel %vm2620, %v2624, %v2608
      %vm2629 = vcmp.lt.s32.totalorder %v2625, 2
      %vm2630 = vcmp.lt.s32.totalorder %v2626, 2
      %vm2631 = vcmp.lt.s32.totalorder %v2627, 2
      %vm2632 = vcmp.lt.s32.totalorder %v2628, 2
      %v2633 = vsel %vm2629, 1, 0
      %v2634 = vsel %vm2630, 1, 0
      %v2635 = vsel %vm2631, 1, 0
      %v2636 = vsel %vm2632, 1, 0
      %vm2637 = vcmp.eq.s32.totalorder %v2633, 1
      %vm2638 = vcmp.eq.s32.totalorder %v2634, 1
      %vm2639 = vcmp.eq.s32.totalorder %v2635, 1
      %vm2640 = vcmp.eq.s32.totalorder %v2636, 1
      %v2641 = vsel %vm2637, %v2568, 0.0
      %v2642 = vsel %vm2637, %v2569, 0.0
      %v2643 = vsel %vm2638, %v2570, 0.0
      %v2644 = vsel %vm2638, %v2571, 0.0
      %v2645 = vsel %vm2639, %v2572, 0.0
      %v2646 = vsel %vm2639, %v2573, 0.0
      %v2647 = vsel %vm2640, %v2574, 0.0
      %v2648 = vsel %vm2640, %v2575, 0.0
      %v2649 = vpack.c.bf16 %v2643, %v2641
      %v2650 = vpack.c.bf16 %v2644, %v2642
      %v2651 = vpack.c.bf16 %v2647, %v2645
      %v2652 = vpack.c.bf16 %v2648, %v2646
      %v2657 = vunpack.c.l.b16 %v2649
      %v2658 = vunpack.c.l.b16 %v2650
      %v2659 = vunpack.c.h.b16 %v2649
      %v2660 = vunpack.c.h.b16 %v2650
      %v2661 = vunpack.c.l.b16 %v2651
      %v2662 = vunpack.c.l.b16 %v2652
      %v2663 = vunpack.c.h.b16 %v2651
      %v2664 = vunpack.c.h.b16 %v2652
      %v2665 = vpack.c.b16 %v2658, %v2657
      %v2666 = vpack.c.b16 %v2660, %v2659
      %v2667 = vpack.c.b16 %v2662, %v2661
      %v2668 = vpack.c.b16 %v2664, %v2663
      %2673 = vst [vmem:[%s350] sm:$0xff] %v2665
      %2674 = vst [vmem:[%s350 + $0x8] sm:$0xff] %v2666
      %2675 = vst [vmem:[%s350 + $0x10] sm:$0xff] %v2667
      %2676 = vst [vmem:[%s350 + $0x18] sm:$0xff] %v2668
      %s2677 = smul.u32 4, %s20
      %p2678 = scmp.lt.s32.totalorder %s19, 1
      %s2679 = scalar_select %p2678, %s19, 1
      %p2680 = scmp.lt.s32.totalorder %s2677, 3
      %s2681 = scalar_select %p2680, %s2677, 3
      %s2682 = smul.addr %s2681, 2
      %s2683 = smul.addr %s2679, 8
      %s2684 = sadd.s32 %s2682, %s2683
      %s2685 = smul.addr %s2684, 4
      %s2686 = scalar_lea.vmem %s4, %s2685
      // Predicated region
      $region37: #{variational_encoder_forward.8} parent=35 // pred_check
        %p2687 = pneg %p151
      $region38: #{variational_encoder_forward.8} parent=35 // pred_check_branch
        %2689 = sbr.rel (%p2687) target = $region40
      $region39: #{variational_encoder_forward.8} parent=35 // pred_region
        %s2690 = smul.u32 4, %s20
      $region40: #{variational_encoder_forward.8} parent=35 // pred_fallthru
        _
    $region36: #{variational_encoder_forward.8} parent=5 // pred_fallthru
      _
    %p2691 = scmp.le.s32.totalorder 2, %s10
    // Predicated region
    $region41: #{variational_encoder_forward.8} parent=5 // pred_check
      %p2692 = pneg %p2691
    $region42: #{variational_encoder_forward.8} parent=5 // pred_check_branch
      %2694 = sbr.rel (%p2692) target = $region44
    $region43: #{variational_encoder_forward.8} parent=5 // pred_region
      %s2695 = ssub.s32 %s10, 2
      // Predicated region
      $region45: #{variational_encoder_forward.8} parent=43 // pred_check
        %p2696 = pneg %p157
      $region46: #{variational_encoder_forward.8} parent=43 // pred_check_branch
        %2698 = sbr.rel (%p2696) target = $region48
      $region47: #{variational_encoder_forward.8} parent=43 // pred_region
        %s2699 = smul.u32 4, %s22
        %p2700 = scmp.lt.s32.totalorder %s21, 1
        %s2701 = scalar_select %p2700, %s21, 1
        %p2702 = scmp.lt.s32.totalorder %s2699, 3
        %s2703 = scalar_select %p2702, %s2699, 3
        %s2704 = smul.addr %s2703, 2
        %s2705 = smul.addr %s2701, 8
        %s2706 = sadd.s32 %s2704, %s2705
        %s2707 = smul.addr %s2706, 4
        %s2708 = scalar_lea.vmem %s4, %s2707
      $region48: #{variational_encoder_forward.8} parent=43 // pred_fallthru
        _
    $region44: #{variational_encoder_forward.8} parent=5 // pred_fallthru
      _
  $region6: #{variational_encoder_forward.8} parent=0 // loop_footer
    %s14 = sadd.s32 1, %s10
  $region7: #{variational_encoder_forward.8} parent=0 // loop_footer_branch
    %9 = sbr.rel target = $region3
  $region8: #{variational_encoder_forward.8} parent=0 // loop_exit
    _

// kernel: variational_encoder_forward.9
$region0: #{variational_encoder_forward.9}
  #allocation0 [shape = 'u32[]', space=smem, size = 0x4, offset = 0x4, fixed_abs, tag = 'smem constant byte address 0x4 - core index']
  #allocation1 [shape = 'u32[144,128]{1,0:T(1,128)}', space=vmem, size = 0x12000, scoped, tag = 'internal scratch']
  #allocation2 [shape = 'f32[2,16]{1,0:T(2,128)}', space=vmem, size = 0x400, scoped, tag = 'scratch operand']
  #allocation3 [shape = 'f32[2,16]{1,0:T(2,128)}', space=vmem, size = 0x400, scoped, tag = 'scratch operand']
  %s0 = inlined_call_operand.vmem [shape: bf16[2,1024], index: 0, kind: input, shape index: {}]
  %s1 = inlined_call_operand.vmem [shape: bf16[1024,16], index: 1, kind: input, shape index: {}]
  %s2 = inlined_call_operand.vmem [shape: bf16[1024,16], index: 2, kind: input, shape index: {}]
  %s3 = inlined_call_operand.vmem [shape: f32[1,16], index: 3, kind: input, shape index: {}]
  %s4 = inlined_call_operand.vmem [shape: f32[1,16], index: 4, kind: input, shape index: {}]
  %s5 = inlined_call_operand.vmem [shape: f32[2,16], index: 5, kind: input, shape index: {}]
  %s6 = inlined_call_operand.hbm [shape: f32[2,16], index: 6, kind: output, shape index: {}]
  %s7 = sld [smem:[#allocation0]]
  $region42: #{variational_encoder_forward.9} parent=0
    _
  %s9 = ssub.s32 1, %s7
  %s10 = scalar_select 0, %s9, %s7
  $region1: #{variational_encoder_forward.9} parent=0
    #allocation4 [shape = 'u8[1024]{0}', space=vmem, size = 0x400, scoped, tag = 'output window, operand 0, single buffered']
    #allocation5 [shape = 's32[1]{0}', space=sflag, size = 0x4, scoped, tag = 'scoped memory for variational_encoder_forward.9']
    %11 = vsyncpa [#allocation5], 0
    // Predicated region
    $region2: #{variational_encoder_forward.9} parent=1 // pred_check
      _
    $region3: #{variational_encoder_forward.9} parent=1 // pred_check_branch
      %13 = sbr.rel (0) target = $region5
    $region4: #{variational_encoder_forward.9} parent=1 // pred_region
      _
    $region5: #{variational_encoder_forward.9} parent=1 // pred_fallthru
      _
    // Predicated region
    $region6: #{variational_encoder_forward.9} parent=1 // pred_check
      _
    $region7: #{variational_encoder_forward.9} parent=1 // pred_check_branch
      %15 = sbr.rel (0) target = $region9
    $region8: #{variational_encoder_forward.9} parent=1 // pred_region
      _
    $region9: #{variational_encoder_forward.9} parent=1 // pred_fallthru
      _
    // Predicated region
    $region10: #{variational_encoder_forward.9} parent=1 // pred_check
      _
    $region11: #{variational_encoder_forward.9} parent=1 // pred_check_branch
      %17 = sbr.rel (0) target = $region13
    $region12: #{variational_encoder_forward.9} parent=1 // pred_region
      _
    $region13: #{variational_encoder_forward.9} parent=1 // pred_fallthru
      _
    // Predicated region
    $region14: #{variational_encoder_forward.9} parent=1 // pred_check
      _
    $region15: #{variational_encoder_forward.9} parent=1 // pred_check_branch
      %19 = sbr.rel (0) target = $region17
    $region16: #{variational_encoder_forward.9} parent=1 // pred_region
      _
    $region17: #{variational_encoder_forward.9} parent=1 // pred_fallthru
      _
    // Predicated region
    $region18: #{variational_encoder_forward.9} parent=1 // pred_check
      _
    $region19: #{variational_encoder_forward.9} parent=1 // pred_check_branch
      %21 = sbr.rel (0) target = $region21
    $region20: #{variational_encoder_forward.9} parent=1 // pred_region
      _
    $region21: #{variational_encoder_forward.9} parent=1 // pred_fallthru
      _
    // Predicated region
    $region22: #{variational_encoder_forward.9} parent=1 // pred_check
      _
    $region23: #{variational_encoder_forward.9} parent=1 // pred_check_branch
      %23 = sbr.rel (0) target = $region25
    $region24: #{variational_encoder_forward.9} parent=1 // pred_region
      _
    $region25: #{variational_encoder_forward.9} parent=1 // pred_fallthru
      _
    %p25 = scmp.eq.s32.totalorder 0, 0
    // Predicated region
    $region26: #{variational_encoder_forward.9} parent=1 // pred_check
      %p26 = pneg %p25
    $region27: #{variational_encoder_forward.9} parent=1 // pred_check_branch
      %28 = sbr.rel (%p26) target = $region29
    $region28: #{variational_encoder_forward.9} parent=1 // pred_region
      %vm29 = vcmask 123904
      %30 = vst.msk [vmem:[#allocation2] sm:$0x3] %vm29, 0.0
      %31 = vst.msk [vmem:[#allocation3] sm:$0x3] %vm29, 0.0
    $region29: #{variational_encoder_forward.9} parent=1 // pred_fallthru
      _
    %v32 = vld [vmem:[%s0] sm:$0xff]
    %v33 = vld [vmem:[#allocation2] sm:$0x3]
    %v34 = vld [vmem:[%s1] sm:$0xf]
    %v35 = vld [vmem:[%s1 + $0x4] sm:$0xf]
    %v36 = vld [vmem:[%s1 + $0x8] sm:$0xf]
    %v37 = vld [vmem:[%s1 + $0xc] sm:$0xf]
    %v38 = vld [vmem:[%s1 + $0x10] sm:$0xf]
    %v39 = vld [vmem:[%s1 + $0x14] sm:$0xf]
    %v40 = vld [vmem:[%s1 + $0x18] sm:$0xf]
    %v41 = vld [vmem:[%s1 + $0x1c] sm:$0xf]
    %v42 = vld [vmem:[%s1 + $0x20] sm:$0xf]
    %v43 = vld [vmem:[%s1 + $0x24] sm:$0xf]
    %v44 = vld [vmem:[%s1 + $0x28] sm:$0xf]
    %v45 = vld [vmem:[%s1 + $0x2c] sm:$0xf]
    %v46 = vld [vmem:[%s1 + $0x30] sm:$0xf]
    %v47 = vld [vmem:[%s1 + $0x34] sm:$0xf]
    %v48 = vld [vmem:[%s1 + $0x38] sm:$0xf]
    %v49 = vld [vmem:[%s1 + $0x3c] sm:$0xf]
    %v50 = vld [vmem:[%s1 + $0x40] sm:$0xf]
    %v51 = vld [vmem:[%s1 + $0x44] sm:$0xf]
    %v52 = vld [vmem:[%s1 + $0x48] sm:$0xf]
    %v53 = vld [vmem:[%s1 + $0x4c] sm:$0xf]
    %v54 = vld [vmem:[%s1 + $0x50] sm:$0xf]
    %v55 = vld [vmem:[%s1 + $0x54] sm:$0xf]
    %v56 = vld [vmem:[%s1 + $0x58] sm:$0xf]
    %v57 = vld [vmem:[%s1 + $0x5c] sm:$0xf]
    %v58 = vld [vmem:[%s1 + $0x60] sm:$0xf]
    %v59 = vld [vmem:[%s1 + $0x64] sm:$0xf]
    %v60 = vld [vmem:[%s1 + $0x68] sm:$0xf]
    %v61 = vld [vmem:[%s1 + $0x6c] sm:$0xf]
    %v62 = vld [vmem:[%s1 + $0x70] sm:$0xf]
    %v63 = vld [vmem:[%s1 + $0x74] sm:$0xf]
    %v64 = vld [vmem:[%s1 + $0x78] sm:$0xf]
    %v65 = vld [vmem:[%s1 + $0x7c] sm:$0xf]
    %v66 = vld [vmem:[%s1 + $0x80] sm:$0xf]
    %v67 = vld [vmem:[%s1 + $0x84] sm:$0xf]
    %v68 = vld [vmem:[%s1 + $0x88] sm:$0xf]
    %v69 = vld [vmem:[%s1 + $0x8c] sm:$0xf]
    %v70 = vld [vmem:[%s1 + $0x90] sm:$0xf]
    %v71 = vld [vmem:[%s1 + $0x94] sm:$0xf]
    %v72 = vld [vmem:[%s1 + $0x98] sm:$0xf]
    %v73 = vld [vmem:[%s1 + $0x9c] sm:$0xf]
    %v74 = vld [vmem:[%s1 + $0xa0] sm:$0xf]
    %v75 = vld [vmem:[%s1 + $0xa4] sm:$0xf]
    %v76 = vld [vmem:[%s1 + $0xa8] sm:$0xf]
    %v77 = vld [vmem:[%s1 + $0xac] sm:$0xf]
    %v78 = vld [vmem:[%s1 + $0xb0] sm:$0xf]
    %v79 = vld [vmem:[%s1 + $0xb4] sm:$0xf]
    %v80 = vld [vmem:[%s1 + $0xb8] sm:$0xf]
    %v81 = vld [vmem:[%s1 + $0xbc] sm:$0xf]
    %v82 = vld [vmem:[%s1 + $0xc0] sm:$0xf]
    %v83 = vld [vmem:[%s1 + $0xc4] sm:$0xf]
    %v84 = vld [vmem:[%s1 + $0xc8] sm:$0xf]
    %v85 = vld [vmem:[%s1 + $0xcc] sm:$0xf]
    %v86 = vld [vmem:[%s1 + $0xd0] sm:$0xf]
    %v87 = vld [vmem:[%s1 + $0xd4] sm:$0xf]
    %v88 = vld [vmem:[%s1 + $0xd8] sm:$0xf]
    %v89 = vld [vmem:[%s1 + $0xdc] sm:$0xf]
    %v90 = vld [vmem:[%s1 + $0xe0] sm:$0xf]
    %v91 = vld [vmem:[%s1 + $0xe4] sm:$0xf]
    %v92 = vld [vmem:[%s1 + $0xe8] sm:$0xf]
    %v93 = vld [vmem:[%s1 + $0xec] sm:$0xf]
    %v94 = vld [vmem:[%s1 + $0xf0] sm:$0xf]
    %v95 = vld [vmem:[%s1 + $0xf4] sm:$0xf]
    %v96 = vld [vmem:[%s1 + $0xf8] sm:$0xf]
    %v97 = vld [vmem:[%s1 + $0xfc] sm:$0xf]
    %v98 = vld [vmem:[%s1 + $0x100] sm:$0xf]
    %v99 = vld [vmem:[%s1 + $0x104] sm:$0xf]
    %v100 = vld [vmem:[%s1 + $0x108] sm:$0xf]
    %v101 = vld [vmem:[%s1 + $0x10c] sm:$0xf]
    %v102 = vld [vmem:[%s1 + $0x110] sm:$0xf]
    %v103 = vld [vmem:[%s1 + $0x114] sm:$0xf]
    %v104 = vld [vmem:[%s1 + $0x118] sm:$0xf]
    %v105 = vld [vmem:[%s1 + $0x11c] sm:$0xf]
    %v106 = vld [vmem:[%s1 + $0x120] sm:$0xf]
    %v107 = vld [vmem:[%s1 + $0x124] sm:$0xf]
    %v108 = vld [vmem:[%s1 + $0x128] sm:$0xf]
    %v109 = vld [vmem:[%s1 + $0x12c] sm:$0xf]
    %v110 = vld [vmem:[%s1 + $0x130] sm:$0xf]
    %v111 = vld [vmem:[%s1 + $0x134] sm:$0xf]
    %v112 = vld [vmem:[%s1 + $0x138] sm:$0xf]
    %v113 = vld [vmem:[%s1 + $0x13c] sm:$0xf]
    %v114 = vld [vmem:[%s1 + $0x140] sm:$0xf]
    %v115 = vld [vmem:[%s1 + $0x144] sm:$0xf]
    %v116 = vld [vmem:[%s1 + $0x148] sm:$0xf]
    %v117 = vld [vmem:[%s1 + $0x14c] sm:$0xf]
    %v118 = vld [vmem:[%s1 + $0x150] sm:$0xf]
    %v119 = vld [vmem:[%s1 + $0x154] sm:$0xf]
    %v120 = vld [vmem:[%s1 + $0x158] sm:$0xf]
    %v121 = vld [vmem:[%s1 + $0x15c] sm:$0xf]
    %v122 = vld [vmem:[%s1 + $0x160] sm:$0xf]
    %v123 = vld [vmem:[%s1 + $0x164] sm:$0xf]
    %v124 = vld [vmem:[%s1 + $0x168] sm:$0xf]
    %v125 = vld [vmem:[%s1 + $0x16c] sm:$0xf]
    %v126 = vld [vmem:[%s1 + $0x170] sm:$0xf]
    %v127 = vld [vmem:[%s1 + $0x174] sm:$0xf]
    %v128 = vld [vmem:[%s1 + $0x178] sm:$0xf]
    %v129 = vld [vmem:[%s1 + $0x17c] sm:$0xf]
    %v130 = vld [vmem:[%s1 + $0x180] sm:$0xf]
    %v131 = vld [vmem:[%s1 + $0x184] sm:$0xf]
    %v132 = vld [vmem:[%s1 + $0x188] sm:$0xf]
    %v133 = vld [vmem:[%s1 + $0x18c] sm:$0xf]
    %v134 = vld [vmem:[%s1 + $0x190] sm:$0xf]
    %v135 = vld [vmem:[%s1 + $0x194] sm:$0xf]
    %v136 = vld [vmem:[%s1 + $0x198] sm:$0xf]
    %v137 = vld [vmem:[%s1 + $0x19c] sm:$0xf]
    %v138 = vld [vmem:[%s1 + $0x1a0] sm:$0xf]
    %v139 = vld [vmem:[%s1 + $0x1a4] sm:$0xf]
    %v140 = vld [vmem:[%s1 + $0x1a8] sm:$0xf]
    %v141 = vld [vmem:[%s1 + $0x1ac] sm:$0xf]
    %v142 = vld [vmem:[%s1 + $0x1b0] sm:$0xf]
    %v143 = vld [vmem:[%s1 + $0x1b4] sm:$0xf]
    %v144 = vld [vmem:[%s1 + $0x1b8] sm:$0xf]
    %v145 = vld [vmem:[%s1 + $0x1bc] sm:$0xf]
    %v146 = vld [vmem:[%s1 + $0x1c0] sm:$0xf]
    %v147 = vld [vmem:[%s1 + $0x1c4] sm:$0xf]
    %v148 = vld [vmem:[%s1 + $0x1c8] sm:$0xf]
    %v149 = vld [vmem:[%s1 + $0x1cc] sm:$0xf]
    %v150 = vld [vmem:[%s1 + $0x1d0] sm:$0xf]
    %v151 = vld [vmem:[%s1 + $0x1d4] sm:$0xf]
    %v152 = vld [vmem:[%s1 + $0x1d8] sm:$0xf]
    %v153 = vld [vmem:[%s1 + $0x1dc] sm:$0xf]
    %v154 = vld [vmem:[%s1 + $0x1e0] sm:$0xf]
    %v155 = vld [vmem:[%s1 + $0x1e4] sm:$0xf]
    %v156 = vld [vmem:[%s1 + $0x1e8] sm:$0xf]
    %v157 = vld [vmem:[%s1 + $0x1ec] sm:$0xf]
    %v158 = vld [vmem:[%s1 + $0x1f0] sm:$0xf]
    %v159 = vld [vmem:[%s1 + $0x1f4] sm:$0xf]
    %v160 = vld [vmem:[%s1 + $0x1f8] sm:$0xf]
    %v161 = vld [vmem:[%s1 + $0x1fc] sm:$0xf]
    %v163 = vcombine.high %v32, %v32
    %v165 = vunpack.c.l.s4 1966171168
    %v166 = vunpack.c.0.s8 %v165
    %v167 = vlaneseq
    %v168 = vshrl.u32 %v167, 7
    %v169 = vsub.s32 %v166, %v168
    %v170 = vrot.slane %v32, %v169
    %v172 = vunpack.c.l.s4 1966171168
    %v173 = vunpack.c.0.s8 %v172
    %v174 = vlaneseq
    %v175 = vshrl.u32 %v174, 7
    %v176 = vsub.s32 %v173, %v175
    %v177 = vrot.slane %v163, %v176
    %v178 = vcombine.high %v170, %v170
    %v179 = vcombine.high %v177, %v177
    %v181 = vunpack.c.l.s4 1966171168
    %v182 = vunpack.c.0.s8 %v181
    %v183 = vlaneseq
    %v184 = vshrl.u32 %v183, 7
    %v185 = vsub.s32 %v182, %v184
    %v186 = vrot.slane %v170, %v185
    %v188 = vunpack.c.l.s4 1966171168
    %v189 = vunpack.c.0.s8 %v188
    %v190 = vlaneseq
    %v191 = vshrl.u32 %v190, 7
    %v192 = vsub.s32 %v189, %v191
    %v193 = vrot.slane %v177, %v192
    %v195 = vunpack.c.l.s4 1966171168
    %v196 = vunpack.c.0.s8 %v195
    %v197 = vlaneseq
    %v198 = vshrl.u32 %v197, 7
    %v199 = vsub.s32 %v196, %v198
    %v200 = vrot.slane %v178, %v199
    %v202 = vunpack.c.l.s4 1966171168
    %v203 = vunpack.c.0.s8 %v202
    %v204 = vlaneseq
    %v205 = vshrl.u32 %v204, 7
    %v206 = vsub.s32 %v203, %v205
    %v207 = vrot.slane %v179, %v206
    %v208 = vcombine.high %v186, %v186
    %v209 = vcombine.high %v193, %v193
    %v210 = vcombine.high %v200, %v200
    %v211 = vcombine.high %v207, %v207
    %v348 = vunpack.c.l.b16 %v34
    %v349 = vunpack.c.l.b16 %v35
    %v350 = vunpack.c.l.b16 %v36
    %v351 = vunpack.c.l.b16 %v37
    %v352 = vunpack.c.l.b16 %v38
    %v353 = vunpack.c.l.b16 %v39
    %v354 = vunpack.c.l.b16 %v40
    %v355 = vunpack.c.l.b16 %v41
    %v356 = vunpack.c.l.b16 %v42
    %v357 = vunpack.c.l.b16 %v43
    %v358 = vunpack.c.l.b16 %v44
    %v359 = vunpack.c.l.b16 %v45
    %v360 = vunpack.c.l.b16 %v46
    %v361 = vunpack.c.l.b16 %v47
    %v362 = vunpack.c.l.b16 %v48
    %v363 = vunpack.c.l.b16 %v49
    %v364 = vunpack.c.l.b16 %v50
    %v365 = vunpack.c.l.b16 %v51
    %v366 = vunpack.c.l.b16 %v52
    %v367 = vunpack.c.l.b16 %v53
    %v368 = vunpack.c.l.b16 %v54
    %v369 = vunpack.c.l.b16 %v55
    %v370 = vunpack.c.l.b16 %v56
    %v371 = vunpack.c.l.b16 %v57
    %v372 = vunpack.c.l.b16 %v58
    %v373 = vunpack.c.l.b16 %v59
    %v374 = vunpack.c.l.b16 %v60
    %v375 = vunpack.c.l.b16 %v61
    %v376 = vunpack.c.l.b16 %v62
    %v377 = vunpack.c.l.b16 %v63
    %v378 = vunpack.c.l.b16 %v64
    %v379 = vunpack.c.l.b16 %v65
    %v380 = vunpack.c.l.b16 %v66
    %v381 = vunpack.c.l.b16 %v67
    %v382 = vunpack.c.l.b16 %v68
    %v383 = vunpack.c.l.b16 %v69
    %v384 = vunpack.c.l.b16 %v70
    %v385 = vunpack.c.l.b16 %v71
    %v386 = vunpack.c.l.b16 %v72
    %v387 = vunpack.c.l.b16 %v73
    %v388 = vunpack.c.l.b16 %v74
    %v389 = vunpack.c.l.b16 %v75
    %v390 = vunpack.c.l.b16 %v76
    %v391 = vunpack.c.l.b16 %v77
    %v392 = vunpack.c.l.b16 %v78
    %v393 = vunpack.c.l.b16 %v79
    %v394 = vunpack.c.l.b16 %v80
    %v395 = vunpack.c.l.b16 %v81
    %v396 = vunpack.c.l.b16 %v82
    %v397 = vunpack.c.l.b16 %v83
    %v398 = vunpack.c.l.b16 %v84
    %v399 = vunpack.c.l.b16 %v85
    %v400 = vunpack.c.l.b16 %v86
    %v401 = vunpack.c.l.b16 %v87
    %v402 = vunpack.c.l.b16 %v88
    %v403 = vunpack.c.l.b16 %v89
    %v404 = vunpack.c.l.b16 %v90
    %v405 = vunpack.c.l.b16 %v91
    %v406 = vunpack.c.l.b16 %v92
    %v407 = vunpack.c.l.b16 %v93
    %v408 = vunpack.c.l.b16 %v94
    %v409 = vunpack.c.l.b16 %v95
    %v410 = vunpack.c.l.b16 %v96
    %v411 = vunpack.c.l.b16 %v97
    %v412 = vunpack.c.l.b16 %v98
    %v413 = vunpack.c.l.b16 %v99
    %v414 = vunpack.c.l.b16 %v100
    %v415 = vunpack.c.l.b16 %v101
    %v416 = vunpack.c.l.b16 %v102
    %v417 = vunpack.c.l.b16 %v103
    %v418 = vunpack.c.l.b16 %v104
    %v419 = vunpack.c.l.b16 %v105
    %v420 = vunpack.c.l.b16 %v106
    %v421 = vunpack.c.l.b16 %v107
    %v422 = vunpack.c.l.b16 %v108
    %v423 = vunpack.c.l.b16 %v109
    %v424 = vunpack.c.l.b16 %v110
    %v425 = vunpack.c.l.b16 %v111
    %v426 = vunpack.c.l.b16 %v112
    %v427 = vunpack.c.l.b16 %v113
    %v428 = vunpack.c.l.b16 %v114
    %v429 = vunpack.c.l.b16 %v115
    %v430 = vunpack.c.l.b16 %v116
    %v431 = vunpack.c.l.b16 %v117
    %v432 = vunpack.c.l.b16 %v118
    %v433 = vunpack.c.l.b16 %v119
    %v434 = vunpack.c.l.b16 %v120
    %v435 = vunpack.c.l.b16 %v121
    %v436 = vunpack.c.l.b16 %v122
    %v437 = vunpack.c.l.b16 %v123
    %v438 = vunpack.c.l.b16 %v124
    %v439 = vunpack.c.l.b16 %v125
    %v440 = vunpack.c.l.b16 %v126
    %v441 = vunpack.c.l.b16 %v127
    %v442 = vunpack.c.l.b16 %v128
    %v443 = vunpack.c.l.b16 %v129
    %v444 = vunpack.c.l.b16 %v130
    %v445 = vunpack.c.l.b16 %v131
    %v446 = vunpack.c.l.b16 %v132
    %v447 = vunpack.c.l.b16 %v133
    %v448 = vunpack.c.l.b16 %v134
    %v449 = vunpack.c.l.b16 %v135
    %v450 = vunpack.c.l.b16 %v136
    %v451 = vunpack.c.l.b16 %v137
    %v452 = vunpack.c.l.b16 %v138
    %v453 = vunpack.c.l.b16 %v139
    %v454 = vunpack.c.l.b16 %v140
    %v455 = vunpack.c.l.b16 %v141
    %v456 = vunpack.c.l.b16 %v142
    %v457 = vunpack.c.l.b16 %v143
    %v458 = vunpack.c.l.b16 %v144
    %v459 = vunpack.c.l.b16 %v145
    %v460 = vunpack.c.l.b16 %v146
    %v461 = vunpack.c.l.b16 %v147
    %v462 = vunpack.c.l.b16 %v148
    %v463 = vunpack.c.l.b16 %v149
    %v464 = vunpack.c.l.b16 %v150
    %v465 = vunpack.c.l.b16 %v151
    %v466 = vunpack.c.l.b16 %v152
    %v467 = vunpack.c.l.b16 %v153
    %v468 = vunpack.c.l.b16 %v154
    %v469 = vunpack.c.l.b16 %v155
    %v470 = vunpack.c.l.b16 %v156
    %v471 = vunpack.c.l.b16 %v157
    %v472 = vunpack.c.l.b16 %v158
    %v473 = vunpack.c.l.b16 %v159
    %v474 = vunpack.c.l.b16 %v160
    %v475 = vunpack.c.l.b16 %v161
    %v476 = vpack.c.b16 %v349, %v348
    %v477 = vpack.c.b16 %v351, %v350
    %v478 = vpack.c.b16 %v353, %v352
    %v479 = vpack.c.b16 %v355, %v354
    %v480 = vpack.c.b16 %v357, %v356
    %v481 = vpack.c.b16 %v359, %v358
    %v482 = vpack.c.b16 %v361, %v360
    %v483 = vpack.c.b16 %v363, %v362
    %v484 = vpack.c.b16 %v365, %v364
    %v485 = vpack.c.b16 %v367, %v366
    %v486 = vpack.c.b16 %v369, %v368
    %v487 = vpack.c.b16 %v371, %v370
    %v488 = vpack.c.b16 %v373, %v372
    %v489 = vpack.c.b16 %v375, %v374
    %v490 = vpack.c.b16 %v377, %v376
    %v491 = vpack.c.b16 %v379, %v378
    %v492 = vpack.c.b16 %v381, %v380
    %v493 = vpack.c.b16 %v383, %v382
    %v494 = vpack.c.b16 %v385, %v384
    %v495 = vpack.c.b16 %v387, %v386
    %v496 = vpack.c.b16 %v389, %v388
    %v497 = vpack.c.b16 %v391, %v390
    %v498 = vpack.c.b16 %v393, %v392
    %v499 = vpack.c.b16 %v395, %v394
    %v500 = vpack.c.b16 %v397, %v396
    %v501 = vpack.c.b16 %v399, %v398
    %v502 = vpack.c.b16 %v401, %v400
    %v503 = vpack.c.b16 %v403, %v402
    %v504 = vpack.c.b16 %v405, %v404
    %v505 = vpack.c.b16 %v407, %v406
    %v506 = vpack.c.b16 %v409, %v408
    %v507 = vpack.c.b16 %v411, %v410
    %v508 = vpack.c.b16 %v413, %v412
    %v509 = vpack.c.b16 %v415, %v414
    %v510 = vpack.c.b16 %v417, %v416
    %v511 = vpack.c.b16 %v419, %v418
    %v512 = vpack.c.b16 %v421, %v420
    %v513 = vpack.c.b16 %v423, %v422
    %v514 = vpack.c.b16 %v425, %v424
    %v515 = vpack.c.b16 %v427, %v426
    %v516 = vpack.c.b16 %v429, %v428
    %v517 = vpack.c.b16 %v431, %v430
    %v518 = vpack.c.b16 %v433, %v432
    %v519 = vpack.c.b16 %v435, %v434
    %v520 = vpack.c.b16 %v437, %v436
    %v521 = vpack.c.b16 %v439, %v438
    %v522 = vpack.c.b16 %v441, %v440
    %v523 = vpack.c.b16 %v443, %v442
    %v524 = vpack.c.b16 %v445, %v444
    %v525 = vpack.c.b16 %v447, %v446
    %v526 = vpack.c.b16 %v449, %v448
    %v527 = vpack.c.b16 %v451, %v450
    %v528 = vpack.c.b16 %v453, %v452
    %v529 = vpack.c.b16 %v455, %v454
    %v530 = vpack.c.b16 %v457, %v456
    %v531 = vpack.c.b16 %v459, %v458
    %v532 = vpack.c.b16 %v461, %v460
    %v533 = vpack.c.b16 %v463, %v462
    %v534 = vpack.c.b16 %v465, %v464
    %v535 = vpack.c.b16 %v467, %v466
    %v536 = vpack.c.b16 %v469, %v468
    %v537 = vpack.c.b16 %v471, %v470
    %v538 = vpack.c.b16 %v473, %v472
    %v539 = vpack.c.b16 %v475, %v474
    %604 = vmatprep.subr.bf16.mxu0 0
    %605 = vmatpush1.bf16.msra.mxu0 %v476
    %606 = vmatprep.subr.bf16.mxu0 0
    %607 = vmatpush1.bf16.msra.mxu0 %v477
    %608 = vmatprep.subr.bf16.mxu0 0
    %609 = vmatpush1.bf16.msra.mxu0 %v478
    %610 = vmatprep.subr.bf16.mxu0 0
    %611 = vmatpush1.bf16.msra.mxu0 %v479
    %612 = vmatprep.subr.bf16.mxu0 0
    %613 = vmatpush1.bf16.msra.mxu0 %v480
    %614 = vmatprep.subr.bf16.mxu0 0
    %615 = vmatpush1.bf16.msra.mxu0 %v481
    %616 = vmatprep.subr.bf16.mxu0 0
    %617 = vmatpush1.bf16.msra.mxu0 %v482
    %618 = vmatprep.subr.bf16.mxu0 0
    %619 = vmatpush1.bf16.msra.mxu0 %v483
    %620 = vmatprep.subr.bf16.mxu0 0
    %621 = vmatpush1.bf16.msra.mxu0 %v484
    %622 = vmatprep.subr.bf16.mxu0 0
    %623 = vmatpush1.bf16.msra.mxu0 %v485
    %624 = vmatprep.subr.bf16.mxu0 0
    %625 = vmatpush1.bf16.msra.mxu0 %v486
    %626 = vmatprep.subr.bf16.mxu0 0
    %627 = vmatpush1.bf16.msra.mxu0 %v487
    %628 = vmatprep.subr.bf16.mxu0 0
    %629 = vmatpush1.bf16.msra.mxu0 %v488
    %630 = vmatprep.subr.bf16.mxu0 0
    %631 = vmatpush1.bf16.msra.mxu0 %v489
    %632 = vmatprep.subr.bf16.mxu0 0
    %633 = vmatpush1.bf16.msra.mxu0 %v490
    %634 = vmatprep.subr.bf16.mxu0 0
    %635 = vmatpush1.bf16.msra.mxu0 %v491
    %636 = vmatprep.mubr.bf16.mxu0 %v200
    %637 = vmatmul.mubr.bf16.gmra.mrb[0].mxu0 %v186
    %v638 = vpop.f32.mrb[0].mxu0
    %v639 = vadd.f32 0.0, %v638
    %v640 = vpop.f32.mrb[0].mxu0
    %v641 = vpop.f32.mrb[0].mxu0
    %v642 = vpop.f32.mrb[0].mxu0
    %643 = vdwg.mxu0
    %644 = vmatprep.subr.bf16.mxu0 0
    %645 = vmatpush1.bf16.msra.mxu0 %v492
    %646 = vmatprep.subr.bf16.mxu0 0
    %647 = vmatpush1.bf16.msra.mxu0 %v493
    %648 = vmatprep.subr.bf16.mxu0 0
    %649 = vmatpush1.bf16.msra.mxu0 %v494
    %650 = vmatprep.subr.bf16.mxu0 0
    %651 = vmatpush1.bf16.msra.mxu0 %v495
    %652 = vmatprep.subr.bf16.mxu0 0
    %653 = vmatpush1.bf16.msra.mxu0 %v496
    %654 = vmatprep.subr.bf16.mxu0 0
    %655 = vmatpush1.bf16.msra.mxu0 %v497
    %656 = vmatprep.subr.bf16.mxu0 0
    %657 = vmatpush1.bf16.msra.mxu0 %v498
    %658 = vmatprep.subr.bf16.mxu0 0
    %659 = vmatpush1.bf16.msra.mxu0 %v499
    %660 = vmatprep.subr.bf16.mxu0 0
    %661 = vmatpush1.bf16.msra.mxu0 %v500
    %662 = vmatprep.subr.bf16.mxu0 0
    %663 = vmatpush1.bf16.msra.mxu0 %v501
    %664 = vmatprep.subr.bf16.mxu0 0
    %665 = vmatpush1.bf16.msra.mxu0 %v502
    %666 = vmatprep.subr.bf16.mxu0 0
    %667 = vmatpush1.bf16.msra.mxu0 %v503
    %668 = vmatprep.subr.bf16.mxu0 0
    %669 = vmatpush1.bf16.msra.mxu0 %v504
    %670 = vmatprep.subr.bf16.mxu0 0
    %671 = vmatpush1.bf16.msra.mxu0 %v505
    %672 = vmatprep.subr.bf16.mxu0 0
    %673 = vmatpush1.bf16.msra.mxu0 %v506
    %674 = vmatprep.subr.bf16.mxu0 0
    %675 = vmatpush1.bf16.msra.mxu0 %v507
    %676 = vmatprep.mubr.bf16.mxu0 %v210
    %677 = vmatmul.mubr.bf16.gmra.mrb[0].mxu0 %v208
    %v678 = vpop.f32.mrb[0].mxu0
    %v679 = vadd.f32 %v639, %v678
    %v680 = vpop.f32.mrb[0].mxu0
    %v681 = vpop.f32.mrb[0].mxu0
    %v682 = vpop.f32.mrb[0].mxu0
    %683 = vdwg.mxu0
    %684 = vmatprep.subr.bf16.mxu0 0
    %685 = vmatpush1.bf16.msra.mxu0 %v508
    %686 = vmatprep.subr.bf16.mxu0 0
    %687 = vmatpush1.bf16.msra.mxu0 %v509
    %688 = vmatprep.subr.bf16.mxu0 0
    %689 = vmatpush1.bf16.msra.mxu0 %v510
    %690 = vmatprep.subr.bf16.mxu0 0
    %691 = vmatpush1.bf16.msra.mxu0 %v511
    %692 = vmatprep.subr.bf16.mxu0 0
    %693 = vmatpush1.bf16.msra.mxu0 %v512
    %694 = vmatprep.subr.bf16.mxu0 0
    %695 = vmatpush1.bf16.msra.mxu0 %v513
    %696 = vmatprep.subr.bf16.mxu0 0
    %697 = vmatpush1.bf16.msra.mxu0 %v514
    %698 = vmatprep.subr.bf16.mxu0 0
    %699 = vmatpush1.bf16.msra.mxu0 %v515
    %700 = vmatprep.subr.bf16.mxu0 0
    %701 = vmatpush1.bf16.msra.mxu0 %v516
    %702 = vmatprep.subr.bf16.mxu0 0
    %703 = vmatpush1.bf16.msra.mxu0 %v517
    %704 = vmatprep.subr.bf16.mxu0 0
    %705 = vmatpush1.bf16.msra.mxu0 %v518
    %706 = vmatprep.subr.bf16.mxu0 0
    %707 = vmatpush1.bf16.msra.mxu0 %v519
    %708 = vmatprep.subr.bf16.mxu0 0
    %709 = vmatpush1.bf16.msra.mxu0 %v520
    %710 = vmatprep.subr.bf16.mxu0 0
    %711 = vmatpush1.bf16.msra.mxu0 %v521
    %712 = vmatprep.subr.bf16.mxu0 0
    %713 = vmatpush1.bf16.msra.mxu0 %v522
    %714 = vmatprep.subr.bf16.mxu0 0
    %715 = vmatpush1.bf16.msra.mxu0 %v523
    %716 = vmatprep.mubr.bf16.mxu0 %v207
    %717 = vmatmul.mubr.bf16.gmra.mrb[0].mxu0 %v193
    %v718 = vpop.f32.mrb[0].mxu0
    %v719 = vadd.f32 %v679, %v718
    %v720 = vpop.f32.mrb[0].mxu0
    %v721 = vpop.f32.mrb[0].mxu0
    %v722 = vpop.f32.mrb[0].mxu0
    %723 = vdwg.mxu0
    %724 = vmatprep.subr.bf16.mxu0 0
    %725 = vmatpush1.bf16.msra.mxu0 %v524
    %726 = vmatprep.subr.bf16.mxu0 0
    %727 = vmatpush1.bf16.msra.mxu0 %v525
    %728 = vmatprep.subr.bf16.mxu0 0
    %729 = vmatpush1.bf16.msra.mxu0 %v526
    %730 = vmatprep.subr.bf16.mxu0 0
    %731 = vmatpush1.bf16.msra.mxu0 %v527
    %732 = vmatprep.subr.bf16.mxu0 0
    %733 = vmatpush1.bf16.msra.mxu0 %v528
    %734 = vmatprep.subr.bf16.mxu0 0
    %735 = vmatpush1.bf16.msra.mxu0 %v529
    %736 = vmatprep.subr.bf16.mxu0 0
    %737 = vmatpush1.bf16.msra.mxu0 %v530
    %738 = vmatprep.subr.bf16.mxu0 0
    %739 = vmatpush1.bf16.msra.mxu0 %v531
    %740 = vmatprep.subr.bf16.mxu0 0
    %741 = vmatpush1.bf16.msra.mxu0 %v532
    %742 = vmatprep.subr.bf16.mxu0 0
    %743 = vmatpush1.bf16.msra.mxu0 %v533
    %744 = vmatprep.subr.bf16.mxu0 0
    %745 = vmatpush1.bf16.msra.mxu0 %v534
    %746 = vmatprep.subr.bf16.mxu0 0
    %747 = vmatpush1.bf16.msra.mxu0 %v535
    %748 = vmatprep.subr.bf16.mxu0 0
    %749 = vmatpush1.bf16.msra.mxu0 %v536
    %750 = vmatprep.subr.bf16.mxu0 0
    %751 = vmatpush1.bf16.msra.mxu0 %v537
    %752 = vmatprep.subr.bf16.mxu0 0
    %753 = vmatpush1.bf16.msra.mxu0 %v538
    %754 = vmatprep.subr.bf16.mxu0 0
    %755 = vmatpush1.bf16.msra.mxu0 %v539
    %756 = vmatprep.mubr.bf16.mxu0 %v211
    %757 = vmatmul.mubr.bf16.gmra.mrb[0].mxu0 %v209
    %v758 = vpop.f32.mrb[0].mxu0
    %v759 = vadd.f32 %v719, %v758
    %v760 = vpop.f32.mrb[0].mxu0
    %v761 = vpop.f32.mrb[0].mxu0
    %v762 = vpop.f32.mrb[0].mxu0
    %763 = vdwg.mxu0
    %v764 = vadd.f32 %v33, %v759
    %vm765 = vcmask 123904
    %766 = vst.msk [vmem:[#allocation2] sm:$0x3] %vm765, %v764
    %v767 = vld [vmem:[#allocation3] sm:$0x3]
    %v768 = vld [vmem:[%s2] sm:$0xf]
    %v769 = vld [vmem:[%s2 + $0x4] sm:$0xf]
    %v770 = vld [vmem:[%s2 + $0x8] sm:$0xf]
    %v771 = vld [vmem:[%s2 + $0xc] sm:$0xf]
    %v772 = vld [vmem:[%s2 + $0x10] sm:$0xf]
    %v773 = vld [vmem:[%s2 + $0x14] sm:$0xf]
    %v774 = vld [vmem:[%s2 + $0x18] sm:$0xf]
    %v775 = vld [vmem:[%s2 + $0x1c] sm:$0xf]
    %v776 = vld [vmem:[%s2 + $0x20] sm:$0xf]
    %v777 = vld [vmem:[%s2 + $0x24] sm:$0xf]
    %v778 = vld [vmem:[%s2 + $0x28] sm:$0xf]
    %v779 = vld [vmem:[%s2 + $0x2c] sm:$0xf]
    %v780 = vld [vmem:[%s2 + $0x30] sm:$0xf]
    %v781 = vld [vmem:[%s2 + $0x34] sm:$0xf]
    %v782 = vld [vmem:[%s2 + $0x38] sm:$0xf]
    %v783 = vld [vmem:[%s2 + $0x3c] sm:$0xf]
    %v784 = vld [vmem:[%s2 + $0x40] sm:$0xf]
    %v785 = vld [vmem:[%s2 + $0x44] sm:$0xf]
    %v786 = vld [vmem:[%s2 + $0x48] sm:$0xf]
    %v787 = vld [vmem:[%s2 + $0x4c] sm:$0xf]
    %v788 = vld [vmem:[%s2 + $0x50] sm:$0xf]
    %v789 = vld [vmem:[%s2 + $0x54] sm:$0xf]
    %v790 = vld [vmem:[%s2 + $0x58] sm:$0xf]
    %v791 = vld [vmem:[%s2 + $0x5c] sm:$0xf]
    %v792 = vld [vmem:[%s2 + $0x60] sm:$0xf]
    %v793 = vld [vmem:[%s2 + $0x64] sm:$0xf]
    %v794 = vld [vmem:[%s2 + $0x68] sm:$0xf]
    %v795 = vld [vmem:[%s2 + $0x6c] sm:$0xf]
    %v796 = vld [vmem:[%s2 + $0x70] sm:$0xf]
    %v797 = vld [vmem:[%s2 + $0x74] sm:$0xf]
    %v798 = vld [vmem:[%s2 + $0x78] sm:$0xf]
    %v799 = vld [vmem:[%s2 + $0x7c] sm:$0xf]
    %v800 = vld [vmem:[%s2 + $0x80] sm:$0xf]
    %v801 = vld [vmem:[%s2 + $0x84] sm:$0xf]
    %v802 = vld [vmem:[%s2 + $0x88] sm:$0xf]
    %v803 = vld [vmem:[%s2 + $0x8c] sm:$0xf]
    %v804 = vld [vmem:[%s2 + $0x90] sm:$0xf]
    %v805 = vld [vmem:[%s2 + $0x94] sm:$0xf]
    %v806 = vld [vmem:[%s2 + $0x98] sm:$0xf]
    %v807 = vld [vmem:[%s2 + $0x9c] sm:$0xf]
    %v808 = vld [vmem:[%s2 + $0xa0] sm:$0xf]
    %v809 = vld [vmem:[%s2 + $0xa4] sm:$0xf]
    %v810 = vld [vmem:[%s2 + $0xa8] sm:$0xf]
    %v811 = vld [vmem:[%s2 + $0xac] sm:$0xf]
    %v812 = vld [vmem:[%s2 + $0xb0] sm:$0xf]
    %v813 = vld [vmem:[%s2 + $0xb4] sm:$0xf]
    %v814 = vld [vmem:[%s2 + $0xb8] sm:$0xf]
    %v815 = vld [vmem:[%s2 + $0xbc] sm:$0xf]
    %v816 = vld [vmem:[%s2 + $0xc0] sm:$0xf]
    %v817 = vld [vmem:[%s2 + $0xc4] sm:$0xf]
    %v818 = vld [vmem:[%s2 + $0xc8] sm:$0xf]
    %v819 = vld [vmem:[%s2 + $0xcc] sm:$0xf]
    %v820 = vld [vmem:[%s2 + $0xd0] sm:$0xf]
    %v821 = vld [vmem:[%s2 + $0xd4] sm:$0xf]
    %v822 = vld [vmem:[%s2 + $0xd8] sm:$0xf]
    %v823 = vld [vmem:[%s2 + $0xdc] sm:$0xf]
    %v824 = vld [vmem:[%s2 + $0xe0] sm:$0xf]
    %v825 = vld [vmem:[%s2 + $0xe4] sm:$0xf]
    %v826 = vld [vmem:[%s2 + $0xe8] sm:$0xf]
    %v827 = vld [vmem:[%s2 + $0xec] sm:$0xf]
    %v828 = vld [vmem:[%s2 + $0xf0] sm:$0xf]
    %v829 = vld [vmem:[%s2 + $0xf4] sm:$0xf]
    %v830 = vld [vmem:[%s2 + $0xf8] sm:$0xf]
    %v831 = vld [vmem:[%s2 + $0xfc] sm:$0xf]
    %v832 = vld [vmem:[%s2 + $0x100] sm:$0xf]
    %v833 = vld [vmem:[%s2 + $0x104] sm:$0xf]
    %v834 = vld [vmem:[%s2 + $0x108] sm:$0xf]
    %v835 = vld [vmem:[%s2 + $0x10c] sm:$0xf]
    %v836 = vld [vmem:[%s2 + $0x110] sm:$0xf]
    %v837 = vld [vmem:[%s2 + $0x114] sm:$0xf]
    %v838 = vld [vmem:[%s2 + $0x118] sm:$0xf]
    %v839 = vld [vmem:[%s2 + $0x11c] sm:$0xf]
    %v840 = vld [vmem:[%s2 + $0x120] sm:$0xf]
    %v841 = vld [vmem:[%s2 + $0x124] sm:$0xf]
    %v842 = vld [vmem:[%s2 + $0x128] sm:$0xf]
    %v843 = vld [vmem:[%s2 + $0x12c] sm:$0xf]
    %v844 = vld [vmem:[%s2 + $0x130] sm:$0xf]
    %v845 = vld [vmem:[%s2 + $0x134] sm:$0xf]
    %v846 = vld [vmem:[%s2 + $0x138] sm:$0xf]
    %v847 = vld [vmem:[%s2 + $0x13c] sm:$0xf]
    %v848 = vld [vmem:[%s2 + $0x140] sm:$0xf]
    %v849 = vld [vmem:[%s2 + $0x144] sm:$0xf]
    %v850 = vld [vmem:[%s2 + $0x148] sm:$0xf]
    %v851 = vld [vmem:[%s2 + $0x14c] sm:$0xf]
    %v852 = vld [vmem:[%s2 + $0x150] sm:$0xf]
    %v853 = vld [vmem:[%s2 + $0x154] sm:$0xf]
    %v854 = vld [vmem:[%s2 + $0x158] sm:$0xf]
    %v855 = vld [vmem:[%s2 + $0x15c] sm:$0xf]
    %v856 = vld [vmem:[%s2 + $0x160] sm:$0xf]
    %v857 = vld [vmem:[%s2 + $0x164] sm:$0xf]
    %v858 = vld [vmem:[%s2 + $0x168] sm:$0xf]
    %v859 = vld [vmem:[%s2 + $0x16c] sm:$0xf]
    %v860 = vld [vmem:[%s2 + $0x170] sm:$0xf]
    %v861 = vld [vmem:[%s2 + $0x174] sm:$0xf]
    %v862 = vld [vmem:[%s2 + $0x178] sm:$0xf]
    %v863 = vld [vmem:[%s2 + $0x17c] sm:$0xf]
    %v864 = vld [vmem:[%s2 + $0x180] sm:$0xf]
    %v865 = vld [vmem:[%s2 + $0x184] sm:$0xf]
    %v866 = vld [vmem:[%s2 + $0x188] sm:$0xf]
    %v867 = vld [vmem:[%s2 + $0x18c] sm:$0xf]
    %v868 = vld [vmem:[%s2 + $0x190] sm:$0xf]
    %v869 = vld [vmem:[%s2 + $0x194] sm:$0xf]
    %v870 = vld [vmem:[%s2 + $0x198] sm:$0xf]
    %v871 = vld [vmem:[%s2 + $0x19c] sm:$0xf]
    %v872 = vld [vmem:[%s2 + $0x1a0] sm:$0xf]
    %v873 = vld [vmem:[%s2 + $0x1a4] sm:$0xf]
    %v874 = vld [vmem:[%s2 + $0x1a8] sm:$0xf]
    %v875 = vld [vmem:[%s2 + $0x1ac] sm:$0xf]
    %v876 = vld [vmem:[%s2 + $0x1b0] sm:$0xf]
    %v877 = vld [vmem:[%s2 + $0x1b4] sm:$0xf]
    %v878 = vld [vmem:[%s2 + $0x1b8] sm:$0xf]
    %v879 = vld [vmem:[%s2 + $0x1bc] sm:$0xf]
    %v880 = vld [vmem:[%s2 + $0x1c0] sm:$0xf]
    %v881 = vld [vmem:[%s2 + $0x1c4] sm:$0xf]
    %v882 = vld [vmem:[%s2 + $0x1c8] sm:$0xf]
    %v883 = vld [vmem:[%s2 + $0x1cc] sm:$0xf]
    %v884 = vld [vmem:[%s2 + $0x1d0] sm:$0xf]
    %v885 = vld [vmem:[%s2 + $0x1d4] sm:$0xf]
    %v886 = vld [vmem:[%s2 + $0x1d8] sm:$0xf]
    %v887 = vld [vmem:[%s2 + $0x1dc] sm:$0xf]
    %v888 = vld [vmem:[%s2 + $0x1e0] sm:$0xf]
    %v889 = vld [vmem:[%s2 + $0x1e4] sm:$0xf]
    %v890 = vld [vmem:[%s2 + $0x1e8] sm:$0xf]
    %v891 = vld [vmem:[%s2 + $0x1ec] sm:$0xf]
    %v892 = vld [vmem:[%s2 + $0x1f0] sm:$0xf]
    %v893 = vld [vmem:[%s2 + $0x1f4] sm:$0xf]
    %v894 = vld [vmem:[%s2 + $0x1f8] sm:$0xf]
    %v895 = vld [vmem:[%s2 + $0x1fc] sm:$0xf]
    %v1024 = vunpack.c.l.b16 %v768
    %v1025 = vunpack.c.l.b16 %v769
    %v1026 = vunpack.c.l.b16 %v770
    %v1027 = vunpack.c.l.b16 %v771
    %v1028 = vunpack.c.l.b16 %v772
    %v1029 = vunpack.c.l.b16 %v773
    %v1030 = vunpack.c.l.b16 %v774
    %v1031 = vunpack.c.l.b16 %v775
    %v1032 = vunpack.c.l.b16 %v776
    %v1033 = vunpack.c.l.b16 %v777
    %v1034 = vunpack.c.l.b16 %v778
    %v1035 = vunpack.c.l.b16 %v779
    %v1036 = vunpack.c.l.b16 %v780
    %v1037 = vunpack.c.l.b16 %v781
    %v1038 = vunpack.c.l.b16 %v782
    %v1039 = vunpack.c.l.b16 %v783
    %v1040 = vunpack.c.l.b16 %v784
    %v1041 = vunpack.c.l.b16 %v785
    %v1042 = vunpack.c.l.b16 %v786
    %v1043 = vunpack.c.l.b16 %v787
    %v1044 = vunpack.c.l.b16 %v788
    %v1045 = vunpack.c.l.b16 %v789
    %v1046 = vunpack.c.l.b16 %v790
    %v1047 = vunpack.c.l.b16 %v791
    %v1048 = vunpack.c.l.b16 %v792
    %v1049 = vunpack.c.l.b16 %v793
    %v1050 = vunpack.c.l.b16 %v794
    %v1051 = vunpack.c.l.b16 %v795
    %v1052 = vunpack.c.l.b16 %v796
    %v1053 = vunpack.c.l.b16 %v797
    %v1054 = vunpack.c.l.b16 %v798
    %v1055 = vunpack.c.l.b16 %v799
    %v1056 = vunpack.c.l.b16 %v800
    %v1057 = vunpack.c.l.b16 %v801
    %v1058 = vunpack.c.l.b16 %v802
    %v1059 = vunpack.c.l.b16 %v803
    %v1060 = vunpack.c.l.b16 %v804
    %v1061 = vunpack.c.l.b16 %v805
    %v1062 = vunpack.c.l.b16 %v806
    %v1063 = vunpack.c.l.b16 %v807
    %v1064 = vunpack.c.l.b16 %v808
    %v1065 = vunpack.c.l.b16 %v809
    %v1066 = vunpack.c.l.b16 %v810
    %v1067 = vunpack.c.l.b16 %v811
    %v1068 = vunpack.c.l.b16 %v812
    %v1069 = vunpack.c.l.b16 %v813
    %v1070 = vunpack.c.l.b16 %v814
    %v1071 = vunpack.c.l.b16 %v815
    %v1072 = vunpack.c.l.b16 %v816
    %v1073 = vunpack.c.l.b16 %v817
    %v1074 = vunpack.c.l.b16 %v818
    %v1075 = vunpack.c.l.b16 %v819
    %v1076 = vunpack.c.l.b16 %v820
    %v1077 = vunpack.c.l.b16 %v821
    %v1078 = vunpack.c.l.b16 %v822
    %v1079 = vunpack.c.l.b16 %v823
    %v1080 = vunpack.c.l.b16 %v824
    %v1081 = vunpack.c.l.b16 %v825
    %v1082 = vunpack.c.l.b16 %v826
    %v1083 = vunpack.c.l.b16 %v827
    %v1084 = vunpack.c.l.b16 %v828
    %v1085 = vunpack.c.l.b16 %v829
    %v1086 = vunpack.c.l.b16 %v830
    %v1087 = vunpack.c.l.b16 %v831
    %v1088 = vunpack.c.l.b16 %v832
    %v1089 = vunpack.c.l.b16 %v833
    %v1090 = vunpack.c.l.b16 %v834
    %v1091 = vunpack.c.l.b16 %v835
    %v1092 = vunpack.c.l.b16 %v836
    %v1093 = vunpack.c.l.b16 %v837
    %v1094 = vunpack.c.l.b16 %v838
    %v1095 = vunpack.c.l.b16 %v839
    %v1096 = vunpack.c.l.b16 %v840
    %v1097 = vunpack.c.l.b16 %v841
    %v1098 = vunpack.c.l.b16 %v842
    %v1099 = vunpack.c.l.b16 %v843
    %v1100 = vunpack.c.l.b16 %v844
    %v1101 = vunpack.c.l.b16 %v845
    %v1102 = vunpack.c.l.b16 %v846
    %v1103 = vunpack.c.l.b16 %v847
    %v1104 = vunpack.c.l.b16 %v848
    %v1105 = vunpack.c.l.b16 %v849
    %v1106 = vunpack.c.l.b16 %v850
    %v1107 = vunpack.c.l.b16 %v851
    %v1108 = vunpack.c.l.b16 %v852
    %v1109 = vunpack.c.l.b16 %v853
    %v1110 = vunpack.c.l.b16 %v854
    %v1111 = vunpack.c.l.b16 %v855
    %v1112 = vunpack.c.l.b16 %v856
    %v1113 = vunpack.c.l.b16 %v857
    %v1114 = vunpack.c.l.b16 %v858
    %v1115 = vunpack.c.l.b16 %v859
    %v1116 = vunpack.c.l.b16 %v860
    %v1117 = vunpack.c.l.b16 %v861
    %v1118 = vunpack.c.l.b16 %v862
    %v1119 = vunpack.c.l.b16 %v863
    %v1120 = vunpack.c.l.b16 %v864
    %v1121 = vunpack.c.l.b16 %v865
    %v1122 = vunpack.c.l.b16 %v866
    %v1123 = vunpack.c.l.b16 %v867
    %v1124 = vunpack.c.l.b16 %v868
    %v1125 = vunpack.c.l.b16 %v869
    %v1126 = vunpack.c.l.b16 %v870
    %v1127 = vunpack.c.l.b16 %v871
    %v1128 = vunpack.c.l.b16 %v872
    %v1129 = vunpack.c.l.b16 %v873
    %v1130 = vunpack.c.l.b16 %v874
    %v1131 = vunpack.c.l.b16 %v875
    %v1132 = vunpack.c.l.b16 %v876
    %v1133 = vunpack.c.l.b16 %v877
    %v1134 = vunpack.c.l.b16 %v878
    %v1135 = vunpack.c.l.b16 %v879
    %v1136 = vunpack.c.l.b16 %v880
    %v1137 = vunpack.c.l.b16 %v881
    %v1138 = vunpack.c.l.b16 %v882
    %v1139 = vunpack.c.l.b16 %v883
    %v1140 = vunpack.c.l.b16 %v884
    %v1141 = vunpack.c.l.b16 %v885
    %v1142 = vunpack.c.l.b16 %v886
    %v1143 = vunpack.c.l.b16 %v887
    %v1144 = vunpack.c.l.b16 %v888
    %v1145 = vunpack.c.l.b16 %v889
    %v1146 = vunpack.c.l.b16 %v890
    %v1147 = vunpack.c.l.b16 %v891
    %v1148 = vunpack.c.l.b16 %v892
    %v1149 = vunpack.c.l.b16 %v893
    %v1150 = vunpack.c.l.b16 %v894
    %v1151 = vunpack.c.l.b16 %v895
    %v1152 = vpack.c.b16 %v1025, %v1024
    %v1153 = vpack.c.b16 %v1027, %v1026
    %v1154 = vpack.c.b16 %v1029, %v1028
    %v1155 = vpack.c.b16 %v1031, %v1030
    %v1156 = vpack.c.b16 %v1033, %v1032
    %v1157 = vpack.c.b16 %v1035, %v1034
    %v1158 = vpack.c.b16 %v1037, %v1036
    %v1159 = vpack.c.b16 %v1039, %v1038
    %v1160 = vpack.c.b16 %v1041, %v1040
    %v1161 = vpack.c.b16 %v1043, %v1042
    %v1162 = vpack.c.b16 %v1045, %v1044
    %v1163 = vpack.c.b16 %v1047, %v1046
    %v1164 = vpack.c.b16 %v1049, %v1048
    %v1165 = vpack.c.b16 %v1051, %v1050
    %v1166 = vpack.c.b16 %v1053, %v1052
    %v1167 = vpack.c.b16 %v1055, %v1054
    %v1168 = vpack.c.b16 %v1057, %v1056
    %v1169 = vpack.c.b16 %v1059, %v1058
    %v1170 = vpack.c.b16 %v1061, %v1060
    %v1171 = vpack.c.b16 %v1063, %v1062
    %v1172 = vpack.c.b16 %v1065, %v1064
    %v1173 = vpack.c.b16 %v1067, %v1066
    %v1174 = vpack.c.b16 %v1069, %v1068
    %v1175 = vpack.c.b16 %v1071, %v1070
    %v1176 = vpack.c.b16 %v1073, %v1072
    %v1177 = vpack.c.b16 %v1075, %v1074
    %v1178 = vpack.c.b16 %v1077, %v1076
    %v1179 = vpack.c.b16 %v1079, %v1078
    %v1180 = vpack.c.b16 %v1081, %v1080
    %v1181 = vpack.c.b16 %v1083, %v1082
    %v1182 = vpack.c.b16 %v1085, %v1084
    %v1183 = vpack.c.b16 %v1087, %v1086
    %v1184 = vpack.c.b16 %v1089, %v1088
    %v1185 = vpack.c.b16 %v1091, %v1090
    %v1186 = vpack.c.b16 %v1093, %v1092
    %v1187 = vpack.c.b16 %v1095, %v1094
    %v1188 = vpack.c.b16 %v1097, %v1096
    %v1189 = vpack.c.b16 %v1099, %v1098
    %v1190 = vpack.c.b16 %v1101, %v1100
    %v1191 = vpack.c.b16 %v1103, %v1102
    %v1192 = vpack.c.b16 %v1105, %v1104
    %v1193 = vpack.c.b16 %v1107, %v1106
    %v1194 = vpack.c.b16 %v1109, %v1108
    %v1195 = vpack.c.b16 %v1111, %v1110
    %v1196 = vpack.c.b16 %v1113, %v1112
    %v1197 = vpack.c.b16 %v1115, %v1114
    %v1198 = vpack.c.b16 %v1117, %v1116
    %v1199 = vpack.c.b16 %v1119, %v1118
    %v1200 = vpack.c.b16 %v1121, %v1120
    %v1201 = vpack.c.b16 %v1123, %v1122
    %v1202 = vpack.c.b16 %v1125, %v1124
    %v1203 = vpack.c.b16 %v1127, %v1126
    %v1204 = vpack.c.b16 %v1129, %v1128
    %v1205 = vpack.c.b16 %v1131, %v1130
    %v1206 = vpack.c.b16 %v1133, %v1132
    %v1207 = vpack.c.b16 %v1135, %v1134
    %v1208 = vpack.c.b16 %v1137, %v1136
    %v1209 = vpack.c.b16 %v1139, %v1138
    %v1210 = vpack.c.b16 %v1141, %v1140
    %v1211 = vpack.c.b16 %v1143, %v1142
    %v1212 = vpack.c.b16 %v1145, %v1144
    %v1213 = vpack.c.b16 %v1147, %v1146
    %v1214 = vpack.c.b16 %v1149, %v1148
    %v1215 = vpack.c.b16 %v1151, %v1150
    %1280 = vmatprep.subr.bf16.mxu0 0
    %1281 = vmatpush1.bf16.msra.mxu0 %v1152
    %1282 = vmatprep.subr.bf16.mxu0 0
    %1283 = vmatpush1.bf16.msra.mxu0 %v1153
    %1284 = vmatprep.subr.bf16.mxu0 0
    %1285 = vmatpush1.bf16.msra.mxu0 %v1154
    %1286 = vmatprep.subr.bf16.mxu0 0
    %1287 = vmatpush1.bf16.msra.mxu0 %v1155
    %1288 = vmatprep.subr.bf16.mxu0 0
    %1289 = vmatpush1.bf16.msra.mxu0 %v1156
    %1290 = vmatprep.subr.bf16.mxu0 0
    %1291 = vmatpush1.bf16.msra.mxu0 %v1157
    %1292 = vmatprep.subr.bf16.mxu0 0
    %1293 = vmatpush1.bf16.msra.mxu0 %v1158
    %1294 = vmatprep.subr.bf16.mxu0 0
    %1295 = vmatpush1.bf16.msra.mxu0 %v1159
    %1296 = vmatprep.subr.bf16.mxu0 0
    %1297 = vmatpush1.bf16.msra.mxu0 %v1160
    %1298 = vmatprep.subr.bf16.mxu0 0
    %1299 = vmatpush1.bf16.msra.mxu0 %v1161
    %1300 = vmatprep.subr.bf16.mxu0 0
    %1301 = vmatpush1.bf16.msra.mxu0 %v1162
    %1302 = vmatprep.subr.bf16.mxu0 0
    %1303 = vmatpush1.bf16.msra.mxu0 %v1163
    %1304 = vmatprep.subr.bf16.mxu0 0
    %1305 = vmatpush1.bf16.msra.mxu0 %v1164
    %1306 = vmatprep.subr.bf16.mxu0 0
    %1307 = vmatpush1.bf16.msra.mxu0 %v1165
    %1308 = vmatprep.subr.bf16.mxu0 0
    %1309 = vmatpush1.bf16.msra.mxu0 %v1166
    %1310 = vmatprep.subr.bf16.mxu0 0
    %1311 = vmatpush1.bf16.msra.mxu0 %v1167
    %1312 = vmatprep.mubr.bf16.mxu0 %v200
    %1313 = vmatmul.mubr.bf16.gmra.mrb[0].mxu0 %v186
    %v1314 = vpop.f32.mrb[0].mxu0
    %v1315 = vadd.f32 0.0, %v1314
    %v1316 = vpop.f32.mrb[0].mxu0
    %v1317 = vpop.f32.mrb[0].mxu0
    %v1318 = vpop.f32.mrb[0].mxu0
    %1319 = vdwg.mxu0
    %1320 = vmatprep.subr.bf16.mxu0 0
    %1321 = vmatpush1.bf16.msra.mxu0 %v1168
    %1322 = vmatprep.subr.bf16.mxu0 0
    %1323 = vmatpush1.bf16.msra.mxu0 %v1169
    %1324 = vmatprep.subr.bf16.mxu0 0
    %1325 = vmatpush1.bf16.msra.mxu0 %v1170
    %1326 = vmatprep.subr.bf16.mxu0 0
    %1327 = vmatpush1.bf16.msra.mxu0 %v1171
    %1328 = vmatprep.subr.bf16.mxu0 0
    %1329 = vmatpush1.bf16.msra.mxu0 %v1172
    %1330 = vmatprep.subr.bf16.mxu0 0
    %1331 = vmatpush1.bf16.msra.mxu0 %v1173
    %1332 = vmatprep.subr.bf16.mxu0 0
    %1333 = vmatpush1.bf16.msra.mxu0 %v1174
    %1334 = vmatprep.subr.bf16.mxu0 0
    %1335 = vmatpush1.bf16.msra.mxu0 %v1175
    %1336 = vmatprep.subr.bf16.mxu0 0
    %1337 = vmatpush1.bf16.msra.mxu0 %v1176
    %1338 = vmatprep.subr.bf16.mxu0 0
    %1339 = vmatpush1.bf16.msra.mxu0 %v1177
    %1340 = vmatprep.subr.bf16.mxu0 0
    %1341 = vmatpush1.bf16.msra.mxu0 %v1178
    %1342 = vmatprep.subr.bf16.mxu0 0
    %1343 = vmatpush1.bf16.msra.mxu0 %v1179
    %1344 = vmatprep.subr.bf16.mxu0 0
    %1345 = vmatpush1.bf16.msra.mxu0 %v1180
    %1346 = vmatprep.subr.bf16.mxu0 0
    %1347 = vmatpush1.bf16.msra.mxu0 %v1181
    %1348 = vmatprep.subr.bf16.mxu0 0
    %1349 = vmatpush1.bf16.msra.mxu0 %v1182
    %1350 = vmatprep.subr.bf16.mxu0 0
    %1351 = vmatpush1.bf16.msra.mxu0 %v1183
    %1352 = vmatprep.mubr.bf16.mxu0 %v210
    %1353 = vmatmul.mubr.bf16.gmra.mrb[0].mxu0 %v208
    %v1354 = vpop.f32.mrb[0].mxu0
    %v1355 = vadd.f32 %v1315, %v1354
    %v1356 = vpop.f32.mrb[0].mxu0
    %v1357 = vpop.f32.mrb[0].mxu0
    %v1358 = vpop.f32.mrb[0].mxu0
    %1359 = vdwg.mxu0
    %1360 = vmatprep.subr.bf16.mxu0 0
    %1361 = vmatpush1.bf16.msra.mxu0 %v1184
    %1362 = vmatprep.subr.bf16.mxu0 0
    %1363 = vmatpush1.bf16.msra.mxu0 %v1185
    %1364 = vmatprep.subr.bf16.mxu0 0
    %1365 = vmatpush1.bf16.msra.mxu0 %v1186
    %1366 = vmatprep.subr.bf16.mxu0 0
    %1367 = vmatpush1.bf16.msra.mxu0 %v1187
    %1368 = vmatprep.subr.bf16.mxu0 0
    %1369 = vmatpush1.bf16.msra.mxu0 %v1188
    %1370 = vmatprep.subr.bf16.mxu0 0
    %1371 = vmatpush1.bf16.msra.mxu0 %v1189
    %1372 = vmatprep.subr.bf16.mxu0 0
    %1373 = vmatpush1.bf16.msra.mxu0 %v1190
    %1374 = vmatprep.subr.bf16.mxu0 0
    %1375 = vmatpush1.bf16.msra.mxu0 %v1191
    %1376 = vmatprep.subr.bf16.mxu0 0
    %1377 = vmatpush1.bf16.msra.mxu0 %v1192
    %1378 = vmatprep.subr.bf16.mxu0 0
    %1379 = vmatpush1.bf16.msra.mxu0 %v1193
    %1380 = vmatprep.subr.bf16.mxu0 0
    %1381 = vmatpush1.bf16.msra.mxu0 %v1194
    %1382 = vmatprep.subr.bf16.mxu0 0
    %1383 = vmatpush1.bf16.msra.mxu0 %v1195
    %1384 = vmatprep.subr.bf16.mxu0 0
    %1385 = vmatpush1.bf16.msra.mxu0 %v1196
    %1386 = vmatprep.subr.bf16.mxu0 0
    %1387 = vmatpush1.bf16.msra.mxu0 %v1197
    %1388 = vmatprep.subr.bf16.mxu0 0
    %1389 = vmatpush1.bf16.msra.mxu0 %v1198
    %1390 = vmatprep.subr.bf16.mxu0 0
    %1391 = vmatpush1.bf16.msra.mxu0 %v1199
    %1392 = vmatprep.mubr.bf16.mxu0 %v207
    %1393 = vmatmul.mubr.bf16.gmra.mrb[0].mxu0 %v193
    %v1394 = vpop.f32.mrb[0].mxu0
    %v1395 = vadd.f32 %v1355, %v1394
    %v1396 = vpop.f32.mrb[0].mxu0
    %v1397 = vpop.f32.mrb[0].mxu0
    %v1398 = vpop.f32.mrb[0].mxu0
    %1399 = vdwg.mxu0
    %1400 = vmatprep.subr.bf16.mxu0 0
    %1401 = vmatpush1.bf16.msra.mxu0 %v1200
    %1402 = vmatprep.subr.bf16.mxu0 0
    %1403 = vmatpush1.bf16.msra.mxu0 %v1201
    %1404 = vmatprep.subr.bf16.mxu0 0
    %1405 = vmatpush1.bf16.msra.mxu0 %v1202
    %1406 = vmatprep.subr.bf16.mxu0 0
    %1407 = vmatpush1.bf16.msra.mxu0 %v1203
    %1408 = vmatprep.subr.bf16.mxu0 0
    %1409 = vmatpush1.bf16.msra.mxu0 %v1204
    %1410 = vmatprep.subr.bf16.mxu0 0
    %1411 = vmatpush1.bf16.msra.mxu0 %v1205
    %1412 = vmatprep.subr.bf16.mxu0 0
    %1413 = vmatpush1.bf16.msra.mxu0 %v1206
    %1414 = vmatprep.subr.bf16.mxu0 0
    %1415 = vmatpush1.bf16.msra.mxu0 %v1207
    %1416 = vmatprep.subr.bf16.mxu0 0
    %1417 = vmatpush1.bf16.msra.mxu0 %v1208
    %1418 = vmatprep.subr.bf16.mxu0 0
    %1419 = vmatpush1.bf16.msra.mxu0 %v1209
    %1420 = vmatprep.subr.bf16.mxu0 0
    %1421 = vmatpush1.bf16.msra.mxu0 %v1210
    %1422 = vmatprep.subr.bf16.mxu0 0
    %1423 = vmatpush1.bf16.msra.mxu0 %v1211
    %1424 = vmatprep.subr.bf16.mxu0 0
    %1425 = vmatpush1.bf16.msra.mxu0 %v1212
    %1426 = vmatprep.subr.bf16.mxu0 0
    %1427 = vmatpush1.bf16.msra.mxu0 %v1213
    %1428 = vmatprep.subr.bf16.mxu0 0
    %1429 = vmatpush1.bf16.msra.mxu0 %v1214
    %1430 = vmatprep.subr.bf16.mxu0 0
    %1431 = vmatpush1.bf16.msra.mxu0 %v1215
    %1432 = vmatprep.mubr.bf16.mxu0 %v211
    %1433 = vmatmul.mubr.bf16.gmra.mrb[0].mxu0 %v209
    %v1434 = vpop.f32.mrb[0].mxu0
    %v1435 = vadd.f32 %v1395, %v1434
    %v1436 = vpop.f32.mrb[0].mxu0
    %v1437 = vpop.f32.mrb[0].mxu0
    %v1438 = vpop.f32.mrb[0].mxu0
    %1439 = vdwg.mxu0
    %v1440 = vadd.f32 %v767, %v1435
    %1441 = vst.msk [vmem:[#allocation3] sm:$0x3] %vm765, %v1440
    // Predicated region
    $region30: #{variational_encoder_forward.9} parent=1 // pred_check
      %p1442 = pneg %p25
    $region31: #{variational_encoder_forward.9} parent=1 // pred_check_branch
      %1444 = sbr.rel (%p1442) target = $region33
    $region32: #{variational_encoder_forward.9} parent=1 // pred_region
      %v1445 = vld [vmem:[#allocation2] sm:$0x3]
      %v1446 = vld [vmem:[%s3] sm:$0x1]
      %v1448 = vlaneseq
      %v1449 = vshrl.u32 %v1448, 7
      %v1450 = vsub.s32 0, %v1449
      %v1451 = vrot.slane %v1446, %v1450
      %v1453 = vadd.f32 %v1445, %v1451
      %v1454 = vld [vmem:[#allocation3] sm:$0x3]
      %v1455 = vld [vmem:[%s4] sm:$0x1]
      %v1457 = vlaneseq
      %v1458 = vshrl.u32 %v1457, 7
      %v1459 = vsub.s32 0, %v1458
      %v1460 = vrot.slane %v1455, %v1459
      %v1462 = vadd.f32 %v1454, %v1460
      %v1463 = vmul.f32 %v1462, 1.442695
      %v1464 = vpow.pop %v1463
      %v1465 = vld [vmem:[%s5] sm:$0x3]
      %v1466 = vmul.f32 %v1464, %v1465
      %v1467 = vadd.f32 %v1453, %v1466
      %1468 = vst.msk [vmem:[#allocation4] sm:$0x3] %vm765, %v1467
    $region33: #{variational_encoder_forward.9} parent=1 // pred_fallthru
      _
    // Predicated region
    $region34: #{variational_encoder_forward.9} parent=1 // pred_check
      _
    $region35: #{variational_encoder_forward.9} parent=1 // pred_check_branch
      %1470 = sbr.rel (0) target = $region37
    $region36: #{variational_encoder_forward.9} parent=1 // pred_region
      %s1472 = ssub.s32 32, 32
      %1473 = vsyncadd [#allocation5], %s1472
      %s1475 = sshll.u32 [#allocation4], 4
      %s1476 = int_to_ptr.vmem [resolvable:$true] %s1475
      %1478 = dma.vmem_to_hbm [thread:$0]  %s1476, 32, %s6, [#allocation5]
    $region37: #{variational_encoder_forward.9} parent=1 // pred_fallthru
      _
    // Predicated region
    $region38: #{variational_encoder_forward.9} parent=1 // pred_check
      _
    $region39: #{variational_encoder_forward.9} parent=1 // pred_check_branch
      %1480 = sbr.rel (0) target = $region41
    $region40: #{variational_encoder_forward.9} parent=1 // pred_region
      %1481 = dma.done [#allocation5], 32
    $region41: #{variational_encoder_forward.9} parent=1 // pred_fallthru
      _
    %1482 = vsyncpa [#allocation5], 1

</llo_original>
